<compile_context>
chip_gen: v5e
topology: v5e:2x2
jax: 0.10.0
libtpu: 0.0.40
codegen_flags: <defaults>
</compile_context>

<pallas_src>
import jax
import jax.numpy as jnp
from jax import lax
from jax.experimental import pallas as pl
from jax.experimental.pallas import tpu as pltpu

LANE = 128                      # channel dims padded to a multiple of the lane width
MATMUL_DTYPE = jnp.bfloat16     # MXU input dtype (f32 accumulation)
STORE_DTYPE = jnp.bfloat16      # inter-kernel activation dtype
TM = 256                        # conv accumulator row-chunk (rows of the flattened plane)


def _round_up(x, m):
    return (x + m - 1) // m * m


def _default_vmem_limit():
    try:
        cap = int(pltpu.get_tpu_info().vmem_capacity_bytes)
        return max(32 * 1024 * 1024, min(cap * 3 // 4, 100 * 1024 * 1024))
    except Exception:
        return 48 * 1024 * 1024


VMEM_LIMIT = _default_vmem_limit()


# --------------------------------------------------------------------------- #
# Kernel 1: 3x3x3 conv (padding=1) + bias + per-depth-plane BN partial stats.  #
# --------------------------------------------------------------------------- #
def conv3x3_bn_stats(xpad, w_flat, bias, mask, *, H, W, TD):
    """xpad  : (N, D+2, HWPAD, cin_p)  zero/guard-padded channels-last, MATMUL_DTYPE
       w_flat: (27*cin_p, cout_p)      MATMUL_DTYPE, rows ordered (kd, kh, kw, cin)
       bias  : (1, cout_p) f32
       mask  : (HPWP, 1)   f32, 1.0 at interior (h, w) positions
       returns y    : (N, D, HPWP, cout_p) STORE_DTYPE   (interior rows valid)
               stats: (N, D, 2, cout_p)    f32, row0 = masked sum, row1 = masked sum of sq."""
    N, Dp, HWPAD, cin_p = xpad.shape
    D = Dp - 2
    assert D % TD == 0
    Hp, Wp = H + 2, W + 2
    HPWP = Hp * Wp
    halo = (HWPAD - HPWP) // 2
    cout_p = w_flat.shape[1]
    assert HWPAD == HPWP + 2 * (Wp + 1)

    m_chunks = [(s, min(TM, HPWP - s)) for s in range(0, HPWP, TM)]

    def kernel(*refs):
        xrefs = refs[:TD + 2]
        w_ref, b_ref, m_ref = refs[TD + 2:TD + 5]
        o_ref, st_ref = refs[TD + 5:]
        for td in range(TD):
            planes = (xrefs[td], xrefs[td + 1], xrefs[td + 2])
            ssum = jnp.zeros((1, cout_p), jnp.float32)
            ssq = jnp.zeros((1, cout_p), jnp.float32)
            for mstart, msize in m_chunks:
                # 27 shifted-slice matmuls, accumulator kept in vregs for this row chunk.
                acc = jnp.zeros((msize, cout_p), jnp.float32)
                for kd in range(3):
                    xr = planes[kd]
                    for kh in range(3):
                        for kw in range(3):
                            t = (kd * 3 + kh) * 3 + kw
                            s = halo + (kh - 1) * Wp + (kw - 1) + mstart   # static offset
                            xs = xr[0, 0, pl.ds(s, msize), :]              # (msize, cin_p)
                            wt = w_ref[pl.ds(t * cin_p, cin_p), :]         # (cin_p, cout_p)
                            acc = acc + jnp.dot(xs, wt,
                                                preferred_element_type=jnp.float32)
                y = acc + b_ref[...]
                o_ref[0, td, pl.ds(mstart, msize), :] = y.astype(o_ref.dtype)
                mk = m_ref[pl.ds(mstart, msize), :]                        # (msize, 1)
                ym = y * mk                                                # masked y (f32)
                ssum = ssum + jnp.sum(ym, axis=0, keepdims=True)
                ssq = ssq + jnp.sum(ym * y, axis=0, keepdims=True)
            st_ref[0, td, pl.ds(0, 1), :] = ssum
            st_ref[0, td, pl.ds(1, 1), :] = ssq

    x_specs = [pl.BlockSpec((1, 1, HWPAD, cin_p),
                            (lambda n, d, j=j: (n, d * TD + j, 0, 0)))
               for j in range(TD + 2)]

    return pl.pallas_call(
        kernel,
        grid=(N, D // TD),
        in_specs=x_specs + [
            pl.BlockSpec((27 * cin_p, cout_p), lambda n, d: (0, 0)),
            pl.BlockSpec((1, cout_p), lambda n, d: (0, 0)),
            pl.BlockSpec((HPWP, 1), lambda n, d: (0, 0)),
        ],
        out_specs=(
            pl.BlockSpec((1, TD, HPWP, cout_p), lambda n, d: (n, d, 0, 0)),
            pl.BlockSpec((1, TD, 2, cout_p), lambda n, d: (n, d, 0, 0)),
        ),
        out_shape=(
            jax.ShapeDtypeStruct((N, D, HPWP, cout_p), STORE_DTYPE),
            jax.ShapeDtypeStruct((N, D, 2, cout_p), jnp.float32),
        ),
        compiler_params=pltpu.CompilerParams(
            dimension_semantics=("parallel", "parallel"),
            vmem_limit_bytes=VMEM_LIMIT),
    )(*([xpad] * (TD + 2)), w_flat, bias, mask)


# --------------------------------------------------------------------------- #
# Kernel 2: BN1 scale/shift + ReLU, emitted directly in the zero/guard-padded  #
#           (N, D+2, HWPAD, Cp) layout the conv kernel consumes (bf16).        #
# --------------------------------------------------------------------------- #
def bn_relu_to_conv_input(y, scale, shift, mask, *, H, W):
    N, D, HPWP, cp = y.shape
    Hp, Wp = H + 2, W + 2
    assert HPWP == Hp * Wp
    halo = Wp + 1
    HWPAD = HPWP + 2 * halo
    Dp = D + 2
    out_dtype = MATMUL_DTYPE

    def kernel(y_ref, s_ref, t_ref, m_ref, o_ref):
        dp = pl.program_id(1)
        zg = jnp.zeros((halo, cp), out_dtype)
        o_ref[0, 0, pl.ds(0, halo), :] = zg
        o_ref[0, 0, pl.ds(halo + HPWP, halo), :] = zg
        is_interior = jnp.logical_and(dp >= 1, dp <= D)

        @pl.when(is_interior)
        def _():
            v = jnp.maximum(
                y_ref[0, 0, :, :].astype(jnp.float32) * s_ref[...] + t_ref[...], 0.0)
            v = jnp.where(m_ref[...] > 0.0, v, 0.0)      # zero the in-plane padding rows
            o_ref[0, 0, pl.ds(halo, HPWP), :] = v.astype(out_dtype)

        @pl.when(jnp.logical_not(is_interior))
        def _():                                          # depth-halo planes are all zero
            o_ref[0, 0, pl.ds(halo, HPWP), :] = jnp.zeros((HPWP, cp), out_dtype)

    return pl.pallas_call(
        kernel,
        grid=(N, Dp),
        in_specs=[
            pl.BlockSpec((1, 1, HPWP, cp),
                         lambda n, dp: (n, jnp.minimum(jnp.maximum(dp - 1, 0), D - 1), 0, 0)),
            pl.BlockSpec((1, cp), lambda n, dp: (0, 0)),
            pl.BlockSpec((1, cp), lambda n, dp: (0, 0)),
            pl.BlockSpec((HPWP, 1), lambda n, dp: (0, 0)),
        ],
        out_specs=pl.BlockSpec((1, 1, HWPAD, cp), lambda n, dp: (n, dp, 0, 0)),
        out_shape=jax.ShapeDtypeStruct((N, Dp, HWPAD, cp), out_dtype),
        compiler_params=pltpu.CompilerParams(
            dimension_semantics=("parallel", "parallel"),
            vmem_limit_bytes=VMEM_LIMIT),
    )(y, scale, shift, mask)


# --------------------------------------------------------------------------- #
# Kernel 3: BN2 scale/shift + shortcut (fused 1x1x1 projection or identity)    #
#           + residual add + ReLU; writes only the interior (H, W) rows.       #
# --------------------------------------------------------------------------- #
def bn2_shortcut_add_relu(y2, scale, shift, x_sc, *, H, W, ws=None, bs=None):
    N, D, HPWP, cout_p = y2.shape
    Wp = W + 2
    HW = H * W
    cin_p = x_sc.shape[-1]
    project = ws is not None

    def kernel(y_ref, s_ref, t_ref, x_ref, *rest):
        if project:
            w_ref, b_ref, o_ref = rest
            sc = jnp.dot(x_ref[0, 0, :, :].astype(MATMUL_DTYPE), w_ref[...],
                         preferred_element_type=jnp.float32) + b_ref[...]
        else:
            (o_ref,) = rest
            sc = x_ref[0, 0, :, :]                       # un-quantized f32 identity shortcut
        bn = y_ref[0, 0, :, :].astype(jnp.float32) * s_ref[...] + t_ref[...]
        for h in range(H):                               # drop the padded rows at write time
            base = (h + 1) * Wp + 1
            o_ref[0, 0, h, :, :] = jnp.maximum(
                bn[base:base + W, :] + sc[h * W:(h + 1) * W, :], 0.0)

    in_specs = [
        pl.BlockSpec((1, 1, HPWP, cout_p), lambda n, d: (n, d, 0, 0)),
        pl.BlockSpec((1, cout_p), lambda n, d: (0, 0)),
        pl.BlockSpec((1, cout_p), lambda n, d: (0, 0)),
        pl.BlockSpec((1, 1, HW, cin_p), lambda n, d: (n, d, 0, 0)),
    ]
    args = [y2, scale, shift, x_sc]
    if project:
        in_specs += [pl.BlockSpec((cin_p, cout_p), lambda n, d: (0, 0)),
                     pl.BlockSpec((1, cout_p), lambda n, d: (0, 0))]
        args += [ws, bs]

    return pl.pallas_call(
        kernel,
        grid=(N, D),
        in_specs=in_specs,
        out_specs=pl.BlockSpec((1, 1, H, W, cout_p), lambda n, d: (n, d, 0, 0, 0)),
        out_shape=jax.ShapeDtypeStruct((N, D, H, W, cout_p), jnp.float32),
        compiler_params=pltpu.CompilerParams(
            dimension_semantics=("parallel", "parallel"),
            vmem_limit_bytes=VMEM_LIMIT),
    )(*args)


# ------------------------------ JAX glue ------------------------------------ #
def _combine_bn_stats(stats, total_count):
    ssum = jnp.sum(stats[:, :, 0, :], axis=(0, 1))
    ssq = jnp.sum(stats[:, :, 1, :], axis=(0, 1))
    mean = (ssum / total_count)[None, :]
    var = jnp.maximum(ssq[None, :] / total_count - mean * mean, 0.0)
    return mean, var


def _pad_conv_weight(w, cin_p, cout_p):
    # w: (3, 3, 3, Cin, Cout) -> (27*cin_p, cout_p), rows ordered (kd, kh, kw, cin)
    ci, co = w.shape[3], w.shape[4]
    wp = jnp.zeros((3, 3, 3, cin_p, cout_p), jnp.float32).at[:, :, :, :ci, :co].set(w)
    return wp.reshape(27 * cin_p, cout_p).astype(MATMUL_DTYPE)


def _pad_row(v, cp, fill=0.0):
    return jnp.full((1, cp), fill, jnp.float32).at[:, :v.shape[1]].set(v.astype(jnp.float32))


def basic_block_forward(x_ncdhw, params, eps=1e-5):
    N, Cin, D, H, W = x_ncdhw.shape
    Cout = params["w1"].shape[-1]
    cin_p, cout_p = _round_up(Cin, LANE), _round_up(Cout, LANE)
    Hp, Wp, Dp = H + 2, W + 2, D + 2
    HPWP = Hp * Wp
    halo = Wp + 1
    TD = 2 if D % 2 == 0 else 1            # depth planes per conv grid step (shared halo)

    # ---- layout prep: NCDHW -> channels-last, pad channels / spatial / guard rows ----
    x_nl = jnp.transpose(x_ncdhw, (0, 2, 3, 4, 1)).astype(jnp.float32)        # NDHWC
    x_cp = jnp.zeros((N, D, H, W, cin_p), jnp.float32).at[..., :Cin].set(x_nl)
    x_sc = x_cp.reshape(N, D, H * W, cin_p)                 # f32 shortcut input (interior)
    xsp = jnp.pad(x_cp, ((0, 0), (1, 1), (1, 1), (1, 1), (0, 0)))
    xsp = xsp.reshape(N, Dp, HPWP, cin_p)
    xpad1 = jnp.pad(xsp, ((0, 0), (0, 0), (halo, halo), (0, 0))).astype(MATMUL_DTYPE)

    hw = jnp.arange(HPWP, dtype=jnp.int32)
    hp, wp = hw // Wp, hw % Wp
    mask = (((hp >= 1) & (hp <= H) & (wp >= 1) & (wp <= W))
            .astype(jnp.float32).reshape(HPWP, 1))

    w1 = _pad_conv_weight(params["w1"], cin_p, cout_p)
    w2 = _pad_conv_weight(params["w2"], cout_p, cout_p)
    b1, b2 = _pad_row(params["b1"], cout_p), _pad_row(params["b2"], cout_p)
    g1, g2 = _pad_row(params["g1"], cout_p, 1.0), _pad_row(params["g2"], cout_p, 1.0)
    be1, be2 = _pad_row(params["be1"], cout_p), _pad_row(params["be2"], cout_p)
    cnt = float(N * D * H * W)

    # ---- conv1 + bias + BN1 partial stats (fused) ----
    y1, st1 = conv3x3_bn_stats(xpad1, w1, b1, mask, H=H, W=W, TD=TD)
    m1, v1 = _combine_bn_stats(st1, cnt)
    s1 = g1 / jnp.sqrt(v1 + eps)
    t1 = be1 - m1 * s1

    # ---- BN1 + ReLU, written directly in the padded conv2 input layout (bf16) ----
    xpad2 = bn_relu_to_conv_input(y1, s1, t1, mask, H=H, W=W)

    # ---- conv2 + bias + BN2 partial stats (fused) ----
    y2, st2 = conv3x3_bn_stats(xpad2, w2, b2, mask, H=H, W=W, TD=TD)
    m2, v2 = _combine_bn_stats(st2, cnt)
    s2 = g2 / jnp.sqrt(v2 + eps)
    t2 = be2 - m2 * s2

    # ---- BN2 + shortcut + add + ReLU (fused), interior rows only ----
    if Cin != Cout:
        ws = (jnp.zeros((cin_p, cout_p), jnp.float32)
              .at[:Cin, :Cout].set(params["ws"]).astype(MATMUL_DTYPE))
        bs = _pad_row(params["bs"], cout_p)
        out = bn2_shortcut_add_relu(y2, s2, t2, x_sc, H=H, W=W, ws=ws, bs=bs)
    else:
        out = bn2_shortcut_add_relu(y2, s2, t2, x_sc, H=H, W=W)

    # channel un-pad + back to NCDHW (single fused XLA copy)
    return jnp.transpose(out[..., :Cout], (0, 4, 1, 2, 3))
    # TODO(synk): BatchNorm running-mean/var buffer updates (training-mode side effect)
    # are not represented; they do not affect the forward output.


# ------------------------- pure-JAX reference -------------------------------- #
def reference_forward(x_ncdhw, params, eps=1e-5, match_kernel_precision=False):
    """match_kernel_precision=False -> exact f32 module semantics.
       match_kernel_precision=True  -> replicates the kernels' bf16 MXU inputs and bf16
       inter-kernel activations (BN statistics stay f32, like the kernels)."""
    md = MATMUL_DTYPE if match_kernel_precision else jnp.float32

    def rnd(a):     # bf16 storage round-trip of an intermediate activation
        return a.astype(STORE_DTYPE).astype(jnp.float32) if match_kernel_precision else a

    x = jnp.transpose(x_ncdhw, (0, 2, 3, 4, 1)).astype(jnp.float32)
    Cin, Cout = x.shape[-1], params["w1"].shape[-1]

    def conv3(a, w, b):
        y = lax.conv_general_dilated(
            a.astype(md), w.astype(md), (1, 1, 1), [(1, 1)] * 3,
            dimension_numbers=("NDHWC", "DHWIO", "NDHWC"),
            preferred_element_type=jnp.float32)
        return y + b.reshape(1, 1, 1, 1, -1)

    def bn(y, g, be):
        m = jnp.mean(y, axis=(0, 1, 2, 3), keepdims=True)
        v = jnp.mean((y - m) ** 2, axis=(0, 1, 2, 3), keepdims=True)
        s = g.reshape(1, 1, 1, 1, -1) / jnp.sqrt(v + eps)
        t = be.reshape(1, 1, 1, 1, -1) - m * s
        return rnd(y) * s + t

    a1 = jax.nn.relu(bn(conv3(x, params["w1"], params["b1"]), params["g1"], params["be1"]))
    out = bn(conv3(a1, params["w2"], params["b2"]), params["g2"], params["be2"])
    if Cin != Cout:
        sc = jnp.einsum("ndhwc,co->ndhwo", x.astype(md), params["ws"].astype(md),
                        preferred_element_type=jnp.float32) \
            + params["bs"].reshape(1, 1, 1, 1, -1)
    else:
        sc = x
    out = jax.nn.relu(out + sc)
    return jnp.transpose(out, (0, 4, 1, 2, 3))


# ----------------------------------- main ------------------------------------ #
def _make_params(key, cin, cout):
    ks = jax.random.split(key, 10)
    p = {
        "w1": 0.1 * jax.random.normal(ks[0], (3, 3, 3, cin, cout), jnp.float32),
        "b1": 0.05 * jax.random.normal(ks[1], (1, cout), jnp.float32),
        "g1": 1.0 + 0.1 * jax.random.normal(ks[2], (1, cout), jnp.float32),
        "be1": 0.1 * jax.random.normal(ks[3], (1, cout), jnp.float32),
        "w2": 0.1 * jax.random.normal(ks[4], (3, 3, 3, cout, cout), jnp.float32),
        "b2": 0.05 * jax.random.normal(ks[5], (1, cout), jnp.float32),
        "g2": 1.0 + 0.1 * jax.random.normal(ks[6], (1, cout), jnp.float32),
        "be2": 0.1 * jax.random.normal(ks[7], (1, cout), jnp.float32),
    }
    if cin != cout:
        p["ws"] = 0.1 * jax.random.normal(ks[8], (cin, cout), jnp.float32)
        p["bs"] = 0.05 * jax.random.normal(ks[9], (1, cout), jnp.float32)
    return p


if __name__ == "__main__":
    key = jax.random.PRNGKey(0)
    k_x1, k_p1, k_x2, k_p2 = jax.random.split(key, 4)
    fwd = jax.jit(basic_block_forward)

    # ---- config 1: projection shortcut (Cin != Cout) ----
    N, Cin, Cout, D, H, W = 2, 4, 8, 4, 4, 4
    x1 = jax.random.normal(k_x1, (N, Cin, D, H, W), jnp.float32)
    p1 = _make_params(k_p1, Cin, Cout)
    out1 = jax.block_until_ready(fwd(x1, p1))
    assert out1.shape == (N, Cout, D, H, W)
    err1m = float(jnp.max(jnp.abs(
        out1 - reference_forward(x1, p1, match_kernel_precision=True))))
    err1f = float(jnp.max(jnp.abs(
        out1 - reference_forward(x1, p1, match_kernel_precision=False))))
    assert err1m < 3e-3, f"projection block mismatch vs precision-matched ref: {err1m}"
    assert err1f < 2e-1, f"projection block drifted from f32 reference: {err1f}"

    # ---- config 2: identity shortcut (Cin == Cout) ----
    N2, C2, D2, H2, W2 = 2, 8, 4, 4, 4
    x2 = jax.random.normal(k_x2, (N2, C2, D2, H2, W2), jnp.float32)
    p2 = _make_params(k_p2, C2, C2)
    out2 = jax.block_until_ready(fwd(x2, p2))
    assert out2.shape == (N2, C2, D2, H2, W2)
    err2m = float(jnp.max(jnp.abs(
        out2 - reference_forward(x2, p2, match_kernel_precision=True))))
    err2f = float(jnp.max(jnp.abs(
        out2 - reference_forward(x2, p2, match_kernel_precision=False))))
    assert err2m < 3e-3, f"identity block mismatch vs precision-matched ref: {err2m}"
    assert err2f < 2e-1, f"identity block drifted from f32 reference: {err2f}"

    print("KERNEL_OK")
</pallas_src>

<mosaic_0001>
module attributes {stable_mosaic.version = 11 : i64} {
  func.func @kernel(%arg0: i32, %arg1: i32, %arg2: memref<1x1x50x128xbf16, #tpu.memory_space<vmem>>, %arg3: memref<1x1x50x128xbf16, #tpu.memory_space<vmem>>, %arg4: memref<1x1x50x128xbf16, #tpu.memory_space<vmem>>, %arg5: memref<1x1x50x128xbf16, #tpu.memory_space<vmem>>, %arg6: memref<3456x128xbf16, #tpu.memory_space<vmem>>, %arg7: memref<1x128xf32, #tpu.memory_space<vmem>>, %arg8: memref<36x1xf32, #tpu.memory_space<vmem>>, %arg9: memref<1x2x36x128xbf16, #tpu.memory_space<vmem>>, %arg10: memref<1x2x2x128xf32, #tpu.memory_space<vmem>>) attributes {dimension_semantics = [#tpu.dimension_semantics<parallel>, #tpu.dimension_semantics<parallel>], iteration_bounds = array<i64: 2, 2>, scalar_prefetch = 0 : i64, scratch_operands = 0 : i64, tpu.core_type = #tpu.core_type<tc>, window_params = [{transform_indices = @transform_0, window_bounds = array<i64: 1, 1, 50, 128>}, {transform_indices = @transform_1, window_bounds = array<i64: 1, 1, 50, 128>}, {transform_indices = @transform_2, window_bounds = array<i64: 1, 1, 50, 128>}, {transform_indices = @transform_3, window_bounds = array<i64: 1, 1, 50, 128>}, {pipeline_mode = #tpu.pipeline_mode<synchronous>, transform_indices = @transform_4, window_bounds = array<i64: 3456, 128>}, {pipeline_mode = #tpu.pipeline_mode<synchronous>, transform_indices = @transform_5, window_bounds = array<i64: 1, 128>}, {pipeline_mode = #tpu.pipeline_mode<synchronous>, transform_indices = @transform_6, window_bounds = array<i64: 36, 1>}, {transform_indices = @transform_7, window_bounds = array<i64: 1, 2, 36, 128>}, {transform_indices = @transform_8, window_bounds = array<i64: 1, 2, 2, 128>}]} {
    %cst = arith.constant 0.000000e+00 : f32
    %0 = vector.broadcast %cst : f32 to vector<1x128xf32>
    %cst_0 = arith.constant 0.000000e+00 : f32
    %1 = vector.broadcast %cst_0 : f32 to vector<1x128xf32>
    %cst_1 = arith.constant 0.000000e+00 : f32
    %2 = vector.broadcast %cst_1 : f32 to vector<36x128xf32>
    %c0 = arith.constant 0 : index
    %c0_2 = arith.constant 0 : index
    %c0_3 = arith.constant 0 : index
    %c0_4 = arith.constant 0 : index
    %3 = vector.load %arg2[%c0, %c0_2, %c0_3, %c0_4] : memref<1x1x50x128xbf16, #tpu.memory_space<vmem>>, vector<1x1x36x128xbf16>
    %4 = vector.shape_cast %3 : vector<1x1x36x128xbf16> to vector<36x128xbf16>
    %c0_5 = arith.constant 0 : index
    %c0_6 = arith.constant 0 : index
    %5 = vector.load %arg6[%c0_5, %c0_6] : memref<3456x128xbf16, #tpu.memory_space<vmem>>, vector<128x128xbf16>
    %cst_7 = arith.constant dense<0.000000e+00> : vector<36x128xf32>
    %6 = tpu.matmul %4, %5, %cst_7 {dimension_numbers = #tpu.dot_dimension_numbers<[1], [0], [0], [1], [0, 0, 1, 1], [], []>} : vector<36x128xbf16>, vector<128x128xbf16>, vector<36x128xf32> -> vector<36x128xf32>
    %7 = arith.addf %2, %6 : vector<36x128xf32>
    %c0_8 = arith.constant 0 : index
    %c0_9 = arith.constant 0 : index
    %c1 = arith.constant 1 : index
    %c0_10 = arith.constant 0 : index
    %8 = vector.load %arg2[%c0_8, %c0_9, %c1, %c0_10] : memref<1x1x50x128xbf16, #tpu.memory_space<vmem>>, vector<1x1x36x128xbf16>
    %9 = vector.shape_cast %8 : vector<1x1x36x128xbf16> to vector<36x128xbf16>
    %c128 = arith.constant 128 : index
    %c0_11 = arith.constant 0 : index
    %10 = vector.load %arg6[%c128, %c0_11] : memref<3456x128xbf16, #tpu.memory_space<vmem>>, vector<128x128xbf16>
    %cst_12 = arith.constant dense<0.000000e+00> : vector<36x128xf32>
    %11 = tpu.matmul %9, %10, %cst_12 {dimension_numbers = #tpu.dot_dimension_numbers<[1], [0], [0], [1], [0, 0, 1, 1], [], []>} : vector<36x128xbf16>, vector<128x128xbf16>, vector<36x128xf32> -> vector<36x128xf32>
    %12 = arith.addf %7, %11 : vector<36x128xf32>
    %c0_13 = arith.constant 0 : index
    %c0_14 = arith.constant 0 : index
    %c2 = arith.constant 2 : index
    %c0_15 = arith.constant 0 : index
    %13 = vector.load %arg2[%c0_13, %c0_14, %c2, %c0_15] : memref<1x1x50x128xbf16, #tpu.memory_space<vmem>>, vector<1x1x36x128xbf16>
    %14 = vector.shape_cast %13 : vector<1x1x36x128xbf16> to vector<36x128xbf16>
    %c256 = arith.constant 256 : index
    %c0_16 = arith.constant 0 : index
    %15 = vector.load %arg6[%c256, %c0_16] : memref<3456x128xbf16, #tpu.memory_space<vmem>>, vector<128x128xbf16>
    %cst_17 = arith.constant dense<0.000000e+00> : vector<36x128xf32>
    %16 = tpu.matmul %14, %15, %cst_17 {dimension_numbers = #tpu.dot_dimension_numbers<[1], [0], [0], [1], [0, 0, 1, 1], [], []>} : vector<36x128xbf16>, vector<128x128xbf16>, vector<36x128xf32> -> vector<36x128xf32>
    %17 = arith.addf %12, %16 : vector<36x128xf32>
    %c0_18 = arith.constant 0 : index
    %c0_19 = arith.constant 0 : index
    %c6 = arith.constant 6 : index
    %c0_20 = arith.constant 0 : index
    %18 = vector.load %arg2[%c0_18, %c0_19, %c6, %c0_20] : memref<1x1x50x128xbf16, #tpu.memory_space<vmem>>, vector<1x1x36x128xbf16>
    %19 = vector.shape_cast %18 : vector<1x1x36x128xbf16> to vector<36x128xbf16>
    %c384 = arith.constant 384 : index
    %c0_21 = arith.constant 0 : index
    %20 = vector.load %arg6[%c384, %c0_21] : memref<3456x128xbf16, #tpu.memory_space<vmem>>, vector<128x128xbf16>
    %cst_22 = arith.constant dense<0.000000e+00> : vector<36x128xf32>
    %21 = tpu.matmul %19, %20, %cst_22 {dimension_numbers = #tpu.dot_dimension_numbers<[1], [0], [0], [1], [0, 0, 1, 1], [], []>} : vector<36x128xbf16>, vector<128x128xbf16>, vector<36x128xf32> -> vector<36x128xf32>
    %22 = arith.addf %17, %21 : vector<36x128xf32>
    %c0_23 = arith.constant 0 : index
    %c0_24 = arith.constant 0 : index
    %c7 = arith.constant 7 : index
    %c0_25 = arith.constant 0 : index
    %23 = vector.load %arg2[%c0_23, %c0_24, %c7, %c0_25] : memref<1x1x50x128xbf16, #tpu.memory_space<vmem>>, vector<1x1x36x128xbf16>
    %24 = vector.shape_cast %23 : vector<1x1x36x128xbf16> to vector<36x128xbf16>
    %c512 = arith.constant 512 : index
    %c0_26 = arith.constant 0 : index
    %25 = vector.load %arg6[%c512, %c0_26] : memref<3456x128xbf16, #tpu.memory_space<vmem>>, vector<128x128xbf16>
    %cst_27 = arith.constant dense<0.000000e+00> : vector<36x128xf32>
    %26 = tpu.matmul %24, %25, %cst_27 {dimension_numbers = #tpu.dot_dimension_numbers<[1], [0], [0], [1], [0, 0, 1, 1], [], []>} : vector<36x128xbf16>, vector<128x128xbf16>, vector<36x128xf32> -> vector<36x128xf32>
    %27 = arith.addf %22, %26 : vector<36x128xf32>
    %c0_28 = arith.constant 0 : index
    %c0_29 = arith.constant 0 : index
    %c8 = arith.constant 8 : index
    %c0_30 = arith.constant 0 : index
    %28 = vector.load %arg2[%c0_28, %c0_29, %c8, %c0_30] : memref<1x1x50x128xbf16, #tpu.memory_space<vmem>>, vector<1x1x36x128xbf16>
    %29 = vector.shape_cast %28 : vector<1x1x36x128xbf16> to vector<36x128xbf16>
    %c640 = arith.constant 640 : index
    %c0_31 = arith.constant 0 : index
    %30 = vector.load %arg6[%c640, %c0_31] : memref<3456x128xbf16, #tpu.memory_space<vmem>>, vector<128x128xbf16>
    %cst_32 = arith.constant dense<0.000000e+00> : vector<36x128xf32>
    %31 = tpu.matmul %29, %30, %cst_32 {dimension_numbers = #tpu.dot_dimension_numbers<[1], [0], [0], [1], [0, 0, 1, 1], [], []>} : vector<36x128xbf16>, vector<128x128xbf16>, vector<36x128xf32> -> vector<36x128xf32>
    %32 = arith.addf %27, %31 : vector<36x128xf32>
    %c0_33 = arith.constant 0 : index
    %c0_34 = arith.constant 0 : index
    %c12 = arith.constant 12 : index
    %c0_35 = arith.constant 0 : index
    %33 = vector.load %arg2[%c0_33, %c0_34, %c12, %c0_35] : memref<1x1x50x128xbf16, #tpu.memory_space<vmem>>, vector<1x1x36x128xbf16>
    %34 = vector.shape_cast %33 : vector<1x1x36x128xbf16> to vector<36x128xbf16>
    %c768 = arith.constant 768 : index
    %c0_36 = arith.constant 0 : index
    %35 = vector.load %arg6[%c768, %c0_36] : memref<3456x128xbf16, #tpu.memory_space<vmem>>, vector<128x128xbf16>
    %cst_37 = arith.constant dense<0.000000e+00> : vector<36x128xf32>
    %36 = tpu.matmul %34, %35, %cst_37 {dimension_numbers = #tpu.dot_dimension_numbers<[1], [0], [0], [1], [0, 0, 1, 1], [], []>} : vector<36x128xbf16>, vector<128x128xbf16>, vector<36x128xf32> -> vector<36x128xf32>
    %37 = arith.addf %32, %36 : vector<36x128xf32>
    %c0_38 = arith.constant 0 : index
    %c0_39 = arith.constant 0 : index
    %c13 = arith.constant 13 : index
    %c0_40 = arith.constant 0 : index
    %38 = vector.load %arg2[%c0_38, %c0_39, %c13, %c0_40] : memref<1x1x50x128xbf16, #tpu.memory_space<vmem>>, vector<1x1x36x128xbf16>
    %39 = vector.shape_cast %38 : vector<1x1x36x128xbf16> to vector<36x128xbf16>
    %c896 = arith.constant 896 : index
    %c0_41 = arith.constant 0 : index
    %40 = vector.load %arg6[%c896, %c0_41] : memref<3456x128xbf16, #tpu.memory_space<vmem>>, vector<128x128xbf16>
    %cst_42 = arith.constant dense<0.000000e+00> : vector<36x128xf32>
    %41 = tpu.matmul %39, %40, %cst_42 {dimension_numbers = #tpu.dot_dimension_numbers<[1], [0], [0], [1], [0, 0, 1, 1], [], []>} : vector<36x128xbf16>, vector<128x128xbf16>, vector<36x128xf32> -> vector<36x128xf32>
    %42 = arith.addf %37, %41 : vector<36x128xf32>
    %c0_43 = arith.constant 0 : index
    %c0_44 = arith.constant 0 : index
    %c14 = arith.constant 14 : index
    %c0_45 = arith.constant 0 : index
    %43 = vector.load %arg2[%c0_43, %c0_44, %c14, %c0_45] : memref<1x1x50x128xbf16, #tpu.memory_space<vmem>>, vector<1x1x36x128xbf16>
    %44 = vector.shape_cast %43 : vector<1x1x36x128xbf16> to vector<36x128xbf16>
    %c1024 = arith.constant 1024 : index
    %c0_46 = arith.constant 0 : index
    %45 = vector.load %arg6[%c1024, %c0_46] : memref<3456x128xbf16, #tpu.memory_space<vmem>>, vector<128x128xbf16>
    %cst_47 = arith.constant dense<0.000000e+00> : vector<36x128xf32>
    %46 = tpu.matmul %44, %45, %cst_47 {dimension_numbers = #tpu.dot_dimension_numbers<[1], [0], [0], [1], [0, 0, 1, 1], [], []>} : vector<36x128xbf16>, vector<128x128xbf16>, vector<36x128xf32> -> vector<36x128xf32>
    %47 = arith.addf %42, %46 : vector<36x128xf32>
    %c0_48 = arith.constant 0 : index
    %c0_49 = arith.constant 0 : index
    %c0_50 = arith.constant 0 : index
    %c0_51 = arith.constant 0 : index
    %48 = vector.load %arg3[%c0_48, %c0_49, %c0_50, %c0_51] : memref<1x1x50x128xbf16, #tpu.memory_space<vmem>>, vector<1x1x36x128xbf16>
    %49 = vector.shape_cast %48 : vector<1x1x36x128xbf16> to vector<36x128xbf16>
    %c1152 = arith.constant 1152 : index
    %c0_52 = arith.constant 0 : index
    %50 = vector.load %arg6[%c1152, %c0_52] : memref<3456x128xbf16, #tpu.memory_space<vmem>>, vector<128x128xbf16>
    %cst_53 = arith.constant dense<0.000000e+00> : vector<36x128xf32>
    %51 = tpu.matmul %49, %50, %cst_53 {dimension_numbers = #tpu.dot_dimension_numbers<[1], [0], [0], [1], [0, 0, 1, 1], [], []>} : vector<36x128xbf16>, vector<128x128xbf16>, vector<36x128xf32> -> vector<36x128xf32>
    %52 = arith.addf %47, %51 : vector<36x128xf32>
    %c0_54 = arith.constant 0 : index
    %c0_55 = arith.constant 0 : index
    %c1_56 = arith.constant 1 : index
    %c0_57 = arith.constant 0 : index
    %53 = vector.load %arg3[%c0_54, %c0_55, %c1_56, %c0_57] : memref<1x1x50x128xbf16, #tpu.memory_space<vmem>>, vector<1x1x36x128xbf16>
    %54 = vector.shape_cast %53 : vector<1x1x36x128xbf16> to vector<36x128xbf16>
    %c1280 = arith.constant 1280 : index
    %c0_58 = arith.constant 0 : index
    %55 = vector.load %arg6[%c1280, %c0_58] : memref<3456x128xbf16, #tpu.memory_space<vmem>>, vector<128x128xbf16>
    %cst_59 = arith.constant dense<0.000000e+00> : vector<36x128xf32>
    %56 = tpu.matmul %54, %55, %cst_59 {dimension_numbers = #tpu.dot_dimension_numbers<[1], [0], [0], [1], [0, 0, 1, 1], [], []>} : vector<36x128xbf16>, vector<128x128xbf16>, vector<36x128xf32> -> vector<36x128xf32>
    %57 = arith.addf %52, %56 : vector<36x128xf32>
    %c0_60 = arith.constant 0 : index
    %c0_61 = arith.constant 0 : index
    %c2_62 = arith.constant 2 : index
    %c0_63 = arith.constant 0 : index
    %58 = vector.load %arg3[%c0_60, %c0_61, %c2_62, %c0_63] : memref<1x1x50x128xbf16, #tpu.memory_space<vmem>>, vector<1x1x36x128xbf16>
    %59 = vector.shape_cast %58 : vector<1x1x36x128xbf16> to vector<36x128xbf16>
    %c1408 = arith.constant 1408 : index
    %c0_64 = arith.constant 0 : index
    %60 = vector.load %arg6[%c1408, %c0_64] : memref<3456x128xbf16, #tpu.memory_space<vmem>>, vector<128x128xbf16>
    %cst_65 = arith.constant dense<0.000000e+00> : vector<36x128xf32>
    %61 = tpu.matmul %59, %60, %cst_65 {dimension_numbers = #tpu.dot_dimension_numbers<[1], [0], [0], [1], [0, 0, 1, 1], [], []>} : vector<36x128xbf16>, vector<128x128xbf16>, vector<36x128xf32> -> vector<36x128xf32>
    %62 = arith.addf %57, %61 : vector<36x128xf32>
    %c0_66 = arith.constant 0 : index
    %c0_67 = arith.constant 0 : index
    %c6_68 = arith.constant 6 : index
    %c0_69 = arith.constant 0 : index
    %63 = vector.load %arg3[%c0_66, %c0_67, %c6_68, %c0_69] : memref<1x1x50x128xbf16, #tpu.memory_space<vmem>>, vector<1x1x36x128xbf16>
    %64 = vector.shape_cast %63 : vector<1x1x36x128xbf16> to vector<36x128xbf16>
    %c1536 = arith.constant 1536 : index
    %c0_70 = arith.constant 0 : index
    %65 = vector.load %arg6[%c1536, %c0_70] : memref<3456x128xbf16, #tpu.memory_space<vmem>>, vector<128x128xbf16>
    %cst_71 = arith.constant dense<0.000000e+00> : vector<36x128xf32>
    %66 = tpu.matmul %64, %65, %cst_71 {dimension_numbers = #tpu.dot_dimension_numbers<[1], [0], [0], [1], [0, 0, 1, 1], [], []>} : vector<36x128xbf16>, vector<128x128xbf16>, vector<36x128xf32> -> vector<36x128xf32>
    %67 = arith.addf %62, %66 : vector<36x128xf32>
    %c0_72 = arith.constant 0 : index
    %c0_73 = arith.constant 0 : index
    %c7_74 = arith.constant 7 : index
    %c0_75 = arith.constant 0 : index
    %68 = vector.load %arg3[%c0_72, %c0_73, %c7_74, %c0_75] : memref<1x1x50x128xbf16, #tpu.memory_space<vmem>>, vector<1x1x36x128xbf16>
    %69 = vector.shape_cast %68 : vector<1x1x36x128xbf16> to vector<36x128xbf16>
    %c1664 = arith.constant 1664 : index
    %c0_76 = arith.constant 0 : index
    %70 = vector.load %arg6[%c1664, %c0_76] : memref<3456x128xbf16, #tpu.memory_space<vmem>>, vector<128x128xbf16>
    %cst_77 = arith.constant dense<0.000000e+00> : vector<36x128xf32>
    %71 = tpu.matmul %69, %70, %cst_77 {dimension_numbers = #tpu.dot_dimension_numbers<[1], [0], [0], [1], [0, 0, 1, 1], [], []>} : vector<36x128xbf16>, vector<128x128xbf16>, vector<36x128xf32> -> vector<36x128xf32>
    %72 = arith.addf %67, %71 : vector<36x128xf32>
    %c0_78 = arith.constant 0 : index
    %c0_79 = arith.constant 0 : index
    %c8_80 = arith.constant 8 : index
    %c0_81 = arith.constant 0 : index
    %73 = vector.load %arg3[%c0_78, %c0_79, %c8_80, %c0_81] : memref<1x1x50x128xbf16, #tpu.memory_space<vmem>>, vector<1x1x36x128xbf16>
    %74 = vector.shape_cast %73 : vector<1x1x36x128xbf16> to vector<36x128xbf16>
    %c1792 = arith.constant 1792 : index
    %c0_82 = arith.constant 0 : index
    %75 = vector.load %arg6[%c1792, %c0_82] : memref<3456x128xbf16, #tpu.memory_space<vmem>>, vector<128x128xbf16>
    %cst_83 = arith.constant dense<0.000000e+00> : vector<36x128xf32>
    %76 = tpu.matmul %74, %75, %cst_83 {dimension_numbers = #tpu.dot_dimension_numbers<[1], [0], [0], [1], [0, 0, 1, 1], [], []>} : vector<36x128xbf16>, vector<128x128xbf16>, vector<36x128xf32> -> vector<36x128xf32>
    %77 = arith.addf %72, %76 : vector<36x128xf32>
    %c0_84 = arith.constant 0 : index
    %c0_85 = arith.constant 0 : index
    %c12_86 = arith.constant 12 : index
    %c0_87 = arith.constant 0 : index
    %78 = vector.load %arg3[%c0_84, %c0_85, %c12_86, %c0_87] : memref<1x1x50x128xbf16, #tpu.memory_space<vmem>>, vector<1x1x36x128xbf16>
    %79 = vector.shape_cast %78 : vector<1x1x36x128xbf16> to vector<36x128xbf16>
    %c1920 = arith.constant 1920 : index
    %c0_88 = arith.constant 0 : index
    %80 = vector.load %arg6[%c1920, %c0_88] : memref<3456x128xbf16, #tpu.memory_space<vmem>>, vector<128x128xbf16>
    %cst_89 = arith.constant dense<0.000000e+00> : vector<36x128xf32>
    %81 = tpu.matmul %79, %80, %cst_89 {dimension_numbers = #tpu.dot_dimension_numbers<[1], [0], [0], [1], [0, 0, 1, 1], [], []>} : vector<36x128xbf16>, vector<128x128xbf16>, vector<36x128xf32> -> vector<36x128xf32>
    %82 = arith.addf %77, %81 : vector<36x128xf32>
    %c0_90 = arith.constant 0 : index
    %c0_91 = arith.constant 0 : index
    %c13_92 = arith.constant 13 : index
    %c0_93 = arith.constant 0 : index
    %83 = vector.load %arg3[%c0_90, %c0_91, %c13_92, %c0_93] : memref<1x1x50x128xbf16, #tpu.memory_space<vmem>>, vector<1x1x36x128xbf16>
    %84 = vector.shape_cast %83 : vector<1x1x36x128xbf16> to vector<36x128xbf16>
    %c2048 = arith.constant 2048 : index
    %c0_94 = arith.constant 0 : index
    %85 = vector.load %arg6[%c2048, %c0_94] : memref<3456x128xbf16, #tpu.memory_space<vmem>>, vector<128x128xbf16>
    %cst_95 = arith.constant dense<0.000000e+00> : vector<36x128xf32>
    %86 = tpu.matmul %84, %85, %cst_95 {dimension_numbers = #tpu.dot_dimension_numbers<[1], [0], [0], [1], [0, 0, 1, 1], [], []>} : vector<36x128xbf16>, vector<128x128xbf16>, vector<36x128xf32> -> vector<36x128xf32>
    %87 = arith.addf %82, %86 : vector<36x128xf32>
    %c0_96 = arith.constant 0 : index
    %c0_97 = arith.constant 0 : index
    %c14_98 = arith.constant 14 : index
    %c0_99 = arith.constant 0 : index
    %88 = vector.load %arg3[%c0_96, %c0_97, %c14_98, %c0_99] : memref<1x1x50x128xbf16, #tpu.memory_space<vmem>>, vector<1x1x36x128xbf16>
    %89 = vector.shape_cast %88 : vector<1x1x36x128xbf16> to vector<36x128xbf16>
    %c2176 = arith.constant 2176 : index
    %c0_100 = arith.constant 0 : index
    %90 = vector.load %arg6[%c2176, %c0_100] : memref<3456x128xbf16, #tpu.memory_space<vmem>>, vector<128x128xbf16>
    %cst_101 = arith.constant dense<0.000000e+00> : vector<36x128xf32>
    %91 = tpu.matmul %89, %90, %cst_101 {dimension_numbers = #tpu.dot_dimension_numbers<[1], [0], [0], [1], [0, 0, 1, 1], [], []>} : vector<36x128xbf16>, vector<128x128xbf16>, vector<36x128xf32> -> vector<36x128xf32>
    %92 = arith.addf %87, %91 : vector<36x128xf32>
    %c0_102 = arith.constant 0 : index
    %c0_103 = arith.constant 0 : index
    %c0_104 = arith.constant 0 : index
    %c0_105 = arith.constant 0 : index
    %93 = vector.load %arg4[%c0_102, %c0_103, %c0_104, %c0_105] : memref<1x1x50x128xbf16, #tpu.memory_space<vmem>>, vector<1x1x36x128xbf16>
    %94 = vector.shape_cast %93 : vector<1x1x36x128xbf16> to vector<36x128xbf16>
    %c2304 = arith.constant 2304 : index
    %c0_106 = arith.constant 0 : index
    %95 = vector.load %arg6[%c2304, %c0_106] : memref<3456x128xbf16, #tpu.memory_space<vmem>>, vector<128x128xbf16>
    %cst_107 = arith.constant dense<0.000000e+00> : vector<36x128xf32>
    %96 = tpu.matmul %94, %95, %cst_107 {dimension_numbers = #tpu.dot_dimension_numbers<[1], [0], [0], [1], [0, 0, 1, 1], [], []>} : vector<36x128xbf16>, vector<128x128xbf16>, vector<36x128xf32> -> vector<36x128xf32>
    %97 = arith.addf %92, %96 : vector<36x128xf32>
    %c0_108 = arith.constant 0 : index
    %c0_109 = arith.constant 0 : index
    %c1_110 = arith.constant 1 : index
    %c0_111 = arith.constant 0 : index
    %98 = vector.load %arg4[%c0_108, %c0_109, %c1_110, %c0_111] : memref<1x1x50x128xbf16, #tpu.memory_space<vmem>>, vector<1x1x36x128xbf16>
    %99 = vector.shape_cast %98 : vector<1x1x36x128xbf16> to vector<36x128xbf16>
    %c2432 = arith.constant 2432 : index
    %c0_112 = arith.constant 0 : index
    %100 = vector.load %arg6[%c2432, %c0_112] : memref<3456x128xbf16, #tpu.memory_space<vmem>>, vector<128x128xbf16>
    %cst_113 = arith.constant dense<0.000000e+00> : vector<36x128xf32>
    %101 = tpu.matmul %99, %100, %cst_113 {dimension_numbers = #tpu.dot_dimension_numbers<[1], [0], [0], [1], [0, 0, 1, 1], [], []>} : vector<36x128xbf16>, vector<128x128xbf16>, vector<36x128xf32> -> vector<36x128xf32>
    %102 = arith.addf %97, %101 : vector<36x128xf32>
    %c0_114 = arith.constant 0 : index
    %c0_115 = arith.constant 0 : index
    %c2_116 = arith.constant 2 : index
    %c0_117 = arith.constant 0 : index
    %103 = vector.load %arg4[%c0_114, %c0_115, %c2_116, %c0_117] : memref<1x1x50x128xbf16, #tpu.memory_space<vmem>>, vector<1x1x36x128xbf16>
    %104 = vector.shape_cast %103 : vector<1x1x36x128xbf16> to vector<36x128xbf16>
    %c2560 = arith.constant 2560 : index
    %c0_118 = arith.constant 0 : index
    %105 = vector.load %arg6[%c2560, %c0_118] : memref<3456x128xbf16, #tpu.memory_space<vmem>>, vector<128x128xbf16>
    %cst_119 = arith.constant dense<0.000000e+00> : vector<36x128xf32>
    %106 = tpu.matmul %104, %105, %cst_119 {dimension_numbers = #tpu.dot_dimension_numbers<[1], [0], [0], [1], [0, 0, 1, 1], [], []>} : vector<36x128xbf16>, vector<128x128xbf16>, vector<36x128xf32> -> vector<36x128xf32>
    %107 = arith.addf %102, %106 : vector<36x128xf32>
    %c0_120 = arith.constant 0 : index
    %c0_121 = arith.constant 0 : index
    %c6_122 = arith.constant 6 : index
    %c0_123 = arith.constant 0 : index
    %108 = vector.load %arg4[%c0_120, %c0_121, %c6_122, %c0_123] : memref<1x1x50x128xbf16, #tpu.memory_space<vmem>>, vector<1x1x36x128xbf16>
    %109 = vector.shape_cast %108 : vector<1x1x36x128xbf16> to vector<36x128xbf16>
    %c2688 = arith.constant 2688 : index
    %c0_124 = arith.constant 0 : index
    %110 = vector.load %arg6[%c2688, %c0_124] : memref<3456x128xbf16, #tpu.memory_space<vmem>>, vector<128x128xbf16>
    %cst_125 = arith.constant dense<0.000000e+00> : vector<36x128xf32>
    %111 = tpu.matmul %109, %110, %cst_125 {dimension_numbers = #tpu.dot_dimension_numbers<[1], [0], [0], [1], [0, 0, 1, 1], [], []>} : vector<36x128xbf16>, vector<128x128xbf16>, vector<36x128xf32> -> vector<36x128xf32>
    %112 = arith.addf %107, %111 : vector<36x128xf32>
    %c0_126 = arith.constant 0 : index
    %c0_127 = arith.constant 0 : index
    %c7_128 = arith.constant 7 : index
    %c0_129 = arith.constant 0 : index
    %113 = vector.load %arg4[%c0_126, %c0_127, %c7_128, %c0_129] : memref<1x1x50x128xbf16, #tpu.memory_space<vmem>>, vector<1x1x36x128xbf16>
    %114 = vector.shape_cast %113 : vector<1x1x36x128xbf16> to vector<36x128xbf16>
    %c2816 = arith.constant 2816 : index
    %c0_130 = arith.constant 0 : index
    %115 = vector.load %arg6[%c2816, %c0_130] : memref<3456x128xbf16, #tpu.memory_space<vmem>>, vector<128x128xbf16>
    %cst_131 = arith.constant dense<0.000000e+00> : vector<36x128xf32>
    %116 = tpu.matmul %114, %115, %cst_131 {dimension_numbers = #tpu.dot_dimension_numbers<[1], [0], [0], [1], [0, 0, 1, 1], [], []>} : vector<36x128xbf16>, vector<128x128xbf16>, vector<36x128xf32> -> vector<36x128xf32>
    %117 = arith.addf %112, %116 : vector<36x128xf32>
    %c0_132 = arith.constant 0 : index
    %c0_133 = arith.constant 0 : index
    %c8_134 = arith.constant 8 : index
    %c0_135 = arith.constant 0 : index
    %118 = vector.load %arg4[%c0_132, %c0_133, %c8_134, %c0_135] : memref<1x1x50x128xbf16, #tpu.memory_space<vmem>>, vector<1x1x36x128xbf16>
    %119 = vector.shape_cast %118 : vector<1x1x36x128xbf16> to vector<36x128xbf16>
    %c2944 = arith.constant 2944 : index
    %c0_136 = arith.constant 0 : index
    %120 = vector.load %arg6[%c2944, %c0_136] : memref<3456x128xbf16, #tpu.memory_space<vmem>>, vector<128x128xbf16>
    %cst_137 = arith.constant dense<0.000000e+00> : vector<36x128xf32>
    %121 = tpu.matmul %119, %120, %cst_137 {dimension_numbers = #tpu.dot_dimension_numbers<[1], [0], [0], [1], [0, 0, 1, 1], [], []>} : vector<36x128xbf16>, vector<128x128xbf16>, vector<36x128xf32> -> vector<36x128xf32>
    %122 = arith.addf %117, %121 : vector<36x128xf32>
    %c0_138 = arith.constant 0 : index
    %c0_139 = arith.constant 0 : index
    %c12_140 = arith.constant 12 : index
    %c0_141 = arith.constant 0 : index
    %123 = vector.load %arg4[%c0_138, %c0_139, %c12_140, %c0_141] : memref<1x1x50x128xbf16, #tpu.memory_space<vmem>>, vector<1x1x36x128xbf16>
    %124 = vector.shape_cast %123 : vector<1x1x36x128xbf16> to vector<36x128xbf16>
    %c3072 = arith.constant 3072 : index
    %c0_142 = arith.constant 0 : index
    %125 = vector.load %arg6[%c3072, %c0_142] : memref<3456x128xbf16, #tpu.memory_space<vmem>>, vector<128x128xbf16>
    %cst_143 = arith.constant dense<0.000000e+00> : vector<36x128xf32>
    %126 = tpu.matmul %124, %125, %cst_143 {dimension_numbers = #tpu.dot_dimension_numbers<[1], [0], [0], [1], [0, 0, 1, 1], [], []>} : vector<36x128xbf16>, vector<128x128xbf16>, vector<36x128xf32> -> vector<36x128xf32>
    %127 = arith.addf %122, %126 : vector<36x128xf32>
    %c0_144 = arith.constant 0 : index
    %c0_145 = arith.constant 0 : index
    %c13_146 = arith.constant 13 : index
    %c0_147 = arith.constant 0 : index
    %128 = vector.load %arg4[%c0_144, %c0_145, %c13_146, %c0_147] : memref<1x1x50x128xbf16, #tpu.memory_space<vmem>>, vector<1x1x36x128xbf16>
    %129 = vector.shape_cast %128 : vector<1x1x36x128xbf16> to vector<36x128xbf16>
    %c3200 = arith.constant 3200 : index
    %c0_148 = arith.constant 0 : index
    %130 = vector.load %arg6[%c3200, %c0_148] : memref<3456x128xbf16, #tpu.memory_space<vmem>>, vector<128x128xbf16>
    %cst_149 = arith.constant dense<0.000000e+00> : vector<36x128xf32>
    %131 = tpu.matmul %129, %130, %cst_149 {dimension_numbers = #tpu.dot_dimension_numbers<[1], [0], [0], [1], [0, 0, 1, 1], [], []>} : vector<36x128xbf16>, vector<128x128xbf16>, vector<36x128xf32> -> vector<36x128xf32>
    %132 = arith.addf %127, %131 : vector<36x128xf32>
    %c0_150 = arith.constant 0 : index
    %c0_151 = arith.constant 0 : index
    %c14_152 = arith.constant 14 : index
    %c0_153 = arith.constant 0 : index
    %133 = vector.load %arg4[%c0_150, %c0_151, %c14_152, %c0_153] : memref<1x1x50x128xbf16, #tpu.memory_space<vmem>>, vector<1x1x36x128xbf16>
    %134 = vector.shape_cast %133 : vector<1x1x36x128xbf16> to vector<36x128xbf16>
    %c3328 = arith.constant 3328 : index
    %c0_154 = arith.constant 0 : index
    %135 = vector.load %arg6[%c3328, %c0_154] : memref<3456x128xbf16, #tpu.memory_space<vmem>>, vector<128x128xbf16>
    %cst_155 = arith.constant dense<0.000000e+00> : vector<36x128xf32>
    %136 = tpu.matmul %134, %135, %cst_155 {dimension_numbers = #tpu.dot_dimension_numbers<[1], [0], [0], [1], [0, 0, 1, 1], [], []>} : vector<36x128xbf16>, vector<128x128xbf16>, vector<36x128xf32> -> vector<36x128xf32>
    %137 = arith.addf %132, %136 : vector<36x128xf32>
    %c0_156 = arith.constant 0 : index
    %c0_157 = arith.constant 0 : index
    %138 = vector.load %arg7[%c0_156, %c0_157] : memref<1x128xf32, #tpu.memory_space<vmem>>, vector<1x128xf32>
    %139 = vector.broadcast %138 : vector<1x128xf32> to vector<36x128xf32>
    %140 = arith.addf %137, %139 : vector<36x128xf32>
    %141 = arith.truncf %140 : vector<36x128xf32> to vector<36x128xbf16>
    %c0_158 = arith.constant 0 : index
    %c0_159 = arith.constant 0 : index
    %c0_160 = arith.constant 0 : index
    %c0_161 = arith.constant 0 : index
    %142 = vector.load %arg9[%c0_158, %c0_159, %c0_160, %c0_161] : memref<1x2x36x128xbf16, #tpu.memory_space<vmem>>, vector<1x1x36x128xbf16>
    %143 = vector.shape_cast %142 : vector<1x1x36x128xbf16> to vector<36x128xbf16>
    %144 = vector.shape_cast %141 : vector<36x128xbf16> to vector<1x1x36x128xbf16>
    tpu.vector_store %arg9[%c0_158, %c0_159, %c0_160, %c0_161], %144 {strides = array<i32>} : memref<1x2x36x128xbf16, #tpu.memory_space<vmem>>, vector<1x1x36x128xbf16>,
    %c0_162 = arith.constant 0 : index
    %c0_163 = arith.constant 0 : index
    %145 = vector.load %arg8[%c0_162, %c0_163] : memref<36x1xf32, #tpu.memory_space<vmem>>, vector<36x1xf32>
    %146 = vector.broadcast %145 : vector<36x1xf32> to vector<36x128xf32>
    %147 = arith.mulf %140, %146 : vector<36x128xf32>
    %cst_164 = arith.constant dense<0.000000e+00> : vector<128xf32>
    %148 = vector.multi_reduction <add>, %147, %cst_164 [0] : vector<36x128xf32> to vector<128xf32>
    %149 = vector.shape_cast %148 : vector<128xf32> to vector<1x128xf32>
    %150 = arith.addf %0, %149 : vector<1x128xf32>
    %151 = arith.mulf %147, %140 : vector<36x128xf32>
    %cst_165 = arith.constant dense<0.000000e+00> : vector<128xf32>
    %152 = vector.multi_reduction <add>, %151, %cst_165 [0] : vector<36x128xf32> to vector<128xf32>
    %153 = vector.shape_cast %152 : vector<128xf32> to vector<1x128xf32>
    %154 = arith.addf %1, %153 : vector<1x128xf32>
    %c0_166 = arith.constant 0 : index
    %c0_167 = arith.constant 0 : index
    %c0_168 = arith.constant 0 : index
    %c0_169 = arith.constant 0 : index
    %155 = vector.load %arg10[%c0_166, %c0_167, %c0_168, %c0_169] : memref<1x2x2x128xf32, #tpu.memory_space<vmem>>, vector<1x1x1x128xf32>
    %156 = vector.shape_cast %155 : vector<1x1x1x128xf32> to vector<1x128xf32>
    %157 = vector.shape_cast %150 : vector<1x128xf32> to vector<1x1x1x128xf32>
    tpu.vector_store %arg10[%c0_166, %c0_167, %c0_168, %c0_169], %157 {strides = array<i32>} : memref<1x2x2x128xf32, #tpu.memory_space<vmem>>, vector<1x1x1x128xf32>,
    %c0_170 = arith.constant 0 : index
    %c0_171 = arith.constant 0 : index
    %c1_172 = arith.constant 1 : index
    %c0_173 = arith.constant 0 : index
    %158 = vector.load %arg10[%c0_170, %c0_171, %c1_172, %c0_173] : memref<1x2x2x128xf32, #tpu.memory_space<vmem>>, vector<1x1x1x128xf32>
    %159 = vector.shape_cast %158 : vector<1x1x1x128xf32> to vector<1x128xf32>
    %160 = vector.shape_cast %154 : vector<1x128xf32> to vector<1x1x1x128xf32>
    tpu.vector_store %arg10[%c0_170, %c0_171, %c1_172, %c0_173], %160 {strides = array<i32>} : memref<1x2x2x128xf32, #tpu.memory_space<vmem>>, vector<1x1x1x128xf32>,
    %cst_174 = arith.constant 0.000000e+00 : f32
    %161 = vector.broadcast %cst_174 : f32 to vector<1x128xf32>
    %cst_175 = arith.constant 0.000000e+00 : f32
    %162 = vector.broadcast %cst_175 : f32 to vector<1x128xf32>
    %cst_176 = arith.constant 0.000000e+00 : f32
    %163 = vector.broadcast %cst_176 : f32 to vector<36x128xf32>
    %c0_177 = arith.constant 0 : index
    %c0_178 = arith.constant 0 : index
    %c0_179 = arith.constant 0 : index
    %c0_180 = arith.constant 0 : index
    %164 = vector.load %arg3[%c0_177, %c0_178, %c0_179, %c0_180] : memref<1x1x50x128xbf16, #tpu.memory_space<vmem>>, vector<1x1x36x128xbf16>
    %165 = vector.shape_cast %164 : vector<1x1x36x128xbf16> to vector<36x128xbf16>
    %c0_181 = arith.constant 0 : index
    %c0_182 = arith.constant 0 : index
    %166 = vector.load %arg6[%c0_181, %c0_182] : memref<3456x128xbf16, #tpu.memory_space<vmem>>, vector<128x128xbf16>
    %cst_183 = arith.constant dense<0.000000e+00> : vector<36x128xf32>
    %167 = tpu.matmul %165, %166, %cst_183 {dimension_numbers = #tpu.dot_dimension_numbers<[1], [0], [0], [1], [0, 0, 1, 1], [], []>} : vector<36x128xbf16>, vector<128x128xbf16>, vector<36x128xf32> -> vector<36x128xf32>
    %168 = arith.addf %163, %167 : vector<36x128xf32>
    %c0_184 = arith.constant 0 : index
    %c0_185 = arith.constant 0 : index
    %c1_186 = arith.constant 1 : index
    %c0_187 = arith.constant 0 : index
    %169 = vector.load %arg3[%c0_184, %c0_185, %c1_186, %c0_187] : memref<1x1x50x128xbf16, #tpu.memory_space<vmem>>, vector<1x1x36x128xbf16>
    %170 = vector.shape_cast %169 : vector<1x1x36x128xbf16> to vector<36x128xbf16>
    %c128_188 = arith.constant 128 : index
    %c0_189 = arith.constant 0 : index
    %171 = vector.load %arg6[%c128_188, %c0_189] : memref<3456x128xbf16, #tpu.memory_space<vmem>>, vector<128x128xbf16>
    %cst_190 = arith.constant dense<0.000000e+00> : vector<36x128xf32>
    %172 = tpu.matmul %170, %171, %cst_190 {dimension_numbers = #tpu.dot_dimension_numbers<[1], [0], [0], [1], [0, 0, 1, 1], [], []>} : vector<36x128xbf16>, vector<128x128xbf16>, vector<36x128xf32> -> vector<36x128xf32>
    %173 = arith.addf %168, %172 : vector<36x128xf32>
    %c0_191 = arith.constant 0 : index
    %c0_192 = arith.constant 0 : index
    %c2_193 = arith.constant 2 : index
    %c0_194 = arith.constant 0 : index
    %174 = vector.load %arg3[%c0_191, %c0_192, %c2_193, %c0_194] : memref<1x1x50x128xbf16, #tpu.memory_space<vmem>>, vector<1x1x36x128xbf16>
    %175 = vector.shape_cast %174 : vector<1x1x36x128xbf16> to vector<36x128xbf16>
    %c256_195 = arith.constant 256 : index
    %c0_196 = arith.constant 0 : index
    %176 = vector.load %arg6[%c256_195, %c0_196] : memref<3456x128xbf16, #tpu.memory_space<vmem>>, vector<128x128xbf16>
    %cst_197 = arith.constant dense<0.000000e+00> : vector<36x128xf32>
    %177 = tpu.matmul %175, %176, %cst_197 {dimension_numbers = #tpu.dot_dimension_numbers<[1], [0], [0], [1], [0, 0, 1, 1], [], []>} : vector<36x128xbf16>, vector<128x128xbf16>, vector<36x128xf32> -> vector<36x128xf32>
    %178 = arith.addf %173, %177 : vector<36x128xf32>
    %c0_198 = arith.constant 0 : index
    %c0_199 = arith.constant 0 : index
    %c6_200 = arith.constant 6 : index
    %c0_201 = arith.constant 0 : index
    %179 = vector.load %arg3[%c0_198, %c0_199, %c6_200, %c0_201] : memref<1x1x50x128xbf16, #tpu.memory_space<vmem>>, vector<1x1x36x128xbf16>
    %180 = vector.shape_cast %179 : vector<1x1x36x128xbf16> to vector<36x128xbf16>
    %c384_202 = arith.constant 384 : index
    %c0_203 = arith.constant 0 : index
    %181 = vector.load %arg6[%c384_202, %c0_203] : memref<3456x128xbf16, #tpu.memory_space<vmem>>, vector<128x128xbf16>
    %cst_204 = arith.constant dense<0.000000e+00> : vector<36x128xf32>
    %182 = tpu.matmul %180, %181, %cst_204 {dimension_numbers = #tpu.dot_dimension_numbers<[1], [0], [0], [1], [0, 0, 1, 1], [], []>} : vector<36x128xbf16>, vector<128x128xbf16>, vector<36x128xf32> -> vector<36x128xf32>
    %183 = arith.addf %178, %182 : vector<36x128xf32>
    %c0_205 = arith.constant 0 : index
    %c0_206 = arith.constant 0 : index
    %c7_207 = arith.constant 7 : index
    %c0_208 = arith.constant 0 : index
    %184 = vector.load %arg3[%c0_205, %c0_206, %c7_207, %c0_208] : memref<1x1x50x128xbf16, #tpu.memory_space<vmem>>, vector<1x1x36x128xbf16>
    %185 = vector.shape_cast %184 : vector<1x1x36x128xbf16> to vector<36x128xbf16>
    %c512_209 = arith.constant 512 : index
    %c0_210 = arith.constant 0 : index
    %186 = vector.load %arg6[%c512_209, %c0_210] : memref<3456x128xbf16, #tpu.memory_space<vmem>>, vector<128x128xbf16>
    %cst_211 = arith.constant dense<0.000000e+00> : vector<36x128xf32>
    %187 = tpu.matmul %185, %186, %cst_211 {dimension_numbers = #tpu.dot_dimension_numbers<[1], [0], [0], [1], [0, 0, 1, 1], [], []>} : vector<36x128xbf16>, vector<128x128xbf16>, vector<36x128xf32> -> vector<36x128xf32>
    %188 = arith.addf %183, %187 : vector<36x128xf32>
    %c0_212 = arith.constant 0 : index
    %c0_213 = arith.constant 0 : index
    %c8_214 = arith.constant 8 : index
    %c0_215 = arith.constant 0 : index
    %189 = vector.load %arg3[%c0_212, %c0_213, %c8_214, %c0_215] : memref<1x1x50x128xbf16, #tpu.memory_space<vmem>>, vector<1x1x36x128xbf16>
    %190 = vector.shape_cast %189 : vector<1x1x36x128xbf16> to vector<36x128xbf16>
    %c640_216 = arith.constant 640 : index
    %c0_217 = arith.constant 0 : index
    %191 = vector.load %arg6[%c640_216, %c0_217] : memref<3456x128xbf16, #tpu.memory_space<vmem>>, vector<128x128xbf16>
    %cst_218 = arith.constant dense<0.000000e+00> : vector<36x128xf32>
    %192 = tpu.matmul %190, %191, %cst_218 {dimension_numbers = #tpu.dot_dimension_numbers<[1], [0], [0], [1], [0, 0, 1, 1], [], []>} : vector<36x128xbf16>, vector<128x128xbf16>, vector<36x128xf32> -> vector<36x128xf32>
    %193 = arith.addf %188, %192 : vector<36x128xf32>
    %c0_219 = arith.constant 0 : index
    %c0_220 = arith.constant 0 : index
    %c12_221 = arith.constant 12 : index
    %c0_222 = arith.constant 0 : index
    %194 = vector.load %arg3[%c0_219, %c0_220, %c12_221, %c0_222] : memref<1x1x50x128xbf16, #tpu.memory_space<vmem>>, vector<1x1x36x128xbf16>
    %195 = vector.shape_cast %194 : vector<1x1x36x128xbf16> to vector<36x128xbf16>
    %c768_223 = arith.constant 768 : index
    %c0_224 = arith.constant 0 : index
    %196 = vector.load %arg6[%c768_223, %c0_224] : memref<3456x128xbf16, #tpu.memory_space<vmem>>, vector<128x128xbf16>
    %cst_225 = arith.constant dense<0.000000e+00> : vector<36x128xf32>
    %197 = tpu.matmul %195, %196, %cst_225 {dimension_numbers = #tpu.dot_dimension_numbers<[1], [0], [0], [1], [0, 0, 1, 1], [], []>} : vector<36x128xbf16>, vector<128x128xbf16>, vector<36x128xf32> -> vector<36x128xf32>
    %198 = arith.addf %193, %197 : vector<36x128xf32>
    %c0_226 = arith.constant 0 : index
    %c0_227 = arith.constant 0 : index
    %c13_228 = arith.constant 13 : index
    %c0_229 = arith.constant 0 : index
    %199 = vector.load %arg3[%c0_226, %c0_227, %c13_228, %c0_229] : memref<1x1x50x128xbf16, #tpu.memory_space<vmem>>, vector<1x1x36x128xbf16>
    %200 = vector.shape_cast %199 : vector<1x1x36x128xbf16> to vector<36x128xbf16>
    %c896_230 = arith.constant 896 : index
    %c0_231 = arith.constant 0 : index
    %201 = vector.load %arg6[%c896_230, %c0_231] : memref<3456x128xbf16, #tpu.memory_space<vmem>>, vector<128x128xbf16>
    %cst_232 = arith.constant dense<0.000000e+00> : vector<36x128xf32>
    %202 = tpu.matmul %200, %201, %cst_232 {dimension_numbers = #tpu.dot_dimension_numbers<[1], [0], [0], [1], [0, 0, 1, 1], [], []>} : vector<36x128xbf16>, vector<128x128xbf16>, vector<36x128xf32> -> vector<36x128xf32>
    %203 = arith.addf %198, %202 : vector<36x128xf32>
    %c0_233 = arith.constant 0 : index
    %c0_234 = arith.constant 0 : index
    %c14_235 = arith.constant 14 : index
    %c0_236 = arith.constant 0 : index
    %204 = vector.load %arg3[%c0_233, %c0_234, %c14_235, %c0_236] : memref<1x1x50x128xbf16, #tpu.memory_space<vmem>>, vector<1x1x36x128xbf16>
    %205 = vector.shape_cast %204 : vector<1x1x36x128xbf16> to vector<36x128xbf16>
    %c1024_237 = arith.constant 1024 : index
    %c0_238 = arith.constant 0 : index
    %206 = vector.load %arg6[%c1024_237, %c0_238] : memref<3456x128xbf16, #tpu.memory_space<vmem>>, vector<128x128xbf16>
    %cst_239 = arith.constant dense<0.000000e+00> : vector<36x128xf32>
    %207 = tpu.matmul %205, %206, %cst_239 {dimension_numbers = #tpu.dot_dimension_numbers<[1], [0], [0], [1], [0, 0, 1, 1], [], []>} : vector<36x128xbf16>, vector<128x128xbf16>, vector<36x128xf32> -> vector<36x128xf32>
    %208 = arith.addf %203, %207 : vector<36x128xf32>
    %c0_240 = arith.constant 0 : index
    %c0_241 = arith.constant 0 : index
    %c0_242 = arith.constant 0 : index
    %c0_243 = arith.constant 0 : index
    %209 = vector.load %arg4[%c0_240, %c0_241, %c0_242, %c0_243] : memref<1x1x50x128xbf16, #tpu.memory_space<vmem>>, vector<1x1x36x128xbf16>
    %210 = vector.shape_cast %209 : vector<1x1x36x128xbf16> to vector<36x128xbf16>
    %c1152_244 = arith.constant 1152 : index
    %c0_245 = arith.constant 0 : index
    %211 = vector.load %arg6[%c1152_244, %c0_245] : memref<3456x128xbf16, #tpu.memory_space<vmem>>, vector<128x128xbf16>
    %cst_246 = arith.constant dense<0.000000e+00> : vector<36x128xf32>
    %212 = tpu.matmul %210, %211, %cst_246 {dimension_numbers = #tpu.dot_dimension_numbers<[1], [0], [0], [1], [0, 0, 1, 1], [], []>} : vector<36x128xbf16>, vector<128x128xbf16>, vector<36x128xf32> -> vector<36x128xf32>
    %213 = arith.addf %208, %212 : vector<36x128xf32>
    %c0_247 = arith.constant 0 : index
    %c0_248 = arith.constant 0 : index
    %c1_249 = arith.constant 1 : index
    %c0_250 = arith.constant 0 : index
    %214 = vector.load %arg4[%c0_247, %c0_248, %c1_249, %c0_250] : memref<1x1x50x128xbf16, #tpu.memory_space<vmem>>, vector<1x1x36x128xbf16>
    %215 = vector.shape_cast %214 : vector<1x1x36x128xbf16> to vector<36x128xbf16>
    %c1280_251 = arith.constant 1280 : index
    %c0_252 = arith.constant 0 : index
    %216 = vector.load %arg6[%c1280_251, %c0_252] : memref<3456x128xbf16, #tpu.memory_space<vmem>>, vector<128x128xbf16>
    %cst_253 = arith.constant dense<0.000000e+00> : vector<36x128xf32>
    %217 = tpu.matmul %215, %216, %cst_253 {dimension_numbers = #tpu.dot_dimension_numbers<[1], [0], [0], [1], [0, 0, 1, 1], [], []>} : vector<36x128xbf16>, vector<128x128xbf16>, vector<36x128xf32> -> vector<36x128xf32>
    %218 = arith.addf %213, %217 : vector<36x128xf32>
    %c0_254 = arith.constant 0 : index
    %c0_255 = arith.constant 0 : index
    %c2_256 = arith.constant 2 : index
    %c0_257 = arith.constant 0 : index
    %219 = vector.load %arg4[%c0_254, %c0_255, %c2_256, %c0_257] : memref<1x1x50x128xbf16, #tpu.memory_space<vmem>>, vector<1x1x36x128xbf16>
    %220 = vector.shape_cast %219 : vector<1x1x36x128xbf16> to vector<36x128xbf16>
    %c1408_258 = arith.constant 1408 : index
    %c0_259 = arith.constant 0 : index
    %221 = vector.load %arg6[%c1408_258, %c0_259] : memref<3456x128xbf16, #tpu.memory_space<vmem>>, vector<128x128xbf16>
    %cst_260 = arith.constant dense<0.000000e+00> : vector<36x128xf32>
    %222 = tpu.matmul %220, %221, %cst_260 {dimension_numbers = #tpu.dot_dimension_numbers<[1], [0], [0], [1], [0, 0, 1, 1], [], []>} : vector<36x128xbf16>, vector<128x128xbf16>, vector<36x128xf32> -> vector<36x128xf32>
    %223 = arith.addf %218, %222 : vector<36x128xf32>
    %c0_261 = arith.constant 0 : index
    %c0_262 = arith.constant 0 : index
    %c6_263 = arith.constant 6 : index
    %c0_264 = arith.constant 0 : index
    %224 = vector.load %arg4[%c0_261, %c0_262, %c6_263, %c0_264] : memref<1x1x50x128xbf16, #tpu.memory_space<vmem>>, vector<1x1x36x128xbf16>
    %225 = vector.shape_cast %224 : vector<1x1x36x128xbf16> to vector<36x128xbf16>
    %c1536_265 = arith.constant 1536 : index
    %c0_266 = arith.constant 0 : index
    %226 = vector.load %arg6[%c1536_265, %c0_266] : memref<3456x128xbf16, #tpu.memory_space<vmem>>, vector<128x128xbf16>
    %cst_267 = arith.constant dense<0.000000e+00> : vector<36x128xf32>
    %227 = tpu.matmul %225, %226, %cst_267 {dimension_numbers = #tpu.dot_dimension_numbers<[1], [0], [0], [1], [0, 0, 1, 1], [], []>} : vector<36x128xbf16>, vector<128x128xbf16>, vector<36x128xf32> -> vector<36x128xf32>
    %228 = arith.addf %223, %227 : vector<36x128xf32>
    %c0_268 = arith.constant 0 : index
    %c0_269 = arith.constant 0 : index
    %c7_270 = arith.constant 7 : index
    %c0_271 = arith.constant 0 : index
    %229 = vector.load %arg4[%c0_268, %c0_269, %c7_270, %c0_271] : memref<1x1x50x128xbf16, #tpu.memory_space<vmem>>, vector<1x1x36x128xbf16>
    %230 = vector.shape_cast %229 : vector<1x1x36x128xbf16> to vector<36x128xbf16>
    %c1664_272 = arith.constant 1664 : index
    %c0_273 = arith.constant 0 : index
    %231 = vector.load %arg6[%c1664_272, %c0_273] : memref<3456x128xbf16, #tpu.memory_space<vmem>>, vector<128x128xbf16>
    %cst_274 = arith.constant dense<0.000000e+00> : vector<36x128xf32>
    %232 = tpu.matmul %230, %231, %cst_274 {dimension_numbers = #tpu.dot_dimension_numbers<[1], [0], [0], [1], [0, 0, 1, 1], [], []>} : vector<36x128xbf16>, vector<128x128xbf16>, vector<36x128xf32> -> vector<36x128xf32>
    %233 = arith.addf %228, %232 : vector<36x128xf32>
    %c0_275 = arith.constant 0 : index
    %c0_276 = arith.constant 0 : index
    %c8_277 = arith.constant 8 : index
    %c0_278 = arith.constant 0 : index
    %234 = vector.load %arg4[%c0_275, %c0_276, %c8_277, %c0_278] : memref<1x1x50x128xbf16, #tpu.memory_space<vmem>>, vector<1x1x36x128xbf16>
    %235 = vector.shape_cast %234 : vector<1x1x36x128xbf16> to vector<36x128xbf16>
    %c1792_279 = arith.constant 1792 : index
    %c0_280 = arith.constant 0 : index
    %236 = vector.load %arg6[%c1792_279, %c0_280] : memref<3456x128xbf16, #tpu.memory_space<vmem>>, vector<128x128xbf16>
    %cst_281 = arith.constant dense<0.000000e+00> : vector<36x128xf32>
    %237 = tpu.matmul %235, %236, %cst_281 {dimension_numbers = #tpu.dot_dimension_numbers<[1], [0], [0], [1], [0, 0, 1, 1], [], []>} : vector<36x128xbf16>, vector<128x128xbf16>, vector<36x128xf32> -> vector<36x128xf32>
    %238 = arith.addf %233, %237 : vector<36x128xf32>
    %c0_282 = arith.constant 0 : index
    %c0_283 = arith.constant 0 : index
    %c12_284 = arith.constant 12 : index
    %c0_285 = arith.constant 0 : index
    %239 = vector.load %arg4[%c0_282, %c0_283, %c12_284, %c0_285] : memref<1x1x50x128xbf16, #tpu.memory_space<vmem>>, vector<1x1x36x128xbf16>
    %240 = vector.shape_cast %239 : vector<1x1x36x128xbf16> to vector<36x128xbf16>
    %c1920_286 = arith.constant 1920 : index
    %c0_287 = arith.constant 0 : index
    %241 = vector.load %arg6[%c1920_286, %c0_287] : memref<3456x128xbf16, #tpu.memory_space<vmem>>, vector<128x128xbf16>
    %cst_288 = arith.constant dense<0.000000e+00> : vector<36x128xf32>
    %242 = tpu.matmul %240, %241, %cst_288 {dimension_numbers = #tpu.dot_dimension_numbers<[1], [0], [0], [1], [0, 0, 1, 1], [], []>} : vector<36x128xbf16>, vector<128x128xbf16>, vector<36x128xf32> -> vector<36x128xf32>
    %243 = arith.addf %238, %242 : vector<36x128xf32>
    %c0_289 = arith.constant 0 : index
    %c0_290 = arith.constant 0 : index
    %c13_291 = arith.constant 13 : index
    %c0_292 = arith.constant 0 : index
    %244 = vector.load %arg4[%c0_289, %c0_290, %c13_291, %c0_292] : memref<1x1x50x128xbf16, #tpu.memory_space<vmem>>, vector<1x1x36x128xbf16>
    %245 = vector.shape_cast %244 : vector<1x1x36x128xbf16> to vector<36x128xbf16>
    %c2048_293 = arith.constant 2048 : index
    %c0_294 = arith.constant 0 : index
    %246 = vector.load %arg6[%c2048_293, %c0_294] : memref<3456x128xbf16, #tpu.memory_space<vmem>>, vector<128x128xbf16>
    %cst_295 = arith.constant dense<0.000000e+00> : vector<36x128xf32>
    %247 = tpu.matmul %245, %246, %cst_295 {dimension_numbers = #tpu.dot_dimension_numbers<[1], [0], [0], [1], [0, 0, 1, 1], [], []>} : vector<36x128xbf16>, vector<128x128xbf16>, vector<36x128xf32> -> vector<36x128xf32>
    %248 = arith.addf %243, %247 : vector<36x128xf32>
    %c0_296 = arith.constant 0 : index
    %c0_297 = arith.constant 0 : index
    %c14_298 = arith.constant 14 : index
    %c0_299 = arith.constant 0 : index
    %249 = vector.load %arg4[%c0_296, %c0_297, %c14_298, %c0_299] : memref<1x1x50x128xbf16, #tpu.memory_space<vmem>>, vector<1x1x36x128xbf16>
    %250 = vector.shape_cast %249 : vector<1x1x36x128xbf16> to vector<36x128xbf16>
    %c2176_300 = arith.constant 2176 : index
    %c0_301 = arith.constant 0 : index
    %251 = vector.load %arg6[%c2176_300, %c0_301] : memref<3456x128xbf16, #tpu.memory_space<vmem>>, vector<128x128xbf16>
    %cst_302 = arith.constant dense<0.000000e+00> : vector<36x128xf32>
    %252 = tpu.matmul %250, %251, %cst_302 {dimension_numbers = #tpu.dot_dimension_numbers<[1], [0], [0], [1], [0, 0, 1, 1], [], []>} : vector<36x128xbf16>, vector<128x128xbf16>, vector<36x128xf32> -> vector<36x128xf32>
    %253 = arith.addf %248, %252 : vector<36x128xf32>
    %c0_303 = arith.constant 0 : index
    %c0_304 = arith.constant 0 : index
    %c0_305 = arith.constant 0 : index
    %c0_306 = arith.constant 0 : index
    %254 = vector.load %arg5[%c0_303, %c0_304, %c0_305, %c0_306] : memref<1x1x50x128xbf16, #tpu.memory_space<vmem>>, vector<1x1x36x128xbf16>
    %255 = vector.shape_cast %254 : vector<1x1x36x128xbf16> to vector<36x128xbf16>
    %c2304_307 = arith.constant 2304 : index
    %c0_308 = arith.constant 0 : index
    %256 = vector.load %arg6[%c2304_307, %c0_308] : memref<3456x128xbf16, #tpu.memory_space<vmem>>, vector<128x128xbf16>
    %cst_309 = arith.constant dense<0.000000e+00> : vector<36x128xf32>
    %257 = tpu.matmul %255, %256, %cst_309 {dimension_numbers = #tpu.dot_dimension_numbers<[1], [0], [0], [1], [0, 0, 1, 1], [], []>} : vector<36x128xbf16>, vector<128x128xbf16>, vector<36x128xf32> -> vector<36x128xf32>
    %258 = arith.addf %253, %257 : vector<36x128xf32>
    %c0_310 = arith.constant 0 : index
    %c0_311 = arith.constant 0 : index
    %c1_312 = arith.constant 1 : index
    %c0_313 = arith.constant 0 : index
    %259 = vector.load %arg5[%c0_310, %c0_311, %c1_312, %c0_313] : memref<1x1x50x128xbf16, #tpu.memory_space<vmem>>, vector<1x1x36x128xbf16>
    %260 = vector.shape_cast %259 : vector<1x1x36x128xbf16> to vector<36x128xbf16>
    %c2432_314 = arith.constant 2432 : index
    %c0_315 = arith.constant 0 : index
    %261 = vector.load %arg6[%c2432_314, %c0_315] : memref<3456x128xbf16, #tpu.memory_space<vmem>>, vector<128x128xbf16>
    %cst_316 = arith.constant dense<0.000000e+00> : vector<36x128xf32>
    %262 = tpu.matmul %260, %261, %cst_316 {dimension_numbers = #tpu.dot_dimension_numbers<[1], [0], [0], [1], [0, 0, 1, 1], [], []>} : vector<36x128xbf16>, vector<128x128xbf16>, vector<36x128xf32> -> vector<36x128xf32>
    %263 = arith.addf %258, %262 : vector<36x128xf32>
    %c0_317 = arith.constant 0 : index
    %c0_318 = arith.constant 0 : index
    %c2_319 = arith.constant 2 : index
    %c0_320 = arith.constant 0 : index
    %264 = vector.load %arg5[%c0_317, %c0_318, %c2_319, %c0_320] : memref<1x1x50x128xbf16, #tpu.memory_space<vmem>>, vector<1x1x36x128xbf16>
    %265 = vector.shape_cast %264 : vector<1x1x36x128xbf16> to vector<36x128xbf16>
    %c2560_321 = arith.constant 2560 : index
    %c0_322 = arith.constant 0 : index
    %266 = vector.load %arg6[%c2560_321, %c0_322] : memref<3456x128xbf16, #tpu.memory_space<vmem>>, vector<128x128xbf16>
    %cst_323 = arith.constant dense<0.000000e+00> : vector<36x128xf32>
    %267 = tpu.matmul %265, %266, %cst_323 {dimension_numbers = #tpu.dot_dimension_numbers<[1], [0], [0], [1], [0, 0, 1, 1], [], []>} : vector<36x128xbf16>, vector<128x128xbf16>, vector<36x128xf32> -> vector<36x128xf32>
    %268 = arith.addf %263, %267 : vector<36x128xf32>
    %c0_324 = arith.constant 0 : index
    %c0_325 = arith.constant 0 : index
    %c6_326 = arith.constant 6 : index
    %c0_327 = arith.constant 0 : index
    %269 = vector.load %arg5[%c0_324, %c0_325, %c6_326, %c0_327] : memref<1x1x50x128xbf16, #tpu.memory_space<vmem>>, vector<1x1x36x128xbf16>
    %270 = vector.shape_cast %269 : vector<1x1x36x128xbf16> to vector<36x128xbf16>
    %c2688_328 = arith.constant 2688 : index
    %c0_329 = arith.constant 0 : index
    %271 = vector.load %arg6[%c2688_328, %c0_329] : memref<3456x128xbf16, #tpu.memory_space<vmem>>, vector<128x128xbf16>
    %cst_330 = arith.constant dense<0.000000e+00> : vector<36x128xf32>
    %272 = tpu.matmul %270, %271, %cst_330 {dimension_numbers = #tpu.dot_dimension_numbers<[1], [0], [0], [1], [0, 0, 1, 1], [], []>} : vector<36x128xbf16>, vector<128x128xbf16>, vector<36x128xf32> -> vector<36x128xf32>
    %273 = arith.addf %268, %272 : vector<36x128xf32>
    %c0_331 = arith.constant 0 : index
    %c0_332 = arith.constant 0 : index
    %c7_333 = arith.constant 7 : index
    %c0_334 = arith.constant 0 : index
    %274 = vector.load %arg5[%c0_331, %c0_332, %c7_333, %c0_334] : memref<1x1x50x128xbf16, #tpu.memory_space<vmem>>, vector<1x1x36x128xbf16>
    %275 = vector.shape_cast %274 : vector<1x1x36x128xbf16> to vector<36x128xbf16>
    %c2816_335 = arith.constant 2816 : index
    %c0_336 = arith.constant 0 : index
    %276 = vector.load %arg6[%c2816_335, %c0_336] : memref<3456x128xbf16, #tpu.memory_space<vmem>>, vector<128x128xbf16>
    %cst_337 = arith.constant dense<0.000000e+00> : vector<36x128xf32>
    %277 = tpu.matmul %275, %276, %cst_337 {dimension_numbers = #tpu.dot_dimension_numbers<[1], [0], [0], [1], [0, 0, 1, 1], [], []>} : vector<36x128xbf16>, vector<128x128xbf16>, vector<36x128xf32> -> vector<36x128xf32>
    %278 = arith.addf %273, %277 : vector<36x128xf32>
    %c0_338 = arith.constant 0 : index
    %c0_339 = arith.constant 0 : index
    %c8_340 = arith.constant 8 : index
    %c0_341 = arith.constant 0 : index
    %279 = vector.load %arg5[%c0_338, %c0_339, %c8_340, %c0_341] : memref<1x1x50x128xbf16, #tpu.memory_space<vmem>>, vector<1x1x36x128xbf16>
    %280 = vector.shape_cast %279 : vector<1x1x36x128xbf16> to vector<36x128xbf16>
    %c2944_342 = arith.constant 2944 : index
    %c0_343 = arith.constant 0 : index
    %281 = vector.load %arg6[%c2944_342, %c0_343] : memref<3456x128xbf16, #tpu.memory_space<vmem>>, vector<128x128xbf16>
    %cst_344 = arith.constant dense<0.000000e+00> : vector<36x128xf32>
    %282 = tpu.matmul %280, %281, %cst_344 {dimension_numbers = #tpu.dot_dimension_numbers<[1], [0], [0], [1], [0, 0, 1, 1], [], []>} : vector<36x128xbf16>, vector<128x128xbf16>, vector<36x128xf32> -> vector<36x128xf32>
    %283 = arith.addf %278, %282 : vector<36x128xf32>
    %c0_345 = arith.constant 0 : index
    %c0_346 = arith.constant 0 : index
    %c12_347 = arith.constant 12 : index
    %c0_348 = arith.constant 0 : index
    %284 = vector.load %arg5[%c0_345, %c0_346, %c12_347, %c0_348] : memref<1x1x50x128xbf16, #tpu.memory_space<vmem>>, vector<1x1x36x128xbf16>
    %285 = vector.shape_cast %284 : vector<1x1x36x128xbf16> to vector<36x128xbf16>
    %c3072_349 = arith.constant 3072 : index
    %c0_350 = arith.constant 0 : index
    %286 = vector.load %arg6[%c3072_349, %c0_350] : memref<3456x128xbf16, #tpu.memory_space<vmem>>, vector<128x128xbf16>
    %cst_351 = arith.constant dense<0.000000e+00> : vector<36x128xf32>
    %287 = tpu.matmul %285, %286, %cst_351 {dimension_numbers = #tpu.dot_dimension_numbers<[1], [0], [0], [1], [0, 0, 1, 1], [], []>} : vector<36x128xbf16>, vector<128x128xbf16>, vector<36x128xf32> -> vector<36x128xf32>
    %288 = arith.addf %283, %287 : vector<36x128xf32>
    %c0_352 = arith.constant 0 : index
    %c0_353 = arith.constant 0 : index
    %c13_354 = arith.constant 13 : index
    %c0_355 = arith.constant 0 : index
    %289 = vector.load %arg5[%c0_352, %c0_353, %c13_354, %c0_355] : memref<1x1x50x128xbf16, #tpu.memory_space<vmem>>, vector<1x1x36x128xbf16>
    %290 = vector.shape_cast %289 : vector<1x1x36x128xbf16> to vector<36x128xbf16>
    %c3200_356 = arith.constant 3200 : index
    %c0_357 = arith.constant 0 : index
    %291 = vector.load %arg6[%c3200_356, %c0_357] : memref<3456x128xbf16, #tpu.memory_space<vmem>>, vector<128x128xbf16>
    %cst_358 = arith.constant dense<0.000000e+00> : vector<36x128xf32>
    %292 = tpu.matmul %290, %291, %cst_358 {dimension_numbers = #tpu.dot_dimension_numbers<[1], [0], [0], [1], [0, 0, 1, 1], [], []>} : vector<36x128xbf16>, vector<128x128xbf16>, vector<36x128xf32> -> vector<36x128xf32>
    %293 = arith.addf %288, %292 : vector<36x128xf32>
    %c0_359 = arith.constant 0 : index
    %c0_360 = arith.constant 0 : index
    %c14_361 = arith.constant 14 : index
    %c0_362 = arith.constant 0 : index
    %294 = vector.load %arg5[%c0_359, %c0_360, %c14_361, %c0_362] : memref<1x1x50x128xbf16, #tpu.memory_space<vmem>>, vector<1x1x36x128xbf16>
    %295 = vector.shape_cast %294 : vector<1x1x36x128xbf16> to vector<36x128xbf16>
    %c3328_363 = arith.constant 3328 : index
    %c0_364 = arith.constant 0 : index
    %296 = vector.load %arg6[%c3328_363, %c0_364] : memref<3456x128xbf16, #tpu.memory_space<vmem>>, vector<128x128xbf16>
    %cst_365 = arith.constant dense<0.000000e+00> : vector<36x128xf32>
    %297 = tpu.matmul %295, %296, %cst_365 {dimension_numbers = #tpu.dot_dimension_numbers<[1], [0], [0], [1], [0, 0, 1, 1], [], []>} : vector<36x128xbf16>, vector<128x128xbf16>, vector<36x128xf32> -> vector<36x128xf32>
    %298 = arith.addf %293, %297 : vector<36x128xf32>
    %c0_366 = arith.constant 0 : index
    %c0_367 = arith.constant 0 : index
    %299 = vector.load %arg7[%c0_366, %c0_367] : memref<1x128xf32, #tpu.memory_space<vmem>>, vector<1x128xf32>
    %300 = vector.broadcast %299 : vector<1x128xf32> to vector<36x128xf32>
    %301 = arith.addf %298, %300 : vector<36x128xf32>
    %302 = arith.truncf %301 : vector<36x128xf32> to vector<36x128xbf16>
    %c0_368 = arith.constant 0 : index
    %c1_369 = arith.constant 1 : index
    %c0_370 = arith.constant 0 : index
    %c0_371 = arith.constant 0 : index
    %303 = vector.load %arg9[%c0_368, %c1_369, %c0_370, %c0_371] : memref<1x2x36x128xbf16, #tpu.memory_space<vmem>>, vector<1x1x36x128xbf16>
    %304 = vector.shape_cast %303 : vector<1x1x36x128xbf16> to vector<36x128xbf16>
    %305 = vector.shape_cast %302 : vector<36x128xbf16> to vector<1x1x36x128xbf16>
    tpu.vector_store %arg9[%c0_368, %c1_369, %c0_370, %c0_371], %305 {strides = array<i32>} : memref<1x2x36x128xbf16, #tpu.memory_space<vmem>>, vector<1x1x36x128xbf16>,
    %c0_372 = arith.constant 0 : index
    %c0_373 = arith.constant 0 : index
    %306 = vector.load %arg8[%c0_372, %c0_373] : memref<36x1xf32, #tpu.memory_space<vmem>>, vector<36x1xf32>
    %307 = vector.broadcast %306 : vector<36x1xf32> to vector<36x128xf32>
    %308 = arith.mulf %301, %307 : vector<36x128xf32>
    %cst_374 = arith.constant dense<0.000000e+00> : vector<128xf32>
    %309 = vector.multi_reduction <add>, %308, %cst_374 [0] : vector<36x128xf32> to vector<128xf32>
    %310 = vector.shape_cast %309 : vector<128xf32> to vector<1x128xf32>
    %311 = arith.addf %161, %310 : vector<1x128xf32>
    %312 = arith.mulf %308, %301 : vector<36x128xf32>
    %cst_375 = arith.constant dense<0.000000e+00> : vector<128xf32>
    %313 = vector.multi_reduction <add>, %312, %cst_375 [0] : vector<36x128xf32> to vector<128xf32>
    %314 = vector.shape_cast %313 : vector<128xf32> to vector<1x128xf32>
    %315 = arith.addf %162, %314 : vector<1x128xf32>
    %c0_376 = arith.constant 0 : index
    %c1_377 = arith.constant 1 : index
    %c0_378 = arith.constant 0 : index
    %c0_379 = arith.constant 0 : index
    %316 = vector.load %arg10[%c0_376, %c1_377, %c0_378, %c0_379] : memref<1x2x2x128xf32, #tpu.memory_space<vmem>>, vector<1x1x1x128xf32>
    %317 = vector.shape_cast %316 : vector<1x1x1x128xf32> to vector<1x128xf32>
    %318 = vector.shape_cast %311 : vector<1x128xf32> to vector<1x1x1x128xf32>
    tpu.vector_store %arg10[%c0_376, %c1_377, %c0_378, %c0_379], %318 {strides = array<i32>} : memref<1x2x2x128xf32, #tpu.memory_space<vmem>>, vector<1x1x1x128xf32>,
    %c0_380 = arith.constant 0 : index
    %c1_381 = arith.constant 1 : index
    %c1_382 = arith.constant 1 : index
    %c0_383 = arith.constant 0 : index
    %319 = vector.load %arg10[%c0_380, %c1_381, %c1_382, %c0_383] : memref<1x2x2x128xf32, #tpu.memory_space<vmem>>, vector<1x1x1x128xf32>
    %320 = vector.shape_cast %319 : vector<1x1x1x128xf32> to vector<1x128xf32>
    %321 = vector.shape_cast %315 : vector<1x128xf32> to vector<1x1x1x128xf32>
    tpu.vector_store %arg10[%c0_380, %c1_381, %c1_382, %c0_383], %321 {strides = array<i32>} : memref<1x2x2x128xf32, #tpu.memory_space<vmem>>, vector<1x1x1x128xf32>,
    return
  }
  func.func @transform_0(%arg0: i32, %arg1: i32) -> (i32, i32, i32, i32) {
    %c2_i32 = arith.constant 2 : i32
    %0 = arith.muli %arg1, %c2_i32 : i32
    %c0_i32 = arith.constant 0 : i32
    %1 = arith.addi %0, %c0_i32 : i32
    %c0_i32_0 = arith.constant 0 : i32
    %c0_i32_1 = arith.constant 0 : i32
    %c0_i32_2 = arith.constant 0 : i32
    return %arg0, %1, %c0_i32_0, %c0_i32_1 : i32, i32, i32, i32
  }
  func.func @transform_1(%arg0: i32, %arg1: i32) -> (i32, i32, i32, i32) {
    %c2_i32 = arith.constant 2 : i32
    %0 = arith.muli %arg1, %c2_i32 : i32
    %c1_i32 = arith.constant 1 : i32
    %1 = arith.addi %0, %c1_i32 : i32
    %c0_i32 = arith.constant 0 : i32
    %c0_i32_0 = arith.constant 0 : i32
    %c0_i32_1 = arith.constant 0 : i32
    return %arg0, %1, %c0_i32, %c0_i32_0 : i32, i32, i32, i32
  }
  func.func @transform_2(%arg0: i32, %arg1: i32) -> (i32, i32, i32, i32) {
    %c2_i32 = arith.constant 2 : i32
    %0 = arith.muli %arg1, %c2_i32 : i32
    %c2_i32_0 = arith.constant 2 : i32
    %1 = arith.addi %0, %c2_i32_0 : i32
    %c0_i32 = arith.constant 0 : i32
    %c0_i32_1 = arith.constant 0 : i32
    %c0_i32_2 = arith.constant 0 : i32
    return %arg0, %1, %c0_i32, %c0_i32_1 : i32, i32, i32, i32
  }
  func.func @transform_3(%arg0: i32, %arg1: i32) -> (i32, i32, i32, i32) {
    %c2_i32 = arith.constant 2 : i32
    %0 = arith.muli %arg1, %c2_i32 : i32
    %c3_i32 = arith.constant 3 : i32
    %1 = arith.addi %0, %c3_i32 : i32
    %c0_i32 = arith.constant 0 : i32
    %c0_i32_0 = arith.constant 0 : i32
    %c0_i32_1 = arith.constant 0 : i32
    return %arg0, %1, %c0_i32, %c0_i32_0 : i32, i32, i32, i32
  }
  func.func @transform_4(%arg0: i32, %arg1: i32) -> (i32, i32) {
    %c0_i32 = arith.constant 0 : i32
    %c0_i32_0 = arith.constant 0 : i32
    %c0_i32_1 = arith.constant 0 : i32
    return %c0_i32, %c0_i32_0 : i32, i32
  }
  func.func @transform_5(%arg0: i32, %arg1: i32) -> (i32, i32) {
    %c0_i32 = arith.constant 0 : i32
    %c0_i32_0 = arith.constant 0 : i32
    %c0_i32_1 = arith.constant 0 : i32
    return %c0_i32, %c0_i32_0 : i32, i32
  }
  func.func @transform_6(%arg0: i32, %arg1: i32) -> (i32, i32) {
    %c0_i32 = arith.constant 0 : i32
    %c0_i32_0 = arith.constant 0 : i32
    %c0_i32_1 = arith.constant 0 : i32
    return %c0_i32, %c0_i32_0 : i32, i32
  }
  func.func @transform_7(%arg0: i32, %arg1: i32) -> (i32, i32, i32, i32) {
    %c0_i32 = arith.constant 0 : i32
    %c0_i32_0 = arith.constant 0 : i32
    %c0_i32_1 = arith.constant 0 : i32
    return %arg0, %arg1, %c0_i32, %c0_i32_0 : i32, i32, i32, i32
  }
  func.func @transform_8(%arg0: i32, %arg1: i32) -> (i32, i32, i32, i32) {
    %c0_i32 = arith.constant 0 : i32
    %c0_i32_0 = arith.constant 0 : i32
    %c0_i32_1 = arith.constant 0 : i32
    return %arg0, %arg1, %c0_i32, %c0_i32_0 : i32, i32, i32, i32
  }
}

module attributes {stable_mosaic.version = 11 : i64} {
  func.func @kernel(%arg0: i32, %arg1: i32, %arg2: memref<1x1x36x128xbf16, #tpu.memory_space<vmem>>, %arg3: memref<1x128xf32, #tpu.memory_space<vmem>>, %arg4: memref<1x128xf32, #tpu.memory_space<vmem>>, %arg5: memref<36x1xf32, #tpu.memory_space<vmem>>, %arg6: memref<1x1x50x128xbf16, #tpu.memory_space<vmem>>) attributes {dimension_semantics = [#tpu.dimension_semantics<parallel>, #tpu.dimension_semantics<parallel>], iteration_bounds = array<i64: 2, 6>, scalar_prefetch = 0 : i64, scratch_operands = 0 : i64, tpu.core_type = #tpu.core_type<tc>, window_params = [{transform_indices = @transform_0, window_bounds = array<i64: 1, 1, 36, 128>}, {pipeline_mode = #tpu.pipeline_mode<synchronous>, transform_indices = @transform_1, window_bounds = array<i64: 1, 128>}, {pipeline_mode = #tpu.pipeline_mode<synchronous>, transform_indices = @transform_2, window_bounds = array<i64: 1, 128>}, {pipeline_mode = #tpu.pipeline_mode<synchronous>, transform_indices = @transform_3, window_bounds = array<i64: 36, 1>}, {transform_indices = @transform_4, window_bounds = array<i64: 1, 1, 50, 128>}]} {
    %cst = arith.constant 0.000000e+00 : bf16
    %0 = vector.broadcast %cst : bf16 to vector<7x128xbf16>
    %c0 = arith.constant 0 : index
    %c0_0 = arith.constant 0 : index
    %c0_1 = arith.constant 0 : index
    %c0_2 = arith.constant 0 : index
    %1 = vector.load %arg6[%c0, %c0_0, %c0_1, %c0_2] : memref<1x1x50x128xbf16, #tpu.memory_space<vmem>>, vector<1x1x7x128xbf16>
    %2 = vector.shape_cast %1 : vector<1x1x7x128xbf16> to vector<7x128xbf16>
    %3 = vector.shape_cast %0 : vector<7x128xbf16> to vector<1x1x7x128xbf16>
    tpu.vector_store %arg6[%c0, %c0_0, %c0_1, %c0_2], %3 {strides = array<i32>} : memref<1x1x50x128xbf16, #tpu.memory_space<vmem>>, vector<1x1x7x128xbf16>,
    %c0_3 = arith.constant 0 : index
    %c0_4 = arith.constant 0 : index
    %c43 = arith.constant 43 : index
    %c0_5 = arith.constant 0 : index
    %4 = vector.load %arg6[%c0_3, %c0_4, %c43, %c0_5] : memref<1x1x50x128xbf16, #tpu.memory_space<vmem>>, vector<1x1x7x128xbf16>
    %5 = vector.shape_cast %4 : vector<1x1x7x128xbf16> to vector<7x128xbf16>
    %6 = vector.shape_cast %0 : vector<7x128xbf16> to vector<1x1x7x128xbf16>
    tpu.vector_store %arg6[%c0_3, %c0_4, %c43, %c0_5], %6 {strides = array<i32>} : memref<1x1x50x128xbf16, #tpu.memory_space<vmem>>, vector<1x1x7x128xbf16>,
    %c1_i32 = arith.constant 1 : i32
    %7 = arith.cmpi sge, %arg1, %c1_i32 : i32
    %c4_i32 = arith.constant 4 : i32
    %8 = arith.cmpi sle, %arg1, %c4_i32 : i32
    %9 = arith.andi %7, %8 : i1
    %10 = arith.extui %9 : i1 to i32
    %c0_i32 = arith.constant 0 : i32
    %11 = arith.cmpi ne, %10, %c0_i32 : i32
    scf.if %11 {
      %c0_7 = arith.constant 0 : index
      %c0_8 = arith.constant 0 : index
      %c0_9 = arith.constant 0 : index
      %c0_10 = arith.constant 0 : index
      %15 = vector.load %arg2[%c0_7, %c0_8, %c0_9, %c0_10] : memref<1x1x36x128xbf16, #tpu.memory_space<vmem>>, vector<1x1x36x128xbf16>
      %16 = vector.shape_cast %15 : vector<1x1x36x128xbf16> to vector<36x128xbf16>
      %17 = arith.extf %16 : vector<36x128xbf16> to vector<36x128xf32>
      %c0_11 = arith.constant 0 : index
      %c0_12 = arith.constant 0 : index
      %18 = vector.load %arg3[%c0_11, %c0_12] : memref<1x128xf32, #tpu.memory_space<vmem>>, vector<1x128xf32>
      %19 = vector.broadcast %18 : vector<1x128xf32> to vector<36x128xf32>
      %20 = arith.mulf %17, %19 : vector<36x128xf32>
      %c0_13 = arith.constant 0 : index
      %c0_14 = arith.constant 0 : index
      %21 = vector.load %arg4[%c0_13, %c0_14] : memref<1x128xf32, #tpu.memory_space<vmem>>, vector<1x128xf32>
      %22 = vector.broadcast %21 : vector<1x128xf32> to vector<36x128xf32>
      %23 = arith.addf %20, %22 : vector<36x128xf32>
      %cst_15 = arith.constant 0.000000e+00 : f32
      %24 = vector.broadcast %cst_15 : f32 to vector<36x128xf32>
      %25 = arith.maximumf %23, %24 : vector<36x128xf32>
      %c0_16 = arith.constant 0 : index
      %c0_17 = arith.constant 0 : index
      %26 = vector.load %arg5[%c0_16, %c0_17] : memref<36x1xf32, #tpu.memory_space<vmem>>, vector<36x1xf32>
      %cst_18 = arith.constant 0.000000e+00 : f32
      %27 = vector.broadcast %cst_18 : f32 to vector<36x1xf32>
      %28 = arith.cmpf ogt, %26, %27 : vector<36x1xf32>
      %cst_19 = arith.constant 0.000000e+00 : f32
      %29 = vector.shape_cast %28 : vector<36x1xi1> to vector<36x1xi1>
      %30 = vector.broadcast %29 : vector<36x1xi1> to vector<36x128xi1>
      %31 = vector.broadcast %cst_19 : f32 to vector<36x128xf32>
      %32 = arith.select %30, %25, %31 : vector<36x128xi1>, vector<36x128xf32>
      %33 = arith.truncf %32 : vector<36x128xf32> to vector<36x128xbf16>
      %c0_20 = arith.constant 0 : index
      %c0_21 = arith.constant 0 : index
      %c7 = arith.constant 7 : index
      %c0_22 = arith.constant 0 : index
      %34 = vector.load %arg6[%c0_20, %c0_21, %c7, %c0_22] : memref<1x1x50x128xbf16, #tpu.memory_space<vmem>>, vector<1x1x36x128xbf16>
      %35 = vector.shape_cast %34 : vector<1x1x36x128xbf16> to vector<36x128xbf16>
      %36 = vector.shape_cast %33 : vector<36x128xbf16> to vector<1x1x36x128xbf16>
      tpu.vector_store %arg6[%c0_20, %c0_21, %c7, %c0_22], %36 {strides = array<i32>} : memref<1x1x50x128xbf16, #tpu.memory_space<vmem>>, vector<1x1x36x128xbf16>,
    } else {
    }
    %true = arith.constant true
    %12 = arith.xori %9, %true : i1
    %13 = arith.extui %12 : i1 to i32
    %c0_i32_6 = arith.constant 0 : i32
    %14 = arith.cmpi ne, %13, %c0_i32_6 : i32
    scf.if %14 {
      %cst_7 = arith.constant 0.000000e+00 : bf16
      %15 = vector.broadcast %cst_7 : bf16 to vector<36x128xbf16>
      %c0_8 = arith.constant 0 : index
      %c0_9 = arith.constant 0 : index
      %c7 = arith.constant 7 : index
      %c0_10 = arith.constant 0 : index
      %16 = vector.load %arg6[%c0_8, %c0_9, %c7, %c0_10] : memref<1x1x50x128xbf16, #tpu.memory_space<vmem>>, vector<1x1x36x128xbf16>
      %17 = vector.shape_cast %16 : vector<1x1x36x128xbf16> to vector<36x128xbf16>
      %18 = vector.shape_cast %15 : vector<36x128xbf16> to vector<1x1x36x128xbf16>
      tpu.vector_store %arg6[%c0_8, %c0_9, %c7, %c0_10], %18 {strides = array<i32>} : memref<1x1x50x128xbf16, #tpu.memory_space<vmem>>, vector<1x1x36x128xbf16>,
    } else {
    }
    return
  }
  func.func @transform_0(%arg0: i32, %arg1: i32) -> (i32, i32, i32, i32) {
    %c1_i32 = arith.constant 1 : i32
    %0 = arith.subi %arg1, %c1_i32 : i32
    %c0_i32 = arith.constant 0 : i32
    %1 = arith.maxsi %0, %c0_i32 : i32
    %c3_i32 = arith.constant 3 : i32
    %2 = arith.minsi %1, %c3_i32 : i32
    %c0_i32_0 = arith.constant 0 : i32
    %c0_i32_1 = arith.constant 0 : i32
    %c0_i32_2 = arith.constant 0 : i32
    return %arg0, %2, %c0_i32_0, %c0_i32_1 : i32, i32, i32, i32
  }
  func.func @transform_1(%arg0: i32, %arg1: i32) -> (i32, i32) {
    %c0_i32 = arith.constant 0 : i32
    %c0_i32_0 = arith.constant 0 : i32
    %c0_i32_1 = arith.constant 0 : i32
    return %c0_i32, %c0_i32_0 : i32, i32
  }
  func.func @transform_2(%arg0: i32, %arg1: i32) -> (i32, i32) {
    %c0_i32 = arith.constant 0 : i32
    %c0_i32_0 = arith.constant 0 : i32
    %c0_i32_1 = arith.constant 0 : i32
    return %c0_i32, %c0_i32_0 : i32, i32
  }
  func.func @transform_3(%arg0: i32, %arg1: i32) -> (i32, i32) {
    %c0_i32 = arith.constant 0 : i32
    %c0_i32_0 = arith.constant 0 : i32
    %c0_i32_1 = arith.constant 0 : i32
    return %c0_i32, %c0_i32_0 : i32, i32
  }
  func.func @transform_4(%arg0: i32, %arg1: i32) -> (i32, i32, i32, i32) {
    %c0_i32 = arith.constant 0 : i32
    %c0_i32_0 = arith.constant 0 : i32
    %c0_i32_1 = arith.constant 0 : i32
    return %arg0, %arg1, %c0_i32, %c0_i32_0 : i32, i32, i32, i32
  }
}

module attributes {stable_mosaic.version = 11 : i64} {
  func.func @kernel(%arg0: i32, %arg1: i32, %arg2: memref<1x1x36x128xbf16, #tpu.memory_space<vmem>>, %arg3: memref<1x128xf32, #tpu.memory_space<vmem>>, %arg4: memref<1x128xf32, #tpu.memory_space<vmem>>, %arg5: memref<1x1x16x128xf32, #tpu.memory_space<vmem>>, %arg6: memref<128x128xbf16, #tpu.memory_space<vmem>>, %arg7: memref<1x128xf32, #tpu.memory_space<vmem>>, %arg8: memref<1x1x4x4x128xf32, #tpu.memory_space<vmem>>) attributes {dimension_semantics = [#tpu.dimension_semantics<parallel>, #tpu.dimension_semantics<parallel>], iteration_bounds = array<i64: 2, 4>, scalar_prefetch = 0 : i64, scratch_operands = 0 : i64, tpu.core_type = #tpu.core_type<tc>, window_params = [{transform_indices = @transform_0, window_bounds = array<i64: 1, 1, 36, 128>}, {pipeline_mode = #tpu.pipeline_mode<synchronous>, transform_indices = @transform_1, window_bounds = array<i64: 1, 128>}, {pipeline_mode = #tpu.pipeline_mode<synchronous>, transform_indices = @transform_2, window_bounds = array<i64: 1, 128>}, {transform_indices = @transform_3, window_bounds = array<i64: 1, 1, 16, 128>}, {pipeline_mode = #tpu.pipeline_mode<synchronous>, transform_indices = @transform_4, window_bounds = array<i64: 128, 128>}, {pipeline_mode = #tpu.pipeline_mode<synchronous>, transform_indices = @transform_5, window_bounds = array<i64: 1, 128>}, {transform_indices = @transform_6, window_bounds = array<i64: 1, 1, 4, 4, 128>}]} {
    %c0 = arith.constant 0 : index
    %c0_0 = arith.constant 0 : index
    %c0_1 = arith.constant 0 : index
    %c0_2 = arith.constant 0 : index
    %0 = vector.load %arg5[%c0, %c0_0, %c0_1, %c0_2] : memref<1x1x16x128xf32, #tpu.memory_space<vmem>>, vector<1x1x16x128xf32>
    %1 = vector.shape_cast %0 : vector<1x1x16x128xf32> to vector<16x128xf32>
    %2 = arith.truncf %1 : vector<16x128xf32> to vector<16x128xbf16>
    %c0_3 = arith.constant 0 : index
    %c0_4 = arith.constant 0 : index
    %3 = vector.load %arg6[%c0_3, %c0_4] : memref<128x128xbf16, #tpu.memory_space<vmem>>, vector<128x128xbf16>
    %cst = arith.constant dense<0.000000e+00> : vector<16x128xf32>
    %4 = tpu.matmul %2, %3, %cst {dimension_numbers = #tpu.dot_dimension_numbers<[1], [0], [0], [1], [0, 0, 1, 1], [], []>} : vector<16x128xbf16>, vector<128x128xbf16>, vector<16x128xf32> -> vector<16x128xf32>
    %c0_5 = arith.constant 0 : index
    %c0_6 = arith.constant 0 : index
    %5 = vector.load %arg7[%c0_5, %c0_6] : memref<1x128xf32, #tpu.memory_space<vmem>>, vector<1x128xf32>
    %6 = vector.broadcast %5 : vector<1x128xf32> to vector<16x128xf32>
    %7 = arith.addf %4, %6 : vector<16x128xf32>
    %c0_7 = arith.constant 0 : index
    %c0_8 = arith.constant 0 : index
    %c0_9 = arith.constant 0 : index
    %c0_10 = arith.constant 0 : index
    %8 = vector.load %arg2[%c0_7, %c0_8, %c0_9, %c0_10] : memref<1x1x36x128xbf16, #tpu.memory_space<vmem>>, vector<1x1x36x128xbf16>
    %9 = vector.shape_cast %8 : vector<1x1x36x128xbf16> to vector<36x128xbf16>
    %10 = arith.extf %9 : vector<36x128xbf16> to vector<36x128xf32>
    %c0_11 = arith.constant 0 : index
    %c0_12 = arith.constant 0 : index
    %11 = vector.load %arg3[%c0_11, %c0_12] : memref<1x128xf32, #tpu.memory_space<vmem>>, vector<1x128xf32>
    %12 = vector.broadcast %11 : vector<1x128xf32> to vector<36x128xf32>
    %13 = arith.mulf %10, %12 : vector<36x128xf32>
    %c0_13 = arith.constant 0 : index
    %c0_14 = arith.constant 0 : index
    %14 = vector.load %arg4[%c0_13, %c0_14] : memref<1x128xf32, #tpu.memory_space<vmem>>, vector<1x128xf32>
    %15 = vector.broadcast %14 : vector<1x128xf32> to vector<36x128xf32>
    %16 = arith.addf %13, %15 : vector<36x128xf32>
    %17 = vector.extract_strided_slice %16 {offsets = [7, 0], sizes = [4, 128], strides = [1, 1]} : vector<36x128xf32> to vector<4x128xf32>
    %18 = vector.extract_strided_slice %7 {offsets = [0, 0], sizes = [4, 128], strides = [1, 1]} : vector<16x128xf32> to vector<4x128xf32>
    %19 = arith.addf %17, %18 : vector<4x128xf32>
    %cst_15 = arith.constant 0.000000e+00 : f32
    %20 = vector.broadcast %cst_15 : f32 to vector<4x128xf32>
    %21 = arith.maximumf %19, %20 : vector<4x128xf32>
    %c0_16 = arith.constant 0 : index
    %c0_17 = arith.constant 0 : index
    %c0_18 = arith.constant 0 : index
    %c0_19 = arith.constant 0 : index
    %c0_20 = arith.constant 0 : index
    %22 = vector.load %arg8[%c0_16, %c0_17, %c0_18, %c0_19, %c0_20] : memref<1x1x4x4x128xf32, #tpu.memory_space<vmem>>, vector<1x1x1x4x128xf32>
    %23 = vector.shape_cast %22 : vector<1x1x1x4x128xf32> to vector<4x128xf32>
    %24 = vector.shape_cast %21 : vector<4x128xf32> to vector<1x1x1x4x128xf32>
    tpu.vector_store %arg8[%c0_16, %c0_17, %c0_18, %c0_19, %c0_20], %24 {strides = array<i32>} : memref<1x1x4x4x128xf32, #tpu.memory_space<vmem>>, vector<1x1x1x4x128xf32>,
    %25 = vector.extract_strided_slice %16 {offsets = [13, 0], sizes = [4, 128], strides = [1, 1]} : vector<36x128xf32> to vector<4x128xf32>
    %26 = vector.extract_strided_slice %7 {offsets = [4, 0], sizes = [4, 128], strides = [1, 1]} : vector<16x128xf32> to vector<4x128xf32>
    %27 = arith.addf %25, %26 : vector<4x128xf32>
    %cst_21 = arith.constant 0.000000e+00 : f32
    %28 = vector.broadcast %cst_21 : f32 to vector<4x128xf32>
    %29 = arith.maximumf %27, %28 : vector<4x128xf32>
    %c0_22 = arith.constant 0 : index
    %c0_23 = arith.constant 0 : index
    %c1 = arith.constant 1 : index
    %c0_24 = arith.constant 0 : index
    %c0_25 = arith.constant 0 : index
    %30 = vector.load %arg8[%c0_22, %c0_23, %c1, %c0_24, %c0_25] : memref<1x1x4x4x128xf32, #tpu.memory_space<vmem>>, vector<1x1x1x4x128xf32>
    %31 = vector.shape_cast %30 : vector<1x1x1x4x128xf32> to vector<4x128xf32>
    %32 = vector.shape_cast %29 : vector<4x128xf32> to vector<1x1x1x4x128xf32>
    tpu.vector_store %arg8[%c0_22, %c0_23, %c1, %c0_24, %c0_25], %32 {strides = array<i32>} : memref<1x1x4x4x128xf32, #tpu.memory_space<vmem>>, vector<1x1x1x4x128xf32>,
    %33 = vector.extract_strided_slice %16 {offsets = [19, 0], sizes = [4, 128], strides = [1, 1]} : vector<36x128xf32> to vector<4x128xf32>
    %34 = vector.extract_strided_slice %7 {offsets = [8, 0], sizes = [4, 128], strides = [1, 1]} : vector<16x128xf32> to vector<4x128xf32>
    %35 = arith.addf %33, %34 : vector<4x128xf32>
    %cst_26 = arith.constant 0.000000e+00 : f32
    %36 = vector.broadcast %cst_26 : f32 to vector<4x128xf32>
    %37 = arith.maximumf %35, %36 : vector<4x128xf32>
    %c0_27 = arith.constant 0 : index
    %c0_28 = arith.constant 0 : index
    %c2 = arith.constant 2 : index
    %c0_29 = arith.constant 0 : index
    %c0_30 = arith.constant 0 : index
    %38 = vector.load %arg8[%c0_27, %c0_28, %c2, %c0_29, %c0_30] : memref<1x1x4x4x128xf32, #tpu.memory_space<vmem>>, vector<1x1x1x4x128xf32>
    %39 = vector.shape_cast %38 : vector<1x1x1x4x128xf32> to vector<4x128xf32>
    %40 = vector.shape_cast %37 : vector<4x128xf32> to vector<1x1x1x4x128xf32>
    tpu.vector_store %arg8[%c0_27, %c0_28, %c2, %c0_29, %c0_30], %40 {strides = array<i32>} : memref<1x1x4x4x128xf32, #tpu.memory_space<vmem>>, vector<1x1x1x4x128xf32>,
    %41 = vector.extract_strided_slice %16 {offsets = [25, 0], sizes = [4, 128], strides = [1, 1]} : vector<36x128xf32> to vector<4x128xf32>
    %42 = vector.extract_strided_slice %7 {offsets = [12, 0], sizes = [4, 128], strides = [1, 1]} : vector<16x128xf32> to vector<4x128xf32>
    %43 = arith.addf %41, %42 : vector<4x128xf32>
    %cst_31 = arith.constant 0.000000e+00 : f32
    %44 = vector.broadcast %cst_31 : f32 to vector<4x128xf32>
    %45 = arith.maximumf %43, %44 : vector<4x128xf32>
    %c0_32 = arith.constant 0 : index
    %c0_33 = arith.constant 0 : index
    %c3 = arith.constant 3 : index
    %c0_34 = arith.constant 0 : index
    %c0_35 = arith.constant 0 : index
    %46 = vector.load %arg8[%c0_32, %c0_33, %c3, %c0_34, %c0_35] : memref<1x1x4x4x128xf32, #tpu.memory_space<vmem>>, vector<1x1x1x4x128xf32>
    %47 = vector.shape_cast %46 : vector<1x1x1x4x128xf32> to vector<4x128xf32>
    %48 = vector.shape_cast %45 : vector<4x128xf32> to vector<1x1x1x4x128xf32>
    tpu.vector_store %arg8[%c0_32, %c0_33, %c3, %c0_34, %c0_35], %48 {strides = array<i32>} : memref<1x1x4x4x128xf32, #tpu.memory_space<vmem>>, vector<1x1x1x4x128xf32>,
    return
  }
  func.func @transform_0(%arg0: i32, %arg1: i32) -> (i32, i32, i32, i32) {
    %c0_i32 = arith.constant 0 : i32
    %c0_i32_0 = arith.constant 0 : i32
    %c0_i32_1 = arith.constant 0 : i32
    return %arg0, %arg1, %c0_i32, %c0_i32_0 : i32, i32, i32, i32
  }
  func.func @transform_1(%arg0: i32, %arg1: i32) -> (i32, i32) {
    %c0_i32 = arith.constant 0 : i32
    %c0_i32_0 = arith.constant 0 : i32
    %c0_i32_1 = arith.constant 0 : i32
    return %c0_i32, %c0_i32_0 : i32, i32
  }
  func.func @transform_2(%arg0: i32, %arg1: i32) -> (i32, i32) {
    %c0_i32 = arith.constant 0 : i32
    %c0_i32_0 = arith.constant 0 : i32
    %c0_i32_1 = arith.constant 0 : i32
    return %c0_i32, %c0_i32_0 : i32, i32
  }
  func.func @transform_3(%arg0: i32, %arg1: i32) -> (i32, i32, i32, i32) {
    %c0_i32 = arith.constant 0 : i32
    %c0_i32_0 = arith.constant 0 : i32
    %c0_i32_1 = arith.constant 0 : i32
    return %arg0, %arg1, %c0_i32, %c0_i32_0 : i32, i32, i32, i32
  }
  func.func @transform_4(%arg0: i32, %arg1: i32) -> (i32, i32) {
    %c0_i32 = arith.constant 0 : i32
    %c0_i32_0 = arith.constant 0 : i32
    %c0_i32_1 = arith.constant 0 : i32
    return %c0_i32, %c0_i32_0 : i32, i32
  }
  func.func @transform_5(%arg0: i32, %arg1: i32) -> (i32, i32) {
    %c0_i32 = arith.constant 0 : i32
    %c0_i32_0 = arith.constant 0 : i32
    %c0_i32_1 = arith.constant 0 : i32
    return %c0_i32, %c0_i32_0 : i32, i32
  }
  func.func @transform_6(%arg0: i32, %arg1: i32) -> (i32, i32, i32, i32, i32) {
    %c0_i32 = arith.constant 0 : i32
    %c0_i32_0 = arith.constant 0 : i32
    %c0_i32_1 = arith.constant 0 : i32
    %c0_i32_2 = arith.constant 0 : i32
    return %arg0, %arg1, %c0_i32, %c0_i32_0, %c0_i32_1 : i32, i32, i32, i32, i32
  }
}

</mosaic_0001>

<llo_original>
// kernel: basic_block_forward.5
$region0: #{basic_block_forward.5}
  #allocation0 [shape = 'u32[]', space=smem, size = 0x4, offset = 0x4, fixed_abs, tag = 'smem constant byte address 0x4 - core index']
  #allocation1 [shape = 'u32[72,128]{1,0:T(1,128)}', space=vmem, size = 0x9000, scoped, tag = 'internal scratch']
  %s0 = inlined_call_operand.vmem [shape: bf16[2,4,36,128], index: 0, kind: input, shape index: {}]
  %s1 = inlined_call_operand.vmem [shape: f32[1,128], index: 1, kind: input, shape index: {}]
  %s2 = inlined_call_operand.vmem [shape: f32[1,128], index: 2, kind: input, shape index: {}]
  %s3 = inlined_call_operand.vmem [shape: f32[36,1], index: 3, kind: input, shape index: {}]
  %s4 = inlined_call_operand.vmem [shape: bf16[2,6,50,128], index: 4, kind: output, shape index: {}]
  %s5 = sld [smem:[#allocation0]]
  $region57: #{basic_block_forward.5} parent=0
    _
  %s7 = ssub.s32 1, %s5
  %s8 = scalar_select 0, %s7, %s5
  loop: start=0, step=1, limit=14
  $region2: #{basic_block_forward.5} parent=0 // loop_pre_header
    _
  $region3: #{basic_block_forward.5} parent=0 // loop_header
    %s10 = sphi 0, %s14
    %p11 = scmp.ge.s32.totalorder %s10, 14
    %s17 = sphi 0, %s29
    %s18 = sphi 0, %s25
    %s19 = sphi 0, %s17
    %s20 = sphi 0, %s18
    %s21 = sphi 0, %s19
    %s22 = sphi 0, %s20
    %s44 = sphi 0, %s46
    %s47 = sphi 0, %s44
    %s48 = sphi 0, %s47
    %s64 = sphi 0, %s48
    %s68 = sphi 0, %s68
    %s70 = sphi 0, %s68
    %s71 = sphi 0, %s70
    %s85 = sphi 0, %s71
    %s89 = sphi 0, %s89
    %s91 = sphi 0, %s89
    %s92 = sphi 0, %s91
    %s106 = sphi 0, %s92
    %s110 = sphi 0, %s110
    %s112 = sphi 0, %s110
    %s113 = sphi 0, %s112
    %s127 = sphi 0, %s113
    %s135 = sphi 0, %s137
    %s138 = sphi 0, %s135
    %s139 = sphi 0, %s138
    %s155 = sphi 0, %s139
  $region4: #{basic_block_forward.5} parent=0 // loop_header_branch
    %13 = sbr.rel (%p11) target = $region8
  $region5: #{basic_block_forward.5} parent=0 // loop_body
    %s15 = ssub.s32 %s10, 1
    %s16 = ssub.s32 %s10, 2
    %s23 = sadd.s32 1, %s18
    %p24 = scmp.ge.s32.totalorder %s23, 6
    %s25 = scalar_select %p24, 0, %s23
    %s26 = sadd.s32 1, %s17
    %s27 = scalar_select %p24, %s26, %s17
    %p28 = scmp.ge.s32.totalorder %s27, 2
    %s29 = scalar_select %p28, 0, %s27
    %s30 = ssub.s32 %s18, 1
    %p31 = scmp.gt.s32.totalorder %s30, 0
    %s32 = scalar_select %p31, %s30, 0
    %p33 = scmp.lt.s32.totalorder %s32, 3
    %s34 = scalar_select %p33, %s32, 3
    %s35 = ssub.s32 %s25, 1
    %p36 = scmp.gt.s32.totalorder %s35, 0
    %s37 = scalar_select %p36, %s35, 0
    %p38 = scmp.lt.s32.totalorder %s37, 3
    %s39 = scalar_select %p38, %s37, 3
    %s40 = ssub.s32 %s17, %s29
    %s41 = ssub.s32 %s34, %s39
    %s42 = sor.u32 %s40, %s41
    %p43 = scmp.eq.s32.totalorder %s42, 0
    %s45 = sadd.s32 %s44, 1
    %s46 = scalar_select %p43, %s44, %s45
    %p49 = pneg %p43
    %p50 = scmp.eq.s32.totalorder %s10, 11
    %p51 = por %p49, %p50
    %p52 = scmp.ne.s32.totalorder %s44, %s47
    %p53 = scmp.eq.s32.totalorder %s10, 0
    %p54 = por %p52, %p53
    %p55 = scmp.ne.s32.totalorder %s44, %s47
    %p56 = scmp.eq.s32.totalorder %s15, 11
    %p57 = por %p55, %p56
    %p58 = scmp.ne.s32.totalorder %s47, %s48
    %p59 = scmp.eq.s32.totalorder %s15, 0
    %p60 = por %p58, %p59
    %p61 = scmp.ne.s32.totalorder %s47, %s48
    %p62 = scmp.eq.s32.totalorder %s16, 11
    %p63 = por %p61, %p62
    %p65 = scmp.ne.s32.totalorder %s48, %s64
    %p66 = scmp.eq.s32.totalorder %s16, 0
    %p67 = por %p65, %p66
    %s69 = sadd.s32 %s68, 1
    %p72 = scmp.eq.s32.totalorder %s10, 11
    %p73 = scmp.ne.s32.totalorder %s68, %s70
    %p74 = scmp.eq.s32.totalorder %s10, 0
    %p75 = por %p73, %p74
    %p76 = scmp.ne.s32.totalorder %s68, %s70
    %p77 = scmp.eq.s32.totalorder %s15, 11
    %p78 = por %p76, %p77
    %p79 = scmp.ne.s32.totalorder %s70, %s71
    %p80 = scmp.eq.s32.totalorder %s15, 0
    %p81 = por %p79, %p80
    %p82 = scmp.ne.s32.totalorder %s70, %s71
    %p83 = scmp.eq.s32.totalorder %s16, 11
    %p84 = por %p82, %p83
    %p86 = scmp.ne.s32.totalorder %s71, %s85
    %p87 = scmp.eq.s32.totalorder %s16, 0
    %p88 = por %p86, %p87
    %s90 = sadd.s32 %s89, 1
    %p93 = scmp.eq.s32.totalorder %s10, 11
    %p94 = scmp.ne.s32.totalorder %s89, %s91
    %p95 = scmp.eq.s32.totalorder %s10, 0
    %p96 = por %p94, %p95
    %p97 = scmp.ne.s32.totalorder %s89, %s91
    %p98 = scmp.eq.s32.totalorder %s15, 11
    %p99 = por %p97, %p98
    %p100 = scmp.ne.s32.totalorder %s91, %s92
    %p101 = scmp.eq.s32.totalorder %s15, 0
    %p102 = por %p100, %p101
    %p103 = scmp.ne.s32.totalorder %s91, %s92
    %p104 = scmp.eq.s32.totalorder %s16, 11
    %p105 = por %p103, %p104
    %p107 = scmp.ne.s32.totalorder %s92, %s106
    %p108 = scmp.eq.s32.totalorder %s16, 0
    %p109 = por %p107, %p108
    %s111 = sadd.s32 %s110, 1
    %p114 = scmp.eq.s32.totalorder %s10, 11
    %p115 = scmp.ne.s32.totalorder %s110, %s112
    %p116 = scmp.eq.s32.totalorder %s10, 0
    %p117 = por %p115, %p116
    %p118 = scmp.ne.s32.totalorder %s110, %s112
    %p119 = scmp.eq.s32.totalorder %s15, 11
    %p120 = por %p118, %p119
    %p121 = scmp.ne.s32.totalorder %s112, %s113
    %p122 = scmp.eq.s32.totalorder %s15, 0
    %p123 = por %p121, %p122
    %p124 = scmp.ne.s32.totalorder %s112, %s113
    %p125 = scmp.eq.s32.totalorder %s16, 11
    %p126 = por %p124, %p125
    %p128 = scmp.ne.s32.totalorder %s113, %s127
    %p129 = scmp.eq.s32.totalorder %s16, 0
    %p130 = por %p128, %p129
    %s131 = ssub.s32 %s17, %s29
    %s132 = ssub.s32 %s18, %s25
    %s133 = sor.u32 %s131, %s132
    %p134 = scmp.eq.s32.totalorder %s133, 0
    %s136 = sadd.s32 %s135, 1
    %s137 = scalar_select %p134, %s135, %s136
    %p140 = pneg %p134
    %p141 = scmp.eq.s32.totalorder %s10, 11
    %p142 = por %p140, %p141
    %p143 = scmp.ne.s32.totalorder %s135, %s138
    %p144 = scmp.eq.s32.totalorder %s10, 0
    %p145 = por %p143, %p144
    %p146 = scmp.ne.s32.totalorder %s135, %s138
    %p147 = scmp.eq.s32.totalorder %s15, 11
    %p148 = por %p146, %p147
    %p149 = scmp.ne.s32.totalorder %s138, %s139
    %p150 = scmp.eq.s32.totalorder %s15, 0
    %p151 = por %p149, %p150
    %p152 = scmp.ne.s32.totalorder %s138, %s139
    %p153 = scmp.eq.s32.totalorder %s16, 11
    %p154 = por %p152, %p153
    %p156 = scmp.ne.s32.totalorder %s139, %s155
    %p157 = scmp.eq.s32.totalorder %s16, 0
    %p158 = por %p156, %p157
    %p159 = scmp.le.s32.totalorder 1, %s10
    %p160 = scmp.lt.s32.totalorder %s10, 13
    %p161 = pnand %p159, %p160
    %p162 = pneg %p161
    // Predicated region
    $region9: #{basic_block_forward.5} parent=5 // pred_check
      _
    $region10: #{basic_block_forward.5} parent=5 // pred_check_branch
      %164 = sbr.rel (%p161) target = $region12
    $region11: #{basic_block_forward.5} parent=5 // pred_region
      %s165 = ssub.s32 %s10, 1
      // Predicated region
      $region13: #{basic_block_forward.5} parent=11 // pred_check
        %p166 = pneg %p81
      $region14: #{basic_block_forward.5} parent=11 // pred_check_branch
        %168 = sbr.rel (%p166) target = $region16
      $region15: #{basic_block_forward.5} parent=11 // pred_region
        _
      $region16: #{basic_block_forward.5} parent=11 // pred_fallthru
        _
      // Predicated region
      $region17: #{basic_block_forward.5} parent=11 // pred_check
        %p169 = pneg %p102
      $region18: #{basic_block_forward.5} parent=11 // pred_check_branch
        %171 = sbr.rel (%p169) target = $region20
      $region19: #{basic_block_forward.5} parent=11 // pred_region
        _
      $region20: #{basic_block_forward.5} parent=11 // pred_fallthru
        _
      // Predicated region
      $region21: #{basic_block_forward.5} parent=11 // pred_check
        %p172 = pneg %p123
      $region22: #{basic_block_forward.5} parent=11 // pred_check_branch
        %174 = sbr.rel (%p172) target = $region24
      $region23: #{basic_block_forward.5} parent=11 // pred_region
        _
      $region24: #{basic_block_forward.5} parent=11 // pred_fallthru
        _
    $region12: #{basic_block_forward.5} parent=5 // pred_fallthru
      _
    %p175 = scmp.lt.s32.totalorder %s10, 12
    // Predicated region
    $region25: #{basic_block_forward.5} parent=5 // pred_check
      %p176 = pneg %p175
    $region26: #{basic_block_forward.5} parent=5 // pred_check_branch
      %178 = sbr.rel (%p176) target = $region28
    $region27: #{basic_block_forward.5} parent=5 // pred_region
      // Predicated region
      $region29: #{basic_block_forward.5} parent=27 // pred_check
        %p179 = pneg %p54
      $region30: #{basic_block_forward.5} parent=27 // pred_check_branch
        %181 = sbr.rel (%p179) target = $region32
      $region31: #{basic_block_forward.5} parent=27 // pred_region
        %s182 = ssub.s32 %s18, 1
        %p183 = scmp.gt.s32.totalorder %s182, 0
        %s184 = scalar_select %p183, %s182, 0
        %p185 = scmp.lt.s32.totalorder %s184, 3
        %s186 = scalar_select %p185, %s184, 3
        %p187 = scmp.lt.s32.totalorder %s17, 1
        %s188 = scalar_select %p187, %s17, 1
        %p189 = scmp.lt.s32.totalorder %s186, 3
        %s190 = scalar_select %p189, %s186, 3
        %s191 = smul.addr %s190, 5
        %s192 = smul.addr %s188, 20
        %s193 = sadd.s32 %s191, %s192
        %s194 = smul.addr %s193, 4
        %s195 = scalar_lea.vmem %s0, %s194
        %s196 = ssub.s32 %s18, 1
        %p197 = scmp.gt.s32.totalorder %s196, 0
        %s198 = scalar_select %p197, %s196, 0
        %p199 = scmp.lt.s32.totalorder %s198, 3
        %s200 = scalar_select %p199, %s198, 3
      $region32: #{basic_block_forward.5} parent=27 // pred_fallthru
        _
    $region28: #{basic_block_forward.5} parent=5 // pred_fallthru
      _
    %p201 = scmp.le.s32.totalorder 1, %s10
    %p202 = scmp.lt.s32.totalorder %s10, 13
    %p203 = pnand %p201, %p202
    %p204 = pneg %p203
    // Predicated region
    $region33: #{basic_block_forward.5} parent=5 // pred_check
      _
    $region34: #{basic_block_forward.5} parent=5 // pred_check_branch
      %206 = sbr.rel (%p203) target = $region36
    $region35: #{basic_block_forward.5} parent=5 // pred_region
      %s207 = ssub.s32 %s10, 1
      %s208 = ssub.s32 %s20, 1
      %p209 = scmp.gt.s32.totalorder %s208, 0
      %s210 = scalar_select %p209, %s208, 0
      %p211 = scmp.lt.s32.totalorder %s210, 3
      %s212 = scalar_select %p211, %s210, 3
      %p213 = scmp.lt.s32.totalorder %s19, 1
      %s214 = scalar_select %p213, %s19, 1
      %p215 = scmp.lt.s32.totalorder %s212, 3
      %s216 = scalar_select %p215, %s212, 3
      %s217 = smul.addr %s216, 5
      %s218 = smul.addr %s214, 20
      %s219 = sadd.s32 %s217, %s218
      %s220 = smul.addr %s219, 4
      %s221 = scalar_lea.vmem %s0, %s220
      %p222 = pneg %p60
      %p223 = pneg %p57
      %p224 = pneg %p81
      %p225 = pneg %p78
      %p226 = pneg %p102
      %p227 = pneg %p99
      %p228 = pneg %p123
      %p229 = pneg %p120
      %p230 = pneg %p151
      %p231 = pneg %p148
      %p232 = scmp.lt.s32.totalorder %s19, 1
      %s233 = scalar_select %p232, %s19, 1
      %p234 = scmp.lt.s32.totalorder %s20, 5
      %s235 = scalar_select %p234, %s20, 5
      %s236 = smul.addr %s235, 7
      %s237 = smul.addr %s233, 42
      %s238 = sadd.s32 %s236, %s237
      %s239 = smul.addr %s238, 4
      %s240 = scalar_lea.vmem %s4, %s239
      %s241 = ssub.s32 %s20, 1
      %p242 = scmp.gt.s32.totalorder %s241, 0
      %s243 = scalar_select %p242, %s241, 0
      %p244 = scmp.lt.s32.totalorder %s243, 3
      %s245 = scalar_select %p244, %s243, 3
      %p246 = scmp.lt.s32.totalorder %s19, 1
      %s247 = scalar_select %p246, %s19, 1
      %p248 = scmp.lt.s32.totalorder %s245, 3
      %s249 = scalar_select %p248, %s245, 3
      %s250 = smul.addr %s249, 5
      %s251 = smul.addr %s247, 20
      %s252 = sadd.s32 %s250, %s251
      %s253 = smul.addr %s252, 4
      %s254 = scalar_lea.vmem %s0, %s253
      %s255 = ssub.s32 %s20, 1
      %p256 = scmp.gt.s32.totalorder %s255, 0
      %s257 = scalar_select %p256, %s255, 0
      %p258 = scmp.lt.s32.totalorder %s257, 3
      %s259 = scalar_select %p258, %s257, 3
      %p260 = scmp.lt.s32.totalorder %s19, 1
      %s261 = scalar_select %p260, %s19, 1
      %p262 = scmp.lt.s32.totalorder %s20, 5
      %s263 = scalar_select %p262, %s20, 5
      %s264 = smul.addr %s263, 7
      %s265 = smul.addr %s261, 42
      %s266 = sadd.s32 %s264, %s265
      %s267 = smul.addr %s266, 4
      %s268 = scalar_lea.vmem %s4, %s267
      %vm270 = vcmask 1043456
      %vm271 = vsmask.f32 3328
      %vm272 = vmand %vm270, %vm271
      %v273 = vld [vmem:[%s268] sm:$0xf]
      %v274 = vsel %vm272, 0, %v273
      %275 = vst [vmem:[%s268] sm:$0xf] %v274
      %vm276 = vcmask 1043457
      %vm277 = vsmask.f32 7942
      %vm278 = vmand %vm276, %vm277
      %v279 = vld [vmem:[%s268 + $0x14] sm:$0xe]
      %v280 = vsel %vm278, 0, %v279
      %281 = vst [vmem:[%s268 + $0x14] sm:$0xe] %v280
      %282 = vst [vmem:[%s268 + $0x18] sm:$0x1] 0
      %p283 = scmp.ge.s32.totalorder %s20, 1
      %p284 = scmp.le.s32.totalorder %s20, 4
      %p285 = pnand %p283, %p284
      %p286 = pneg %p285
      // Predicated region
      $region37: #{basic_block_forward.5} parent=35 // pred_check
        _
      $region38: #{basic_block_forward.5} parent=35 // pred_check_branch
        %288 = sbr.rel (%p285) target = $region40
      $region39: #{basic_block_forward.5} parent=35 // pred_region
        %v289 = vld [vmem:[%s254] sm:$0xf]
        %v290 = vld [vmem:[%s254 + $0x4] sm:$0xf]
        %v291 = vld [vmem:[%s254 + $0x8] sm:$0xf]
        %v292 = vld [vmem:[%s254 + $0xc] sm:$0xf]
        %v293 = vld [vmem:[%s254 + $0x10] sm:$0x3]
        %v294 = vunpack.c.l.bf16 %v289
        %v295 = vunpack.c.l.bf16 %v290
        %v296 = vunpack.c.l.bf16 %v291
        %v297 = vunpack.c.l.bf16 %v292
        %v298 = vunpack.c.l.bf16 %v293
        %v299 = vld [vmem:[%s1] sm:$0x1]
        %v301 = vperm.slane %v299, 0
        %v303 = vmul.f32 %v294, %v301
        %v304 = vmul.f32 %v295, %v301
        %v305 = vmul.f32 %v296, %v301
        %v306 = vmul.f32 %v297, %v301
        %v307 = vmul.f32 %v298, %v301
        %v308 = vld [vmem:[%s2] sm:$0x1]
        %v310 = vperm.slane %v308, 0
        %v312 = vadd.f32 %v303, %v310
        %v313 = vadd.f32 %v304, %v310
        %v314 = vadd.f32 %v305, %v310
        %v315 = vadd.f32 %v306, %v310
        %v316 = vadd.f32 %v307, %v310
        %v317 = vmax.f32 %v312, 0.0
        %v318 = vmax.f32 %v313, 0.0
        %v319 = vmax.f32 %v314, 0.0
        %v320 = vmax.f32 %v315, 0.0
        %v321 = vmax.f32 %v316, 0.0
        %v322 = vld [vmem:[%s3] sm:$0xff]
        %v323 = vld [vmem:[%s3 + $0x8] sm:$0xff]
        %v324 = vld [vmem:[%s3 + $0x10] sm:$0xff]
        %v325 = vld [vmem:[%s3 + $0x18] sm:$0xff]
        %v326 = vld [vmem:[%s3 + $0x20] sm:$0xf]
        %vm327 = vcmp.gt.f32.partialorder %v322, 0.0
        %vm328 = vcmp.gt.f32.partialorder %v323, 0.0
        %vm329 = vcmp.gt.f32.partialorder %v324, 0.0
        %vm330 = vcmp.gt.f32.partialorder %v325, 0.0
        %vm331 = vcmp.gt.f32.partialorder %v326, 0.0
        %v332 = vsel %vm327, 1, 0
        %v333 = vsel %vm328, 1, 0
        %v334 = vsel %vm329, 1, 0
        %v335 = vsel %vm330, 1, 0
        %v336 = vsel %vm331, 1, 0
        %337 = vset.pattern.permute.xlu0 0
        %338 = vperm.xlu0 %337, %v332
        %v339 = vpop.permute.xlu0 %338
        %340 = vset.pattern.permute.xlu0 0
        %341 = vperm.xlu0 %340, %v333
        %v342 = vpop.permute.xlu0 %341
        %343 = vset.pattern.permute.xlu0 0
        %344 = vperm.xlu0 %343, %v334
        %v345 = vpop.permute.xlu0 %344
        %346 = vset.pattern.permute.xlu0 0
        %347 = vperm.xlu0 %346, %v335
        %v348 = vpop.permute.xlu0 %347
        %349 = vset.pattern.permute.xlu0 0
        %350 = vperm.xlu0 %349, %v336
        %v351 = vpop.permute.xlu0 %350
        %vm352 = vcmp.eq.s32.totalorder %v339, 1
        %vm353 = vcmp.eq.s32.totalorder %v342, 1
        %vm354 = vcmp.eq.s32.totalorder %v345, 1
        %vm355 = vcmp.eq.s32.totalorder %v348, 1
        %vm356 = vcmp.eq.s32.totalorder %v351, 1
        %v357 = vsel %vm352, %v317, 0.0
        %v358 = vsel %vm353, %v318, 0.0
        %v359 = vsel %vm354, %v319, 0.0
        %v360 = vsel %vm355, %v320, 0.0
        %v361 = vsel %vm356, %v321, 0.0
        %v362 = vpack.c.bf16 %v357, %v357
        %v363 = vpack.c.bf16 %v358, %v358
        %v364 = vpack.c.bf16 %v359, %v359
        %v365 = vpack.c.bf16 %v360, %v360
        %v366 = vpack.c.bf16 %v361, %v361
        %vm367 = vsmask.f32 7440
        %vm368 = vmor %vm271, %vm367
        %v370 = vshll.u32 %v362, 16
        %v372 = vrot.slane %v370, 5
        %v373 = vshrl.u32 %v362, 16
        %v375 = vrot.slane %v373, 4
        %v376 = vor.u32 %v375, %v372
        %v377 = vrot.slane %v376, 4
        %v379 = vshll.u32 %v363, 16
        %v381 = vrot.slane %v379, 5
        %v382 = vsel %vm368, %v377, %v381
        %v383 = vshrl.u32 %v363, 16
        %v385 = vrot.slane %v383, 4
        %v386 = vor.u32 %v385, %v381
        %v387 = vrot.slane %v386, 4
        %v389 = vshll.u32 %v364, 16
        %v391 = vrot.slane %v389, 5
        %v392 = vsel %vm368, %v387, %v391
        %v393 = vshrl.u32 %v364, 16
        %v395 = vrot.slane %v393, 4
        %v396 = vor.u32 %v395, %v391
        %v397 = vrot.slane %v396, 4
        %v399 = vshll.u32 %v365, 16
        %v401 = vrot.slane %v399, 5
        %v402 = vsel %vm368, %v397, %v401
        %v403 = vshrl.u32 %v365, 16
        %v405 = vrot.slane %v403, 4
        %v406 = vor.u32 %v405, %v401
        %v407 = vrot.slane %v406, 4
        %v409 = vshll.u32 %v366, 16
        %v411 = vrot.slane %v409, 5
        %v412 = vsel %vm368, %v407, %v411
        %v413 = vshrl.u32 %v366, 16
        %v415 = vrot.slane %v413, 4
        %v416 = vor.u32 %v415, %v411
        %v417 = vrot.slane %v416, 4
        %vm424 = vcmask 1043459
        %vm425 = vsmask.f32 7950
        %vm426 = vmand %vm424, %vm425
        %v427 = vld [vmem:[%s268] sm:$0x8]
        %v428 = vsel %vm426, %v372, %v427
        %429 = vst [vmem:[%s268] sm:$0x8] %v428
        %430 = vst [vmem:[%s268 + $0x4] sm:$0xf] %v382
        %431 = vst [vmem:[%s268 + $0x8] sm:$0xf] %v392
        %432 = vst [vmem:[%s268 + $0xc] sm:$0xf] %v402
        %433 = vst [vmem:[%s268 + $0x10] sm:$0xf] %v412
        %vm434 = vcmask 1041408
        %vm435 = vsmask.f32 1280
        %vm436 = vmand %vm434, %vm435
        %v437 = vld [vmem:[%s268 + $0x14] sm:$0x3]
        %v438 = vsel %vm436, %v417, %v437
        %439 = vst [vmem:[%s268 + $0x14] sm:$0x3] %v438
      $region40: #{basic_block_forward.5} parent=35 // pred_fallthru
        _
      %p440 = pneg %p286
      // Predicated region
      $region41: #{basic_block_forward.5} parent=35 // pred_check
        _
      $region42: #{basic_block_forward.5} parent=35 // pred_check_branch
        %442 = sbr.rel (%p286) target = $region44
      $region43: #{basic_block_forward.5} parent=35 // pred_region
        %vm443 = vcmask 1043459
        %vm444 = vsmask.f32 7950
        %vm445 = vmand %vm443, %vm444
        %v446 = vld [vmem:[%s268] sm:$0x8]
        %v447 = vsel %vm445, 0, %v446
        %448 = vst [vmem:[%s268] sm:$0x8] %v447
        %449 = vst [vmem:[%s268 + $0x4] sm:$0xf] 0
        %450 = vst [vmem:[%s268 + $0x8] sm:$0xf] 0
        %451 = vst [vmem:[%s268 + $0xc] sm:$0xf] 0
        %452 = vst [vmem:[%s268 + $0x10] sm:$0xf] 0
        %vm453 = vcmask 1041408
        %vm454 = vsmask.f32 1280
        %vm455 = vmand %vm453, %vm454
        %v456 = vld [vmem:[%s268 + $0x14] sm:$0x3]
        %v457 = vsel %vm455, 0, %v456
        %458 = vst [vmem:[%s268 + $0x14] sm:$0x3] %v457
      $region44: #{basic_block_forward.5} parent=35 // pred_fallthru
        _
      %p459 = scmp.lt.s32.totalorder %s19, 1
      %s460 = scalar_select %p459, %s19, 1
      %p461 = scmp.lt.s32.totalorder %s20, 5
      %s462 = scalar_select %p461, %s20, 5
      %s463 = smul.addr %s462, 7
      %s464 = smul.addr %s460, 42
      %s465 = sadd.s32 %s463, %s464
      %s466 = smul.addr %s465, 4
      %s467 = scalar_lea.vmem %s4, %s466
      // Predicated region
      $region45: #{basic_block_forward.5} parent=35 // pred_check
        %p468 = pneg %p148
      $region46: #{basic_block_forward.5} parent=35 // pred_check_branch
        %470 = sbr.rel (%p468) target = $region48
      $region47: #{basic_block_forward.5} parent=35 // pred_region
        _
      $region48: #{basic_block_forward.5} parent=35 // pred_fallthru
        _
    $region36: #{basic_block_forward.5} parent=5 // pred_fallthru
      _
    %p471 = scmp.le.s32.totalorder 2, %s10
    // Predicated region
    $region49: #{basic_block_forward.5} parent=5 // pred_check
      %p472 = pneg %p471
    $region50: #{basic_block_forward.5} parent=5 // pred_check_branch
      %474 = sbr.rel (%p472) target = $region52
    $region51: #{basic_block_forward.5} parent=5 // pred_region
      %s475 = ssub.s32 %s10, 2
      // Predicated region
      $region53: #{basic_block_forward.5} parent=51 // pred_check
        %p476 = pneg %p154
      $region54: #{basic_block_forward.5} parent=51 // pred_check_branch
        %478 = sbr.rel (%p476) target = $region56
      $region55: #{basic_block_forward.5} parent=51 // pred_region
        %p479 = scmp.lt.s32.totalorder %s21, 1
        %s480 = scalar_select %p479, %s21, 1
        %p481 = scmp.lt.s32.totalorder %s22, 5
        %s482 = scalar_select %p481, %s22, 5
        %s483 = smul.addr %s482, 7
        %s484 = smul.addr %s480, 42
        %s485 = sadd.s32 %s483, %s484
        %s486 = smul.addr %s485, 4
        %s487 = scalar_lea.vmem %s4, %s486
      $region56: #{basic_block_forward.5} parent=51 // pred_fallthru
        _
    $region52: #{basic_block_forward.5} parent=5 // pred_fallthru
      _
  $region6: #{basic_block_forward.5} parent=0 // loop_footer
    %s14 = sadd.s32 1, %s10
  $region7: #{basic_block_forward.5} parent=0 // loop_footer_branch
    %9 = sbr.rel target = $region3
  $region8: #{basic_block_forward.5} parent=0 // loop_exit
    _

// kernel: basic_block_forward.7
$region0: #{basic_block_forward.7}
  #allocation0 [shape = 'u32[]', space=smem, size = 0x4, offset = 0x4, fixed_abs, tag = 'smem constant byte address 0x4 - core index']
  #allocation1 [shape = 'u32[72,128]{1,0:T(1,128)}', space=vmem, size = 0x9000, scoped, tag = 'internal scratch']
  %s0 = inlined_call_operand.vmem [shape: bf16[2,4,36,128], index: 0, kind: input, shape index: {}]
  %s1 = inlined_call_operand.vmem [shape: f32[1,128], index: 1, kind: input, shape index: {}]
  %s2 = inlined_call_operand.vmem [shape: f32[1,128], index: 2, kind: input, shape index: {}]
  %s3 = inlined_call_operand.vmem [shape: f32[2,4,16,128], index: 3, kind: input, shape index: {}]
  %s4 = inlined_call_operand.vmem [shape: bf16[128,128], index: 4, kind: input, shape index: {}]
  %s5 = inlined_call_operand.vmem [shape: f32[1,128], index: 5, kind: input, shape index: {}]
  %s6 = inlined_call_operand.vmem [shape: f32[2,4,4,4,128], index: 6, kind: output, shape index: {}]
  %s7 = sld [smem:[#allocation0]]
  $region57: #{basic_block_forward.7} parent=0
    _
  %s9 = ssub.s32 1, %s7
  %s10 = scalar_select 0, %s9, %s7
  loop: start=0, step=1, limit=10
  $region2: #{basic_block_forward.7} parent=0 // loop_pre_header
    _
  $region3: #{basic_block_forward.7} parent=0 // loop_header
    %s12 = sphi 0, %s16
    %p13 = scmp.ge.s32.totalorder %s12, 10
    %s19 = sphi 0, %s31
    %s20 = sphi 0, %s27
    %s21 = sphi 0, %s19
    %s22 = sphi 0, %s20
    %s23 = sphi 0, %s21
    %s24 = sphi 0, %s22
    %s36 = sphi 0, %s38
    %s39 = sphi 0, %s36
    %s40 = sphi 0, %s39
    %s56 = sphi 0, %s40
    %s60 = sphi 0, %s60
    %s62 = sphi 0, %s60
    %s63 = sphi 0, %s62
    %s77 = sphi 0, %s63
    %s81 = sphi 0, %s81
    %s83 = sphi 0, %s81
    %s84 = sphi 0, %s83
    %s98 = sphi 0, %s84
    %s106 = sphi 0, %s108
    %s109 = sphi 0, %s106
    %s110 = sphi 0, %s109
    %s126 = sphi 0, %s110
    %s130 = sphi 0, %s130
    %s132 = sphi 0, %s130
    %s133 = sphi 0, %s132
    %s147 = sphi 0, %s133
    %s151 = sphi 0, %s151
    %s153 = sphi 0, %s151
    %s154 = sphi 0, %s153
    %s168 = sphi 0, %s154
    %s176 = sphi 0, %s178
    %s179 = sphi 0, %s176
    %s180 = sphi 0, %s179
    %s196 = sphi 0, %s180
  $region4: #{basic_block_forward.7} parent=0 // loop_header_branch
    %15 = sbr.rel (%p13) target = $region8
  $region5: #{basic_block_forward.7} parent=0 // loop_body
    %s17 = ssub.s32 %s12, 1
    %s18 = ssub.s32 %s12, 2
    %s25 = sadd.s32 1, %s20
    %p26 = scmp.ge.s32.totalorder %s25, 4
    %s27 = scalar_select %p26, 0, %s25
    %s28 = sadd.s32 1, %s19
    %s29 = scalar_select %p26, %s28, %s19
    %p30 = scmp.ge.s32.totalorder %s29, 2
    %s31 = scalar_select %p30, 0, %s29
    %s32 = ssub.s32 %s19, %s31
    %s33 = ssub.s32 %s20, %s27
    %s34 = sor.u32 %s32, %s33
    %p35 = scmp.eq.s32.totalorder %s34, 0
    %s37 = sadd.s32 %s36, 1
    %s38 = scalar_select %p35, %s36, %s37
    %p41 = pneg %p35
    %p42 = scmp.eq.s32.totalorder %s12, 7
    %p43 = por %p41, %p42
    %p44 = scmp.ne.s32.totalorder %s36, %s39
    %p45 = scmp.eq.s32.totalorder %s12, 0
    %p46 = por %p44, %p45
    %p47 = scmp.ne.s32.totalorder %s36, %s39
    %p48 = scmp.eq.s32.totalorder %s17, 7
    %p49 = por %p47, %p48
    %p50 = scmp.ne.s32.totalorder %s39, %s40
    %p51 = scmp.eq.s32.totalorder %s17, 0
    %p52 = por %p50, %p51
    %p53 = scmp.ne.s32.totalorder %s39, %s40
    %p54 = scmp.eq.s32.totalorder %s18, 7
    %p55 = por %p53, %p54
    %p57 = scmp.ne.s32.totalorder %s40, %s56
    %p58 = scmp.eq.s32.totalorder %s18, 0
    %p59 = por %p57, %p58
    %s61 = sadd.s32 %s60, 1
    %p64 = scmp.eq.s32.totalorder %s12, 7
    %p65 = scmp.ne.s32.totalorder %s60, %s62
    %p66 = scmp.eq.s32.totalorder %s12, 0
    %p67 = por %p65, %p66
    %p68 = scmp.ne.s32.totalorder %s60, %s62
    %p69 = scmp.eq.s32.totalorder %s17, 7
    %p70 = por %p68, %p69
    %p71 = scmp.ne.s32.totalorder %s62, %s63
    %p72 = scmp.eq.s32.totalorder %s17, 0
    %p73 = por %p71, %p72
    %p74 = scmp.ne.s32.totalorder %s62, %s63
    %p75 = scmp.eq.s32.totalorder %s18, 7
    %p76 = por %p74, %p75
    %p78 = scmp.ne.s32.totalorder %s63, %s77
    %p79 = scmp.eq.s32.totalorder %s18, 0
    %p80 = por %p78, %p79
    %s82 = sadd.s32 %s81, 1
    %p85 = scmp.eq.s32.totalorder %s12, 7
    %p86 = scmp.ne.s32.totalorder %s81, %s83
    %p87 = scmp.eq.s32.totalorder %s12, 0
    %p88 = por %p86, %p87
    %p89 = scmp.ne.s32.totalorder %s81, %s83
    %p90 = scmp.eq.s32.totalorder %s17, 7
    %p91 = por %p89, %p90
    %p92 = scmp.ne.s32.totalorder %s83, %s84
    %p93 = scmp.eq.s32.totalorder %s17, 0
    %p94 = por %p92, %p93
    %p95 = scmp.ne.s32.totalorder %s83, %s84
    %p96 = scmp.eq.s32.totalorder %s18, 7
    %p97 = por %p95, %p96
    %p99 = scmp.ne.s32.totalorder %s84, %s98
    %p100 = scmp.eq.s32.totalorder %s18, 0
    %p101 = por %p99, %p100
    %s102 = ssub.s32 %s19, %s31
    %s103 = ssub.s32 %s20, %s27
    %s104 = sor.u32 %s102, %s103
    %p105 = scmp.eq.s32.totalorder %s104, 0
    %s107 = sadd.s32 %s106, 1
    %s108 = scalar_select %p105, %s106, %s107
    %p111 = pneg %p105
    %p112 = scmp.eq.s32.totalorder %s12, 7
    %p113 = por %p111, %p112
    %p114 = scmp.ne.s32.totalorder %s106, %s109
    %p115 = scmp.eq.s32.totalorder %s12, 0
    %p116 = por %p114, %p115
    %p117 = scmp.ne.s32.totalorder %s106, %s109
    %p118 = scmp.eq.s32.totalorder %s17, 7
    %p119 = por %p117, %p118
    %p120 = scmp.ne.s32.totalorder %s109, %s110
    %p121 = scmp.eq.s32.totalorder %s17, 0
    %p122 = por %p120, %p121
    %p123 = scmp.ne.s32.totalorder %s109, %s110
    %p124 = scmp.eq.s32.totalorder %s18, 7
    %p125 = por %p123, %p124
    %p127 = scmp.ne.s32.totalorder %s110, %s126
    %p128 = scmp.eq.s32.totalorder %s18, 0
    %p129 = por %p127, %p128
    %s131 = sadd.s32 %s130, 1
    %p134 = scmp.eq.s32.totalorder %s12, 7
    %p135 = scmp.ne.s32.totalorder %s130, %s132
    %p136 = scmp.eq.s32.totalorder %s12, 0
    %p137 = por %p135, %p136
    %p138 = scmp.ne.s32.totalorder %s130, %s132
    %p139 = scmp.eq.s32.totalorder %s17, 7
    %p140 = por %p138, %p139
    %p141 = scmp.ne.s32.totalorder %s132, %s133
    %p142 = scmp.eq.s32.totalorder %s17, 0
    %p143 = por %p141, %p142
    %p144 = scmp.ne.s32.totalorder %s132, %s133
    %p145 = scmp.eq.s32.totalorder %s18, 7
    %p146 = por %p144, %p145
    %p148 = scmp.ne.s32.totalorder %s133, %s147
    %p149 = scmp.eq.s32.totalorder %s18, 0
    %p150 = por %p148, %p149
    %s152 = sadd.s32 %s151, 1
    %p155 = scmp.eq.s32.totalorder %s12, 7
    %p156 = scmp.ne.s32.totalorder %s151, %s153
    %p157 = scmp.eq.s32.totalorder %s12, 0
    %p158 = por %p156, %p157
    %p159 = scmp.ne.s32.totalorder %s151, %s153
    %p160 = scmp.eq.s32.totalorder %s17, 7
    %p161 = por %p159, %p160
    %p162 = scmp.ne.s32.totalorder %s153, %s154
    %p163 = scmp.eq.s32.totalorder %s17, 0
    %p164 = por %p162, %p163
    %p165 = scmp.ne.s32.totalorder %s153, %s154
    %p166 = scmp.eq.s32.totalorder %s18, 7
    %p167 = por %p165, %p166
    %p169 = scmp.ne.s32.totalorder %s154, %s168
    %p170 = scmp.eq.s32.totalorder %s18, 0
    %p171 = por %p169, %p170
    %s172 = ssub.s32 %s19, %s31
    %s173 = ssub.s32 %s20, %s27
    %s174 = sor.u32 %s172, %s173
    %p175 = scmp.eq.s32.totalorder %s174, 0
    %s177 = sadd.s32 %s176, 1
    %s178 = scalar_select %p175, %s176, %s177
    %p181 = pneg %p175
    %p182 = scmp.eq.s32.totalorder %s12, 7
    %p183 = por %p181, %p182
    %p184 = scmp.ne.s32.totalorder %s176, %s179
    %p185 = scmp.eq.s32.totalorder %s12, 0
    %p186 = por %p184, %p185
    %p187 = scmp.ne.s32.totalorder %s176, %s179
    %p188 = scmp.eq.s32.totalorder %s17, 7
    %p189 = por %p187, %p188
    %p190 = scmp.ne.s32.totalorder %s179, %s180
    %p191 = scmp.eq.s32.totalorder %s17, 0
    %p192 = por %p190, %p191
    %p193 = scmp.ne.s32.totalorder %s179, %s180
    %p194 = scmp.eq.s32.totalorder %s18, 7
    %p195 = por %p193, %p194
    %p197 = scmp.ne.s32.totalorder %s180, %s196
    %p198 = scmp.eq.s32.totalorder %s18, 0
    %p199 = por %p197, %p198
    %p200 = scmp.le.s32.totalorder 1, %s12
    %p201 = scmp.lt.s32.totalorder %s12, 9
    %p202 = pnand %p200, %p201
    %p203 = pneg %p202
    // Predicated region
    $region9: #{basic_block_forward.7} parent=5 // pred_check
      _
    $region10: #{basic_block_forward.7} parent=5 // pred_check_branch
      %205 = sbr.rel (%p202) target = $region12
    $region11: #{basic_block_forward.7} parent=5 // pred_region
      %s206 = ssub.s32 %s12, 1
      // Predicated region
      $region13: #{basic_block_forward.7} parent=11 // pred_check
        %p207 = pneg %p73
      $region14: #{basic_block_forward.7} parent=11 // pred_check_branch
        %209 = sbr.rel (%p207) target = $region16
      $region15: #{basic_block_forward.7} parent=11 // pred_region
        _
      $region16: #{basic_block_forward.7} parent=11 // pred_fallthru
        _
      // Predicated region
      $region17: #{basic_block_forward.7} parent=11 // pred_check
        %p210 = pneg %p94
      $region18: #{basic_block_forward.7} parent=11 // pred_check_branch
        %212 = sbr.rel (%p210) target = $region20
      $region19: #{basic_block_forward.7} parent=11 // pred_region
        _
      $region20: #{basic_block_forward.7} parent=11 // pred_fallthru
        _
      // Predicated region
      $region21: #{basic_block_forward.7} parent=11 // pred_check
        %p213 = pneg %p143
      $region22: #{basic_block_forward.7} parent=11 // pred_check_branch
        %215 = sbr.rel (%p213) target = $region24
      $region23: #{basic_block_forward.7} parent=11 // pred_region
        _
      $region24: #{basic_block_forward.7} parent=11 // pred_fallthru
        _
      // Predicated region
      $region25: #{basic_block_forward.7} parent=11 // pred_check
        %p216 = pneg %p164
      $region26: #{basic_block_forward.7} parent=11 // pred_check_branch
        %218 = sbr.rel (%p216) target = $region28
      $region27: #{basic_block_forward.7} parent=11 // pred_region
        _
      $region28: #{basic_block_forward.7} parent=11 // pred_fallthru
        _
    $region12: #{basic_block_forward.7} parent=5 // pred_fallthru
      _
    %p219 = scmp.lt.s32.totalorder %s12, 8
    // Predicated region
    $region29: #{basic_block_forward.7} parent=5 // pred_check
      %p220 = pneg %p219
    $region30: #{basic_block_forward.7} parent=5 // pred_check_branch
      %222 = sbr.rel (%p220) target = $region32
    $region31: #{basic_block_forward.7} parent=5 // pred_region
      // Predicated region
      $region33: #{basic_block_forward.7} parent=31 // pred_check
        %p223 = pneg %p46
      $region34: #{basic_block_forward.7} parent=31 // pred_check_branch
        %225 = sbr.rel (%p223) target = $region36
      $region35: #{basic_block_forward.7} parent=31 // pred_region
        %p226 = scmp.lt.s32.totalorder %s19, 1
        %s227 = scalar_select %p226, %s19, 1
        %p228 = scmp.lt.s32.totalorder %s20, 3
        %s229 = scalar_select %p228, %s20, 3
        %s230 = smul.addr %s229, 5
        %s231 = smul.addr %s227, 20
        %s232 = sadd.s32 %s230, %s231
        %s233 = smul.addr %s232, 4
        %s234 = scalar_lea.vmem %s0, %s233
      $region36: #{basic_block_forward.7} parent=31 // pred_fallthru
        _
      // Predicated region
      $region37: #{basic_block_forward.7} parent=31 // pred_check
        %p235 = pneg %p116
      $region38: #{basic_block_forward.7} parent=31 // pred_check_branch
        %237 = sbr.rel (%p235) target = $region40
      $region39: #{basic_block_forward.7} parent=31 // pred_region
        %p238 = scmp.lt.s32.totalorder %s19, 1
        %s239 = scalar_select %p238, %s19, 1
        %p240 = scmp.lt.s32.totalorder %s20, 3
        %s241 = scalar_select %p240, %s20, 3
        %s242 = smul.addr %s241, 2
        %s243 = smul.addr %s239, 8
        %s244 = sadd.s32 %s242, %s243
        %s245 = smul.addr %s244, 8
        %s246 = scalar_lea.vmem %s3, %s245
      $region40: #{basic_block_forward.7} parent=31 // pred_fallthru
        _
    $region32: #{basic_block_forward.7} parent=5 // pred_fallthru
      _
    %p247 = scmp.le.s32.totalorder 1, %s12
    %p248 = scmp.lt.s32.totalorder %s12, 9
    %p249 = pnand %p247, %p248
    %p250 = pneg %p249
    // Predicated region
    $region41: #{basic_block_forward.7} parent=5 // pred_check
      _
    $region42: #{basic_block_forward.7} parent=5 // pred_check_branch
      %252 = sbr.rel (%p249) target = $region44
    $region43: #{basic_block_forward.7} parent=5 // pred_region
      %s253 = ssub.s32 %s12, 1
      %p254 = scmp.lt.s32.totalorder %s21, 1
      %s255 = scalar_select %p254, %s21, 1
      %p256 = scmp.lt.s32.totalorder %s22, 3
      %s257 = scalar_select %p256, %s22, 3
      %s258 = smul.addr %s257, 5
      %s259 = smul.addr %s255, 20
      %s260 = sadd.s32 %s258, %s259
      %s261 = smul.addr %s260, 4
      %s262 = scalar_lea.vmem %s0, %s261
      %p263 = pneg %p52
      %p264 = pneg %p49
      %p265 = pneg %p73
      %p266 = pneg %p70
      %p267 = pneg %p94
      %p268 = pneg %p91
      %p269 = scmp.lt.s32.totalorder %s21, 1
      %s270 = scalar_select %p269, %s21, 1
      %p271 = scmp.lt.s32.totalorder %s22, 3
      %s272 = scalar_select %p271, %s22, 3
      %s273 = smul.addr %s272, 2
      %s274 = smul.addr %s270, 8
      %s275 = sadd.s32 %s273, %s274
      %s276 = smul.addr %s275, 8
      %s277 = scalar_lea.vmem %s3, %s276
      %p278 = pneg %p122
      %p279 = pneg %p119
      %p280 = pneg %p143
      %p281 = pneg %p140
      %p282 = pneg %p164
      %p283 = pneg %p161
      %p284 = pneg %p192
      %p285 = pneg %p189
      %p286 = scmp.lt.s32.totalorder %s21, 1
      %s287 = scalar_select %p286, %s21, 1
      %p288 = scmp.lt.s32.totalorder %s22, 3
      %s289 = scalar_select %p288, %s22, 3
      %s290 = smul.addr %s289, 4
      %s291 = smul.addr %s287, 16
      %s292 = sadd.s32 %s290, %s291
      %s293 = smul.addr %s292, 4
      %s294 = scalar_lea.vmem %s6, %s293
      %p295 = scmp.lt.s32.totalorder %s21, 1
      %s296 = scalar_select %p295, %s21, 1
      %p297 = scmp.lt.s32.totalorder %s22, 3
      %s298 = scalar_select %p297, %s22, 3
      %s299 = smul.addr %s298, 5
      %s300 = smul.addr %s296, 20
      %s301 = sadd.s32 %s299, %s300
      %s302 = smul.addr %s301, 4
      %s303 = scalar_lea.vmem %s0, %s302
      %p304 = scmp.lt.s32.totalorder %s21, 1
      %s305 = scalar_select %p304, %s21, 1
      %p306 = scmp.lt.s32.totalorder %s22, 3
      %s307 = scalar_select %p306, %s22, 3
      %s308 = smul.addr %s307, 2
      %s309 = smul.addr %s305, 8
      %s310 = sadd.s32 %s308, %s309
      %s311 = smul.addr %s310, 8
      %s312 = scalar_lea.vmem %s3, %s311
      %p313 = scmp.lt.s32.totalorder %s21, 1
      %s314 = scalar_select %p313, %s21, 1
      %p315 = scmp.lt.s32.totalorder %s22, 3
      %s316 = scalar_select %p315, %s22, 3
      %s317 = smul.addr %s316, 4
      %s318 = smul.addr %s314, 16
      %s319 = sadd.s32 %s317, %s318
      %s320 = smul.addr %s319, 4
      %s321 = scalar_lea.vmem %s6, %s320
      %v322 = vld [vmem:[%s312] sm:$0xff]
      %v323 = vld [vmem:[%s312 + $0x8] sm:$0xff]
      %v324 = vpack.c.bf16 %v323, %v322
      %v325 = vld [vmem:[%s4] sm:$0xf]
      %v326 = vld [vmem:[%s4 + $0x4] sm:$0xf]
      %v327 = vld [vmem:[%s4 + $0x8] sm:$0xf]
      %v328 = vld [vmem:[%s4 + $0xc] sm:$0xf]
      %v329 = vld [vmem:[%s4 + $0x10] sm:$0xf]
      %v330 = vld [vmem:[%s4 + $0x14] sm:$0xf]
      %v331 = vld [vmem:[%s4 + $0x18] sm:$0xf]
      %v332 = vld [vmem:[%s4 + $0x1c] sm:$0xf]
      %v333 = vld [vmem:[%s4 + $0x20] sm:$0xf]
      %v334 = vld [vmem:[%s4 + $0x24] sm:$0xf]
      %v335 = vld [vmem:[%s4 + $0x28] sm:$0xf]
      %v336 = vld [vmem:[%s4 + $0x2c] sm:$0xf]
      %v337 = vld [vmem:[%s4 + $0x30] sm:$0xf]
      %v338 = vld [vmem:[%s4 + $0x34] sm:$0xf]
      %v339 = vld [vmem:[%s4 + $0x38] sm:$0xf]
      %v340 = vld [vmem:[%s4 + $0x3c] sm:$0xf]
      %v341 = vld [vmem:[%s5] sm:$0x1]
      %v343 = vperm.slane %v341, 0
      %v361 = vunpack.c.l.b16 %v325
      %v362 = vunpack.c.l.b16 %v326
      %v363 = vunpack.c.l.b16 %v327
      %v364 = vunpack.c.l.b16 %v328
      %v365 = vunpack.c.l.b16 %v329
      %v366 = vunpack.c.l.b16 %v330
      %v367 = vunpack.c.l.b16 %v331
      %v368 = vunpack.c.l.b16 %v332
      %v369 = vunpack.c.l.b16 %v333
      %v370 = vunpack.c.l.b16 %v334
      %v371 = vunpack.c.l.b16 %v335
      %v372 = vunpack.c.l.b16 %v336
      %v373 = vunpack.c.l.b16 %v337
      %v374 = vunpack.c.l.b16 %v338
      %v375 = vunpack.c.l.b16 %v339
      %v376 = vunpack.c.l.b16 %v340
      %v377 = vpack.c.b16 %v362, %v361
      %v378 = vpack.c.b16 %v364, %v363
      %v379 = vpack.c.b16 %v366, %v365
      %v380 = vpack.c.b16 %v368, %v367
      %v381 = vpack.c.b16 %v370, %v369
      %v382 = vpack.c.b16 %v372, %v371
      %v383 = vpack.c.b16 %v374, %v373
      %v384 = vpack.c.b16 %v376, %v375
      %393 = vmatpush.bf16.msra.mxu0 %v384
      %394 = vmatpush.bf16.msra.mxu0 %v383
      %395 = vmatpush.bf16.msra.mxu0 %v382
      %396 = vmatpush.bf16.msra.mxu0 %v381
      %397 = vmatpush.bf16.msra.mxu0 %v380
      %398 = vmatpush.bf16.msra.mxu0 %v379
      %399 = vmatpush.bf16.msra.mxu0 %v378
      %400 = vmatpush.bf16.msra.mxu0 %v377
      %401 = vmatmul.bf16.gmra.mxu0 %v324
      %v402 = vpop.f32.mrf.mxu0
      %v403 = vadd.f32 %v343, %v402
      %v404 = vpop.f32.mrf.mxu0
      %v405 = vadd.f32 %v343, %v404
      %406 = vdwg.mxu0
      %v407 = vld [vmem:[%s303] sm:$0xf]
      %v408 = vld [vmem:[%s303 + $0x4] sm:$0xf]
      %v409 = vld [vmem:[%s303 + $0x8] sm:$0xf]
      %v410 = vld [vmem:[%s303 + $0xc] sm:$0xf]
      %v411 = vunpack.c.l.bf16 %v407
      %v412 = vunpack.c.l.bf16 %v408
      %v413 = vunpack.c.l.bf16 %v409
      %v414 = vunpack.c.l.bf16 %v410
      %v415 = vld [vmem:[%s1] sm:$0x1]
      %v417 = vperm.slane %v415, 0
      %v419 = vmul.f32 %v411, %v417
      %v420 = vmul.f32 %v412, %v417
      %v421 = vmul.f32 %v413, %v417
      %v422 = vmul.f32 %v414, %v417
      %v423 = vld [vmem:[%s2] sm:$0x1]
      %v425 = vperm.slane %v423, 0
      %v427 = vadd.f32 %v419, %v425
      %v428 = vadd.f32 %v420, %v425
      %v429 = vadd.f32 %v421, %v425
      %v430 = vadd.f32 %v422, %v425
      %v432 = vrot.slane %v403, 1
      %v434 = vadd.f32 %v427, %v432
      %v435 = vadd.f32 %v428, %v432
      %v436 = vmax.f32 %v434, 0.0
      %v437 = vmax.f32 %v435, 0.0
      %438 = vst [vmem:[%s321 - $0x7] sm:$0x80] %v436
      %439 = vst [vmem:[%s321 + $0x1] sm:$0x7] %v437
      %v440 = vrot.slane %v403, 7
      %v442 = vadd.f32 %v428, %v440
      %v443 = vadd.f32 %v429, %v440
      %v444 = vmax.f32 %v442, 0.0
      %v445 = vmax.f32 %v443, 0.0
      %s446 = scalar_lea.vmem %s321, 4
      %447 = vst [vmem:[%s446 - $0x5] sm:$0xe0] %v444
      %448 = vst [vmem:[%s446 + $0x3] sm:$0x1] %v445
      %v450 = vrot.slane %v405, 5
      %v452 = vadd.f32 %v429, %v450
      %v453 = vmax.f32 %v452, 0.0
      %s454 = scalar_lea.vmem %s321, 8
      %455 = vst [vmem:[%s454 - $0x3] sm:$0x78] %v453
      %v456 = vrot.slane %v405, 3
      %v458 = vadd.f32 %v430, %v456
      %v459 = vmax.f32 %v458, 0.0
      %s460 = scalar_lea.vmem %s321, 12
      %461 = vst [vmem:[%s460 - $0x1] sm:$0x1e] %v459
      %p462 = scmp.lt.s32.totalorder %s21, 1
      %s463 = scalar_select %p462, %s21, 1
      %p464 = scmp.lt.s32.totalorder %s22, 3
      %s465 = scalar_select %p464, %s22, 3
      %s466 = smul.addr %s465, 4
      %s467 = smul.addr %s463, 16
      %s468 = sadd.s32 %s466, %s467
      %s469 = smul.addr %s468, 4
      %s470 = scalar_lea.vmem %s6, %s469
      // Predicated region
      $region45: #{basic_block_forward.7} parent=43 // pred_check
        %p471 = pneg %p189
      $region46: #{basic_block_forward.7} parent=43 // pred_check_branch
        %473 = sbr.rel (%p471) target = $region48
      $region47: #{basic_block_forward.7} parent=43 // pred_region
        _
      $region48: #{basic_block_forward.7} parent=43 // pred_fallthru
        _
    $region44: #{basic_block_forward.7} parent=5 // pred_fallthru
      _
    %p474 = scmp.le.s32.totalorder 2, %s12
    // Predicated region
    $region49: #{basic_block_forward.7} parent=5 // pred_check
      %p475 = pneg %p474
    $region50: #{basic_block_forward.7} parent=5 // pred_check_branch
      %477 = sbr.rel (%p475) target = $region52
    $region51: #{basic_block_forward.7} parent=5 // pred_region
      %s478 = ssub.s32 %s12, 2
      // Predicated region
      $region53: #{basic_block_forward.7} parent=51 // pred_check
        %p479 = pneg %p195
      $region54: #{basic_block_forward.7} parent=51 // pred_check_branch
        %481 = sbr.rel (%p479) target = $region56
      $region55: #{basic_block_forward.7} parent=51 // pred_region
        %p482 = scmp.lt.s32.totalorder %s23, 1
        %s483 = scalar_select %p482, %s23, 1
        %p484 = scmp.lt.s32.totalorder %s24, 3
        %s485 = scalar_select %p484, %s24, 3
        %s486 = smul.addr %s485, 4
        %s487 = smul.addr %s483, 16
        %s488 = sadd.s32 %s486, %s487
        %s489 = smul.addr %s488, 4
        %s490 = scalar_lea.vmem %s6, %s489
      $region56: #{basic_block_forward.7} parent=51 // pred_fallthru
        _
    $region52: #{basic_block_forward.7} parent=5 // pred_fallthru
      _
  $region6: #{basic_block_forward.7} parent=0 // loop_footer
    %s16 = sadd.s32 1, %s12
  $region7: #{basic_block_forward.7} parent=0 // loop_footer_branch
    %11 = sbr.rel target = $region3
  $region8: #{basic_block_forward.7} parent=0 // loop_exit
    _

// kernel: basic_block_forward.4
$region0: #{basic_block_forward.4}
  #allocation0 [shape = 'u32[]', space=smem, size = 0x4, offset = 0x4, fixed_abs, tag = 'smem constant byte address 0x4 - core index']
  #allocation1 [shape = 'u32[72,128]{1,0:T(1,128)}', space=vmem, size = 0x9000, scoped, tag = 'internal scratch']
  %s0 = inlined_call_operand.vmem [shape: bf16[2,6,50,128], index: 0, kind: input, shape index: {}, may-alias: {0,1,2,3}]
  %s1 = inlined_call_operand.vmem [shape: bf16[2,6,50,128], index: 1, kind: input, shape index: {}, may-alias: {0,1,2,3}]
  %s2 = inlined_call_operand.vmem [shape: bf16[2,6,50,128], index: 2, kind: input, shape index: {}, may-alias: {0,1,2,3}]
  %s3 = inlined_call_operand.vmem [shape: bf16[2,6,50,128], index: 3, kind: input, shape index: {}, may-alias: {0,1,2,3}]
  %s4 = inlined_call_operand.vmem [shape: bf16[3456,128], index: 4, kind: input, shape index: {}]
  %s5 = inlined_call_operand.vmem [shape: f32[1,128], index: 5, kind: input, shape index: {}]
  %s6 = inlined_call_operand.vmem [shape: f32[36,1], index: 6, kind: input, shape index: {}]
  %s7 = inlined_call_operand.vmem [shape: bf16[2,4,36,128], index: 7, kind: output, shape index: {0}]
  %s8 = inlined_call_operand.vmem [shape: f32[2,4,2,128], index: 8, kind: output, shape index: {1}]
  %9 = xla_tuple %s7, %s8
  %s10 = sld [smem:[#allocation0]]
  $region69: #{basic_block_forward.4} parent=0
    _
  %s12 = ssub.s32 1, %s10
  %s13 = scalar_select 0, %s12, %s10
  loop: start=0, step=1, limit=6
  $region2: #{basic_block_forward.4} parent=0 // loop_pre_header
    _
  $region3: #{basic_block_forward.4} parent=0 // loop_header
    %s15 = sphi 0, %s19
    %p16 = scmp.ge.s32.totalorder %s15, 6
    %s22 = sphi 0, %s34
    %s23 = sphi 0, %s30
    %s24 = sphi 0, %s22
    %s25 = sphi 0, %s23
    %s26 = sphi 0, %s24
    %s27 = sphi 0, %s25
    %s41 = sphi 0, %s43
    %s44 = sphi 0, %s41
    %s45 = sphi 0, %s44
    %s61 = sphi 0, %s45
    %s73 = sphi 0, %s75
    %s76 = sphi 0, %s73
    %s77 = sphi 0, %s76
    %s93 = sphi 0, %s77
    %s105 = sphi 0, %s107
    %s108 = sphi 0, %s105
    %s109 = sphi 0, %s108
    %s125 = sphi 0, %s109
    %s137 = sphi 0, %s139
    %s140 = sphi 0, %s137
    %s141 = sphi 0, %s140
    %s157 = sphi 0, %s141
    %s161 = sphi 0, %s161
    %s163 = sphi 0, %s161
    %s164 = sphi 0, %s163
    %s178 = sphi 0, %s164
    %s182 = sphi 0, %s182
    %s184 = sphi 0, %s182
    %s185 = sphi 0, %s184
    %s199 = sphi 0, %s185
    %s203 = sphi 0, %s203
    %s205 = sphi 0, %s203
    %s206 = sphi 0, %s205
    %s220 = sphi 0, %s206
    %s228 = sphi 0, %s230
    %s231 = sphi 0, %s228
    %s232 = sphi 0, %s231
    %s248 = sphi 0, %s232
    %s256 = sphi 0, %s258
    %s259 = sphi 0, %s256
    %s260 = sphi 0, %s259
    %s276 = sphi 0, %s260
  $region4: #{basic_block_forward.4} parent=0 // loop_header_branch
    %18 = sbr.rel (%p16) target = $region8
  $region5: #{basic_block_forward.4} parent=0 // loop_body
    %s20 = ssub.s32 %s15, 1
    %s21 = ssub.s32 %s15, 2
    %s28 = sadd.s32 1, %s23
    %p29 = scmp.ge.s32.totalorder %s28, 2
    %s30 = scalar_select %p29, 0, %s28
    %s31 = sadd.s32 1, %s22
    %s32 = scalar_select %p29, %s31, %s22
    %p33 = scmp.ge.s32.totalorder %s32, 2
    %s34 = scalar_select %p33, 0, %s32
    %s35 = smul.u32 %s23, 2
    %s36 = smul.u32 %s30, 2
    %s37 = ssub.s32 %s22, %s34
    %s38 = ssub.s32 %s35, %s36
    %s39 = sor.u32 %s37, %s38
    %p40 = scmp.eq.s32.totalorder %s39, 0
    %s42 = sadd.s32 %s41, 1
    %s43 = scalar_select %p40, %s41, %s42
    %p46 = pneg %p40
    %p47 = scmp.eq.s32.totalorder %s15, 3
    %p48 = por %p46, %p47
    %p49 = scmp.ne.s32.totalorder %s41, %s44
    %p50 = scmp.eq.s32.totalorder %s15, 0
    %p51 = por %p49, %p50
    %p52 = scmp.ne.s32.totalorder %s41, %s44
    %p53 = scmp.eq.s32.totalorder %s20, 3
    %p54 = por %p52, %p53
    %p55 = scmp.ne.s32.totalorder %s44, %s45
    %p56 = scmp.eq.s32.totalorder %s20, 0
    %p57 = por %p55, %p56
    %p58 = scmp.ne.s32.totalorder %s44, %s45
    %p59 = scmp.eq.s32.totalorder %s21, 3
    %p60 = por %p58, %p59
    %p62 = scmp.ne.s32.totalorder %s45, %s61
    %p63 = scmp.eq.s32.totalorder %s21, 0
    %p64 = por %p62, %p63
    %s65 = smul.u32 %s23, 2
    %s66 = sadd.s32 %s65, 1
    %s67 = smul.u32 %s30, 2
    %s68 = sadd.s32 %s67, 1
    %s69 = ssub.s32 %s22, %s34
    %s70 = ssub.s32 %s66, %s68
    %s71 = sor.u32 %s69, %s70
    %p72 = scmp.eq.s32.totalorder %s71, 0
    %s74 = sadd.s32 %s73, 1
    %s75 = scalar_select %p72, %s73, %s74
    %p78 = pneg %p72
    %p79 = scmp.eq.s32.totalorder %s15, 3
    %p80 = por %p78, %p79
    %p81 = scmp.ne.s32.totalorder %s73, %s76
    %p82 = scmp.eq.s32.totalorder %s15, 0
    %p83 = por %p81, %p82
    %p84 = scmp.ne.s32.totalorder %s73, %s76
    %p85 = scmp.eq.s32.totalorder %s20, 3
    %p86 = por %p84, %p85
    %p87 = scmp.ne.s32.totalorder %s76, %s77
    %p88 = scmp.eq.s32.totalorder %s20, 0
    %p89 = por %p87, %p88
    %p90 = scmp.ne.s32.totalorder %s76, %s77
    %p91 = scmp.eq.s32.totalorder %s21, 3
    %p92 = por %p90, %p91
    %p94 = scmp.ne.s32.totalorder %s77, %s93
    %p95 = scmp.eq.s32.totalorder %s21, 0
    %p96 = por %p94, %p95
    %s97 = smul.u32 %s23, 2
    %s98 = sadd.s32 %s97, 2
    %s99 = smul.u32 %s30, 2
    %s100 = sadd.s32 %s99, 2
    %s101 = ssub.s32 %s22, %s34
    %s102 = ssub.s32 %s98, %s100
    %s103 = sor.u32 %s101, %s102
    %p104 = scmp.eq.s32.totalorder %s103, 0
    %s106 = sadd.s32 %s105, 1
    %s107 = scalar_select %p104, %s105, %s106
    %p110 = pneg %p104
    %p111 = scmp.eq.s32.totalorder %s15, 3
    %p112 = por %p110, %p111
    %p113 = scmp.ne.s32.totalorder %s105, %s108
    %p114 = scmp.eq.s32.totalorder %s15, 0
    %p115 = por %p113, %p114
    %p116 = scmp.ne.s32.totalorder %s105, %s108
    %p117 = scmp.eq.s32.totalorder %s20, 3
    %p118 = por %p116, %p117
    %p119 = scmp.ne.s32.totalorder %s108, %s109
    %p120 = scmp.eq.s32.totalorder %s20, 0
    %p121 = por %p119, %p120
    %p122 = scmp.ne.s32.totalorder %s108, %s109
    %p123 = scmp.eq.s32.totalorder %s21, 3
    %p124 = por %p122, %p123
    %p126 = scmp.ne.s32.totalorder %s109, %s125
    %p127 = scmp.eq.s32.totalorder %s21, 0
    %p128 = por %p126, %p127
    %s129 = smul.u32 %s23, 2
    %s130 = sadd.s32 %s129, 3
    %s131 = smul.u32 %s30, 2
    %s132 = sadd.s32 %s131, 3
    %s133 = ssub.s32 %s22, %s34
    %s134 = ssub.s32 %s130, %s132
    %s135 = sor.u32 %s133, %s134
    %p136 = scmp.eq.s32.totalorder %s135, 0
    %s138 = sadd.s32 %s137, 1
    %s139 = scalar_select %p136, %s137, %s138
    %p142 = pneg %p136
    %p143 = scmp.eq.s32.totalorder %s15, 3
    %p144 = por %p142, %p143
    %p145 = scmp.ne.s32.totalorder %s137, %s140
    %p146 = scmp.eq.s32.totalorder %s15, 0
    %p147 = por %p145, %p146
    %p148 = scmp.ne.s32.totalorder %s137, %s140
    %p149 = scmp.eq.s32.totalorder %s20, 3
    %p150 = por %p148, %p149
    %p151 = scmp.ne.s32.totalorder %s140, %s141
    %p152 = scmp.eq.s32.totalorder %s20, 0
    %p153 = por %p151, %p152
    %p154 = scmp.ne.s32.totalorder %s140, %s141
    %p155 = scmp.eq.s32.totalorder %s21, 3
    %p156 = por %p154, %p155
    %p158 = scmp.ne.s32.totalorder %s141, %s157
    %p159 = scmp.eq.s32.totalorder %s21, 0
    %p160 = por %p158, %p159
    %s162 = sadd.s32 %s161, 1
    %p165 = scmp.eq.s32.totalorder %s15, 3
    %p166 = scmp.ne.s32.totalorder %s161, %s163
    %p167 = scmp.eq.s32.totalorder %s15, 0
    %p168 = por %p166, %p167
    %p169 = scmp.ne.s32.totalorder %s161, %s163
    %p170 = scmp.eq.s32.totalorder %s20, 3
    %p171 = por %p169, %p170
    %p172 = scmp.ne.s32.totalorder %s163, %s164
    %p173 = scmp.eq.s32.totalorder %s20, 0
    %p174 = por %p172, %p173
    %p175 = scmp.ne.s32.totalorder %s163, %s164
    %p176 = scmp.eq.s32.totalorder %s21, 3
    %p177 = por %p175, %p176
    %p179 = scmp.ne.s32.totalorder %s164, %s178
    %p180 = scmp.eq.s32.totalorder %s21, 0
    %p181 = por %p179, %p180
    %s183 = sadd.s32 %s182, 1
    %p186 = scmp.eq.s32.totalorder %s15, 3
    %p187 = scmp.ne.s32.totalorder %s182, %s184
    %p188 = scmp.eq.s32.totalorder %s15, 0
    %p189 = por %p187, %p188
    %p190 = scmp.ne.s32.totalorder %s182, %s184
    %p191 = scmp.eq.s32.totalorder %s20, 3
    %p192 = por %p190, %p191
    %p193 = scmp.ne.s32.totalorder %s184, %s185
    %p194 = scmp.eq.s32.totalorder %s20, 0
    %p195 = por %p193, %p194
    %p196 = scmp.ne.s32.totalorder %s184, %s185
    %p197 = scmp.eq.s32.totalorder %s21, 3
    %p198 = por %p196, %p197
    %p200 = scmp.ne.s32.totalorder %s185, %s199
    %p201 = scmp.eq.s32.totalorder %s21, 0
    %p202 = por %p200, %p201
    %s204 = sadd.s32 %s203, 1
    %p207 = scmp.eq.s32.totalorder %s15, 3
    %p208 = scmp.ne.s32.totalorder %s203, %s205
    %p209 = scmp.eq.s32.totalorder %s15, 0
    %p210 = por %p208, %p209
    %p211 = scmp.ne.s32.totalorder %s203, %s205
    %p212 = scmp.eq.s32.totalorder %s20, 3
    %p213 = por %p211, %p212
    %p214 = scmp.ne.s32.totalorder %s205, %s206
    %p215 = scmp.eq.s32.totalorder %s20, 0
    %p216 = por %p214, %p215
    %p217 = scmp.ne.s32.totalorder %s205, %s206
    %p218 = scmp.eq.s32.totalorder %s21, 3
    %p219 = por %p217, %p218
    %p221 = scmp.ne.s32.totalorder %s206, %s220
    %p222 = scmp.eq.s32.totalorder %s21, 0
    %p223 = por %p221, %p222
    %s224 = ssub.s32 %s22, %s34
    %s225 = ssub.s32 %s23, %s30
    %s226 = sor.u32 %s224, %s225
    %p227 = scmp.eq.s32.totalorder %s226, 0
    %s229 = sadd.s32 %s228, 1
    %s230 = scalar_select %p227, %s228, %s229
    %p233 = pneg %p227
    %p234 = scmp.eq.s32.totalorder %s15, 3
    %p235 = por %p233, %p234
    %p236 = scmp.ne.s32.totalorder %s228, %s231
    %p237 = scmp.eq.s32.totalorder %s15, 0
    %p238 = por %p236, %p237
    %p239 = scmp.ne.s32.totalorder %s228, %s231
    %p240 = scmp.eq.s32.totalorder %s20, 3
    %p241 = por %p239, %p240
    %p242 = scmp.ne.s32.totalorder %s231, %s232
    %p243 = scmp.eq.s32.totalorder %s20, 0
    %p244 = por %p242, %p243
    %p245 = scmp.ne.s32.totalorder %s231, %s232
    %p246 = scmp.eq.s32.totalorder %s21, 3
    %p247 = por %p245, %p246
    %p249 = scmp.ne.s32.totalorder %s232, %s248
    %p250 = scmp.eq.s32.totalorder %s21, 0
    %p251 = por %p249, %p250
    %s252 = ssub.s32 %s22, %s34
    %s253 = ssub.s32 %s23, %s30
    %s254 = sor.u32 %s252, %s253
    %p255 = scmp.eq.s32.totalorder %s254, 0
    %s257 = sadd.s32 %s256, 1
    %s258 = scalar_select %p255, %s256, %s257
    %p261 = pneg %p255
    %p262 = scmp.eq.s32.totalorder %s15, 3
    %p263 = por %p261, %p262
    %p264 = scmp.ne.s32.totalorder %s256, %s259
    %p265 = scmp.eq.s32.totalorder %s15, 0
    %p266 = por %p264, %p265
    %p267 = scmp.ne.s32.totalorder %s256, %s259
    %p268 = scmp.eq.s32.totalorder %s20, 3
    %p269 = por %p267, %p268
    %p270 = scmp.ne.s32.totalorder %s259, %s260
    %p271 = scmp.eq.s32.totalorder %s20, 0
    %p272 = por %p270, %p271
    %p273 = scmp.ne.s32.totalorder %s259, %s260
    %p274 = scmp.eq.s32.totalorder %s21, 3
    %p275 = por %p273, %p274
    %p277 = scmp.ne.s32.totalorder %s260, %s276
    %p278 = scmp.eq.s32.totalorder %s21, 0
    %p279 = por %p277, %p278
    %p280 = scmp.le.s32.totalorder 1, %s15
    %p281 = scmp.lt.s32.totalorder %s15, 5
    %p282 = pnand %p280, %p281
    %p283 = pneg %p282
    // Predicated region
    $region9: #{basic_block_forward.4} parent=5 // pred_check
      _
    $region10: #{basic_block_forward.4} parent=5 // pred_check_branch
      %285 = sbr.rel (%p282) target = $region12
    $region11: #{basic_block_forward.4} parent=5 // pred_region
      %s286 = ssub.s32 %s15, 1
      // Predicated region
      $region13: #{basic_block_forward.4} parent=11 // pred_check
        %p287 = pneg %p174
      $region14: #{basic_block_forward.4} parent=11 // pred_check_branch
        %289 = sbr.rel (%p287) target = $region16
      $region15: #{basic_block_forward.4} parent=11 // pred_region
        _
      $region16: #{basic_block_forward.4} parent=11 // pred_fallthru
        _
      // Predicated region
      $region17: #{basic_block_forward.4} parent=11 // pred_check
        %p290 = pneg %p195
      $region18: #{basic_block_forward.4} parent=11 // pred_check_branch
        %292 = sbr.rel (%p290) target = $region20
      $region19: #{basic_block_forward.4} parent=11 // pred_region
        _
      $region20: #{basic_block_forward.4} parent=11 // pred_fallthru
        _
      // Predicated region
      $region21: #{basic_block_forward.4} parent=11 // pred_check
        %p293 = pneg %p216
      $region22: #{basic_block_forward.4} parent=11 // pred_check_branch
        %295 = sbr.rel (%p293) target = $region24
      $region23: #{basic_block_forward.4} parent=11 // pred_region
        _
      $region24: #{basic_block_forward.4} parent=11 // pred_fallthru
        _
    $region12: #{basic_block_forward.4} parent=5 // pred_fallthru
      _
    %p296 = scmp.lt.s32.totalorder %s15, 4
    // Predicated region
    $region25: #{basic_block_forward.4} parent=5 // pred_check
      %p297 = pneg %p296
    $region26: #{basic_block_forward.4} parent=5 // pred_check_branch
      %299 = sbr.rel (%p297) target = $region28
    $region27: #{basic_block_forward.4} parent=5 // pred_region
      // Predicated region
      $region29: #{basic_block_forward.4} parent=27 // pred_check
        %p300 = pneg %p51
      $region30: #{basic_block_forward.4} parent=27 // pred_check_branch
        %302 = sbr.rel (%p300) target = $region32
      $region31: #{basic_block_forward.4} parent=27 // pred_region
        %s303 = smul.u32 %s23, 2
        %p304 = scmp.lt.s32.totalorder %s22, 1
        %s305 = scalar_select %p304, %s22, 1
        %p306 = scmp.lt.s32.totalorder %s303, 5
        %s307 = scalar_select %p306, %s303, 5
        %s308 = smul.addr %s307, 7
        %s309 = smul.addr %s305, 42
        %s310 = sadd.s32 %s308, %s309
        %s311 = smul.addr %s310, 4
        %s312 = scalar_lea.vmem %s0, %s311
        %s313 = smul.u32 %s23, 2
      $region32: #{basic_block_forward.4} parent=27 // pred_fallthru
        _
      // Predicated region
      $region33: #{basic_block_forward.4} parent=27 // pred_check
        %p314 = pneg %p83
      $region34: #{basic_block_forward.4} parent=27 // pred_check_branch
        %316 = sbr.rel (%p314) target = $region36
      $region35: #{basic_block_forward.4} parent=27 // pred_region
        %s317 = smul.u32 %s23, 2
        %s318 = sadd.s32 %s317, 1
        %p319 = scmp.lt.s32.totalorder %s22, 1
        %s320 = scalar_select %p319, %s22, 1
        %p321 = scmp.lt.s32.totalorder %s318, 5
        %s322 = scalar_select %p321, %s318, 5
        %s323 = smul.addr %s322, 7
        %s324 = smul.addr %s320, 42
        %s325 = sadd.s32 %s323, %s324
        %s326 = smul.addr %s325, 4
        %s327 = scalar_lea.vmem %s1, %s326
        %s328 = smul.u32 %s23, 2
        %s329 = sadd.s32 %s328, 1
      $region36: #{basic_block_forward.4} parent=27 // pred_fallthru
        _
      // Predicated region
      $region37: #{basic_block_forward.4} parent=27 // pred_check
        %p330 = pneg %p115
      $region38: #{basic_block_forward.4} parent=27 // pred_check_branch
        %332 = sbr.rel (%p330) target = $region40
      $region39: #{basic_block_forward.4} parent=27 // pred_region
        %s333 = smul.u32 %s23, 2
        %s334 = sadd.s32 %s333, 2
        %p335 = scmp.lt.s32.totalorder %s22, 1
        %s336 = scalar_select %p335, %s22, 1
        %p337 = scmp.lt.s32.totalorder %s334, 5
        %s338 = scalar_select %p337, %s334, 5
        %s339 = smul.addr %s338, 7
        %s340 = smul.addr %s336, 42
        %s341 = sadd.s32 %s339, %s340
        %s342 = smul.addr %s341, 4
        %s343 = scalar_lea.vmem %s2, %s342
        %s344 = smul.u32 %s23, 2
        %s345 = sadd.s32 %s344, 2
      $region40: #{basic_block_forward.4} parent=27 // pred_fallthru
        _
      // Predicated region
      $region41: #{basic_block_forward.4} parent=27 // pred_check
        %p346 = pneg %p147
      $region42: #{basic_block_forward.4} parent=27 // pred_check_branch
        %348 = sbr.rel (%p346) target = $region44
      $region43: #{basic_block_forward.4} parent=27 // pred_region
        %s349 = smul.u32 %s23, 2
        %s350 = sadd.s32 %s349, 3
        %p351 = scmp.lt.s32.totalorder %s22, 1
        %s352 = scalar_select %p351, %s22, 1
        %p353 = scmp.lt.s32.totalorder %s350, 5
        %s354 = scalar_select %p353, %s350, 5
        %s355 = smul.addr %s354, 7
        %s356 = smul.addr %s352, 42
        %s357 = sadd.s32 %s355, %s356
        %s358 = smul.addr %s357, 4
        %s359 = scalar_lea.vmem %s3, %s358
        %s360 = smul.u32 %s23, 2
        %s361 = sadd.s32 %s360, 3
      $region44: #{basic_block_forward.4} parent=27 // pred_fallthru
        _
    $region28: #{basic_block_forward.4} parent=5 // pred_fallthru
      _
    %p362 = scmp.le.s32.totalorder 1, %s15
    %p363 = scmp.lt.s32.totalorder %s15, 5
    %p364 = pnand %p362, %p363
    %p365 = pneg %p364
    // Predicated region
    $region45: #{basic_block_forward.4} parent=5 // pred_check
      _
    $region46: #{basic_block_forward.4} parent=5 // pred_check_branch
      %367 = sbr.rel (%p364) target = $region48
    $region47: #{basic_block_forward.4} parent=5 // pred_region
      %s368 = ssub.s32 %s15, 1
      %s369 = smul.u32 %s25, 2
      %p370 = scmp.lt.s32.totalorder %s24, 1
      %s371 = scalar_select %p370, %s24, 1
      %p372 = scmp.lt.s32.totalorder %s369, 5
      %s373 = scalar_select %p372, %s369, 5
      %s374 = smul.addr %s373, 7
      %s375 = smul.addr %s371, 42
      %s376 = sadd.s32 %s374, %s375
      %s377 = smul.addr %s376, 4
      %s378 = scalar_lea.vmem %s0, %s377
      %p379 = pneg %p57
      %p380 = pneg %p54
      %s381 = smul.u32 %s25, 2
      %s382 = sadd.s32 %s381, 1
      %p383 = scmp.lt.s32.totalorder %s24, 1
      %s384 = scalar_select %p383, %s24, 1
      %p385 = scmp.lt.s32.totalorder %s382, 5
      %s386 = scalar_select %p385, %s382, 5
      %s387 = smul.addr %s386, 7
      %s388 = smul.addr %s384, 42
      %s389 = sadd.s32 %s387, %s388
      %s390 = smul.addr %s389, 4
      %s391 = scalar_lea.vmem %s1, %s390
      %p392 = pneg %p89
      %p393 = pneg %p86
      %s394 = smul.u32 %s25, 2
      %s395 = sadd.s32 %s394, 2
      %p396 = scmp.lt.s32.totalorder %s24, 1
      %s397 = scalar_select %p396, %s24, 1
      %p398 = scmp.lt.s32.totalorder %s395, 5
      %s399 = scalar_select %p398, %s395, 5
      %s400 = smul.addr %s399, 7
      %s401 = smul.addr %s397, 42
      %s402 = sadd.s32 %s400, %s401
      %s403 = smul.addr %s402, 4
      %s404 = scalar_lea.vmem %s2, %s403
      %p405 = pneg %p121
      %p406 = pneg %p118
      %s407 = smul.u32 %s25, 2
      %s408 = sadd.s32 %s407, 3
      %p409 = scmp.lt.s32.totalorder %s24, 1
      %s410 = scalar_select %p409, %s24, 1
      %p411 = scmp.lt.s32.totalorder %s408, 5
      %s412 = scalar_select %p411, %s408, 5
      %s413 = smul.addr %s412, 7
      %s414 = smul.addr %s410, 42
      %s415 = sadd.s32 %s413, %s414
      %s416 = smul.addr %s415, 4
      %s417 = scalar_lea.vmem %s3, %s416
      %p418 = pneg %p153
      %p419 = pneg %p150
      %p420 = pneg %p174
      %p421 = pneg %p171
      %p422 = pneg %p195
      %p423 = pneg %p192
      %p424 = pneg %p216
      %p425 = pneg %p213
      %p426 = pneg %p244
      %p427 = pneg %p241
      %s428 = smul.u32 2, %s25
      %p429 = scmp.lt.s32.totalorder %s24, 1
      %s430 = scalar_select %p429, %s24, 1
      %p431 = scmp.lt.s32.totalorder %s428, 3
      %s432 = scalar_select %p431, %s428, 3
      %s433 = smul.addr %s432, 5
      %s434 = smul.addr %s430, 20
      %s435 = sadd.s32 %s433, %s434
      %s436 = smul.addr %s435, 4
      %s437 = scalar_lea.vmem %s7, %s436
      %p438 = pneg %p272
      %p439 = pneg %p269
      %s440 = smul.u32 2, %s25
      %p441 = scmp.lt.s32.totalorder %s24, 1
      %s442 = scalar_select %p441, %s24, 1
      %p443 = scmp.lt.s32.totalorder %s440, 3
      %s444 = scalar_select %p443, %s440, 3
      %s445 = smul.addr %s442, 4
      %s446 = sadd.s32 %s444, %s445
      %s447 = smul.addr %s446, 2
      %s448 = scalar_lea.vmem %s8, %s447
      %s449 = smul.u32 %s25, 2
      %p450 = scmp.lt.s32.totalorder %s24, 1
      %s451 = scalar_select %p450, %s24, 1
      %p452 = scmp.lt.s32.totalorder %s449, 5
      %s453 = scalar_select %p452, %s449, 5
      %s454 = smul.addr %s453, 7
      %s455 = smul.addr %s451, 42
      %s456 = sadd.s32 %s454, %s455
      %s457 = smul.addr %s456, 4
      %s458 = scalar_lea.vmem %s0, %s457
      %s459 = smul.u32 %s25, 2
      %s460 = smul.u32 %s25, 2
      %s461 = sadd.s32 %s460, 1
      %p462 = scmp.lt.s32.totalorder %s24, 1
      %s463 = scalar_select %p462, %s24, 1
      %p464 = scmp.lt.s32.totalorder %s461, 5
      %s465 = scalar_select %p464, %s461, 5
      %s466 = smul.addr %s465, 7
      %s467 = smul.addr %s463, 42
      %s468 = sadd.s32 %s466, %s467
      %s469 = smul.addr %s468, 4
      %s470 = scalar_lea.vmem %s1, %s469
      %s471 = smul.u32 %s25, 2
      %s472 = sadd.s32 %s471, 1
      %s473 = smul.u32 %s25, 2
      %s474 = sadd.s32 %s473, 2
      %p475 = scmp.lt.s32.totalorder %s24, 1
      %s476 = scalar_select %p475, %s24, 1
      %p477 = scmp.lt.s32.totalorder %s474, 5
      %s478 = scalar_select %p477, %s474, 5
      %s479 = smul.addr %s478, 7
      %s480 = smul.addr %s476, 42
      %s481 = sadd.s32 %s479, %s480
      %s482 = smul.addr %s481, 4
      %s483 = scalar_lea.vmem %s2, %s482
      %s484 = smul.u32 %s25, 2
      %s485 = sadd.s32 %s484, 2
      %s486 = smul.u32 %s25, 2
      %s487 = sadd.s32 %s486, 3
      %p488 = scmp.lt.s32.totalorder %s24, 1
      %s489 = scalar_select %p488, %s24, 1
      %p490 = scmp.lt.s32.totalorder %s487, 5
      %s491 = scalar_select %p490, %s487, 5
      %s492 = smul.addr %s491, 7
      %s493 = smul.addr %s489, 42
      %s494 = sadd.s32 %s492, %s493
      %s495 = smul.addr %s494, 4
      %s496 = scalar_lea.vmem %s3, %s495
      %s497 = smul.u32 %s25, 2
      %s498 = sadd.s32 %s497, 3
      %s499 = smul.u32 2, %s25
      %p500 = scmp.lt.s32.totalorder %s24, 1
      %s501 = scalar_select %p500, %s24, 1
      %p502 = scmp.lt.s32.totalorder %s499, 3
      %s503 = scalar_select %p502, %s499, 3
      %s504 = smul.addr %s503, 5
      %s505 = smul.addr %s501, 20
      %s506 = sadd.s32 %s504, %s505
      %s507 = smul.addr %s506, 4
      %s508 = scalar_lea.vmem %s7, %s507
      %s509 = smul.u32 2, %s25
      %s510 = smul.u32 2, %s25
      %p511 = scmp.lt.s32.totalorder %s24, 1
      %s512 = scalar_select %p511, %s24, 1
      %p513 = scmp.lt.s32.totalorder %s510, 3
      %s514 = scalar_select %p513, %s510, 3
      %s515 = smul.addr %s512, 4
      %s516 = sadd.s32 %s514, %s515
      %s517 = smul.addr %s516, 2
      %s518 = scalar_lea.vmem %s8, %s517
      %s519 = smul.u32 2, %s25
      %v520 = vld [vmem:[%s458] sm:$0xf]
      %v521 = vld [vmem:[%s458 + $0x4] sm:$0xf]
      %v522 = vld [vmem:[%s458 + $0x8] sm:$0xf]
      %v523 = vld [vmem:[%s458 + $0xc] sm:$0xf]
      %v524 = vld [vmem:[%s458 + $0x10] sm:$0x3]
      %v525 = vld [vmem:[%s4] sm:$0xf]
      %v526 = vld [vmem:[%s4 + $0x4] sm:$0xf]
      %v527 = vld [vmem:[%s4 + $0x8] sm:$0xf]
      %v528 = vld [vmem:[%s4 + $0xc] sm:$0xf]
      %v529 = vld [vmem:[%s4 + $0x10] sm:$0xf]
      %v530 = vld [vmem:[%s4 + $0x14] sm:$0xf]
      %v531 = vld [vmem:[%s4 + $0x18] sm:$0xf]
      %v532 = vld [vmem:[%s4 + $0x1c] sm:$0xf]
      %v533 = vld [vmem:[%s4 + $0x20] sm:$0xf]
      %v534 = vld [vmem:[%s4 + $0x24] sm:$0xf]
      %v535 = vld [vmem:[%s4 + $0x28] sm:$0xf]
      %v536 = vld [vmem:[%s4 + $0x2c] sm:$0xf]
      %v537 = vld [vmem:[%s4 + $0x30] sm:$0xf]
      %v538 = vld [vmem:[%s4 + $0x34] sm:$0xf]
      %v539 = vld [vmem:[%s4 + $0x38] sm:$0xf]
      %v540 = vld [vmem:[%s4 + $0x3c] sm:$0xf]
      %v541 = vld [vmem:[%s458 + $0x10] sm:$0x7]
      %v542 = vld [vmem:[%s4 + $0x40] sm:$0xf]
      %v543 = vld [vmem:[%s4 + $0x44] sm:$0xf]
      %v544 = vld [vmem:[%s4 + $0x48] sm:$0xf]
      %v545 = vld [vmem:[%s4 + $0x4c] sm:$0xf]
      %v546 = vld [vmem:[%s4 + $0x50] sm:$0xf]
      %v547 = vld [vmem:[%s4 + $0x54] sm:$0xf]
      %v548 = vld [vmem:[%s4 + $0x58] sm:$0xf]
      %v549 = vld [vmem:[%s4 + $0x5c] sm:$0xf]
      %v550 = vld [vmem:[%s4 + $0x60] sm:$0xf]
      %v551 = vld [vmem:[%s4 + $0x64] sm:$0xf]
      %v552 = vld [vmem:[%s4 + $0x68] sm:$0xf]
      %v553 = vld [vmem:[%s4 + $0x6c] sm:$0xf]
      %v554 = vld [vmem:[%s4 + $0x70] sm:$0xf]
      %v555 = vld [vmem:[%s4 + $0x74] sm:$0xf]
      %v556 = vld [vmem:[%s4 + $0x78] sm:$0xf]
      %v557 = vld [vmem:[%s4 + $0x7c] sm:$0xf]
      %v563 = vunpack.c.l.b16 %v520
      %v564 = vunpack.c.l.b16 %v521
      %v565 = vunpack.c.l.b16 %v522
      %v566 = vunpack.c.l.b16 %v523
      %v567 = vunpack.c.l.b16 %v541
      %v568 = vpack.c.b16 %v564, %v563
      %v569 = vpack.c.b16 %v566, %v565
      %v570 = vpack.c.b16 %v567, %v567
      %vm571 = vsmask.f32 7424
      %v573 = vshrl.u32 %v568, 16
      %v575 = vshll.u32 %v568, 16
      %v577 = vrot.slane %v575, 1
      %v578 = vor.u32 %v573, %v577
      %v580 = vshll.u32 %v569, 16
      %v582 = vrot.slane %v580, 1
      %v583 = vsel %vm571, %v578, %v582
      %v584 = vshrl.u32 %v569, 16
      %v586 = vor.u32 %v584, %v582
      %v588 = vshll.u32 %v570, 16
      %v590 = vrot.slane %v588, 1
      %v591 = vsel %vm571, %v586, %v590
      %v592 = vshrl.u32 %v570, 16
      %v594 = vor.u32 %v592, %v590
      %v614 = vunpack.c.l.b16 %v542
      %v615 = vunpack.c.l.b16 %v543
      %v616 = vunpack.c.l.b16 %v544
      %v617 = vunpack.c.l.b16 %v545
      %v618 = vunpack.c.l.b16 %v546
      %v619 = vunpack.c.l.b16 %v547
      %v620 = vunpack.c.l.b16 %v548
      %v621 = vunpack.c.l.b16 %v549
      %v622 = vunpack.c.l.b16 %v550
      %v623 = vunpack.c.l.b16 %v551
      %v624 = vunpack.c.l.b16 %v552
      %v625 = vunpack.c.l.b16 %v553
      %v626 = vunpack.c.l.b16 %v554
      %v627 = vunpack.c.l.b16 %v555
      %v628 = vunpack.c.l.b16 %v556
      %v629 = vunpack.c.l.b16 %v557
      %v630 = vpack.c.b16 %v615, %v614
      %v631 = vpack.c.b16 %v617, %v616
      %v632 = vpack.c.b16 %v619, %v618
      %v633 = vpack.c.b16 %v621, %v620
      %v634 = vpack.c.b16 %v623, %v622
      %v635 = vpack.c.b16 %v625, %v624
      %v636 = vpack.c.b16 %v627, %v626
      %v637 = vpack.c.b16 %v629, %v628
      %646 = vmatpush.bf16.msra.mxu0 %v637
      %647 = vmatpush.bf16.msra.mxu0 %v636
      %648 = vmatpush.bf16.msra.mxu0 %v635
      %649 = vmatpush.bf16.msra.mxu0 %v634
      %650 = vmatpush.bf16.msra.mxu0 %v633
      %651 = vmatpush.bf16.msra.mxu0 %v632
      %652 = vmatpush.bf16.msra.mxu0 %v631
      %653 = vmatpush.bf16.msra.mxu0 %v630
      %654 = vmatmul.bf16.gmra.mxu0 %v583
      %v655 = vpop.f32.mrf.mxu0
      %v656 = vadd.f32 0.0, %v655
      %v657 = vpop.f32.mrf.mxu0
      %v658 = vadd.f32 0.0, %v657
      %659 = vmatmul.bf16.gmra.mxu0 %v591
      %v660 = vpop.f32.mrf.mxu0
      %v661 = vadd.f32 0.0, %v660
      %v662 = vpop.f32.mrf.mxu0
      %v663 = vadd.f32 0.0, %v662
      %664 = vmatmul.bf16.gmra.mxu0 %v594
      %v665 = vpop.f32.mrf.mxu0
      %v666 = vadd.f32 0.0, %v665
      %v667 = vpop.f32.mrf.mxu0
      %668 = vdwg.mxu0
      %v670 = vunpack.c.l.b16 %v524
      %v671 = vpack.c.b16 %v670, %v670
      %v691 = vunpack.c.l.b16 %v525
      %v692 = vunpack.c.l.b16 %v526
      %v693 = vunpack.c.l.b16 %v527
      %v694 = vunpack.c.l.b16 %v528
      %v695 = vunpack.c.l.b16 %v529
      %v696 = vunpack.c.l.b16 %v530
      %v697 = vunpack.c.l.b16 %v531
      %v698 = vunpack.c.l.b16 %v532
      %v699 = vunpack.c.l.b16 %v533
      %v700 = vunpack.c.l.b16 %v534
      %v701 = vunpack.c.l.b16 %v535
      %v702 = vunpack.c.l.b16 %v536
      %v703 = vunpack.c.l.b16 %v537
      %v704 = vunpack.c.l.b16 %v538
      %v705 = vunpack.c.l.b16 %v539
      %v706 = vunpack.c.l.b16 %v540
      %v707 = vpack.c.b16 %v692, %v691
      %v708 = vpack.c.b16 %v694, %v693
      %v709 = vpack.c.b16 %v696, %v695
      %v710 = vpack.c.b16 %v698, %v697
      %v711 = vpack.c.b16 %v700, %v699
      %v712 = vpack.c.b16 %v702, %v701
      %v713 = vpack.c.b16 %v704, %v703
      %v714 = vpack.c.b16 %v706, %v705
      %723 = vmatpush.bf16.msra.mxu0 %v714
      %724 = vmatpush.bf16.msra.mxu0 %v713
      %725 = vmatpush.bf16.msra.mxu0 %v712
      %726 = vmatpush.bf16.msra.mxu0 %v711
      %727 = vmatpush.bf16.msra.mxu0 %v710
      %728 = vmatpush.bf16.msra.mxu0 %v709
      %729 = vmatpush.bf16.msra.mxu0 %v708
      %730 = vmatpush.bf16.msra.mxu0 %v707
      %731 = vmatmul.bf16.gmra.mxu0 %v568
      %v732 = vpop.f32.mrf.mxu0
      %v733 = vadd.f32 %v656, %v732
      %v734 = vpop.f32.mrf.mxu0
      %v735 = vadd.f32 %v658, %v734
      %736 = vmatmul.bf16.gmra.mxu0 %v569
      %v737 = vpop.f32.mrf.mxu0
      %v738 = vadd.f32 %v661, %v737
      %v739 = vpop.f32.mrf.mxu0
      %v740 = vadd.f32 %v663, %v739
      %741 = vmatmul.bf16.gmra.mxu0 %v671
      %v742 = vpop.f32.mrf.mxu0
      %v743 = vadd.f32 %v666, %v742
      %v744 = vpop.f32.mrf.mxu0
      %745 = vdwg.mxu0
      %v746 = vld [vmem:[%s458] sm:$0xe]
      %v747 = vld [vmem:[%s4 + $0x80] sm:$0xf]
      %v748 = vld [vmem:[%s4 + $0x84] sm:$0xf]
      %v749 = vld [vmem:[%s4 + $0x88] sm:$0xf]
      %v750 = vld [vmem:[%s4 + $0x8c] sm:$0xf]
      %v751 = vld [vmem:[%s4 + $0x90] sm:$0xf]
      %v752 = vld [vmem:[%s4 + $0x94] sm:$0xf]
      %v753 = vld [vmem:[%s4 + $0x98] sm:$0xf]
      %v754 = vld [vmem:[%s4 + $0x9c] sm:$0xf]
      %v755 = vld [vmem:[%s4 + $0xa0] sm:$0xf]
      %v756 = vld [vmem:[%s4 + $0xa4] sm:$0xf]
      %v757 = vld [vmem:[%s4 + $0xa8] sm:$0xf]
      %v758 = vld [vmem:[%s4 + $0xac] sm:$0xf]
      %v759 = vld [vmem:[%s4 + $0xb0] sm:$0xf]
      %v760 = vld [vmem:[%s4 + $0xb4] sm:$0xf]
      %v761 = vld [vmem:[%s4 + $0xb8] sm:$0xf]
      %v762 = vld [vmem:[%s4 + $0xbc] sm:$0xf]
      %v764 = vunpack.c.l.b16 %v746
      %v765 = vpack.c.b16 %v564, %v764
      %vm766 = vcmask 1046528
      %v767 = vrot.slane %v765, 1
      %v768 = vrot.slane %v569, 1
      %v769 = vsel %vm766, %v767, %v768
      %v770 = vrot.slane %v570, 1
      %v771 = vsel %vm766, %v768, %v770
      %v791 = vunpack.c.l.b16 %v747
      %v792 = vunpack.c.l.b16 %v748
      %v793 = vunpack.c.l.b16 %v749
      %v794 = vunpack.c.l.b16 %v750
      %v795 = vunpack.c.l.b16 %v751
      %v796 = vunpack.c.l.b16 %v752
      %v797 = vunpack.c.l.b16 %v753
      %v798 = vunpack.c.l.b16 %v754
      %v799 = vunpack.c.l.b16 %v755
      %v800 = vunpack.c.l.b16 %v756
      %v801 = vunpack.c.l.b16 %v757
      %v802 = vunpack.c.l.b16 %v758
      %v803 = vunpack.c.l.b16 %v759
      %v804 = vunpack.c.l.b16 %v760
      %v805 = vunpack.c.l.b16 %v761
      %v806 = vunpack.c.l.b16 %v762
      %v807 = vpack.c.b16 %v792, %v791
      %v808 = vpack.c.b16 %v794, %v793
      %v809 = vpack.c.b16 %v796, %v795
      %v810 = vpack.c.b16 %v798, %v797
      %v811 = vpack.c.b16 %v800, %v799
      %v812 = vpack.c.b16 %v802, %v801
      %v813 = vpack.c.b16 %v804, %v803
      %v814 = vpack.c.b16 %v806, %v805
      %823 = vmatpush.bf16.msra.mxu0 %v814
      %824 = vmatpush.bf16.msra.mxu0 %v813
      %825 = vmatpush.bf16.msra.mxu0 %v812
      %826 = vmatpush.bf16.msra.mxu0 %v811
      %827 = vmatpush.bf16.msra.mxu0 %v810
      %828 = vmatpush.bf16.msra.mxu0 %v809
      %829 = vmatpush.bf16.msra.mxu0 %v808
      %830 = vmatpush.bf16.msra.mxu0 %v807
      %831 = vmatmul.bf16.gmra.mxu0 %v769
      %v832 = vpop.f32.mrf.mxu0
      %v833 = vadd.f32 0.0, %v832
      %v834 = vpop.f32.mrf.mxu0
      %v835 = vadd.f32 0.0, %v834
      %836 = vmatmul.bf16.gmra.mxu0 %v771
      %v837 = vpop.f32.mrf.mxu0
      %v838 = vadd.f32 0.0, %v837
      %v839 = vpop.f32.mrf.mxu0
      %v840 = vadd.f32 0.0, %v839
      %841 = vmatmul.bf16.gmra.mxu0 %v770
      %v842 = vpop.f32.mrf.mxu0
      %v843 = vadd.f32 0.0, %v842
      %v844 = vpop.f32.mrf.mxu0
      %845 = vdwg.mxu0
      %v846 = vadd.f32 %v733, %v833
      %v847 = vadd.f32 %v735, %v835
      %v848 = vadd.f32 %v738, %v838
      %v849 = vadd.f32 %v740, %v840
      %v850 = vadd.f32 %v743, %v843
      %v851 = vld [vmem:[%s458] sm:$0x8]
      %v852 = vld [vmem:[%s458 + $0x4] sm:$0xf]
      %v853 = vld [vmem:[%s458 + $0x8] sm:$0xf]
      %v854 = vld [vmem:[%s458 + $0xc] sm:$0xf]
      %v855 = vld [vmem:[%s458 + $0x10] sm:$0xf]
      %v856 = vld [vmem:[%s458 + $0x14] sm:$0x1]
      %v857 = vld [vmem:[%s4 + $0xc0] sm:$0xf]
      %v858 = vld [vmem:[%s4 + $0xc4] sm:$0xf]
      %v859 = vld [vmem:[%s4 + $0xc8] sm:$0xf]
      %v860 = vld [vmem:[%s4 + $0xcc] sm:$0xf]
      %v861 = vld [vmem:[%s4 + $0xd0] sm:$0xf]
      %v862 = vld [vmem:[%s4 + $0xd4] sm:$0xf]
      %v863 = vld [vmem:[%s4 + $0xd8] sm:$0xf]
      %v864 = vld [vmem:[%s4 + $0xdc] sm:$0xf]
      %v865 = vld [vmem:[%s4 + $0xe0] sm:$0xf]
      %v866 = vld [vmem:[%s4 + $0xe4] sm:$0xf]
      %v867 = vld [vmem:[%s4 + $0xe8] sm:$0xf]
      %v868 = vld [vmem:[%s4 + $0xec] sm:$0xf]
      %v869 = vld [vmem:[%s4 + $0xf0] sm:$0xf]
      %v870 = vld [vmem:[%s4 + $0xf4] sm:$0xf]
      %v871 = vld [vmem:[%s4 + $0xf8] sm:$0xf]
      %v872 = vld [vmem:[%s4 + $0xfc] sm:$0xf]
      %v879 = vunpack.c.l.b16 %v851
      %v880 = vunpack.c.l.b16 %v852
      %v881 = vunpack.c.l.b16 %v853
      %v882 = vunpack.c.l.b16 %v854
      %v883 = vunpack.c.l.b16 %v855
      %v884 = vunpack.c.l.b16 %v856
      %v885 = vpack.c.b16 %v880, %v879
      %v886 = vpack.c.b16 %v882, %v881
      %v887 = vpack.c.b16 %v884, %v883
      %vm888 = vcmask 1044480
      %v889 = vrot.slane %v885, 3
      %v890 = vrot.slane %v886, 3
      %v891 = vsel %vm888, %v889, %v890
      %v892 = vrot.slane %v887, 3
      %v893 = vsel %vm888, %v890, %v892
      %v913 = vunpack.c.l.b16 %v857
      %v914 = vunpack.c.l.b16 %v858
      %v915 = vunpack.c.l.b16 %v859
      %v916 = vunpack.c.l.b16 %v860
      %v917 = vunpack.c.l.b16 %v861
      %v918 = vunpack.c.l.b16 %v862
      %v919 = vunpack.c.l.b16 %v863
      %v920 = vunpack.c.l.b16 %v864
      %v921 = vunpack.c.l.b16 %v865
      %v922 = vunpack.c.l.b16 %v866
      %v923 = vunpack.c.l.b16 %v867
      %v924 = vunpack.c.l.b16 %v868
      %v925 = vunpack.c.l.b16 %v869
      %v926 = vunpack.c.l.b16 %v870
      %v927 = vunpack.c.l.b16 %v871
      %v928 = vunpack.c.l.b16 %v872
      %v929 = vpack.c.b16 %v914, %v913
      %v930 = vpack.c.b16 %v916, %v915
      %v931 = vpack.c.b16 %v918, %v917
      %v932 = vpack.c.b16 %v920, %v919
      %v933 = vpack.c.b16 %v922, %v921
      %v934 = vpack.c.b16 %v924, %v923
      %v935 = vpack.c.b16 %v926, %v925
      %v936 = vpack.c.b16 %v928, %v927
      %945 = vmatpush.bf16.msra.mxu0 %v936
      %946 = vmatpush.bf16.msra.mxu0 %v935
      %947 = vmatpush.bf16.msra.mxu0 %v934
      %948 = vmatpush.bf16.msra.mxu0 %v933
      %949 = vmatpush.bf16.msra.mxu0 %v932
      %950 = vmatpush.bf16.msra.mxu0 %v931
      %951 = vmatpush.bf16.msra.mxu0 %v930
      %952 = vmatpush.bf16.msra.mxu0 %v929
      %953 = vmatmul.bf16.gmra.mxu0 %v891
      %v954 = vpop.f32.mrf.mxu0
      %v955 = vadd.f32 0.0, %v954
      %v956 = vpop.f32.mrf.mxu0
      %v957 = vadd.f32 0.0, %v956
      %958 = vmatmul.bf16.gmra.mxu0 %v893
      %v959 = vpop.f32.mrf.mxu0
      %v960 = vadd.f32 0.0, %v959
      %v961 = vpop.f32.mrf.mxu0
      %v962 = vadd.f32 0.0, %v961
      %963 = vmatmul.bf16.gmra.mxu0 %v892
      %v964 = vpop.f32.mrf.mxu0
      %v965 = vadd.f32 0.0, %v964
      %v966 = vpop.f32.mrf.mxu0
      %967 = vdwg.mxu0
      %v968 = vadd.f32 %v846, %v955
      %v969 = vadd.f32 %v847, %v957
      %v970 = vadd.f32 %v848, %v960
      %v971 = vadd.f32 %v849, %v962
      %v972 = vadd.f32 %v850, %v965
      %v973 = vld [vmem:[%s458 + $0x14] sm:$0x3]
      %v974 = vld [vmem:[%s4 + $0x100] sm:$0xf]
      %v975 = vld [vmem:[%s4 + $0x104] sm:$0xf]
      %v976 = vld [vmem:[%s4 + $0x108] sm:$0xf]
      %v977 = vld [vmem:[%s4 + $0x10c] sm:$0xf]
      %v978 = vld [vmem:[%s4 + $0x110] sm:$0xf]
      %v979 = vld [vmem:[%s4 + $0x114] sm:$0xf]
      %v980 = vld [vmem:[%s4 + $0x118] sm:$0xf]
      %v981 = vld [vmem:[%s4 + $0x11c] sm:$0xf]
      %v982 = vld [vmem:[%s4 + $0x120] sm:$0xf]
      %v983 = vld [vmem:[%s4 + $0x124] sm:$0xf]
      %v984 = vld [vmem:[%s4 + $0x128] sm:$0xf]
      %v985 = vld [vmem:[%s4 + $0x12c] sm:$0xf]
      %v986 = vld [vmem:[%s4 + $0x130] sm:$0xf]
      %v987 = vld [vmem:[%s4 + $0x134] sm:$0xf]
      %v988 = vld [vmem:[%s4 + $0x138] sm:$0xf]
      %v989 = vld [vmem:[%s4 + $0x13c] sm:$0xf]
      %v991 = vunpack.c.l.b16 %v973
      %v992 = vpack.c.b16 %v991, %v883
      %vm993 = vsmask.f32 4352
      %v995 = vshrl.u32 %v885, 16
      %v997 = vrot.slane %v995, 3
      %v998 = vshll.u32 %v885, 16
      %v1000 = vrot.slane %v998, 4
      %v1001 = vor.u32 %v997, %v1000
      %v1003 = vshrl.u32 %v886, 16
      %v1005 = vrot.slane %v1003, 3
      %v1006 = vshll.u32 %v886, 16
      %v1008 = vrot.slane %v1006, 4
      %v1009 = vor.u32 %v1005, %v1008
      %v1010 = vsel %vm993, %v1001, %v1009
      %v1012 = vshrl.u32 %v992, 16
      %v1014 = vrot.slane %v1012, 3
      %v1015 = vshll.u32 %v992, 16
      %v1017 = vrot.slane %v1015, 4
      %v1018 = vor.u32 %v1014, %v1017
      %v1019 = vsel %vm993, %v1009, %v1018
      %v1039 = vunpack.c.l.b16 %v974
      %v1040 = vunpack.c.l.b16 %v975
      %v1041 = vunpack.c.l.b16 %v976
      %v1042 = vunpack.c.l.b16 %v977
      %v1043 = vunpack.c.l.b16 %v978
      %v1044 = vunpack.c.l.b16 %v979
      %v1045 = vunpack.c.l.b16 %v980
      %v1046 = vunpack.c.l.b16 %v981
      %v1047 = vunpack.c.l.b16 %v982
      %v1048 = vunpack.c.l.b16 %v983
      %v1049 = vunpack.c.l.b16 %v984
      %v1050 = vunpack.c.l.b16 %v985
      %v1051 = vunpack.c.l.b16 %v986
      %v1052 = vunpack.c.l.b16 %v987
      %v1053 = vunpack.c.l.b16 %v988
      %v1054 = vunpack.c.l.b16 %v989
      %v1055 = vpack.c.b16 %v1040, %v1039
      %v1056 = vpack.c.b16 %v1042, %v1041
      %v1057 = vpack.c.b16 %v1044, %v1043
      %v1058 = vpack.c.b16 %v1046, %v1045
      %v1059 = vpack.c.b16 %v1048, %v1047
      %v1060 = vpack.c.b16 %v1050, %v1049
      %v1061 = vpack.c.b16 %v1052, %v1051
      %v1062 = vpack.c.b16 %v1054, %v1053
      %1071 = vmatpush.bf16.msra.mxu0 %v1062
      %1072 = vmatpush.bf16.msra.mxu0 %v1061
      %1073 = vmatpush.bf16.msra.mxu0 %v1060
      %1074 = vmatpush.bf16.msra.mxu0 %v1059
      %1075 = vmatpush.bf16.msra.mxu0 %v1058
      %1076 = vmatpush.bf16.msra.mxu0 %v1057
      %1077 = vmatpush.bf16.msra.mxu0 %v1056
      %1078 = vmatpush.bf16.msra.mxu0 %v1055
      %1079 = vmatmul.bf16.gmra.mxu0 %v1010
      %v1080 = vpop.f32.mrf.mxu0
      %v1081 = vadd.f32 0.0, %v1080
      %v1082 = vpop.f32.mrf.mxu0
      %v1083 = vadd.f32 0.0, %v1082
      %1084 = vmatmul.bf16.gmra.mxu0 %v1019
      %v1085 = vpop.f32.mrf.mxu0
      %v1086 = vadd.f32 0.0, %v1085
      %v1087 = vpop.f32.mrf.mxu0
      %v1088 = vadd.f32 0.0, %v1087
      %1089 = vmatmul.bf16.gmra.mxu0 %v1018
      %v1090 = vpop.f32.mrf.mxu0
      %v1091 = vadd.f32 0.0, %v1090
      %v1092 = vpop.f32.mrf.mxu0
      %1093 = vdwg.mxu0
      %v1094 = vadd.f32 %v968, %v1081
      %v1095 = vadd.f32 %v969, %v1083
      %v1096 = vadd.f32 %v970, %v1086
      %v1097 = vadd.f32 %v971, %v1088
      %v1098 = vadd.f32 %v972, %v1091
      %v1099 = vld [vmem:[%s4 + $0x140] sm:$0xf]
      %v1100 = vld [vmem:[%s4 + $0x144] sm:$0xf]
      %v1101 = vld [vmem:[%s4 + $0x148] sm:$0xf]
      %v1102 = vld [vmem:[%s4 + $0x14c] sm:$0xf]
      %v1103 = vld [vmem:[%s4 + $0x150] sm:$0xf]
      %v1104 = vld [vmem:[%s4 + $0x154] sm:$0xf]
      %v1105 = vld [vmem:[%s4 + $0x158] sm:$0xf]
      %v1106 = vld [vmem:[%s4 + $0x15c] sm:$0xf]
      %v1107 = vld [vmem:[%s4 + $0x160] sm:$0xf]
      %v1108 = vld [vmem:[%s4 + $0x164] sm:$0xf]
      %v1109 = vld [vmem:[%s4 + $0x168] sm:$0xf]
      %v1110 = vld [vmem:[%s4 + $0x16c] sm:$0xf]
      %v1111 = vld [vmem:[%s4 + $0x170] sm:$0xf]
      %v1112 = vld [vmem:[%s4 + $0x174] sm:$0xf]
      %v1113 = vld [vmem:[%s4 + $0x178] sm:$0xf]
      %v1114 = vld [vmem:[%s4 + $0x17c] sm:$0xf]
      %v1115 = vpack.c.b16 %v881, %v880
      %v1116 = vpack.c.b16 %v883, %v882
      %v1117 = vpack.c.b16 %v991, %v991
      %v1137 = vunpack.c.l.b16 %v1099
      %v1138 = vunpack.c.l.b16 %v1100
      %v1139 = vunpack.c.l.b16 %v1101
      %v1140 = vunpack.c.l.b16 %v1102
      %v1141 = vunpack.c.l.b16 %v1103
      %v1142 = vunpack.c.l.b16 %v1104
      %v1143 = vunpack.c.l.b16 %v1105
      %v1144 = vunpack.c.l.b16 %v1106
      %v1145 = vunpack.c.l.b16 %v1107
      %v1146 = vunpack.c.l.b16 %v1108
      %v1147 = vunpack.c.l.b16 %v1109
      %v1148 = vunpack.c.l.b16 %v1110
      %v1149 = vunpack.c.l.b16 %v1111
      %v1150 = vunpack.c.l.b16 %v1112
      %v1151 = vunpack.c.l.b16 %v1113
      %v1152 = vunpack.c.l.b16 %v1114
      %v1153 = vpack.c.b16 %v1138, %v1137
      %v1154 = vpack.c.b16 %v1140, %v1139
      %v1155 = vpack.c.b16 %v1142, %v1141
      %v1156 = vpack.c.b16 %v1144, %v1143
      %v1157 = vpack.c.b16 %v1146, %v1145
      %v1158 = vpack.c.b16 %v1148, %v1147
      %v1159 = vpack.c.b16 %v1150, %v1149
      %v1160 = vpack.c.b16 %v1152, %v1151
      %1169 = vmatpush.bf16.msra.mxu0 %v1160
      %1170 = vmatpush.bf16.msra.mxu0 %v1159
      %1171 = vmatpush.bf16.msra.mxu0 %v1158
      %1172 = vmatpush.bf16.msra.mxu0 %v1157
      %1173 = vmatpush.bf16.msra.mxu0 %v1156
      %1174 = vmatpush.bf16.msra.mxu0 %v1155
      %1175 = vmatpush.bf16.msra.mxu0 %v1154
      %1176 = vmatpush.bf16.msra.mxu0 %v1153
      %1177 = vmatmul.bf16.gmra.mxu0 %v1115
      %v1178 = vpop.f32.mrf.mxu0
      %v1179 = vadd.f32 0.0, %v1178
      %v1180 = vpop.f32.mrf.mxu0
      %v1181 = vadd.f32 0.0, %v1180
      %1182 = vmatmul.bf16.gmra.mxu0 %v1116
      %v1183 = vpop.f32.mrf.mxu0
      %v1184 = vadd.f32 0.0, %v1183
      %v1185 = vpop.f32.mrf.mxu0
      %v1186 = vadd.f32 0.0, %v1185
      %1187 = vmatmul.bf16.gmra.mxu0 %v1117
      %v1188 = vpop.f32.mrf.mxu0
      %v1189 = vadd.f32 0.0, %v1188
      %v1190 = vpop.f32.mrf.mxu0
      %1191 = vdwg.mxu0
      %v1192 = vadd.f32 %v1094, %v1179
      %v1193 = vadd.f32 %v1095, %v1181
      %v1194 = vadd.f32 %v1096, %v1184
      %v1195 = vadd.f32 %v1097, %v1186
      %v1196 = vadd.f32 %v1098, %v1189
      %v1197 = vld [vmem:[%s458 + $0x4] sm:$0xc]
      %v1198 = vld [vmem:[%s458 + $0x14] sm:$0xf]
      %v1199 = vld [vmem:[%s4 + $0x180] sm:$0xf]
      %v1200 = vld [vmem:[%s4 + $0x184] sm:$0xf]
      %v1201 = vld [vmem:[%s4 + $0x188] sm:$0xf]
      %v1202 = vld [vmem:[%s4 + $0x18c] sm:$0xf]
      %v1203 = vld [vmem:[%s4 + $0x190] sm:$0xf]
      %v1204 = vld [vmem:[%s4 + $0x194] sm:$0xf]
      %v1205 = vld [vmem:[%s4 + $0x198] sm:$0xf]
      %v1206 = vld [vmem:[%s4 + $0x19c] sm:$0xf]
      %v1207 = vld [vmem:[%s4 + $0x1a0] sm:$0xf]
      %v1208 = vld [vmem:[%s4 + $0x1a4] sm:$0xf]
      %v1209 = vld [vmem:[%s4 + $0x1a8] sm:$0xf]
      %v1210 = vld [vmem:[%s4 + $0x1ac] sm:$0xf]
      %v1211 = vld [vmem:[%s4 + $0x1b0] sm:$0xf]
      %v1212 = vld [vmem:[%s4 + $0x1b4] sm:$0xf]
      %v1213 = vld [vmem:[%s4 + $0x1b8] sm:$0xf]
      %v1214 = vld [vmem:[%s4 + $0x1bc] sm:$0xf]
      %v1217 = vunpack.c.l.b16 %v1197
      %v1218 = vunpack.c.l.b16 %v1198
      %v1219 = vpack.c.b16 %v881, %v1217
      %v1220 = vpack.c.b16 %v1218, %v1218
      %vm1221 = vcmask 1045504
      %v1222 = vrot.slane %v1219, 2
      %v1223 = vrot.slane %v1116, 2
      %v1224 = vsel %vm1221, %v1222, %v1223
      %v1225 = vrot.slane %v1220, 2
      %v1226 = vsel %vm1221, %v1223, %v1225
      %v1246 = vunpack.c.l.b16 %v1199
      %v1247 = vunpack.c.l.b16 %v1200
      %v1248 = vunpack.c.l.b16 %v1201
      %v1249 = vunpack.c.l.b16 %v1202
      %v1250 = vunpack.c.l.b16 %v1203
      %v1251 = vunpack.c.l.b16 %v1204
      %v1252 = vunpack.c.l.b16 %v1205
      %v1253 = vunpack.c.l.b16 %v1206
      %v1254 = vunpack.c.l.b16 %v1207
      %v1255 = vunpack.c.l.b16 %v1208
      %v1256 = vunpack.c.l.b16 %v1209
      %v1257 = vunpack.c.l.b16 %v1210
      %v1258 = vunpack.c.l.b16 %v1211
      %v1259 = vunpack.c.l.b16 %v1212
      %v1260 = vunpack.c.l.b16 %v1213
      %v1261 = vunpack.c.l.b16 %v1214
      %v1262 = vpack.c.b16 %v1247, %v1246
      %v1263 = vpack.c.b16 %v1249, %v1248
      %v1264 = vpack.c.b16 %v1251, %v1250
      %v1265 = vpack.c.b16 %v1253, %v1252
      %v1266 = vpack.c.b16 %v1255, %v1254
      %v1267 = vpack.c.b16 %v1257, %v1256
      %v1268 = vpack.c.b16 %v1259, %v1258
      %v1269 = vpack.c.b16 %v1261, %v1260
      %1278 = vmatpush.bf16.msra.mxu0 %v1269
      %1279 = vmatpush.bf16.msra.mxu0 %v1268
      %1280 = vmatpush.bf16.msra.mxu0 %v1267
      %1281 = vmatpush.bf16.msra.mxu0 %v1266
      %1282 = vmatpush.bf16.msra.mxu0 %v1265
      %1283 = vmatpush.bf16.msra.mxu0 %v1264
      %1284 = vmatpush.bf16.msra.mxu0 %v1263
      %1285 = vmatpush.bf16.msra.mxu0 %v1262
      %1286 = vmatmul.bf16.gmra.mxu0 %v1224
      %v1287 = vpop.f32.mrf.mxu0
      %v1288 = vadd.f32 0.0, %v1287
      %v1289 = vpop.f32.mrf.mxu0
      %v1290 = vadd.f32 0.0, %v1289
      %1291 = vmatmul.bf16.gmra.mxu0 %v1226
      %v1292 = vpop.f32.mrf.mxu0
      %v1293 = vadd.f32 0.0, %v1292
      %v1294 = vpop.f32.mrf.mxu0
      %v1295 = vadd.f32 0.0, %v1294
      %1296 = vmatmul.bf16.gmra.mxu0 %v1225
      %v1297 = vpop.f32.mrf.mxu0
      %v1298 = vadd.f32 0.0, %v1297
      %v1299 = vpop.f32.mrf.mxu0
      %1300 = vdwg.mxu0
      %v1301 = vadd.f32 %v1192, %v1288
      %v1302 = vadd.f32 %v1193, %v1290
      %v1303 = vadd.f32 %v1194, %v1293
      %v1304 = vadd.f32 %v1195, %v1295
      %v1305 = vadd.f32 %v1196, %v1298
      %v1306 = vld [vmem:[%s458 + $0x4] sm:$0xc]
      %v1307 = vld [vmem:[%s458 + $0x8] sm:$0xf]
      %v1308 = vld [vmem:[%s458 + $0xc] sm:$0xf]
      %v1309 = vld [vmem:[%s458 + $0x10] sm:$0xf]
      %v1310 = vld [vmem:[%s458 + $0x14] sm:$0xf]
      %v1311 = vld [vmem:[%s458 + $0x18] sm:$0x1]
      %v1312 = vld [vmem:[%s4 + $0x1c0] sm:$0xf]
      %v1313 = vld [vmem:[%s4 + $0x1c4] sm:$0xf]
      %v1314 = vld [vmem:[%s4 + $0x1c8] sm:$0xf]
      %v1315 = vld [vmem:[%s4 + $0x1cc] sm:$0xf]
      %v1316 = vld [vmem:[%s4 + $0x1d0] sm:$0xf]
      %v1317 = vld [vmem:[%s4 + $0x1d4] sm:$0xf]
      %v1318 = vld [vmem:[%s4 + $0x1d8] sm:$0xf]
      %v1319 = vld [vmem:[%s4 + $0x1dc] sm:$0xf]
      %v1320 = vld [vmem:[%s4 + $0x1e0] sm:$0xf]
      %v1321 = vld [vmem:[%s4 + $0x1e4] sm:$0xf]
      %v1322 = vld [vmem:[%s4 + $0x1e8] sm:$0xf]
      %v1323 = vld [vmem:[%s4 + $0x1ec] sm:$0xf]
      %v1324 = vld [vmem:[%s4 + $0x1f0] sm:$0xf]
      %v1325 = vld [vmem:[%s4 + $0x1f4] sm:$0xf]
      %v1326 = vld [vmem:[%s4 + $0x1f8] sm:$0xf]
      %v1327 = vld [vmem:[%s4 + $0x1fc] sm:$0xf]
      %v1334 = vunpack.c.l.b16 %v1306
      %v1335 = vunpack.c.l.b16 %v1307
      %v1336 = vunpack.c.l.b16 %v1308
      %v1337 = vunpack.c.l.b16 %v1309
      %v1338 = vunpack.c.l.b16 %v1310
      %v1339 = vunpack.c.l.b16 %v1311
      %v1340 = vpack.c.b16 %v1335, %v1334
      %v1341 = vpack.c.b16 %v1337, %v1336
      %v1342 = vpack.c.b16 %v1339, %v1338
      %vm1343 = vsmask.f32 5376
      %v1345 = vshrl.u32 %v1340, 16
      %v1347 = vrot.slane %v1345, 2
      %v1348 = vshll.u32 %v1340, 16
      %v1350 = vrot.slane %v1348, 3
      %v1351 = vor.u32 %v1347, %v1350
      %v1353 = vshrl.u32 %v1341, 16
      %v1355 = vrot.slane %v1353, 2
      %v1356 = vshll.u32 %v1341, 16
      %v1358 = vrot.slane %v1356, 3
      %v1359 = vor.u32 %v1355, %v1358
      %v1360 = vsel %vm1343, %v1351, %v1359
      %v1362 = vshrl.u32 %v1342, 16
      %v1364 = vrot.slane %v1362, 2
      %v1365 = vshll.u32 %v1342, 16
      %v1367 = vrot.slane %v1365, 3
      %v1368 = vor.u32 %v1364, %v1367
      %v1369 = vsel %vm1343, %v1359, %v1368
      %v1389 = vunpack.c.l.b16 %v1312
      %v1390 = vunpack.c.l.b16 %v1313
      %v1391 = vunpack.c.l.b16 %v1314
      %v1392 = vunpack.c.l.b16 %v1315
      %v1393 = vunpack.c.l.b16 %v1316
      %v1394 = vunpack.c.l.b16 %v1317
      %v1395 = vunpack.c.l.b16 %v1318
      %v1396 = vunpack.c.l.b16 %v1319
      %v1397 = vunpack.c.l.b16 %v1320
      %v1398 = vunpack.c.l.b16 %v1321
      %v1399 = vunpack.c.l.b16 %v1322
      %v1400 = vunpack.c.l.b16 %v1323
      %v1401 = vunpack.c.l.b16 %v1324
      %v1402 = vunpack.c.l.b16 %v1325
      %v1403 = vunpack.c.l.b16 %v1326
      %v1404 = vunpack.c.l.b16 %v1327
      %v1405 = vpack.c.b16 %v1390, %v1389
      %v1406 = vpack.c.b16 %v1392, %v1391
      %v1407 = vpack.c.b16 %v1394, %v1393
      %v1408 = vpack.c.b16 %v1396, %v1395
      %v1409 = vpack.c.b16 %v1398, %v1397
      %v1410 = vpack.c.b16 %v1400, %v1399
      %v1411 = vpack.c.b16 %v1402, %v1401
      %v1412 = vpack.c.b16 %v1404, %v1403
      %1421 = vmatpush.bf16.msra.mxu0 %v1412
      %1422 = vmatpush.bf16.msra.mxu0 %v1411
      %1423 = vmatpush.bf16.msra.mxu0 %v1410
      %1424 = vmatpush.bf16.msra.mxu0 %v1409
      %1425 = vmatpush.bf16.msra.mxu0 %v1408
      %1426 = vmatpush.bf16.msra.mxu0 %v1407
      %1427 = vmatpush.bf16.msra.mxu0 %v1406
      %1428 = vmatpush.bf16.msra.mxu0 %v1405
      %1429 = vmatmul.bf16.gmra.mxu0 %v1360
      %v1430 = vpop.f32.mrf.mxu0
      %v1431 = vadd.f32 0.0, %v1430
      %v1432 = vpop.f32.mrf.mxu0
      %v1433 = vadd.f32 0.0, %v1432
      %1434 = vmatmul.bf16.gmra.mxu0 %v1369
      %v1435 = vpop.f32.mrf.mxu0
      %v1436 = vadd.f32 0.0, %v1435
      %v1437 = vpop.f32.mrf.mxu0
      %v1438 = vadd.f32 0.0, %v1437
      %1439 = vmatmul.bf16.gmra.mxu0 %v1368
      %v1440 = vpop.f32.mrf.mxu0
      %v1441 = vadd.f32 0.0, %v1440
      %v1442 = vpop.f32.mrf.mxu0
      %1443 = vdwg.mxu0
      %v1444 = vadd.f32 %v1301, %v1431
      %v1445 = vadd.f32 %v1302, %v1433
      %v1446 = vadd.f32 %v1303, %v1436
      %v1447 = vadd.f32 %v1304, %v1438
      %v1448 = vadd.f32 %v1305, %v1441
      %v1449 = vld [vmem:[%s458 + $0x4] sm:$0x8]
      %v1450 = vld [vmem:[%s4 + $0x200] sm:$0xf]
      %v1451 = vld [vmem:[%s4 + $0x204] sm:$0xf]
      %v1452 = vld [vmem:[%s4 + $0x208] sm:$0xf]
      %v1453 = vld [vmem:[%s4 + $0x20c] sm:$0xf]
      %v1454 = vld [vmem:[%s4 + $0x210] sm:$0xf]
      %v1455 = vld [vmem:[%s4 + $0x214] sm:$0xf]
      %v1456 = vld [vmem:[%s4 + $0x218] sm:$0xf]
      %v1457 = vld [vmem:[%s4 + $0x21c] sm:$0xf]
      %v1458 = vld [vmem:[%s4 + $0x220] sm:$0xf]
      %v1459 = vld [vmem:[%s4 + $0x224] sm:$0xf]
      %v1460 = vld [vmem:[%s4 + $0x228] sm:$0xf]
      %v1461 = vld [vmem:[%s4 + $0x22c] sm:$0xf]
      %v1462 = vld [vmem:[%s4 + $0x230] sm:$0xf]
      %v1463 = vld [vmem:[%s4 + $0x234] sm:$0xf]
      %v1464 = vld [vmem:[%s4 + $0x238] sm:$0xf]
      %v1465 = vld [vmem:[%s4 + $0x23c] sm:$0xf]
      %v1467 = vunpack.c.l.b16 %v1449
      %v1468 = vpack.c.b16 %v1335, %v1467
      %v1469 = vrot.slane %v1468, 3
      %v1470 = vrot.slane %v1341, 3
      %v1471 = vsel %vm888, %v1469, %v1470
      %v1472 = vrot.slane %v1342, 3
      %v1473 = vsel %vm888, %v1470, %v1472
      %v1493 = vunpack.c.l.b16 %v1450
      %v1494 = vunpack.c.l.b16 %v1451
      %v1495 = vunpack.c.l.b16 %v1452
      %v1496 = vunpack.c.l.b16 %v1453
      %v1497 = vunpack.c.l.b16 %v1454
      %v1498 = vunpack.c.l.b16 %v1455
      %v1499 = vunpack.c.l.b16 %v1456
      %v1500 = vunpack.c.l.b16 %v1457
      %v1501 = vunpack.c.l.b16 %v1458
      %v1502 = vunpack.c.l.b16 %v1459
      %v1503 = vunpack.c.l.b16 %v1460
      %v1504 = vunpack.c.l.b16 %v1461
      %v1505 = vunpack.c.l.b16 %v1462
      %v1506 = vunpack.c.l.b16 %v1463
      %v1507 = vunpack.c.l.b16 %v1464
      %v1508 = vunpack.c.l.b16 %v1465
      %v1509 = vpack.c.b16 %v1494, %v1493
      %v1510 = vpack.c.b16 %v1496, %v1495
      %v1511 = vpack.c.b16 %v1498, %v1497
      %v1512 = vpack.c.b16 %v1500, %v1499
      %v1513 = vpack.c.b16 %v1502, %v1501
      %v1514 = vpack.c.b16 %v1504, %v1503
      %v1515 = vpack.c.b16 %v1506, %v1505
      %v1516 = vpack.c.b16 %v1508, %v1507
      %1525 = vmatpush.bf16.msra.mxu0 %v1516
      %1526 = vmatpush.bf16.msra.mxu0 %v1515
      %1527 = vmatpush.bf16.msra.mxu0 %v1514
      %1528 = vmatpush.bf16.msra.mxu0 %v1513
      %1529 = vmatpush.bf16.msra.mxu0 %v1512
      %1530 = vmatpush.bf16.msra.mxu0 %v1511
      %1531 = vmatpush.bf16.msra.mxu0 %v1510
      %1532 = vmatpush.bf16.msra.mxu0 %v1509
      %1533 = vmatmul.bf16.gmra.mxu0 %v1471
      %v1534 = vpop.f32.mrf.mxu0
      %v1535 = vadd.f32 0.0, %v1534
      %v1536 = vpop.f32.mrf.mxu0
      %v1537 = vadd.f32 0.0, %v1536
      %1538 = vmatmul.bf16.gmra.mxu0 %v1473
      %v1539 = vpop.f32.mrf.mxu0
      %v1540 = vadd.f32 0.0, %v1539
      %v1541 = vpop.f32.mrf.mxu0
      %v1542 = vadd.f32 0.0, %v1541
      %1543 = vmatmul.bf16.gmra.mxu0 %v1472
      %v1544 = vpop.f32.mrf.mxu0
      %v1545 = vadd.f32 0.0, %v1544
      %v1546 = vpop.f32.mrf.mxu0
      %1547 = vdwg.mxu0
      %v1548 = vadd.f32 %v1444, %v1535
      %v1549 = vadd.f32 %v1445, %v1537
      %v1550 = vadd.f32 %v1446, %v1540
      %v1551 = vadd.f32 %v1447, %v1542
      %v1552 = vadd.f32 %v1448, %v1545
      %v1553 = vld [vmem:[%s470] sm:$0xf]
      %v1554 = vld [vmem:[%s470 + $0x4] sm:$0xf]
      %v1555 = vld [vmem:[%s470 + $0x8] sm:$0xf]
      %v1556 = vld [vmem:[%s470 + $0xc] sm:$0xf]
      %v1557 = vld [vmem:[%s470 + $0x10] sm:$0x3]
      %v1558 = vld [vmem:[%s4 + $0x240] sm:$0xf]
      %v1559 = vld [vmem:[%s4 + $0x244] sm:$0xf]
      %v1560 = vld [vmem:[%s4 + $0x248] sm:$0xf]
      %v1561 = vld [vmem:[%s4 + $0x24c] sm:$0xf]
      %v1562 = vld [vmem:[%s4 + $0x250] sm:$0xf]
      %v1563 = vld [vmem:[%s4 + $0x254] sm:$0xf]
      %v1564 = vld [vmem:[%s4 + $0x258] sm:$0xf]
      %v1565 = vld [vmem:[%s4 + $0x25c] sm:$0xf]
      %v1566 = vld [vmem:[%s4 + $0x260] sm:$0xf]
      %v1567 = vld [vmem:[%s4 + $0x264] sm:$0xf]
      %v1568 = vld [vmem:[%s4 + $0x268] sm:$0xf]
      %v1569 = vld [vmem:[%s4 + $0x26c] sm:$0xf]
      %v1570 = vld [vmem:[%s4 + $0x270] sm:$0xf]
      %v1571 = vld [vmem:[%s4 + $0x274] sm:$0xf]
      %v1572 = vld [vmem:[%s4 + $0x278] sm:$0xf]
      %v1573 = vld [vmem:[%s4 + $0x27c] sm:$0xf]
      %v1579 = vunpack.c.l.b16 %v1553
      %v1580 = vunpack.c.l.b16 %v1554
      %v1581 = vunpack.c.l.b16 %v1555
      %v1582 = vunpack.c.l.b16 %v1556
      %v1583 = vunpack.c.l.b16 %v1557
      %v1584 = vpack.c.b16 %v1580, %v1579
      %v1585 = vpack.c.b16 %v1582, %v1581
      %v1586 = vpack.c.b16 %v1583, %v1583
      %v1606 = vunpack.c.l.b16 %v1558
      %v1607 = vunpack.c.l.b16 %v1559
      %v1608 = vunpack.c.l.b16 %v1560
      %v1609 = vunpack.c.l.b16 %v1561
      %v1610 = vunpack.c.l.b16 %v1562
      %v1611 = vunpack.c.l.b16 %v1563
      %v1612 = vunpack.c.l.b16 %v1564
      %v1613 = vunpack.c.l.b16 %v1565
      %v1614 = vunpack.c.l.b16 %v1566
      %v1615 = vunpack.c.l.b16 %v1567
      %v1616 = vunpack.c.l.b16 %v1568
      %v1617 = vunpack.c.l.b16 %v1569
      %v1618 = vunpack.c.l.b16 %v1570
      %v1619 = vunpack.c.l.b16 %v1571
      %v1620 = vunpack.c.l.b16 %v1572
      %v1621 = vunpack.c.l.b16 %v1573
      %v1622 = vpack.c.b16 %v1607, %v1606
      %v1623 = vpack.c.b16 %v1609, %v1608
      %v1624 = vpack.c.b16 %v1611, %v1610
      %v1625 = vpack.c.b16 %v1613, %v1612
      %v1626 = vpack.c.b16 %v1615, %v1614
      %v1627 = vpack.c.b16 %v1617, %v1616
      %v1628 = vpack.c.b16 %v1619, %v1618
      %v1629 = vpack.c.b16 %v1621, %v1620
      %1638 = vmatpush.bf16.msra.mxu0 %v1629
      %1639 = vmatpush.bf16.msra.mxu0 %v1628
      %1640 = vmatpush.bf16.msra.mxu0 %v1627
      %1641 = vmatpush.bf16.msra.mxu0 %v1626
      %1642 = vmatpush.bf16.msra.mxu0 %v1625
      %1643 = vmatpush.bf16.msra.mxu0 %v1624
      %1644 = vmatpush.bf16.msra.mxu0 %v1623
      %1645 = vmatpush.bf16.msra.mxu0 %v1622
      %1646 = vmatmul.bf16.gmra.mxu0 %v1584
      %v1647 = vpop.f32.mrf.mxu0
      %v1648 = vadd.f32 0.0, %v1647
      %v1649 = vpop.f32.mrf.mxu0
      %v1650 = vadd.f32 0.0, %v1649
      %1651 = vmatmul.bf16.gmra.mxu0 %v1585
      %v1652 = vpop.f32.mrf.mxu0
      %v1653 = vadd.f32 0.0, %v1652
      %v1654 = vpop.f32.mrf.mxu0
      %v1655 = vadd.f32 0.0, %v1654
      %1656 = vmatmul.bf16.gmra.mxu0 %v1586
      %v1657 = vpop.f32.mrf.mxu0
      %v1658 = vadd.f32 0.0, %v1657
      %v1659 = vpop.f32.mrf.mxu0
      %1660 = vdwg.mxu0
      %v1661 = vadd.f32 %v1548, %v1648
      %v1662 = vadd.f32 %v1549, %v1650
      %v1663 = vadd.f32 %v1550, %v1653
      %v1664 = vadd.f32 %v1551, %v1655
      %v1665 = vadd.f32 %v1552, %v1658
      %v1666 = vld [vmem:[%s470 + $0x10] sm:$0x7]
      %v1667 = vld [vmem:[%s4 + $0x280] sm:$0xf]
      %v1668 = vld [vmem:[%s4 + $0x284] sm:$0xf]
      %v1669 = vld [vmem:[%s4 + $0x288] sm:$0xf]
      %v1670 = vld [vmem:[%s4 + $0x28c] sm:$0xf]
      %v1671 = vld [vmem:[%s4 + $0x290] sm:$0xf]
      %v1672 = vld [vmem:[%s4 + $0x294] sm:$0xf]
      %v1673 = vld [vmem:[%s4 + $0x298] sm:$0xf]
      %v1674 = vld [vmem:[%s4 + $0x29c] sm:$0xf]
      %v1675 = vld [vmem:[%s4 + $0x2a0] sm:$0xf]
      %v1676 = vld [vmem:[%s4 + $0x2a4] sm:$0xf]
      %v1677 = vld [vmem:[%s4 + $0x2a8] sm:$0xf]
      %v1678 = vld [vmem:[%s4 + $0x2ac] sm:$0xf]
      %v1679 = vld [vmem:[%s4 + $0x2b0] sm:$0xf]
      %v1680 = vld [vmem:[%s4 + $0x2b4] sm:$0xf]
      %v1681 = vld [vmem:[%s4 + $0x2b8] sm:$0xf]
      %v1682 = vld [vmem:[%s4 + $0x2bc] sm:$0xf]
      %v1684 = vunpack.c.l.b16 %v1666
      %v1685 = vpack.c.b16 %v1684, %v1684
      %v1687 = vshrl.u32 %v1584, 16
      %v1689 = vshll.u32 %v1584, 16
      %v1691 = vrot.slane %v1689, 1
      %v1692 = vor.u32 %v1687, %v1691
      %v1694 = vshll.u32 %v1585, 16
      %v1696 = vrot.slane %v1694, 1
      %v1697 = vsel %vm571, %v1692, %v1696
      %v1698 = vshrl.u32 %v1585, 16
      %v1700 = vor.u32 %v1698, %v1696
      %v1702 = vshll.u32 %v1685, 16
      %v1704 = vrot.slane %v1702, 1
      %v1705 = vsel %vm571, %v1700, %v1704
      %v1706 = vshrl.u32 %v1685, 16
      %v1708 = vor.u32 %v1706, %v1704
      %v1728 = vunpack.c.l.b16 %v1667
      %v1729 = vunpack.c.l.b16 %v1668
      %v1730 = vunpack.c.l.b16 %v1669
      %v1731 = vunpack.c.l.b16 %v1670
      %v1732 = vunpack.c.l.b16 %v1671
      %v1733 = vunpack.c.l.b16 %v1672
      %v1734 = vunpack.c.l.b16 %v1673
      %v1735 = vunpack.c.l.b16 %v1674
      %v1736 = vunpack.c.l.b16 %v1675
      %v1737 = vunpack.c.l.b16 %v1676
      %v1738 = vunpack.c.l.b16 %v1677
      %v1739 = vunpack.c.l.b16 %v1678
      %v1740 = vunpack.c.l.b16 %v1679
      %v1741 = vunpack.c.l.b16 %v1680
      %v1742 = vunpack.c.l.b16 %v1681
      %v1743 = vunpack.c.l.b16 %v1682
      %v1744 = vpack.c.b16 %v1729, %v1728
      %v1745 = vpack.c.b16 %v1731, %v1730
      %v1746 = vpack.c.b16 %v1733, %v1732
      %v1747 = vpack.c.b16 %v1735, %v1734
      %v1748 = vpack.c.b16 %v1737, %v1736
      %v1749 = vpack.c.b16 %v1739, %v1738
      %v1750 = vpack.c.b16 %v1741, %v1740
      %v1751 = vpack.c.b16 %v1743, %v1742
      %1760 = vmatpush.bf16.msra.mxu0 %v1751
      %1761 = vmatpush.bf16.msra.mxu0 %v1750
      %1762 = vmatpush.bf16.msra.mxu0 %v1749
      %1763 = vmatpush.bf16.msra.mxu0 %v1748
      %1764 = vmatpush.bf16.msra.mxu0 %v1747
      %1765 = vmatpush.bf16.msra.mxu0 %v1746
      %1766 = vmatpush.bf16.msra.mxu0 %v1745
      %1767 = vmatpush.bf16.msra.mxu0 %v1744
      %1768 = vmatmul.bf16.gmra.mxu0 %v1697
      %v1769 = vpop.f32.mrf.mxu0
      %v1770 = vadd.f32 0.0, %v1769
      %v1771 = vpop.f32.mrf.mxu0
      %v1772 = vadd.f32 0.0, %v1771
      %1773 = vmatmul.bf16.gmra.mxu0 %v1705
      %v1774 = vpop.f32.mrf.mxu0
      %v1775 = vadd.f32 0.0, %v1774
      %v1776 = vpop.f32.mrf.mxu0
      %v1777 = vadd.f32 0.0, %v1776
      %1778 = vmatmul.bf16.gmra.mxu0 %v1708
      %v1779 = vpop.f32.mrf.mxu0
      %v1780 = vadd.f32 0.0, %v1779
      %v1781 = vpop.f32.mrf.mxu0
      %1782 = vdwg.mxu0
      %v1783 = vadd.f32 %v1661, %v1770
      %v1784 = vadd.f32 %v1662, %v1772
      %v1785 = vadd.f32 %v1663, %v1775
      %v1786 = vadd.f32 %v1664, %v1777
      %v1787 = vadd.f32 %v1665, %v1780
      %v1788 = vld [vmem:[%s470] sm:$0xe]
      %v1789 = vld [vmem:[%s4 + $0x2c0] sm:$0xf]
      %v1790 = vld [vmem:[%s4 + $0x2c4] sm:$0xf]
      %v1791 = vld [vmem:[%s4 + $0x2c8] sm:$0xf]
      %v1792 = vld [vmem:[%s4 + $0x2cc] sm:$0xf]
      %v1793 = vld [vmem:[%s4 + $0x2d0] sm:$0xf]
      %v1794 = vld [vmem:[%s4 + $0x2d4] sm:$0xf]
      %v1795 = vld [vmem:[%s4 + $0x2d8] sm:$0xf]
      %v1796 = vld [vmem:[%s4 + $0x2dc] sm:$0xf]
      %v1797 = vld [vmem:[%s4 + $0x2e0] sm:$0xf]
      %v1798 = vld [vmem:[%s4 + $0x2e4] sm:$0xf]
      %v1799 = vld [vmem:[%s4 + $0x2e8] sm:$0xf]
      %v1800 = vld [vmem:[%s4 + $0x2ec] sm:$0xf]
      %v1801 = vld [vmem:[%s4 + $0x2f0] sm:$0xf]
      %v1802 = vld [vmem:[%s4 + $0x2f4] sm:$0xf]
      %v1803 = vld [vmem:[%s4 + $0x2f8] sm:$0xf]
      %v1804 = vld [vmem:[%s4 + $0x2fc] sm:$0xf]
      %v1806 = vunpack.c.l.b16 %v1788
      %v1807 = vpack.c.b16 %v1580, %v1806
      %v1808 = vrot.slane %v1807, 1
      %v1809 = vrot.slane %v1585, 1
      %v1810 = vsel %vm766, %v1808, %v1809
      %v1811 = vrot.slane %v1685, 1
      %v1812 = vsel %vm766, %v1809, %v1811
      %v1832 = vunpack.c.l.b16 %v1789
      %v1833 = vunpack.c.l.b16 %v1790
      %v1834 = vunpack.c.l.b16 %v1791
      %v1835 = vunpack.c.l.b16 %v1792
      %v1836 = vunpack.c.l.b16 %v1793
      %v1837 = vunpack.c.l.b16 %v1794
      %v1838 = vunpack.c.l.b16 %v1795
      %v1839 = vunpack.c.l.b16 %v1796
      %v1840 = vunpack.c.l.b16 %v1797
      %v1841 = vunpack.c.l.b16 %v1798
      %v1842 = vunpack.c.l.b16 %v1799
      %v1843 = vunpack.c.l.b16 %v1800
      %v1844 = vunpack.c.l.b16 %v1801
      %v1845 = vunpack.c.l.b16 %v1802
      %v1846 = vunpack.c.l.b16 %v1803
      %v1847 = vunpack.c.l.b16 %v1804
      %v1848 = vpack.c.b16 %v1833, %v1832
      %v1849 = vpack.c.b16 %v1835, %v1834
      %v1850 = vpack.c.b16 %v1837, %v1836
      %v1851 = vpack.c.b16 %v1839, %v1838
      %v1852 = vpack.c.b16 %v1841, %v1840
      %v1853 = vpack.c.b16 %v1843, %v1842
      %v1854 = vpack.c.b16 %v1845, %v1844
      %v1855 = vpack.c.b16 %v1847, %v1846
      %1864 = vmatpush.bf16.msra.mxu0 %v1855
      %1865 = vmatpush.bf16.msra.mxu0 %v1854
      %1866 = vmatpush.bf16.msra.mxu0 %v1853
      %1867 = vmatpush.bf16.msra.mxu0 %v1852
      %1868 = vmatpush.bf16.msra.mxu0 %v1851
      %1869 = vmatpush.bf16.msra.mxu0 %v1850
      %1870 = vmatpush.bf16.msra.mxu0 %v1849
      %1871 = vmatpush.bf16.msra.mxu0 %v1848
      %1872 = vmatmul.bf16.gmra.mxu0 %v1810
      %v1873 = vpop.f32.mrf.mxu0
      %v1874 = vadd.f32 0.0, %v1873
      %v1875 = vpop.f32.mrf.mxu0
      %v1876 = vadd.f32 0.0, %v1875
      %1877 = vmatmul.bf16.gmra.mxu0 %v1812
      %v1878 = vpop.f32.mrf.mxu0
      %v1879 = vadd.f32 0.0, %v1878
      %v1880 = vpop.f32.mrf.mxu0
      %v1881 = vadd.f32 0.0, %v1880
      %1882 = vmatmul.bf16.gmra.mxu0 %v1811
      %v1883 = vpop.f32.mrf.mxu0
      %v1884 = vadd.f32 0.0, %v1883
      %v1885 = vpop.f32.mrf.mxu0
      %1886 = vdwg.mxu0
      %v1887 = vadd.f32 %v1783, %v1874
      %v1888 = vadd.f32 %v1784, %v1876
      %v1889 = vadd.f32 %v1785, %v1879
      %v1890 = vadd.f32 %v1786, %v1881
      %v1891 = vadd.f32 %v1787, %v1884
      %v1892 = vld [vmem:[%s470] sm:$0x8]
      %v1893 = vld [vmem:[%s470 + $0x4] sm:$0xf]
      %v1894 = vld [vmem:[%s470 + $0x8] sm:$0xf]
      %v1895 = vld [vmem:[%s470 + $0xc] sm:$0xf]
      %v1896 = vld [vmem:[%s470 + $0x10] sm:$0xf]
      %v1897 = vld [vmem:[%s470 + $0x14] sm:$0x1]
      %v1898 = vld [vmem:[%s4 + $0x300] sm:$0xf]
      %v1899 = vld [vmem:[%s4 + $0x304] sm:$0xf]
      %v1900 = vld [vmem:[%s4 + $0x308] sm:$0xf]
      %v1901 = vld [vmem:[%s4 + $0x30c] sm:$0xf]
      %v1902 = vld [vmem:[%s4 + $0x310] sm:$0xf]
      %v1903 = vld [vmem:[%s4 + $0x314] sm:$0xf]
      %v1904 = vld [vmem:[%s4 + $0x318] sm:$0xf]
      %v1905 = vld [vmem:[%s4 + $0x31c] sm:$0xf]
      %v1906 = vld [vmem:[%s4 + $0x320] sm:$0xf]
      %v1907 = vld [vmem:[%s4 + $0x324] sm:$0xf]
      %v1908 = vld [vmem:[%s4 + $0x328] sm:$0xf]
      %v1909 = vld [vmem:[%s4 + $0x32c] sm:$0xf]
      %v1910 = vld [vmem:[%s4 + $0x330] sm:$0xf]
      %v1911 = vld [vmem:[%s4 + $0x334] sm:$0xf]
      %v1912 = vld [vmem:[%s4 + $0x338] sm:$0xf]
      %v1913 = vld [vmem:[%s4 + $0x33c] sm:$0xf]
      %v1920 = vunpack.c.l.b16 %v1892
      %v1921 = vunpack.c.l.b16 %v1893
      %v1922 = vunpack.c.l.b16 %v1894
      %v1923 = vunpack.c.l.b16 %v1895
      %v1924 = vunpack.c.l.b16 %v1896
      %v1925 = vunpack.c.l.b16 %v1897
      %v1926 = vpack.c.b16 %v1921, %v1920
      %v1927 = vpack.c.b16 %v1923, %v1922
      %v1928 = vpack.c.b16 %v1925, %v1924
      %v1929 = vrot.slane %v1926, 3
      %v1930 = vrot.slane %v1927, 3
      %v1931 = vsel %vm888, %v1929, %v1930
      %v1932 = vrot.slane %v1928, 3
      %v1933 = vsel %vm888, %v1930, %v1932
      %v1953 = vunpack.c.l.b16 %v1898
      %v1954 = vunpack.c.l.b16 %v1899
      %v1955 = vunpack.c.l.b16 %v1900
      %v1956 = vunpack.c.l.b16 %v1901
      %v1957 = vunpack.c.l.b16 %v1902
      %v1958 = vunpack.c.l.b16 %v1903
      %v1959 = vunpack.c.l.b16 %v1904
      %v1960 = vunpack.c.l.b16 %v1905
      %v1961 = vunpack.c.l.b16 %v1906
      %v1962 = vunpack.c.l.b16 %v1907
      %v1963 = vunpack.c.l.b16 %v1908
      %v1964 = vunpack.c.l.b16 %v1909
      %v1965 = vunpack.c.l.b16 %v1910
      %v1966 = vunpack.c.l.b16 %v1911
      %v1967 = vunpack.c.l.b16 %v1912
      %v1968 = vunpack.c.l.b16 %v1913
      %v1969 = vpack.c.b16 %v1954, %v1953
      %v1970 = vpack.c.b16 %v1956, %v1955
      %v1971 = vpack.c.b16 %v1958, %v1957
      %v1972 = vpack.c.b16 %v1960, %v1959
      %v1973 = vpack.c.b16 %v1962, %v1961
      %v1974 = vpack.c.b16 %v1964, %v1963
      %v1975 = vpack.c.b16 %v1966, %v1965
      %v1976 = vpack.c.b16 %v1968, %v1967
      %1985 = vmatpush.bf16.msra.mxu0 %v1976
      %1986 = vmatpush.bf16.msra.mxu0 %v1975
      %1987 = vmatpush.bf16.msra.mxu0 %v1974
      %1988 = vmatpush.bf16.msra.mxu0 %v1973
      %1989 = vmatpush.bf16.msra.mxu0 %v1972
      %1990 = vmatpush.bf16.msra.mxu0 %v1971
      %1991 = vmatpush.bf16.msra.mxu0 %v1970
      %1992 = vmatpush.bf16.msra.mxu0 %v1969
      %1993 = vmatmul.bf16.gmra.mxu0 %v1931
      %v1994 = vpop.f32.mrf.mxu0
      %v1995 = vadd.f32 0.0, %v1994
      %v1996 = vpop.f32.mrf.mxu0
      %v1997 = vadd.f32 0.0, %v1996
      %1998 = vmatmul.bf16.gmra.mxu0 %v1933
      %v1999 = vpop.f32.mrf.mxu0
      %v2000 = vadd.f32 0.0, %v1999
      %v2001 = vpop.f32.mrf.mxu0
      %v2002 = vadd.f32 0.0, %v2001
      %2003 = vmatmul.bf16.gmra.mxu0 %v1932
      %v2004 = vpop.f32.mrf.mxu0
      %v2005 = vadd.f32 0.0, %v2004
      %v2006 = vpop.f32.mrf.mxu0
      %2007 = vdwg.mxu0
      %v2008 = vadd.f32 %v1887, %v1995
      %v2009 = vadd.f32 %v1888, %v1997
      %v2010 = vadd.f32 %v1889, %v2000
      %v2011 = vadd.f32 %v1890, %v2002
      %v2012 = vadd.f32 %v1891, %v2005
      %v2013 = vld [vmem:[%s470 + $0x14] sm:$0x3]
      %v2014 = vld [vmem:[%s4 + $0x340] sm:$0xf]
      %v2015 = vld [vmem:[%s4 + $0x344] sm:$0xf]
      %v2016 = vld [vmem:[%s4 + $0x348] sm:$0xf]
      %v2017 = vld [vmem:[%s4 + $0x34c] sm:$0xf]
      %v2018 = vld [vmem:[%s4 + $0x350] sm:$0xf]
      %v2019 = vld [vmem:[%s4 + $0x354] sm:$0xf]
      %v2020 = vld [vmem:[%s4 + $0x358] sm:$0xf]
      %v2021 = vld [vmem:[%s4 + $0x35c] sm:$0xf]
      %v2022 = vld [vmem:[%s4 + $0x360] sm:$0xf]
      %v2023 = vld [vmem:[%s4 + $0x364] sm:$0xf]
      %v2024 = vld [vmem:[%s4 + $0x368] sm:$0xf]
      %v2025 = vld [vmem:[%s4 + $0x36c] sm:$0xf]
      %v2026 = vld [vmem:[%s4 + $0x370] sm:$0xf]
      %v2027 = vld [vmem:[%s4 + $0x374] sm:$0xf]
      %v2028 = vld [vmem:[%s4 + $0x378] sm:$0xf]
      %v2029 = vld [vmem:[%s4 + $0x37c] sm:$0xf]
      %v2031 = vunpack.c.l.b16 %v2013
      %v2032 = vpack.c.b16 %v2031, %v1924
      %v2034 = vshrl.u32 %v1926, 16
      %v2036 = vrot.slane %v2034, 3
      %v2037 = vshll.u32 %v1926, 16
      %v2039 = vrot.slane %v2037, 4
      %v2040 = vor.u32 %v2036, %v2039
      %v2042 = vshrl.u32 %v1927, 16
      %v2044 = vrot.slane %v2042, 3
      %v2045 = vshll.u32 %v1927, 16
      %v2047 = vrot.slane %v2045, 4
      %v2048 = vor.u32 %v2044, %v2047
      %v2049 = vsel %vm993, %v2040, %v2048
      %v2051 = vshrl.u32 %v2032, 16
      %v2053 = vrot.slane %v2051, 3
      %v2054 = vshll.u32 %v2032, 16
      %v2056 = vrot.slane %v2054, 4
      %v2057 = vor.u32 %v2053, %v2056
      %v2058 = vsel %vm993, %v2048, %v2057
      %v2078 = vunpack.c.l.b16 %v2014
      %v2079 = vunpack.c.l.b16 %v2015
      %v2080 = vunpack.c.l.b16 %v2016
      %v2081 = vunpack.c.l.b16 %v2017
      %v2082 = vunpack.c.l.b16 %v2018
      %v2083 = vunpack.c.l.b16 %v2019
      %v2084 = vunpack.c.l.b16 %v2020
      %v2085 = vunpack.c.l.b16 %v2021
      %v2086 = vunpack.c.l.b16 %v2022
      %v2087 = vunpack.c.l.b16 %v2023
      %v2088 = vunpack.c.l.b16 %v2024
      %v2089 = vunpack.c.l.b16 %v2025
      %v2090 = vunpack.c.l.b16 %v2026
      %v2091 = vunpack.c.l.b16 %v2027
      %v2092 = vunpack.c.l.b16 %v2028
      %v2093 = vunpack.c.l.b16 %v2029
      %v2094 = vpack.c.b16 %v2079, %v2078
      %v2095 = vpack.c.b16 %v2081, %v2080
      %v2096 = vpack.c.b16 %v2083, %v2082
      %v2097 = vpack.c.b16 %v2085, %v2084
      %v2098 = vpack.c.b16 %v2087, %v2086
      %v2099 = vpack.c.b16 %v2089, %v2088
      %v2100 = vpack.c.b16 %v2091, %v2090
      %v2101 = vpack.c.b16 %v2093, %v2092
      %2110 = vmatpush.bf16.msra.mxu0 %v2101
      %2111 = vmatpush.bf16.msra.mxu0 %v2100
      %2112 = vmatpush.bf16.msra.mxu0 %v2099
      %2113 = vmatpush.bf16.msra.mxu0 %v2098
      %2114 = vmatpush.bf16.msra.mxu0 %v2097
      %2115 = vmatpush.bf16.msra.mxu0 %v2096
      %2116 = vmatpush.bf16.msra.mxu0 %v2095
      %2117 = vmatpush.bf16.msra.mxu0 %v2094
      %2118 = vmatmul.bf16.gmra.mxu0 %v2049
      %v2119 = vpop.f32.mrf.mxu0
      %v2120 = vadd.f32 0.0, %v2119
      %v2121 = vpop.f32.mrf.mxu0
      %v2122 = vadd.f32 0.0, %v2121
      %2123 = vmatmul.bf16.gmra.mxu0 %v2058
      %v2124 = vpop.f32.mrf.mxu0
      %v2125 = vadd.f32 0.0, %v2124
      %v2126 = vpop.f32.mrf.mxu0
      %v2127 = vadd.f32 0.0, %v2126
      %2128 = vmatmul.bf16.gmra.mxu0 %v2057
      %v2129 = vpop.f32.mrf.mxu0
      %v2130 = vadd.f32 0.0, %v2129
      %v2131 = vpop.f32.mrf.mxu0
      %2132 = vdwg.mxu0
      %v2133 = vadd.f32 %v2008, %v2120
      %v2134 = vadd.f32 %v2009, %v2122
      %v2135 = vadd.f32 %v2010, %v2125
      %v2136 = vadd.f32 %v2011, %v2127
      %v2137 = vadd.f32 %v2012, %v2130
      %v2138 = vld [vmem:[%s4 + $0x380] sm:$0xf]
      %v2139 = vld [vmem:[%s4 + $0x384] sm:$0xf]
      %v2140 = vld [vmem:[%s4 + $0x388] sm:$0xf]
      %v2141 = vld [vmem:[%s4 + $0x38c] sm:$0xf]
      %v2142 = vld [vmem:[%s4 + $0x390] sm:$0xf]
      %v2143 = vld [vmem:[%s4 + $0x394] sm:$0xf]
      %v2144 = vld [vmem:[%s4 + $0x398] sm:$0xf]
      %v2145 = vld [vmem:[%s4 + $0x39c] sm:$0xf]
      %v2146 = vld [vmem:[%s4 + $0x3a0] sm:$0xf]
      %v2147 = vld [vmem:[%s4 + $0x3a4] sm:$0xf]
      %v2148 = vld [vmem:[%s4 + $0x3a8] sm:$0xf]
      %v2149 = vld [vmem:[%s4 + $0x3ac] sm:$0xf]
      %v2150 = vld [vmem:[%s4 + $0x3b0] sm:$0xf]
      %v2151 = vld [vmem:[%s4 + $0x3b4] sm:$0xf]
      %v2152 = vld [vmem:[%s4 + $0x3b8] sm:$0xf]
      %v2153 = vld [vmem:[%s4 + $0x3bc] sm:$0xf]
      %v2154 = vpack.c.b16 %v1922, %v1921
      %v2155 = vpack.c.b16 %v1924, %v1923
      %v2156 = vpack.c.b16 %v2031, %v2031
      %v2176 = vunpack.c.l.b16 %v2138
      %v2177 = vunpack.c.l.b16 %v2139
      %v2178 = vunpack.c.l.b16 %v2140
      %v2179 = vunpack.c.l.b16 %v2141
      %v2180 = vunpack.c.l.b16 %v2142
      %v2181 = vunpack.c.l.b16 %v2143
      %v2182 = vunpack.c.l.b16 %v2144
      %v2183 = vunpack.c.l.b16 %v2145
      %v2184 = vunpack.c.l.b16 %v2146
      %v2185 = vunpack.c.l.b16 %v2147
      %v2186 = vunpack.c.l.b16 %v2148
      %v2187 = vunpack.c.l.b16 %v2149
      %v2188 = vunpack.c.l.b16 %v2150
      %v2189 = vunpack.c.l.b16 %v2151
      %v2190 = vunpack.c.l.b16 %v2152
      %v2191 = vunpack.c.l.b16 %v2153
      %v2192 = vpack.c.b16 %v2177, %v2176
      %v2193 = vpack.c.b16 %v2179, %v2178
      %v2194 = vpack.c.b16 %v2181, %v2180
      %v2195 = vpack.c.b16 %v2183, %v2182
      %v2196 = vpack.c.b16 %v2185, %v2184
      %v2197 = vpack.c.b16 %v2187, %v2186
      %v2198 = vpack.c.b16 %v2189, %v2188
      %v2199 = vpack.c.b16 %v2191, %v2190
      %2208 = vmatpush.bf16.msra.mxu0 %v2199
      %2209 = vmatpush.bf16.msra.mxu0 %v2198
      %2210 = vmatpush.bf16.msra.mxu0 %v2197
      %2211 = vmatpush.bf16.msra.mxu0 %v2196
      %2212 = vmatpush.bf16.msra.mxu0 %v2195
      %2213 = vmatpush.bf16.msra.mxu0 %v2194
      %2214 = vmatpush.bf16.msra.mxu0 %v2193
      %2215 = vmatpush.bf16.msra.mxu0 %v2192
      %2216 = vmatmul.bf16.gmra.mxu0 %v2154
      %v2217 = vpop.f32.mrf.mxu0
      %v2218 = vadd.f32 0.0, %v2217
      %v2219 = vpop.f32.mrf.mxu0
      %v2220 = vadd.f32 0.0, %v2219
      %2221 = vmatmul.bf16.gmra.mxu0 %v2155
      %v2222 = vpop.f32.mrf.mxu0
      %v2223 = vadd.f32 0.0, %v2222
      %v2224 = vpop.f32.mrf.mxu0
      %v2225 = vadd.f32 0.0, %v2224
      %2226 = vmatmul.bf16.gmra.mxu0 %v2156
      %v2227 = vpop.f32.mrf.mxu0
      %v2228 = vadd.f32 0.0, %v2227
      %v2229 = vpop.f32.mrf.mxu0
      %2230 = vdwg.mxu0
      %v2231 = vadd.f32 %v2133, %v2218
      %v2232 = vadd.f32 %v2134, %v2220
      %v2233 = vadd.f32 %v2135, %v2223
      %v2234 = vadd.f32 %v2136, %v2225
      %v2235 = vadd.f32 %v2137, %v2228
      %v2236 = vld [vmem:[%s470 + $0x4] sm:$0xc]
      %v2237 = vld [vmem:[%s470 + $0x14] sm:$0xf]
      %v2238 = vld [vmem:[%s4 + $0x3c0] sm:$0xf]
      %v2239 = vld [vmem:[%s4 + $0x3c4] sm:$0xf]
      %v2240 = vld [vmem:[%s4 + $0x3c8] sm:$0xf]
      %v2241 = vld [vmem:[%s4 + $0x3cc] sm:$0xf]
      %v2242 = vld [vmem:[%s4 + $0x3d0] sm:$0xf]
      %v2243 = vld [vmem:[%s4 + $0x3d4] sm:$0xf]
      %v2244 = vld [vmem:[%s4 + $0x3d8] sm:$0xf]
      %v2245 = vld [vmem:[%s4 + $0x3dc] sm:$0xf]
      %v2246 = vld [vmem:[%s4 + $0x3e0] sm:$0xf]
      %v2247 = vld [vmem:[%s4 + $0x3e4] sm:$0xf]
      %v2248 = vld [vmem:[%s4 + $0x3e8] sm:$0xf]
      %v2249 = vld [vmem:[%s4 + $0x3ec] sm:$0xf]
      %v2250 = vld [vmem:[%s4 + $0x3f0] sm:$0xf]
      %v2251 = vld [vmem:[%s4 + $0x3f4] sm:$0xf]
      %v2252 = vld [vmem:[%s4 + $0x3f8] sm:$0xf]
      %v2253 = vld [vmem:[%s4 + $0x3fc] sm:$0xf]
      %v2256 = vunpack.c.l.b16 %v2236
      %v2257 = vunpack.c.l.b16 %v2237
      %v2258 = vpack.c.b16 %v1922, %v2256
      %v2259 = vpack.c.b16 %v2257, %v2257
      %v2260 = vrot.slane %v2258, 2
      %v2261 = vrot.slane %v2155, 2
      %v2262 = vsel %vm1221, %v2260, %v2261
      %v2263 = vrot.slane %v2259, 2
      %v2264 = vsel %vm1221, %v2261, %v2263
      %v2284 = vunpack.c.l.b16 %v2238
      %v2285 = vunpack.c.l.b16 %v2239
      %v2286 = vunpack.c.l.b16 %v2240
      %v2287 = vunpack.c.l.b16 %v2241
      %v2288 = vunpack.c.l.b16 %v2242
      %v2289 = vunpack.c.l.b16 %v2243
      %v2290 = vunpack.c.l.b16 %v2244
      %v2291 = vunpack.c.l.b16 %v2245
      %v2292 = vunpack.c.l.b16 %v2246
      %v2293 = vunpack.c.l.b16 %v2247
      %v2294 = vunpack.c.l.b16 %v2248
      %v2295 = vunpack.c.l.b16 %v2249
      %v2296 = vunpack.c.l.b16 %v2250
      %v2297 = vunpack.c.l.b16 %v2251
      %v2298 = vunpack.c.l.b16 %v2252
      %v2299 = vunpack.c.l.b16 %v2253
      %v2300 = vpack.c.b16 %v2285, %v2284
      %v2301 = vpack.c.b16 %v2287, %v2286
      %v2302 = vpack.c.b16 %v2289, %v2288
      %v2303 = vpack.c.b16 %v2291, %v2290
      %v2304 = vpack.c.b16 %v2293, %v2292
      %v2305 = vpack.c.b16 %v2295, %v2294
      %v2306 = vpack.c.b16 %v2297, %v2296
      %v2307 = vpack.c.b16 %v2299, %v2298
      %2316 = vmatpush.bf16.msra.mxu0 %v2307
      %2317 = vmatpush.bf16.msra.mxu0 %v2306
      %2318 = vmatpush.bf16.msra.mxu0 %v2305
      %2319 = vmatpush.bf16.msra.mxu0 %v2304
      %2320 = vmatpush.bf16.msra.mxu0 %v2303
      %2321 = vmatpush.bf16.msra.mxu0 %v2302
      %2322 = vmatpush.bf16.msra.mxu0 %v2301
      %2323 = vmatpush.bf16.msra.mxu0 %v2300
      %2324 = vmatmul.bf16.gmra.mxu0 %v2262
      %v2325 = vpop.f32.mrf.mxu0
      %v2326 = vadd.f32 0.0, %v2325
      %v2327 = vpop.f32.mrf.mxu0
      %v2328 = vadd.f32 0.0, %v2327
      %2329 = vmatmul.bf16.gmra.mxu0 %v2264
      %v2330 = vpop.f32.mrf.mxu0
      %v2331 = vadd.f32 0.0, %v2330
      %v2332 = vpop.f32.mrf.mxu0
      %v2333 = vadd.f32 0.0, %v2332
      %2334 = vmatmul.bf16.gmra.mxu0 %v2263
      %v2335 = vpop.f32.mrf.mxu0
      %v2336 = vadd.f32 0.0, %v2335
      %v2337 = vpop.f32.mrf.mxu0
      %2338 = vdwg.mxu0
      %v2339 = vadd.f32 %v2231, %v2326
      %v2340 = vadd.f32 %v2232, %v2328
      %v2341 = vadd.f32 %v2233, %v2331
      %v2342 = vadd.f32 %v2234, %v2333
      %v2343 = vadd.f32 %v2235, %v2336
      %v2344 = vld [vmem:[%s470 + $0x4] sm:$0xc]
      %v2345 = vld [vmem:[%s470 + $0x8] sm:$0xf]
      %v2346 = vld [vmem:[%s470 + $0xc] sm:$0xf]
      %v2347 = vld [vmem:[%s470 + $0x10] sm:$0xf]
      %v2348 = vld [vmem:[%s470 + $0x14] sm:$0xf]
      %v2349 = vld [vmem:[%s470 + $0x18] sm:$0x1]
      %v2350 = vld [vmem:[%s4 + $0x400] sm:$0xf]
      %v2351 = vld [vmem:[%s4 + $0x404] sm:$0xf]
      %v2352 = vld [vmem:[%s4 + $0x408] sm:$0xf]
      %v2353 = vld [vmem:[%s4 + $0x40c] sm:$0xf]
      %v2354 = vld [vmem:[%s4 + $0x410] sm:$0xf]
      %v2355 = vld [vmem:[%s4 + $0x414] sm:$0xf]
      %v2356 = vld [vmem:[%s4 + $0x418] sm:$0xf]
      %v2357 = vld [vmem:[%s4 + $0x41c] sm:$0xf]
      %v2358 = vld [vmem:[%s4 + $0x420] sm:$0xf]
      %v2359 = vld [vmem:[%s4 + $0x424] sm:$0xf]
      %v2360 = vld [vmem:[%s4 + $0x428] sm:$0xf]
      %v2361 = vld [vmem:[%s4 + $0x42c] sm:$0xf]
      %v2362 = vld [vmem:[%s4 + $0x430] sm:$0xf]
      %v2363 = vld [vmem:[%s4 + $0x434] sm:$0xf]
      %v2364 = vld [vmem:[%s4 + $0x438] sm:$0xf]
      %v2365 = vld [vmem:[%s4 + $0x43c] sm:$0xf]
      %v2372 = vunpack.c.l.b16 %v2344
      %v2373 = vunpack.c.l.b16 %v2345
      %v2374 = vunpack.c.l.b16 %v2346
      %v2375 = vunpack.c.l.b16 %v2347
      %v2376 = vunpack.c.l.b16 %v2348
      %v2377 = vunpack.c.l.b16 %v2349
      %v2378 = vpack.c.b16 %v2373, %v2372
      %v2379 = vpack.c.b16 %v2375, %v2374
      %v2380 = vpack.c.b16 %v2377, %v2376
      %v2382 = vshrl.u32 %v2378, 16
      %v2384 = vrot.slane %v2382, 2
      %v2385 = vshll.u32 %v2378, 16
      %v2387 = vrot.slane %v2385, 3
      %v2388 = vor.u32 %v2384, %v2387
      %v2390 = vshrl.u32 %v2379, 16
      %v2392 = vrot.slane %v2390, 2
      %v2393 = vshll.u32 %v2379, 16
      %v2395 = vrot.slane %v2393, 3
      %v2396 = vor.u32 %v2392, %v2395
      %v2397 = vsel %vm1343, %v2388, %v2396
      %v2399 = vshrl.u32 %v2380, 16
      %v2401 = vrot.slane %v2399, 2
      %v2402 = vshll.u32 %v2380, 16
      %v2404 = vrot.slane %v2402, 3
      %v2405 = vor.u32 %v2401, %v2404
      %v2406 = vsel %vm1343, %v2396, %v2405
      %v2426 = vunpack.c.l.b16 %v2350
      %v2427 = vunpack.c.l.b16 %v2351
      %v2428 = vunpack.c.l.b16 %v2352
      %v2429 = vunpack.c.l.b16 %v2353
      %v2430 = vunpack.c.l.b16 %v2354
      %v2431 = vunpack.c.l.b16 %v2355
      %v2432 = vunpack.c.l.b16 %v2356
      %v2433 = vunpack.c.l.b16 %v2357
      %v2434 = vunpack.c.l.b16 %v2358
      %v2435 = vunpack.c.l.b16 %v2359
      %v2436 = vunpack.c.l.b16 %v2360
      %v2437 = vunpack.c.l.b16 %v2361
      %v2438 = vunpack.c.l.b16 %v2362
      %v2439 = vunpack.c.l.b16 %v2363
      %v2440 = vunpack.c.l.b16 %v2364
      %v2441 = vunpack.c.l.b16 %v2365
      %v2442 = vpack.c.b16 %v2427, %v2426
      %v2443 = vpack.c.b16 %v2429, %v2428
      %v2444 = vpack.c.b16 %v2431, %v2430
      %v2445 = vpack.c.b16 %v2433, %v2432
      %v2446 = vpack.c.b16 %v2435, %v2434
      %v2447 = vpack.c.b16 %v2437, %v2436
      %v2448 = vpack.c.b16 %v2439, %v2438
      %v2449 = vpack.c.b16 %v2441, %v2440
      %2458 = vmatpush.bf16.msra.mxu0 %v2449
      %2459 = vmatpush.bf16.msra.mxu0 %v2448
      %2460 = vmatpush.bf16.msra.mxu0 %v2447
      %2461 = vmatpush.bf16.msra.mxu0 %v2446
      %2462 = vmatpush.bf16.msra.mxu0 %v2445
      %2463 = vmatpush.bf16.msra.mxu0 %v2444
      %2464 = vmatpush.bf16.msra.mxu0 %v2443
      %2465 = vmatpush.bf16.msra.mxu0 %v2442
      %2466 = vmatmul.bf16.gmra.mxu0 %v2397
      %v2467 = vpop.f32.mrf.mxu0
      %v2468 = vadd.f32 0.0, %v2467
      %v2469 = vpop.f32.mrf.mxu0
      %v2470 = vadd.f32 0.0, %v2469
      %2471 = vmatmul.bf16.gmra.mxu0 %v2406
      %v2472 = vpop.f32.mrf.mxu0
      %v2473 = vadd.f32 0.0, %v2472
      %v2474 = vpop.f32.mrf.mxu0
      %v2475 = vadd.f32 0.0, %v2474
      %2476 = vmatmul.bf16.gmra.mxu0 %v2405
      %v2477 = vpop.f32.mrf.mxu0
      %v2478 = vadd.f32 0.0, %v2477
      %v2479 = vpop.f32.mrf.mxu0
      %2480 = vdwg.mxu0
      %v2481 = vadd.f32 %v2339, %v2468
      %v2482 = vadd.f32 %v2340, %v2470
      %v2483 = vadd.f32 %v2341, %v2473
      %v2484 = vadd.f32 %v2342, %v2475
      %v2485 = vadd.f32 %v2343, %v2478
      %v2486 = vld [vmem:[%s470 + $0x4] sm:$0x8]
      %v2487 = vld [vmem:[%s4 + $0x440] sm:$0xf]
      %v2488 = vld [vmem:[%s4 + $0x444] sm:$0xf]
      %v2489 = vld [vmem:[%s4 + $0x448] sm:$0xf]
      %v2490 = vld [vmem:[%s4 + $0x44c] sm:$0xf]
      %v2491 = vld [vmem:[%s4 + $0x450] sm:$0xf]
      %v2492 = vld [vmem:[%s4 + $0x454] sm:$0xf]
      %v2493 = vld [vmem:[%s4 + $0x458] sm:$0xf]
      %v2494 = vld [vmem:[%s4 + $0x45c] sm:$0xf]
      %v2495 = vld [vmem:[%s4 + $0x460] sm:$0xf]
      %v2496 = vld [vmem:[%s4 + $0x464] sm:$0xf]
      %v2497 = vld [vmem:[%s4 + $0x468] sm:$0xf]
      %v2498 = vld [vmem:[%s4 + $0x46c] sm:$0xf]
      %v2499 = vld [vmem:[%s4 + $0x470] sm:$0xf]
      %v2500 = vld [vmem:[%s4 + $0x474] sm:$0xf]
      %v2501 = vld [vmem:[%s4 + $0x478] sm:$0xf]
      %v2502 = vld [vmem:[%s4 + $0x47c] sm:$0xf]
      %v2504 = vunpack.c.l.b16 %v2486
      %v2505 = vpack.c.b16 %v2373, %v2504
      %v2506 = vrot.slane %v2505, 3
      %v2507 = vrot.slane %v2379, 3
      %v2508 = vsel %vm888, %v2506, %v2507
      %v2509 = vrot.slane %v2380, 3
      %v2510 = vsel %vm888, %v2507, %v2509
      %v2530 = vunpack.c.l.b16 %v2487
      %v2531 = vunpack.c.l.b16 %v2488
      %v2532 = vunpack.c.l.b16 %v2489
      %v2533 = vunpack.c.l.b16 %v2490
      %v2534 = vunpack.c.l.b16 %v2491
      %v2535 = vunpack.c.l.b16 %v2492
      %v2536 = vunpack.c.l.b16 %v2493
      %v2537 = vunpack.c.l.b16 %v2494
      %v2538 = vunpack.c.l.b16 %v2495
      %v2539 = vunpack.c.l.b16 %v2496
      %v2540 = vunpack.c.l.b16 %v2497
      %v2541 = vunpack.c.l.b16 %v2498
      %v2542 = vunpack.c.l.b16 %v2499
      %v2543 = vunpack.c.l.b16 %v2500
      %v2544 = vunpack.c.l.b16 %v2501
      %v2545 = vunpack.c.l.b16 %v2502
      %v2546 = vpack.c.b16 %v2531, %v2530
      %v2547 = vpack.c.b16 %v2533, %v2532
      %v2548 = vpack.c.b16 %v2535, %v2534
      %v2549 = vpack.c.b16 %v2537, %v2536
      %v2550 = vpack.c.b16 %v2539, %v2538
      %v2551 = vpack.c.b16 %v2541, %v2540
      %v2552 = vpack.c.b16 %v2543, %v2542
      %v2553 = vpack.c.b16 %v2545, %v2544
      %2562 = vmatpush.bf16.msra.mxu0 %v2553
      %2563 = vmatpush.bf16.msra.mxu0 %v2552
      %2564 = vmatpush.bf16.msra.mxu0 %v2551
      %2565 = vmatpush.bf16.msra.mxu0 %v2550
      %2566 = vmatpush.bf16.msra.mxu0 %v2549
      %2567 = vmatpush.bf16.msra.mxu0 %v2548
      %2568 = vmatpush.bf16.msra.mxu0 %v2547
      %2569 = vmatpush.bf16.msra.mxu0 %v2546
      %2570 = vmatmul.bf16.gmra.mxu0 %v2508
      %v2571 = vpop.f32.mrf.mxu0
      %v2572 = vadd.f32 0.0, %v2571
      %v2573 = vpop.f32.mrf.mxu0
      %v2574 = vadd.f32 0.0, %v2573
      %2575 = vmatmul.bf16.gmra.mxu0 %v2510
      %v2576 = vpop.f32.mrf.mxu0
      %v2577 = vadd.f32 0.0, %v2576
      %v2578 = vpop.f32.mrf.mxu0
      %v2579 = vadd.f32 0.0, %v2578
      %2580 = vmatmul.bf16.gmra.mxu0 %v2509
      %v2581 = vpop.f32.mrf.mxu0
      %v2582 = vadd.f32 0.0, %v2581
      %v2583 = vpop.f32.mrf.mxu0
      %2584 = vdwg.mxu0
      %v2585 = vadd.f32 %v2481, %v2572
      %v2586 = vadd.f32 %v2482, %v2574
      %v2587 = vadd.f32 %v2483, %v2577
      %v2588 = vadd.f32 %v2484, %v2579
      %v2589 = vadd.f32 %v2485, %v2582
      %v2590 = vld [vmem:[%s483] sm:$0xf]
      %v2591 = vld [vmem:[%s483 + $0x4] sm:$0xf]
      %v2592 = vld [vmem:[%s483 + $0x8] sm:$0xf]
      %v2593 = vld [vmem:[%s483 + $0xc] sm:$0xf]
      %v2594 = vld [vmem:[%s483 + $0x10] sm:$0x3]
      %v2595 = vld [vmem:[%s4 + $0x480] sm:$0xf]
      %v2596 = vld [vmem:[%s4 + $0x484] sm:$0xf]
      %v2597 = vld [vmem:[%s4 + $0x488] sm:$0xf]
      %v2598 = vld [vmem:[%s4 + $0x48c] sm:$0xf]
      %v2599 = vld [vmem:[%s4 + $0x490] sm:$0xf]
      %v2600 = vld [vmem:[%s4 + $0x494] sm:$0xf]
      %v2601 = vld [vmem:[%s4 + $0x498] sm:$0xf]
      %v2602 = vld [vmem:[%s4 + $0x49c] sm:$0xf]
      %v2603 = vld [vmem:[%s4 + $0x4a0] sm:$0xf]
      %v2604 = vld [vmem:[%s4 + $0x4a4] sm:$0xf]
      %v2605 = vld [vmem:[%s4 + $0x4a8] sm:$0xf]
      %v2606 = vld [vmem:[%s4 + $0x4ac] sm:$0xf]
      %v2607 = vld [vmem:[%s4 + $0x4b0] sm:$0xf]
      %v2608 = vld [vmem:[%s4 + $0x4b4] sm:$0xf]
      %v2609 = vld [vmem:[%s4 + $0x4b8] sm:$0xf]
      %v2610 = vld [vmem:[%s4 + $0x4bc] sm:$0xf]
      %v2616 = vunpack.c.l.b16 %v2590
      %v2617 = vunpack.c.l.b16 %v2591
      %v2618 = vunpack.c.l.b16 %v2592
      %v2619 = vunpack.c.l.b16 %v2593
      %v2620 = vunpack.c.l.b16 %v2594
      %v2621 = vpack.c.b16 %v2617, %v2616
      %v2622 = vpack.c.b16 %v2619, %v2618
      %v2623 = vpack.c.b16 %v2620, %v2620
      %v2643 = vunpack.c.l.b16 %v2595
      %v2644 = vunpack.c.l.b16 %v2596
      %v2645 = vunpack.c.l.b16 %v2597
      %v2646 = vunpack.c.l.b16 %v2598
      %v2647 = vunpack.c.l.b16 %v2599
      %v2648 = vunpack.c.l.b16 %v2600
      %v2649 = vunpack.c.l.b16 %v2601
      %v2650 = vunpack.c.l.b16 %v2602
      %v2651 = vunpack.c.l.b16 %v2603
      %v2652 = vunpack.c.l.b16 %v2604
      %v2653 = vunpack.c.l.b16 %v2605
      %v2654 = vunpack.c.l.b16 %v2606
      %v2655 = vunpack.c.l.b16 %v2607
      %v2656 = vunpack.c.l.b16 %v2608
      %v2657 = vunpack.c.l.b16 %v2609
      %v2658 = vunpack.c.l.b16 %v2610
      %v2659 = vpack.c.b16 %v2644, %v2643
      %v2660 = vpack.c.b16 %v2646, %v2645
      %v2661 = vpack.c.b16 %v2648, %v2647
      %v2662 = vpack.c.b16 %v2650, %v2649
      %v2663 = vpack.c.b16 %v2652, %v2651
      %v2664 = vpack.c.b16 %v2654, %v2653
      %v2665 = vpack.c.b16 %v2656, %v2655
      %v2666 = vpack.c.b16 %v2658, %v2657
      %2675 = vmatpush.bf16.msra.mxu0 %v2666
      %2676 = vmatpush.bf16.msra.mxu0 %v2665
      %2677 = vmatpush.bf16.msra.mxu0 %v2664
      %2678 = vmatpush.bf16.msra.mxu0 %v2663
      %2679 = vmatpush.bf16.msra.mxu0 %v2662
      %2680 = vmatpush.bf16.msra.mxu0 %v2661
      %2681 = vmatpush.bf16.msra.mxu0 %v2660
      %2682 = vmatpush.bf16.msra.mxu0 %v2659
      %2683 = vmatmul.bf16.gmra.mxu0 %v2621
      %v2684 = vpop.f32.mrf.mxu0
      %v2685 = vadd.f32 0.0, %v2684
      %v2686 = vpop.f32.mrf.mxu0
      %v2687 = vadd.f32 0.0, %v2686
      %2688 = vmatmul.bf16.gmra.mxu0 %v2622
      %v2689 = vpop.f32.mrf.mxu0
      %v2690 = vadd.f32 0.0, %v2689
      %v2691 = vpop.f32.mrf.mxu0
      %v2692 = vadd.f32 0.0, %v2691
      %2693 = vmatmul.bf16.gmra.mxu0 %v2623
      %v2694 = vpop.f32.mrf.mxu0
      %v2695 = vadd.f32 0.0, %v2694
      %v2696 = vpop.f32.mrf.mxu0
      %2697 = vdwg.mxu0
      %v2698 = vadd.f32 %v2585, %v2685
      %v2699 = vadd.f32 %v2586, %v2687
      %v2700 = vadd.f32 %v2587, %v2690
      %v2701 = vadd.f32 %v2588, %v2692
      %v2702 = vadd.f32 %v2589, %v2695
      %v2703 = vld [vmem:[%s483 + $0x10] sm:$0x7]
      %v2704 = vld [vmem:[%s4 + $0x4c0] sm:$0xf]
      %v2705 = vld [vmem:[%s4 + $0x4c4] sm:$0xf]
      %v2706 = vld [vmem:[%s4 + $0x4c8] sm:$0xf]
      %v2707 = vld [vmem:[%s4 + $0x4cc] sm:$0xf]
      %v2708 = vld [vmem:[%s4 + $0x4d0] sm:$0xf]
      %v2709 = vld [vmem:[%s4 + $0x4d4] sm:$0xf]
      %v2710 = vld [vmem:[%s4 + $0x4d8] sm:$0xf]
      %v2711 = vld [vmem:[%s4 + $0x4dc] sm:$0xf]
      %v2712 = vld [vmem:[%s4 + $0x4e0] sm:$0xf]
      %v2713 = vld [vmem:[%s4 + $0x4e4] sm:$0xf]
      %v2714 = vld [vmem:[%s4 + $0x4e8] sm:$0xf]
      %v2715 = vld [vmem:[%s4 + $0x4ec] sm:$0xf]
      %v2716 = vld [vmem:[%s4 + $0x4f0] sm:$0xf]
      %v2717 = vld [vmem:[%s4 + $0x4f4] sm:$0xf]
      %v2718 = vld [vmem:[%s4 + $0x4f8] sm:$0xf]
      %v2719 = vld [vmem:[%s4 + $0x4fc] sm:$0xf]
      %v2721 = vunpack.c.l.b16 %v2703
      %v2722 = vpack.c.b16 %v2721, %v2721
      %v2724 = vshrl.u32 %v2621, 16
      %v2726 = vshll.u32 %v2621, 16
      %v2728 = vrot.slane %v2726, 1
      %v2729 = vor.u32 %v2724, %v2728
      %v2731 = vshll.u32 %v2622, 16
      %v2733 = vrot.slane %v2731, 1
      %v2734 = vsel %vm571, %v2729, %v2733
      %v2735 = vshrl.u32 %v2622, 16
      %v2737 = vor.u32 %v2735, %v2733
      %v2739 = vshll.u32 %v2722, 16
      %v2741 = vrot.slane %v2739, 1
      %v2742 = vsel %vm571, %v2737, %v2741
      %v2743 = vshrl.u32 %v2722, 16
      %v2745 = vor.u32 %v2743, %v2741
      %v2765 = vunpack.c.l.b16 %v2704
      %v2766 = vunpack.c.l.b16 %v2705
      %v2767 = vunpack.c.l.b16 %v2706
      %v2768 = vunpack.c.l.b16 %v2707
      %v2769 = vunpack.c.l.b16 %v2708
      %v2770 = vunpack.c.l.b16 %v2709
      %v2771 = vunpack.c.l.b16 %v2710
      %v2772 = vunpack.c.l.b16 %v2711
      %v2773 = vunpack.c.l.b16 %v2712
      %v2774 = vunpack.c.l.b16 %v2713
      %v2775 = vunpack.c.l.b16 %v2714
      %v2776 = vunpack.c.l.b16 %v2715
      %v2777 = vunpack.c.l.b16 %v2716
      %v2778 = vunpack.c.l.b16 %v2717
      %v2779 = vunpack.c.l.b16 %v2718
      %v2780 = vunpack.c.l.b16 %v2719
      %v2781 = vpack.c.b16 %v2766, %v2765
      %v2782 = vpack.c.b16 %v2768, %v2767
      %v2783 = vpack.c.b16 %v2770, %v2769
      %v2784 = vpack.c.b16 %v2772, %v2771
      %v2785 = vpack.c.b16 %v2774, %v2773
      %v2786 = vpack.c.b16 %v2776, %v2775
      %v2787 = vpack.c.b16 %v2778, %v2777
      %v2788 = vpack.c.b16 %v2780, %v2779
      %2797 = vmatpush.bf16.msra.mxu0 %v2788
      %2798 = vmatpush.bf16.msra.mxu0 %v2787
      %2799 = vmatpush.bf16.msra.mxu0 %v2786
      %2800 = vmatpush.bf16.msra.mxu0 %v2785
      %2801 = vmatpush.bf16.msra.mxu0 %v2784
      %2802 = vmatpush.bf16.msra.mxu0 %v2783
      %2803 = vmatpush.bf16.msra.mxu0 %v2782
      %2804 = vmatpush.bf16.msra.mxu0 %v2781
      %2805 = vmatmul.bf16.gmra.mxu0 %v2734
      %v2806 = vpop.f32.mrf.mxu0
      %v2807 = vadd.f32 0.0, %v2806
      %v2808 = vpop.f32.mrf.mxu0
      %v2809 = vadd.f32 0.0, %v2808
      %2810 = vmatmul.bf16.gmra.mxu0 %v2742
      %v2811 = vpop.f32.mrf.mxu0
      %v2812 = vadd.f32 0.0, %v2811
      %v2813 = vpop.f32.mrf.mxu0
      %v2814 = vadd.f32 0.0, %v2813
      %2815 = vmatmul.bf16.gmra.mxu0 %v2745
      %v2816 = vpop.f32.mrf.mxu0
      %v2817 = vadd.f32 0.0, %v2816
      %v2818 = vpop.f32.mrf.mxu0
      %2819 = vdwg.mxu0
      %v2820 = vadd.f32 %v2698, %v2807
      %v2821 = vadd.f32 %v2699, %v2809
      %v2822 = vadd.f32 %v2700, %v2812
      %v2823 = vadd.f32 %v2701, %v2814
      %v2824 = vadd.f32 %v2702, %v2817
      %v2825 = vld [vmem:[%s483] sm:$0xe]
      %v2826 = vld [vmem:[%s4 + $0x500] sm:$0xf]
      %v2827 = vld [vmem:[%s4 + $0x504] sm:$0xf]
      %v2828 = vld [vmem:[%s4 + $0x508] sm:$0xf]
      %v2829 = vld [vmem:[%s4 + $0x50c] sm:$0xf]
      %v2830 = vld [vmem:[%s4 + $0x510] sm:$0xf]
      %v2831 = vld [vmem:[%s4 + $0x514] sm:$0xf]
      %v2832 = vld [vmem:[%s4 + $0x518] sm:$0xf]
      %v2833 = vld [vmem:[%s4 + $0x51c] sm:$0xf]
      %v2834 = vld [vmem:[%s4 + $0x520] sm:$0xf]
      %v2835 = vld [vmem:[%s4 + $0x524] sm:$0xf]
      %v2836 = vld [vmem:[%s4 + $0x528] sm:$0xf]
      %v2837 = vld [vmem:[%s4 + $0x52c] sm:$0xf]
      %v2838 = vld [vmem:[%s4 + $0x530] sm:$0xf]
      %v2839 = vld [vmem:[%s4 + $0x534] sm:$0xf]
      %v2840 = vld [vmem:[%s4 + $0x538] sm:$0xf]
      %v2841 = vld [vmem:[%s4 + $0x53c] sm:$0xf]
      %v2843 = vunpack.c.l.b16 %v2825
      %v2844 = vpack.c.b16 %v2617, %v2843
      %v2845 = vrot.slane %v2844, 1
      %v2846 = vrot.slane %v2622, 1
      %v2847 = vsel %vm766, %v2845, %v2846
      %v2848 = vrot.slane %v2722, 1
      %v2849 = vsel %vm766, %v2846, %v2848
      %v2869 = vunpack.c.l.b16 %v2826
      %v2870 = vunpack.c.l.b16 %v2827
      %v2871 = vunpack.c.l.b16 %v2828
      %v2872 = vunpack.c.l.b16 %v2829
      %v2873 = vunpack.c.l.b16 %v2830
      %v2874 = vunpack.c.l.b16 %v2831
      %v2875 = vunpack.c.l.b16 %v2832
      %v2876 = vunpack.c.l.b16 %v2833
      %v2877 = vunpack.c.l.b16 %v2834
      %v2878 = vunpack.c.l.b16 %v2835
      %v2879 = vunpack.c.l.b16 %v2836
      %v2880 = vunpack.c.l.b16 %v2837
      %v2881 = vunpack.c.l.b16 %v2838
      %v2882 = vunpack.c.l.b16 %v2839
      %v2883 = vunpack.c.l.b16 %v2840
      %v2884 = vunpack.c.l.b16 %v2841
      %v2885 = vpack.c.b16 %v2870, %v2869
      %v2886 = vpack.c.b16 %v2872, %v2871
      %v2887 = vpack.c.b16 %v2874, %v2873
      %v2888 = vpack.c.b16 %v2876, %v2875
      %v2889 = vpack.c.b16 %v2878, %v2877
      %v2890 = vpack.c.b16 %v2880, %v2879
      %v2891 = vpack.c.b16 %v2882, %v2881
      %v2892 = vpack.c.b16 %v2884, %v2883
      %2901 = vmatpush.bf16.msra.mxu0 %v2892
      %2902 = vmatpush.bf16.msra.mxu0 %v2891
      %2903 = vmatpush.bf16.msra.mxu0 %v2890
      %2904 = vmatpush.bf16.msra.mxu0 %v2889
      %2905 = vmatpush.bf16.msra.mxu0 %v2888
      %2906 = vmatpush.bf16.msra.mxu0 %v2887
      %2907 = vmatpush.bf16.msra.mxu0 %v2886
      %2908 = vmatpush.bf16.msra.mxu0 %v2885
      %2909 = vmatmul.bf16.gmra.mxu0 %v2847
      %v2910 = vpop.f32.mrf.mxu0
      %v2911 = vadd.f32 0.0, %v2910
      %v2912 = vpop.f32.mrf.mxu0
      %v2913 = vadd.f32 0.0, %v2912
      %2914 = vmatmul.bf16.gmra.mxu0 %v2849
      %v2915 = vpop.f32.mrf.mxu0
      %v2916 = vadd.f32 0.0, %v2915
      %v2917 = vpop.f32.mrf.mxu0
      %v2918 = vadd.f32 0.0, %v2917
      %2919 = vmatmul.bf16.gmra.mxu0 %v2848
      %v2920 = vpop.f32.mrf.mxu0
      %v2921 = vadd.f32 0.0, %v2920
      %v2922 = vpop.f32.mrf.mxu0
      %2923 = vdwg.mxu0
      %v2924 = vadd.f32 %v2820, %v2911
      %v2925 = vadd.f32 %v2821, %v2913
      %v2926 = vadd.f32 %v2822, %v2916
      %v2927 = vadd.f32 %v2823, %v2918
      %v2928 = vadd.f32 %v2824, %v2921
      %v2929 = vld [vmem:[%s483] sm:$0x8]
      %v2930 = vld [vmem:[%s483 + $0x4] sm:$0xf]
      %v2931 = vld [vmem:[%s483 + $0x8] sm:$0xf]
      %v2932 = vld [vmem:[%s483 + $0xc] sm:$0xf]
      %v2933 = vld [vmem:[%s483 + $0x10] sm:$0xf]
      %v2934 = vld [vmem:[%s483 + $0x14] sm:$0x1]
      %v2935 = vld [vmem:[%s4 + $0x540] sm:$0xf]
      %v2936 = vld [vmem:[%s4 + $0x544] sm:$0xf]
      %v2937 = vld [vmem:[%s4 + $0x548] sm:$0xf]
      %v2938 = vld [vmem:[%s4 + $0x54c] sm:$0xf]
      %v2939 = vld [vmem:[%s4 + $0x550] sm:$0xf]
      %v2940 = vld [vmem:[%s4 + $0x554] sm:$0xf]
      %v2941 = vld [vmem:[%s4 + $0x558] sm:$0xf]
      %v2942 = vld [vmem:[%s4 + $0x55c] sm:$0xf]
      %v2943 = vld [vmem:[%s4 + $0x560] sm:$0xf]
      %v2944 = vld [vmem:[%s4 + $0x564] sm:$0xf]
      %v2945 = vld [vmem:[%s4 + $0x568] sm:$0xf]
      %v2946 = vld [vmem:[%s4 + $0x56c] sm:$0xf]
      %v2947 = vld [vmem:[%s4 + $0x570] sm:$0xf]
      %v2948 = vld [vmem:[%s4 + $0x574] sm:$0xf]
      %v2949 = vld [vmem:[%s4 + $0x578] sm:$0xf]
      %v2950 = vld [vmem:[%s4 + $0x57c] sm:$0xf]
      %v2957 = vunpack.c.l.b16 %v2929
      %v2958 = vunpack.c.l.b16 %v2930
      %v2959 = vunpack.c.l.b16 %v2931
      %v2960 = vunpack.c.l.b16 %v2932
      %v2961 = vunpack.c.l.b16 %v2933
      %v2962 = vunpack.c.l.b16 %v2934
      %v2963 = vpack.c.b16 %v2958, %v2957
      %v2964 = vpack.c.b16 %v2960, %v2959
      %v2965 = vpack.c.b16 %v2962, %v2961
      %v2966 = vrot.slane %v2963, 3
      %v2967 = vrot.slane %v2964, 3
      %v2968 = vsel %vm888, %v2966, %v2967
      %v2969 = vrot.slane %v2965, 3
      %v2970 = vsel %vm888, %v2967, %v2969
      %v2990 = vunpack.c.l.b16 %v2935
      %v2991 = vunpack.c.l.b16 %v2936
      %v2992 = vunpack.c.l.b16 %v2937
      %v2993 = vunpack.c.l.b16 %v2938
      %v2994 = vunpack.c.l.b16 %v2939
      %v2995 = vunpack.c.l.b16 %v2940
      %v2996 = vunpack.c.l.b16 %v2941
      %v2997 = vunpack.c.l.b16 %v2942
      %v2998 = vunpack.c.l.b16 %v2943
      %v2999 = vunpack.c.l.b16 %v2944
      %v3000 = vunpack.c.l.b16 %v2945
      %v3001 = vunpack.c.l.b16 %v2946
      %v3002 = vunpack.c.l.b16 %v2947
      %v3003 = vunpack.c.l.b16 %v2948
      %v3004 = vunpack.c.l.b16 %v2949
      %v3005 = vunpack.c.l.b16 %v2950
      %v3006 = vpack.c.b16 %v2991, %v2990
      %v3007 = vpack.c.b16 %v2993, %v2992
      %v3008 = vpack.c.b16 %v2995, %v2994
      %v3009 = vpack.c.b16 %v2997, %v2996
      %v3010 = vpack.c.b16 %v2999, %v2998
      %v3011 = vpack.c.b16 %v3001, %v3000
      %v3012 = vpack.c.b16 %v3003, %v3002
      %v3013 = vpack.c.b16 %v3005, %v3004
      %3022 = vmatpush.bf16.msra.mxu0 %v3013
      %3023 = vmatpush.bf16.msra.mxu0 %v3012
      %3024 = vmatpush.bf16.msra.mxu0 %v3011
      %3025 = vmatpush.bf16.msra.mxu0 %v3010
      %3026 = vmatpush.bf16.msra.mxu0 %v3009
      %3027 = vmatpush.bf16.msra.mxu0 %v3008
      %3028 = vmatpush.bf16.msra.mxu0 %v3007
      %3029 = vmatpush.bf16.msra.mxu0 %v3006
      %3030 = vmatmul.bf16.gmra.mxu0 %v2968
      %v3031 = vpop.f32.mrf.mxu0
      %v3032 = vadd.f32 0.0, %v3031
      %v3033 = vpop.f32.mrf.mxu0
      %v3034 = vadd.f32 0.0, %v3033
      %3035 = vmatmul.bf16.gmra.mxu0 %v2970
      %v3036 = vpop.f32.mrf.mxu0
      %v3037 = vadd.f32 0.0, %v3036
      %v3038 = vpop.f32.mrf.mxu0
      %v3039 = vadd.f32 0.0, %v3038
      %3040 = vmatmul.bf16.gmra.mxu0 %v2969
      %v3041 = vpop.f32.mrf.mxu0
      %v3042 = vadd.f32 0.0, %v3041
      %v3043 = vpop.f32.mrf.mxu0
      %3044 = vdwg.mxu0
      %v3045 = vadd.f32 %v2924, %v3032
      %v3046 = vadd.f32 %v2925, %v3034
      %v3047 = vadd.f32 %v2926, %v3037
      %v3048 = vadd.f32 %v2927, %v3039
      %v3049 = vadd.f32 %v2928, %v3042
      %v3050 = vld [vmem:[%s483 + $0x14] sm:$0x3]
      %v3051 = vld [vmem:[%s4 + $0x580] sm:$0xf]
      %v3052 = vld [vmem:[%s4 + $0x584] sm:$0xf]
      %v3053 = vld [vmem:[%s4 + $0x588] sm:$0xf]
      %v3054 = vld [vmem:[%s4 + $0x58c] sm:$0xf]
      %v3055 = vld [vmem:[%s4 + $0x590] sm:$0xf]
      %v3056 = vld [vmem:[%s4 + $0x594] sm:$0xf]
      %v3057 = vld [vmem:[%s4 + $0x598] sm:$0xf]
      %v3058 = vld [vmem:[%s4 + $0x59c] sm:$0xf]
      %v3059 = vld [vmem:[%s4 + $0x5a0] sm:$0xf]
      %v3060 = vld [vmem:[%s4 + $0x5a4] sm:$0xf]
      %v3061 = vld [vmem:[%s4 + $0x5a8] sm:$0xf]
      %v3062 = vld [vmem:[%s4 + $0x5ac] sm:$0xf]
      %v3063 = vld [vmem:[%s4 + $0x5b0] sm:$0xf]
      %v3064 = vld [vmem:[%s4 + $0x5b4] sm:$0xf]
      %v3065 = vld [vmem:[%s4 + $0x5b8] sm:$0xf]
      %v3066 = vld [vmem:[%s4 + $0x5bc] sm:$0xf]
      %v3068 = vunpack.c.l.b16 %v3050
      %v3069 = vpack.c.b16 %v3068, %v2961
      %v3071 = vshrl.u32 %v2963, 16
      %v3073 = vrot.slane %v3071, 3
      %v3074 = vshll.u32 %v2963, 16
      %v3076 = vrot.slane %v3074, 4
      %v3077 = vor.u32 %v3073, %v3076
      %v3079 = vshrl.u32 %v2964, 16
      %v3081 = vrot.slane %v3079, 3
      %v3082 = vshll.u32 %v2964, 16
      %v3084 = vrot.slane %v3082, 4
      %v3085 = vor.u32 %v3081, %v3084
      %v3086 = vsel %vm993, %v3077, %v3085
      %v3088 = vshrl.u32 %v3069, 16
      %v3090 = vrot.slane %v3088, 3
      %v3091 = vshll.u32 %v3069, 16
      %v3093 = vrot.slane %v3091, 4
      %v3094 = vor.u32 %v3090, %v3093
      %v3095 = vsel %vm993, %v3085, %v3094
      %v3115 = vunpack.c.l.b16 %v3051
      %v3116 = vunpack.c.l.b16 %v3052
      %v3117 = vunpack.c.l.b16 %v3053
      %v3118 = vunpack.c.l.b16 %v3054
      %v3119 = vunpack.c.l.b16 %v3055
      %v3120 = vunpack.c.l.b16 %v3056
      %v3121 = vunpack.c.l.b16 %v3057
      %v3122 = vunpack.c.l.b16 %v3058
      %v3123 = vunpack.c.l.b16 %v3059
      %v3124 = vunpack.c.l.b16 %v3060
      %v3125 = vunpack.c.l.b16 %v3061
      %v3126 = vunpack.c.l.b16 %v3062
      %v3127 = vunpack.c.l.b16 %v3063
      %v3128 = vunpack.c.l.b16 %v3064
      %v3129 = vunpack.c.l.b16 %v3065
      %v3130 = vunpack.c.l.b16 %v3066
      %v3131 = vpack.c.b16 %v3116, %v3115
      %v3132 = vpack.c.b16 %v3118, %v3117
      %v3133 = vpack.c.b16 %v3120, %v3119
      %v3134 = vpack.c.b16 %v3122, %v3121
      %v3135 = vpack.c.b16 %v3124, %v3123
      %v3136 = vpack.c.b16 %v3126, %v3125
      %v3137 = vpack.c.b16 %v3128, %v3127
      %v3138 = vpack.c.b16 %v3130, %v3129
      %3147 = vmatpush.bf16.msra.mxu0 %v3138
      %3148 = vmatpush.bf16.msra.mxu0 %v3137
      %3149 = vmatpush.bf16.msra.mxu0 %v3136
      %3150 = vmatpush.bf16.msra.mxu0 %v3135
      %3151 = vmatpush.bf16.msra.mxu0 %v3134
      %3152 = vmatpush.bf16.msra.mxu0 %v3133
      %3153 = vmatpush.bf16.msra.mxu0 %v3132
      %3154 = vmatpush.bf16.msra.mxu0 %v3131
      %3155 = vmatmul.bf16.gmra.mxu0 %v3086
      %v3156 = vpop.f32.mrf.mxu0
      %v3157 = vadd.f32 0.0, %v3156
      %v3158 = vpop.f32.mrf.mxu0
      %v3159 = vadd.f32 0.0, %v3158
      %3160 = vmatmul.bf16.gmra.mxu0 %v3095
      %v3161 = vpop.f32.mrf.mxu0
      %v3162 = vadd.f32 0.0, %v3161
      %v3163 = vpop.f32.mrf.mxu0
      %v3164 = vadd.f32 0.0, %v3163
      %3165 = vmatmul.bf16.gmra.mxu0 %v3094
      %v3166 = vpop.f32.mrf.mxu0
      %v3167 = vadd.f32 0.0, %v3166
      %v3168 = vpop.f32.mrf.mxu0
      %3169 = vdwg.mxu0
      %v3170 = vadd.f32 %v3045, %v3157
      %v3171 = vadd.f32 %v3046, %v3159
      %v3172 = vadd.f32 %v3047, %v3162
      %v3173 = vadd.f32 %v3048, %v3164
      %v3174 = vadd.f32 %v3049, %v3167
      %v3175 = vld [vmem:[%s4 + $0x5c0] sm:$0xf]
      %v3176 = vld [vmem:[%s4 + $0x5c4] sm:$0xf]
      %v3177 = vld [vmem:[%s4 + $0x5c8] sm:$0xf]
      %v3178 = vld [vmem:[%s4 + $0x5cc] sm:$0xf]
      %v3179 = vld [vmem:[%s4 + $0x5d0] sm:$0xf]
      %v3180 = vld [vmem:[%s4 + $0x5d4] sm:$0xf]
      %v3181 = vld [vmem:[%s4 + $0x5d8] sm:$0xf]
      %v3182 = vld [vmem:[%s4 + $0x5dc] sm:$0xf]
      %v3183 = vld [vmem:[%s4 + $0x5e0] sm:$0xf]
      %v3184 = vld [vmem:[%s4 + $0x5e4] sm:$0xf]
      %v3185 = vld [vmem:[%s4 + $0x5e8] sm:$0xf]
      %v3186 = vld [vmem:[%s4 + $0x5ec] sm:$0xf]
      %v3187 = vld [vmem:[%s4 + $0x5f0] sm:$0xf]
      %v3188 = vld [vmem:[%s4 + $0x5f4] sm:$0xf]
      %v3189 = vld [vmem:[%s4 + $0x5f8] sm:$0xf]
      %v3190 = vld [vmem:[%s4 + $0x5fc] sm:$0xf]
      %v3191 = vpack.c.b16 %v2959, %v2958
      %v3192 = vpack.c.b16 %v2961, %v2960
      %v3193 = vpack.c.b16 %v3068, %v3068
      %v3213 = vunpack.c.l.b16 %v3175
      %v3214 = vunpack.c.l.b16 %v3176
      %v3215 = vunpack.c.l.b16 %v3177
      %v3216 = vunpack.c.l.b16 %v3178
      %v3217 = vunpack.c.l.b16 %v3179
      %v3218 = vunpack.c.l.b16 %v3180
      %v3219 = vunpack.c.l.b16 %v3181
      %v3220 = vunpack.c.l.b16 %v3182
      %v3221 = vunpack.c.l.b16 %v3183
      %v3222 = vunpack.c.l.b16 %v3184
      %v3223 = vunpack.c.l.b16 %v3185
      %v3224 = vunpack.c.l.b16 %v3186
      %v3225 = vunpack.c.l.b16 %v3187
      %v3226 = vunpack.c.l.b16 %v3188
      %v3227 = vunpack.c.l.b16 %v3189
      %v3228 = vunpack.c.l.b16 %v3190
      %v3229 = vpack.c.b16 %v3214, %v3213
      %v3230 = vpack.c.b16 %v3216, %v3215
      %v3231 = vpack.c.b16 %v3218, %v3217
      %v3232 = vpack.c.b16 %v3220, %v3219
      %v3233 = vpack.c.b16 %v3222, %v3221
      %v3234 = vpack.c.b16 %v3224, %v3223
      %v3235 = vpack.c.b16 %v3226, %v3225
      %v3236 = vpack.c.b16 %v3228, %v3227
      %3245 = vmatpush.bf16.msra.mxu0 %v3236
      %3246 = vmatpush.bf16.msra.mxu0 %v3235
      %3247 = vmatpush.bf16.msra.mxu0 %v3234
      %3248 = vmatpush.bf16.msra.mxu0 %v3233
      %3249 = vmatpush.bf16.msra.mxu0 %v3232
      %3250 = vmatpush.bf16.msra.mxu0 %v3231
      %3251 = vmatpush.bf16.msra.mxu0 %v3230
      %3252 = vmatpush.bf16.msra.mxu0 %v3229
      %3253 = vmatmul.bf16.gmra.mxu0 %v3191
      %v3254 = vpop.f32.mrf.mxu0
      %v3255 = vadd.f32 0.0, %v3254
      %v3256 = vpop.f32.mrf.mxu0
      %v3257 = vadd.f32 0.0, %v3256
      %3258 = vmatmul.bf16.gmra.mxu0 %v3192
      %v3259 = vpop.f32.mrf.mxu0
      %v3260 = vadd.f32 0.0, %v3259
      %v3261 = vpop.f32.mrf.mxu0
      %v3262 = vadd.f32 0.0, %v3261
      %3263 = vmatmul.bf16.gmra.mxu0 %v3193
      %v3264 = vpop.f32.mrf.mxu0
      %v3265 = vadd.f32 0.0, %v3264
      %v3266 = vpop.f32.mrf.mxu0
      %3267 = vdwg.mxu0
      %v3268 = vadd.f32 %v3170, %v3255
      %v3269 = vadd.f32 %v3171, %v3257
      %v3270 = vadd.f32 %v3172, %v3260
      %v3271 = vadd.f32 %v3173, %v3262
      %v3272 = vadd.f32 %v3174, %v3265
      %v3273 = vld [vmem:[%s483 + $0x4] sm:$0xc]
      %v3274 = vld [vmem:[%s483 + $0x14] sm:$0xf]
      %v3275 = vld [vmem:[%s4 + $0x600] sm:$0xf]
      %v3276 = vld [vmem:[%s4 + $0x604] sm:$0xf]
      %v3277 = vld [vmem:[%s4 + $0x608] sm:$0xf]
      %v3278 = vld [vmem:[%s4 + $0x60c] sm:$0xf]
      %v3279 = vld [vmem:[%s4 + $0x610] sm:$0xf]
      %v3280 = vld [vmem:[%s4 + $0x614] sm:$0xf]
      %v3281 = vld [vmem:[%s4 + $0x618] sm:$0xf]
      %v3282 = vld [vmem:[%s4 + $0x61c] sm:$0xf]
      %v3283 = vld [vmem:[%s4 + $0x620] sm:$0xf]
      %v3284 = vld [vmem:[%s4 + $0x624] sm:$0xf]
      %v3285 = vld [vmem:[%s4 + $0x628] sm:$0xf]
      %v3286 = vld [vmem:[%s4 + $0x62c] sm:$0xf]
      %v3287 = vld [vmem:[%s4 + $0x630] sm:$0xf]
      %v3288 = vld [vmem:[%s4 + $0x634] sm:$0xf]
      %v3289 = vld [vmem:[%s4 + $0x638] sm:$0xf]
      %v3290 = vld [vmem:[%s4 + $0x63c] sm:$0xf]
      %v3293 = vunpack.c.l.b16 %v3273
      %v3294 = vunpack.c.l.b16 %v3274
      %v3295 = vpack.c.b16 %v2959, %v3293
      %v3296 = vpack.c.b16 %v3294, %v3294
      %v3297 = vrot.slane %v3295, 2
      %v3298 = vrot.slane %v3192, 2
      %v3299 = vsel %vm1221, %v3297, %v3298
      %v3300 = vrot.slane %v3296, 2
      %v3301 = vsel %vm1221, %v3298, %v3300
      %v3321 = vunpack.c.l.b16 %v3275
      %v3322 = vunpack.c.l.b16 %v3276
      %v3323 = vunpack.c.l.b16 %v3277
      %v3324 = vunpack.c.l.b16 %v3278
      %v3325 = vunpack.c.l.b16 %v3279
      %v3326 = vunpack.c.l.b16 %v3280
      %v3327 = vunpack.c.l.b16 %v3281
      %v3328 = vunpack.c.l.b16 %v3282
      %v3329 = vunpack.c.l.b16 %v3283
      %v3330 = vunpack.c.l.b16 %v3284
      %v3331 = vunpack.c.l.b16 %v3285
      %v3332 = vunpack.c.l.b16 %v3286
      %v3333 = vunpack.c.l.b16 %v3287
      %v3334 = vunpack.c.l.b16 %v3288
      %v3335 = vunpack.c.l.b16 %v3289
      %v3336 = vunpack.c.l.b16 %v3290
      %v3337 = vpack.c.b16 %v3322, %v3321
      %v3338 = vpack.c.b16 %v3324, %v3323
      %v3339 = vpack.c.b16 %v3326, %v3325
      %v3340 = vpack.c.b16 %v3328, %v3327
      %v3341 = vpack.c.b16 %v3330, %v3329
      %v3342 = vpack.c.b16 %v3332, %v3331
      %v3343 = vpack.c.b16 %v3334, %v3333
      %v3344 = vpack.c.b16 %v3336, %v3335
      %3353 = vmatpush.bf16.msra.mxu0 %v3344
      %3354 = vmatpush.bf16.msra.mxu0 %v3343
      %3355 = vmatpush.bf16.msra.mxu0 %v3342
      %3356 = vmatpush.bf16.msra.mxu0 %v3341
      %3357 = vmatpush.bf16.msra.mxu0 %v3340
      %3358 = vmatpush.bf16.msra.mxu0 %v3339
      %3359 = vmatpush.bf16.msra.mxu0 %v3338
      %3360 = vmatpush.bf16.msra.mxu0 %v3337
      %3361 = vmatmul.bf16.gmra.mxu0 %v3299
      %v3362 = vpop.f32.mrf.mxu0
      %v3363 = vadd.f32 0.0, %v3362
      %v3364 = vpop.f32.mrf.mxu0
      %v3365 = vadd.f32 0.0, %v3364
      %3366 = vmatmul.bf16.gmra.mxu0 %v3301
      %v3367 = vpop.f32.mrf.mxu0
      %v3368 = vadd.f32 0.0, %v3367
      %v3369 = vpop.f32.mrf.mxu0
      %v3370 = vadd.f32 0.0, %v3369
      %3371 = vmatmul.bf16.gmra.mxu0 %v3300
      %v3372 = vpop.f32.mrf.mxu0
      %v3373 = vadd.f32 0.0, %v3372
      %v3374 = vpop.f32.mrf.mxu0
      %3375 = vdwg.mxu0
      %v3376 = vadd.f32 %v3268, %v3363
      %v3377 = vadd.f32 %v3269, %v3365
      %v3378 = vadd.f32 %v3270, %v3368
      %v3379 = vadd.f32 %v3271, %v3370
      %v3380 = vadd.f32 %v3272, %v3373
      %v3381 = vld [vmem:[%s483 + $0x4] sm:$0xc]
      %v3382 = vld [vmem:[%s483 + $0x8] sm:$0xf]
      %v3383 = vld [vmem:[%s483 + $0xc] sm:$0xf]
      %v3384 = vld [vmem:[%s483 + $0x10] sm:$0xf]
      %v3385 = vld [vmem:[%s483 + $0x14] sm:$0xf]
      %v3386 = vld [vmem:[%s483 + $0x18] sm:$0x1]
      %v3387 = vld [vmem:[%s4 + $0x640] sm:$0xf]
      %v3388 = vld [vmem:[%s4 + $0x644] sm:$0xf]
      %v3389 = vld [vmem:[%s4 + $0x648] sm:$0xf]
      %v3390 = vld [vmem:[%s4 + $0x64c] sm:$0xf]
      %v3391 = vld [vmem:[%s4 + $0x650] sm:$0xf]
      %v3392 = vld [vmem:[%s4 + $0x654] sm:$0xf]
      %v3393 = vld [vmem:[%s4 + $0x658] sm:$0xf]
      %v3394 = vld [vmem:[%s4 + $0x65c] sm:$0xf]
      %v3395 = vld [vmem:[%s4 + $0x660] sm:$0xf]
      %v3396 = vld [vmem:[%s4 + $0x664] sm:$0xf]
      %v3397 = vld [vmem:[%s4 + $0x668] sm:$0xf]
      %v3398 = vld [vmem:[%s4 + $0x66c] sm:$0xf]
      %v3399 = vld [vmem:[%s4 + $0x670] sm:$0xf]
      %v3400 = vld [vmem:[%s4 + $0x674] sm:$0xf]
      %v3401 = vld [vmem:[%s4 + $0x678] sm:$0xf]
      %v3402 = vld [vmem:[%s4 + $0x67c] sm:$0xf]
      %v3409 = vunpack.c.l.b16 %v3381
      %v3410 = vunpack.c.l.b16 %v3382
      %v3411 = vunpack.c.l.b16 %v3383
      %v3412 = vunpack.c.l.b16 %v3384
      %v3413 = vunpack.c.l.b16 %v3385
      %v3414 = vunpack.c.l.b16 %v3386
      %v3415 = vpack.c.b16 %v3410, %v3409
      %v3416 = vpack.c.b16 %v3412, %v3411
      %v3417 = vpack.c.b16 %v3414, %v3413
      %v3419 = vshrl.u32 %v3415, 16
      %v3421 = vrot.slane %v3419, 2
      %v3422 = vshll.u32 %v3415, 16
      %v3424 = vrot.slane %v3422, 3
      %v3425 = vor.u32 %v3421, %v3424
      %v3427 = vshrl.u32 %v3416, 16
      %v3429 = vrot.slane %v3427, 2
      %v3430 = vshll.u32 %v3416, 16
      %v3432 = vrot.slane %v3430, 3
      %v3433 = vor.u32 %v3429, %v3432
      %v3434 = vsel %vm1343, %v3425, %v3433
      %v3436 = vshrl.u32 %v3417, 16
      %v3438 = vrot.slane %v3436, 2
      %v3439 = vshll.u32 %v3417, 16
      %v3441 = vrot.slane %v3439, 3
      %v3442 = vor.u32 %v3438, %v3441
      %v3443 = vsel %vm1343, %v3433, %v3442
      %v3463 = vunpack.c.l.b16 %v3387
      %v3464 = vunpack.c.l.b16 %v3388
      %v3465 = vunpack.c.l.b16 %v3389
      %v3466 = vunpack.c.l.b16 %v3390
      %v3467 = vunpack.c.l.b16 %v3391
      %v3468 = vunpack.c.l.b16 %v3392
      %v3469 = vunpack.c.l.b16 %v3393
      %v3470 = vunpack.c.l.b16 %v3394
      %v3471 = vunpack.c.l.b16 %v3395
      %v3472 = vunpack.c.l.b16 %v3396
      %v3473 = vunpack.c.l.b16 %v3397
      %v3474 = vunpack.c.l.b16 %v3398
      %v3475 = vunpack.c.l.b16 %v3399
      %v3476 = vunpack.c.l.b16 %v3400
      %v3477 = vunpack.c.l.b16 %v3401
      %v3478 = vunpack.c.l.b16 %v3402
      %v3479 = vpack.c.b16 %v3464, %v3463
      %v3480 = vpack.c.b16 %v3466, %v3465
      %v3481 = vpack.c.b16 %v3468, %v3467
      %v3482 = vpack.c.b16 %v3470, %v3469
      %v3483 = vpack.c.b16 %v3472, %v3471
      %v3484 = vpack.c.b16 %v3474, %v3473
      %v3485 = vpack.c.b16 %v3476, %v3475
      %v3486 = vpack.c.b16 %v3478, %v3477
      %3495 = vmatpush.bf16.msra.mxu0 %v3486
      %3496 = vmatpush.bf16.msra.mxu0 %v3485
      %3497 = vmatpush.bf16.msra.mxu0 %v3484
      %3498 = vmatpush.bf16.msra.mxu0 %v3483
      %3499 = vmatpush.bf16.msra.mxu0 %v3482
      %3500 = vmatpush.bf16.msra.mxu0 %v3481
      %3501 = vmatpush.bf16.msra.mxu0 %v3480
      %3502 = vmatpush.bf16.msra.mxu0 %v3479
      %3503 = vmatmul.bf16.gmra.mxu0 %v3434
      %v3504 = vpop.f32.mrf.mxu0
      %v3505 = vadd.f32 0.0, %v3504
      %v3506 = vpop.f32.mrf.mxu0
      %v3507 = vadd.f32 0.0, %v3506
      %3508 = vmatmul.bf16.gmra.mxu0 %v3443
      %v3509 = vpop.f32.mrf.mxu0
      %v3510 = vadd.f32 0.0, %v3509
      %v3511 = vpop.f32.mrf.mxu0
      %v3512 = vadd.f32 0.0, %v3511
      %3513 = vmatmul.bf16.gmra.mxu0 %v3442
      %v3514 = vpop.f32.mrf.mxu0
      %v3515 = vadd.f32 0.0, %v3514
      %v3516 = vpop.f32.mrf.mxu0
      %3517 = vdwg.mxu0
      %v3518 = vadd.f32 %v3376, %v3505
      %v3519 = vadd.f32 %v3377, %v3507
      %v3520 = vadd.f32 %v3378, %v3510
      %v3521 = vadd.f32 %v3379, %v3512
      %v3522 = vadd.f32 %v3380, %v3515
      %v3523 = vld [vmem:[%s483 + $0x4] sm:$0x8]
      %v3524 = vld [vmem:[%s4 + $0x680] sm:$0xf]
      %v3525 = vld [vmem:[%s4 + $0x684] sm:$0xf]
      %v3526 = vld [vmem:[%s4 + $0x688] sm:$0xf]
      %v3527 = vld [vmem:[%s4 + $0x68c] sm:$0xf]
      %v3528 = vld [vmem:[%s4 + $0x690] sm:$0xf]
      %v3529 = vld [vmem:[%s4 + $0x694] sm:$0xf]
      %v3530 = vld [vmem:[%s4 + $0x698] sm:$0xf]
      %v3531 = vld [vmem:[%s4 + $0x69c] sm:$0xf]
      %v3532 = vld [vmem:[%s4 + $0x6a0] sm:$0xf]
      %v3533 = vld [vmem:[%s4 + $0x6a4] sm:$0xf]
      %v3534 = vld [vmem:[%s4 + $0x6a8] sm:$0xf]
      %v3535 = vld [vmem:[%s4 + $0x6ac] sm:$0xf]
      %v3536 = vld [vmem:[%s4 + $0x6b0] sm:$0xf]
      %v3537 = vld [vmem:[%s4 + $0x6b4] sm:$0xf]
      %v3538 = vld [vmem:[%s4 + $0x6b8] sm:$0xf]
      %v3539 = vld [vmem:[%s4 + $0x6bc] sm:$0xf]
      %v3541 = vunpack.c.l.b16 %v3523
      %v3542 = vpack.c.b16 %v3410, %v3541
      %v3543 = vrot.slane %v3542, 3
      %v3544 = vrot.slane %v3416, 3
      %v3545 = vsel %vm888, %v3543, %v3544
      %v3546 = vrot.slane %v3417, 3
      %v3547 = vsel %vm888, %v3544, %v3546
      %v3567 = vunpack.c.l.b16 %v3524
      %v3568 = vunpack.c.l.b16 %v3525
      %v3569 = vunpack.c.l.b16 %v3526
      %v3570 = vunpack.c.l.b16 %v3527
      %v3571 = vunpack.c.l.b16 %v3528
      %v3572 = vunpack.c.l.b16 %v3529
      %v3573 = vunpack.c.l.b16 %v3530
      %v3574 = vunpack.c.l.b16 %v3531
      %v3575 = vunpack.c.l.b16 %v3532
      %v3576 = vunpack.c.l.b16 %v3533
      %v3577 = vunpack.c.l.b16 %v3534
      %v3578 = vunpack.c.l.b16 %v3535
      %v3579 = vunpack.c.l.b16 %v3536
      %v3580 = vunpack.c.l.b16 %v3537
      %v3581 = vunpack.c.l.b16 %v3538
      %v3582 = vunpack.c.l.b16 %v3539
      %v3583 = vpack.c.b16 %v3568, %v3567
      %v3584 = vpack.c.b16 %v3570, %v3569
      %v3585 = vpack.c.b16 %v3572, %v3571
      %v3586 = vpack.c.b16 %v3574, %v3573
      %v3587 = vpack.c.b16 %v3576, %v3575
      %v3588 = vpack.c.b16 %v3578, %v3577
      %v3589 = vpack.c.b16 %v3580, %v3579
      %v3590 = vpack.c.b16 %v3582, %v3581
      %3599 = vmatpush.bf16.msra.mxu0 %v3590
      %3600 = vmatpush.bf16.msra.mxu0 %v3589
      %3601 = vmatpush.bf16.msra.mxu0 %v3588
      %3602 = vmatpush.bf16.msra.mxu0 %v3587
      %3603 = vmatpush.bf16.msra.mxu0 %v3586
      %3604 = vmatpush.bf16.msra.mxu0 %v3585
      %3605 = vmatpush.bf16.msra.mxu0 %v3584
      %3606 = vmatpush.bf16.msra.mxu0 %v3583
      %3607 = vmatmul.bf16.gmra.mxu0 %v3545
      %v3608 = vpop.f32.mrf.mxu0
      %v3609 = vadd.f32 0.0, %v3608
      %v3610 = vpop.f32.mrf.mxu0
      %v3611 = vadd.f32 0.0, %v3610
      %3612 = vmatmul.bf16.gmra.mxu0 %v3547
      %v3613 = vpop.f32.mrf.mxu0
      %v3614 = vadd.f32 0.0, %v3613
      %v3615 = vpop.f32.mrf.mxu0
      %v3616 = vadd.f32 0.0, %v3615
      %3617 = vmatmul.bf16.gmra.mxu0 %v3546
      %v3618 = vpop.f32.mrf.mxu0
      %v3619 = vadd.f32 0.0, %v3618
      %v3620 = vpop.f32.mrf.mxu0
      %3621 = vdwg.mxu0
      %v3622 = vadd.f32 %v3518, %v3609
      %v3623 = vadd.f32 %v3519, %v3611
      %v3624 = vadd.f32 %v3520, %v3614
      %v3625 = vadd.f32 %v3521, %v3616
      %v3626 = vadd.f32 %v3522, %v3619
      %v3627 = vld [vmem:[%s5] sm:$0x1]
      %v3629 = vperm.slane %v3627, 0
      %v3631 = vadd.f32 %v3622, %v3629
      %v3632 = vadd.f32 %v3623, %v3629
      %v3633 = vadd.f32 %v3624, %v3629
      %v3634 = vadd.f32 %v3625, %v3629
      %v3635 = vadd.f32 %v3626, %v3629
      %v3636 = vpack.c.bf16 %v3631, %v3631
      %v3637 = vpack.c.bf16 %v3632, %v3632
      %v3638 = vpack.c.bf16 %v3633, %v3633
      %v3639 = vpack.c.bf16 %v3634, %v3634
      %v3640 = vpack.c.bf16 %v3635, %v3635
      %3641 = vst [vmem:[%s508] sm:$0xf] %v3636
      %3642 = vst [vmem:[%s508 + $0x4] sm:$0xf] %v3637
      %3643 = vst [vmem:[%s508 + $0x8] sm:$0xf] %v3638
      %3644 = vst [vmem:[%s508 + $0xc] sm:$0xf] %v3639
      %3645 = vst [vmem:[%s508 + $0x10] sm:$0x3] %v3640
      %v3646 = vld [vmem:[%s6] sm:$0xff]
      %v3647 = vld [vmem:[%s6 + $0x8] sm:$0xff]
      %v3648 = vld [vmem:[%s6 + $0x10] sm:$0xff]
      %v3649 = vld [vmem:[%s6 + $0x18] sm:$0xff]
      %v3650 = vld [vmem:[%s6 + $0x20] sm:$0xf]
      %3652 = vset.pattern.permute.xlu0 0
      %3653 = vperm.xlu0 %3652, %v3646
      %v3654 = vpop.permute.xlu0 %3653
      %3657 = vset.pattern.permute.xlu0 0
      %3658 = vperm.xlu0 %3657, %v3647
      %v3659 = vpop.permute.xlu0 %3658
      %3662 = vset.pattern.permute.xlu0 0
      %3663 = vperm.xlu0 %3662, %v3648
      %v3664 = vpop.permute.xlu0 %3663
      %3667 = vset.pattern.permute.xlu0 0
      %3668 = vperm.xlu0 %3667, %v3649
      %v3669 = vpop.permute.xlu0 %3668
      %3672 = vset.pattern.permute.xlu0 0
      %3673 = vperm.xlu0 %3672, %v3650
      %v3674 = vpop.permute.xlu0 %3673
      %v3676 = vmul.f32 %v3631, %v3654
      %v3677 = vmul.f32 %v3632, %v3659
      %v3678 = vmul.f32 %v3633, %v3664
      %v3679 = vmul.f32 %v3634, %v3669
      %v3680 = vmul.f32 %v3635, %v3674
      %v3681 = vadd.f32 %v3676, %v3677
      %v3682 = vadd.f32 %v3681, %v3678
      %v3683 = vadd.f32 %v3682, %v3679
      %vm3684 = vcmask 1043456
      %v3685 = vsel %vm3684, %v3680, 0.0
      %v3686 = vadd.f32 %v3683, %v3685
      %v3687 = vrot.slane %v3686, 4
      %v3688 = vadd.f32 %v3686, %v3687
      %v3689 = vrot.slane %v3688, 2
      %v3690 = vadd.f32 %v3688, %v3689
      %v3691 = vrot.slane %v3690, 1
      %v3692 = vadd.f32 %v3690, %v3691
      %v3693 = vadd.f32 %v3692, 0.0
      %v3694 = vmul.f32 %v3676, %v3631
      %v3695 = vmul.f32 %v3677, %v3632
      %v3696 = vmul.f32 %v3678, %v3633
      %v3697 = vmul.f32 %v3679, %v3634
      %v3698 = vmul.f32 %v3680, %v3635
      %v3699 = vadd.f32 %v3694, %v3695
      %v3700 = vadd.f32 %v3699, %v3696
      %v3701 = vadd.f32 %v3700, %v3697
      %v3702 = vsel %vm3684, %v3698, 0.0
      %v3703 = vadd.f32 %v3701, %v3702
      %v3704 = vrot.slane %v3703, 4
      %v3705 = vadd.f32 %v3703, %v3704
      %v3706 = vrot.slane %v3705, 2
      %v3707 = vadd.f32 %v3705, %v3706
      %v3708 = vrot.slane %v3707, 1
      %v3709 = vadd.f32 %v3707, %v3708
      %v3710 = vadd.f32 %v3709, 0.0
      %3711 = vst [vmem:[%s518] sm:$0x1] %v3693
      %3712 = vst [vmem:[%s518 + $0x1] sm:$0x1] %v3710
      %v3713 = vld [vmem:[%s470] sm:$0xf]
      %v3714 = vld [vmem:[%s470 + $0x4] sm:$0xf]
      %v3715 = vld [vmem:[%s470 + $0x8] sm:$0xf]
      %v3716 = vld [vmem:[%s470 + $0xc] sm:$0xf]
      %v3717 = vld [vmem:[%s470 + $0x10] sm:$0x3]
      %v3718 = vld [vmem:[%s4] sm:$0xf]
      %v3719 = vld [vmem:[%s4 + $0x4] sm:$0xf]
      %v3720 = vld [vmem:[%s4 + $0x8] sm:$0xf]
      %v3721 = vld [vmem:[%s4 + $0xc] sm:$0xf]
      %v3722 = vld [vmem:[%s4 + $0x10] sm:$0xf]
      %v3723 = vld [vmem:[%s4 + $0x14] sm:$0xf]
      %v3724 = vld [vmem:[%s4 + $0x18] sm:$0xf]
      %v3725 = vld [vmem:[%s4 + $0x1c] sm:$0xf]
      %v3726 = vld [vmem:[%s4 + $0x20] sm:$0xf]
      %v3727 = vld [vmem:[%s4 + $0x24] sm:$0xf]
      %v3728 = vld [vmem:[%s4 + $0x28] sm:$0xf]
      %v3729 = vld [vmem:[%s4 + $0x2c] sm:$0xf]
      %v3730 = vld [vmem:[%s4 + $0x30] sm:$0xf]
      %v3731 = vld [vmem:[%s4 + $0x34] sm:$0xf]
      %v3732 = vld [vmem:[%s4 + $0x38] sm:$0xf]
      %v3733 = vld [vmem:[%s4 + $0x3c] sm:$0xf]
      %v3734 = vld [vmem:[%s470 + $0x10] sm:$0x7]
      %v3735 = vld [vmem:[%s4 + $0x40] sm:$0xf]
      %v3736 = vld [vmem:[%s4 + $0x44] sm:$0xf]
      %v3737 = vld [vmem:[%s4 + $0x48] sm:$0xf]
      %v3738 = vld [vmem:[%s4 + $0x4c] sm:$0xf]
      %v3739 = vld [vmem:[%s4 + $0x50] sm:$0xf]
      %v3740 = vld [vmem:[%s4 + $0x54] sm:$0xf]
      %v3741 = vld [vmem:[%s4 + $0x58] sm:$0xf]
      %v3742 = vld [vmem:[%s4 + $0x5c] sm:$0xf]
      %v3743 = vld [vmem:[%s4 + $0x60] sm:$0xf]
      %v3744 = vld [vmem:[%s4 + $0x64] sm:$0xf]
      %v3745 = vld [vmem:[%s4 + $0x68] sm:$0xf]
      %v3746 = vld [vmem:[%s4 + $0x6c] sm:$0xf]
      %v3747 = vld [vmem:[%s4 + $0x70] sm:$0xf]
      %v3748 = vld [vmem:[%s4 + $0x74] sm:$0xf]
      %v3749 = vld [vmem:[%s4 + $0x78] sm:$0xf]
      %v3750 = vld [vmem:[%s4 + $0x7c] sm:$0xf]
      %v3756 = vunpack.c.l.b16 %v3713
      %v3757 = vunpack.c.l.b16 %v3714
      %v3758 = vunpack.c.l.b16 %v3715
      %v3759 = vunpack.c.l.b16 %v3716
      %v3760 = vunpack.c.l.b16 %v3734
      %v3761 = vpack.c.b16 %v3757, %v3756
      %v3762 = vpack.c.b16 %v3759, %v3758
      %v3763 = vpack.c.b16 %v3760, %v3760
      %v3765 = vshrl.u32 %v3761, 16
      %v3767 = vshll.u32 %v3761, 16
      %v3769 = vrot.slane %v3767, 1
      %v3770 = vor.u32 %v3765, %v3769
      %v3772 = vshll.u32 %v3762, 16
      %v3774 = vrot.slane %v3772, 1
      %v3775 = vsel %vm571, %v3770, %v3774
      %v3776 = vshrl.u32 %v3762, 16
      %v3778 = vor.u32 %v3776, %v3774
      %v3780 = vshll.u32 %v3763, 16
      %v3782 = vrot.slane %v3780, 1
      %v3783 = vsel %vm571, %v3778, %v3782
      %v3784 = vshrl.u32 %v3763, 16
      %v3786 = vor.u32 %v3784, %v3782
      %v3806 = vunpack.c.l.b16 %v3735
      %v3807 = vunpack.c.l.b16 %v3736
      %v3808 = vunpack.c.l.b16 %v3737
      %v3809 = vunpack.c.l.b16 %v3738
      %v3810 = vunpack.c.l.b16 %v3739
      %v3811 = vunpack.c.l.b16 %v3740
      %v3812 = vunpack.c.l.b16 %v3741
      %v3813 = vunpack.c.l.b16 %v3742
      %v3814 = vunpack.c.l.b16 %v3743
      %v3815 = vunpack.c.l.b16 %v3744
      %v3816 = vunpack.c.l.b16 %v3745
      %v3817 = vunpack.c.l.b16 %v3746
      %v3818 = vunpack.c.l.b16 %v3747
      %v3819 = vunpack.c.l.b16 %v3748
      %v3820 = vunpack.c.l.b16 %v3749
      %v3821 = vunpack.c.l.b16 %v3750
      %v3822 = vpack.c.b16 %v3807, %v3806
      %v3823 = vpack.c.b16 %v3809, %v3808
      %v3824 = vpack.c.b16 %v3811, %v3810
      %v3825 = vpack.c.b16 %v3813, %v3812
      %v3826 = vpack.c.b16 %v3815, %v3814
      %v3827 = vpack.c.b16 %v3817, %v3816
      %v3828 = vpack.c.b16 %v3819, %v3818
      %v3829 = vpack.c.b16 %v3821, %v3820
      %3838 = vmatpush.bf16.msra.mxu0 %v3829
      %3839 = vmatpush.bf16.msra.mxu0 %v3828
      %3840 = vmatpush.bf16.msra.mxu0 %v3827
      %3841 = vmatpush.bf16.msra.mxu0 %v3826
      %3842 = vmatpush.bf16.msra.mxu0 %v3825
      %3843 = vmatpush.bf16.msra.mxu0 %v3824
      %3844 = vmatpush.bf16.msra.mxu0 %v3823
      %3845 = vmatpush.bf16.msra.mxu0 %v3822
      %3846 = vmatmul.bf16.gmra.mxu0 %v3775
      %v3847 = vpop.f32.mrf.mxu0
      %v3848 = vadd.f32 0.0, %v3847
      %v3849 = vpop.f32.mrf.mxu0
      %v3850 = vadd.f32 0.0, %v3849
      %3851 = vmatmul.bf16.gmra.mxu0 %v3783
      %v3852 = vpop.f32.mrf.mxu0
      %v3853 = vadd.f32 0.0, %v3852
      %v3854 = vpop.f32.mrf.mxu0
      %v3855 = vadd.f32 0.0, %v3854
      %3856 = vmatmul.bf16.gmra.mxu0 %v3786
      %v3857 = vpop.f32.mrf.mxu0
      %v3858 = vadd.f32 0.0, %v3857
      %v3859 = vpop.f32.mrf.mxu0
      %3860 = vdwg.mxu0
      %v3862 = vunpack.c.l.b16 %v3717
      %v3863 = vpack.c.b16 %v3862, %v3862
      %v3883 = vunpack.c.l.b16 %v3718
      %v3884 = vunpack.c.l.b16 %v3719
      %v3885 = vunpack.c.l.b16 %v3720
      %v3886 = vunpack.c.l.b16 %v3721
      %v3887 = vunpack.c.l.b16 %v3722
      %v3888 = vunpack.c.l.b16 %v3723
      %v3889 = vunpack.c.l.b16 %v3724
      %v3890 = vunpack.c.l.b16 %v3725
      %v3891 = vunpack.c.l.b16 %v3726
      %v3892 = vunpack.c.l.b16 %v3727
      %v3893 = vunpack.c.l.b16 %v3728
      %v3894 = vunpack.c.l.b16 %v3729
      %v3895 = vunpack.c.l.b16 %v3730
      %v3896 = vunpack.c.l.b16 %v3731
      %v3897 = vunpack.c.l.b16 %v3732
      %v3898 = vunpack.c.l.b16 %v3733
      %v3899 = vpack.c.b16 %v3884, %v3883
      %v3900 = vpack.c.b16 %v3886, %v3885
      %v3901 = vpack.c.b16 %v3888, %v3887
      %v3902 = vpack.c.b16 %v3890, %v3889
      %v3903 = vpack.c.b16 %v3892, %v3891
      %v3904 = vpack.c.b16 %v3894, %v3893
      %v3905 = vpack.c.b16 %v3896, %v3895
      %v3906 = vpack.c.b16 %v3898, %v3897
      %3915 = vmatpush.bf16.msra.mxu0 %v3906
      %3916 = vmatpush.bf16.msra.mxu0 %v3905
      %3917 = vmatpush.bf16.msra.mxu0 %v3904
      %3918 = vmatpush.bf16.msra.mxu0 %v3903
      %3919 = vmatpush.bf16.msra.mxu0 %v3902
      %3920 = vmatpush.bf16.msra.mxu0 %v3901
      %3921 = vmatpush.bf16.msra.mxu0 %v3900
      %3922 = vmatpush.bf16.msra.mxu0 %v3899
      %3923 = vmatmul.bf16.gmra.mxu0 %v3761
      %v3924 = vpop.f32.mrf.mxu0
      %v3925 = vadd.f32 %v3848, %v3924
      %v3926 = vpop.f32.mrf.mxu0
      %v3927 = vadd.f32 %v3850, %v3926
      %3928 = vmatmul.bf16.gmra.mxu0 %v3762
      %v3929 = vpop.f32.mrf.mxu0
      %v3930 = vadd.f32 %v3853, %v3929
      %v3931 = vpop.f32.mrf.mxu0
      %v3932 = vadd.f32 %v3855, %v3931
      %3933 = vmatmul.bf16.gmra.mxu0 %v3863
      %v3934 = vpop.f32.mrf.mxu0
      %v3935 = vadd.f32 %v3858, %v3934
      %v3936 = vpop.f32.mrf.mxu0
      %3937 = vdwg.mxu0
      %v3938 = vld [vmem:[%s470] sm:$0xe]
      %v3939 = vld [vmem:[%s4 + $0x80] sm:$0xf]
      %v3940 = vld [vmem:[%s4 + $0x84] sm:$0xf]
      %v3941 = vld [vmem:[%s4 + $0x88] sm:$0xf]
      %v3942 = vld [vmem:[%s4 + $0x8c] sm:$0xf]
      %v3943 = vld [vmem:[%s4 + $0x90] sm:$0xf]
      %v3944 = vld [vmem:[%s4 + $0x94] sm:$0xf]
      %v3945 = vld [vmem:[%s4 + $0x98] sm:$0xf]
      %v3946 = vld [vmem:[%s4 + $0x9c] sm:$0xf]
      %v3947 = vld [vmem:[%s4 + $0xa0] sm:$0xf]
      %v3948 = vld [vmem:[%s4 + $0xa4] sm:$0xf]
      %v3949 = vld [vmem:[%s4 + $0xa8] sm:$0xf]
      %v3950 = vld [vmem:[%s4 + $0xac] sm:$0xf]
      %v3951 = vld [vmem:[%s4 + $0xb0] sm:$0xf]
      %v3952 = vld [vmem:[%s4 + $0xb4] sm:$0xf]
      %v3953 = vld [vmem:[%s4 + $0xb8] sm:$0xf]
      %v3954 = vld [vmem:[%s4 + $0xbc] sm:$0xf]
      %v3956 = vunpack.c.l.b16 %v3938
      %v3957 = vpack.c.b16 %v3757, %v3956
      %v3958 = vrot.slane %v3957, 1
      %v3959 = vrot.slane %v3762, 1
      %v3960 = vsel %vm766, %v3958, %v3959
      %v3961 = vrot.slane %v3763, 1
      %v3962 = vsel %vm766, %v3959, %v3961
      %v3982 = vunpack.c.l.b16 %v3939
      %v3983 = vunpack.c.l.b16 %v3940
      %v3984 = vunpack.c.l.b16 %v3941
      %v3985 = vunpack.c.l.b16 %v3942
      %v3986 = vunpack.c.l.b16 %v3943
      %v3987 = vunpack.c.l.b16 %v3944
      %v3988 = vunpack.c.l.b16 %v3945
      %v3989 = vunpack.c.l.b16 %v3946
      %v3990 = vunpack.c.l.b16 %v3947
      %v3991 = vunpack.c.l.b16 %v3948
      %v3992 = vunpack.c.l.b16 %v3949
      %v3993 = vunpack.c.l.b16 %v3950
      %v3994 = vunpack.c.l.b16 %v3951
      %v3995 = vunpack.c.l.b16 %v3952
      %v3996 = vunpack.c.l.b16 %v3953
      %v3997 = vunpack.c.l.b16 %v3954
      %v3998 = vpack.c.b16 %v3983, %v3982
      %v3999 = vpack.c.b16 %v3985, %v3984
      %v4000 = vpack.c.b16 %v3987, %v3986
      %v4001 = vpack.c.b16 %v3989, %v3988
      %v4002 = vpack.c.b16 %v3991, %v3990
      %v4003 = vpack.c.b16 %v3993, %v3992
      %v4004 = vpack.c.b16 %v3995, %v3994
      %v4005 = vpack.c.b16 %v3997, %v3996
      %4014 = vmatpush.bf16.msra.mxu0 %v4005
      %4015 = vmatpush.bf16.msra.mxu0 %v4004
      %4016 = vmatpush.bf16.msra.mxu0 %v4003
      %4017 = vmatpush.bf16.msra.mxu0 %v4002
      %4018 = vmatpush.bf16.msra.mxu0 %v4001
      %4019 = vmatpush.bf16.msra.mxu0 %v4000
      %4020 = vmatpush.bf16.msra.mxu0 %v3999
      %4021 = vmatpush.bf16.msra.mxu0 %v3998
      %4022 = vmatmul.bf16.gmra.mxu0 %v3960
      %v4023 = vpop.f32.mrf.mxu0
      %v4024 = vadd.f32 0.0, %v4023
      %v4025 = vpop.f32.mrf.mxu0
      %v4026 = vadd.f32 0.0, %v4025
      %4027 = vmatmul.bf16.gmra.mxu0 %v3962
      %v4028 = vpop.f32.mrf.mxu0
      %v4029 = vadd.f32 0.0, %v4028
      %v4030 = vpop.f32.mrf.mxu0
      %v4031 = vadd.f32 0.0, %v4030
      %4032 = vmatmul.bf16.gmra.mxu0 %v3961
      %v4033 = vpop.f32.mrf.mxu0
      %v4034 = vadd.f32 0.0, %v4033
      %v4035 = vpop.f32.mrf.mxu0
      %4036 = vdwg.mxu0
      %v4037 = vadd.f32 %v3925, %v4024
      %v4038 = vadd.f32 %v3927, %v4026
      %v4039 = vadd.f32 %v3930, %v4029
      %v4040 = vadd.f32 %v3932, %v4031
      %v4041 = vadd.f32 %v3935, %v4034
      %v4042 = vld [vmem:[%s470] sm:$0x8]
      %v4043 = vld [vmem:[%s470 + $0x4] sm:$0xf]
      %v4044 = vld [vmem:[%s470 + $0x8] sm:$0xf]
      %v4045 = vld [vmem:[%s470 + $0xc] sm:$0xf]
      %v4046 = vld [vmem:[%s470 + $0x10] sm:$0xf]
      %v4047 = vld [vmem:[%s470 + $0x14] sm:$0x1]
      %v4048 = vld [vmem:[%s4 + $0xc0] sm:$0xf]
      %v4049 = vld [vmem:[%s4 + $0xc4] sm:$0xf]
      %v4050 = vld [vmem:[%s4 + $0xc8] sm:$0xf]
      %v4051 = vld [vmem:[%s4 + $0xcc] sm:$0xf]
      %v4052 = vld [vmem:[%s4 + $0xd0] sm:$0xf]
      %v4053 = vld [vmem:[%s4 + $0xd4] sm:$0xf]
      %v4054 = vld [vmem:[%s4 + $0xd8] sm:$0xf]
      %v4055 = vld [vmem:[%s4 + $0xdc] sm:$0xf]
      %v4056 = vld [vmem:[%s4 + $0xe0] sm:$0xf]
      %v4057 = vld [vmem:[%s4 + $0xe4] sm:$0xf]
      %v4058 = vld [vmem:[%s4 + $0xe8] sm:$0xf]
      %v4059 = vld [vmem:[%s4 + $0xec] sm:$0xf]
      %v4060 = vld [vmem:[%s4 + $0xf0] sm:$0xf]
      %v4061 = vld [vmem:[%s4 + $0xf4] sm:$0xf]
      %v4062 = vld [vmem:[%s4 + $0xf8] sm:$0xf]
      %v4063 = vld [vmem:[%s4 + $0xfc] sm:$0xf]
      %v4070 = vunpack.c.l.b16 %v4042
      %v4071 = vunpack.c.l.b16 %v4043
      %v4072 = vunpack.c.l.b16 %v4044
      %v4073 = vunpack.c.l.b16 %v4045
      %v4074 = vunpack.c.l.b16 %v4046
      %v4075 = vunpack.c.l.b16 %v4047
      %v4076 = vpack.c.b16 %v4071, %v4070
      %v4077 = vpack.c.b16 %v4073, %v4072
      %v4078 = vpack.c.b16 %v4075, %v4074
      %v4079 = vrot.slane %v4076, 3
      %v4080 = vrot.slane %v4077, 3
      %v4081 = vsel %vm888, %v4079, %v4080
      %v4082 = vrot.slane %v4078, 3
      %v4083 = vsel %vm888, %v4080, %v4082
      %v4103 = vunpack.c.l.b16 %v4048
      %v4104 = vunpack.c.l.b16 %v4049
      %v4105 = vunpack.c.l.b16 %v4050
      %v4106 = vunpack.c.l.b16 %v4051
      %v4107 = vunpack.c.l.b16 %v4052
      %v4108 = vunpack.c.l.b16 %v4053
      %v4109 = vunpack.c.l.b16 %v4054
      %v4110 = vunpack.c.l.b16 %v4055
      %v4111 = vunpack.c.l.b16 %v4056
      %v4112 = vunpack.c.l.b16 %v4057
      %v4113 = vunpack.c.l.b16 %v4058
      %v4114 = vunpack.c.l.b16 %v4059
      %v4115 = vunpack.c.l.b16 %v4060
      %v4116 = vunpack.c.l.b16 %v4061
      %v4117 = vunpack.c.l.b16 %v4062
      %v4118 = vunpack.c.l.b16 %v4063
      %v4119 = vpack.c.b16 %v4104, %v4103
      %v4120 = vpack.c.b16 %v4106, %v4105
      %v4121 = vpack.c.b16 %v4108, %v4107
      %v4122 = vpack.c.b16 %v4110, %v4109
      %v4123 = vpack.c.b16 %v4112, %v4111
      %v4124 = vpack.c.b16 %v4114, %v4113
      %v4125 = vpack.c.b16 %v4116, %v4115
      %v4126 = vpack.c.b16 %v4118, %v4117
      %4135 = vmatpush.bf16.msra.mxu0 %v4126
      %4136 = vmatpush.bf16.msra.mxu0 %v4125
      %4137 = vmatpush.bf16.msra.mxu0 %v4124
      %4138 = vmatpush.bf16.msra.mxu0 %v4123
      %4139 = vmatpush.bf16.msra.mxu0 %v4122
      %4140 = vmatpush.bf16.msra.mxu0 %v4121
      %4141 = vmatpush.bf16.msra.mxu0 %v4120
      %4142 = vmatpush.bf16.msra.mxu0 %v4119
      %4143 = vmatmul.bf16.gmra.mxu0 %v4081
      %v4144 = vpop.f32.mrf.mxu0
      %v4145 = vadd.f32 0.0, %v4144
      %v4146 = vpop.f32.mrf.mxu0
      %v4147 = vadd.f32 0.0, %v4146
      %4148 = vmatmul.bf16.gmra.mxu0 %v4083
      %v4149 = vpop.f32.mrf.mxu0
      %v4150 = vadd.f32 0.0, %v4149
      %v4151 = vpop.f32.mrf.mxu0
      %v4152 = vadd.f32 0.0, %v4151
      %4153 = vmatmul.bf16.gmra.mxu0 %v4082
      %v4154 = vpop.f32.mrf.mxu0
      %v4155 = vadd.f32 0.0, %v4154
      %v4156 = vpop.f32.mrf.mxu0
      %4157 = vdwg.mxu0
      %v4158 = vadd.f32 %v4037, %v4145
      %v4159 = vadd.f32 %v4038, %v4147
      %v4160 = vadd.f32 %v4039, %v4150
      %v4161 = vadd.f32 %v4040, %v4152
      %v4162 = vadd.f32 %v4041, %v4155
      %v4163 = vld [vmem:[%s470 + $0x14] sm:$0x3]
      %v4164 = vld [vmem:[%s4 + $0x100] sm:$0xf]
      %v4165 = vld [vmem:[%s4 + $0x104] sm:$0xf]
      %v4166 = vld [vmem:[%s4 + $0x108] sm:$0xf]
      %v4167 = vld [vmem:[%s4 + $0x10c] sm:$0xf]
      %v4168 = vld [vmem:[%s4 + $0x110] sm:$0xf]
      %v4169 = vld [vmem:[%s4 + $0x114] sm:$0xf]
      %v4170 = vld [vmem:[%s4 + $0x118] sm:$0xf]
      %v4171 = vld [vmem:[%s4 + $0x11c] sm:$0xf]
      %v4172 = vld [vmem:[%s4 + $0x120] sm:$0xf]
      %v4173 = vld [vmem:[%s4 + $0x124] sm:$0xf]
      %v4174 = vld [vmem:[%s4 + $0x128] sm:$0xf]
      %v4175 = vld [vmem:[%s4 + $0x12c] sm:$0xf]
      %v4176 = vld [vmem:[%s4 + $0x130] sm:$0xf]
      %v4177 = vld [vmem:[%s4 + $0x134] sm:$0xf]
      %v4178 = vld [vmem:[%s4 + $0x138] sm:$0xf]
      %v4179 = vld [vmem:[%s4 + $0x13c] sm:$0xf]
      %v4181 = vunpack.c.l.b16 %v4163
      %v4182 = vpack.c.b16 %v4181, %v4074
      %v4184 = vshrl.u32 %v4076, 16
      %v4186 = vrot.slane %v4184, 3
      %v4187 = vshll.u32 %v4076, 16
      %v4189 = vrot.slane %v4187, 4
      %v4190 = vor.u32 %v4186, %v4189
      %v4192 = vshrl.u32 %v4077, 16
      %v4194 = vrot.slane %v4192, 3
      %v4195 = vshll.u32 %v4077, 16
      %v4197 = vrot.slane %v4195, 4
      %v4198 = vor.u32 %v4194, %v4197
      %v4199 = vsel %vm993, %v4190, %v4198
      %v4201 = vshrl.u32 %v4182, 16
      %v4203 = vrot.slane %v4201, 3
      %v4204 = vshll.u32 %v4182, 16
      %v4206 = vrot.slane %v4204, 4
      %v4207 = vor.u32 %v4203, %v4206
      %v4208 = vsel %vm993, %v4198, %v4207
      %v4228 = vunpack.c.l.b16 %v4164
      %v4229 = vunpack.c.l.b16 %v4165
      %v4230 = vunpack.c.l.b16 %v4166
      %v4231 = vunpack.c.l.b16 %v4167
      %v4232 = vunpack.c.l.b16 %v4168
      %v4233 = vunpack.c.l.b16 %v4169
      %v4234 = vunpack.c.l.b16 %v4170
      %v4235 = vunpack.c.l.b16 %v4171
      %v4236 = vunpack.c.l.b16 %v4172
      %v4237 = vunpack.c.l.b16 %v4173
      %v4238 = vunpack.c.l.b16 %v4174
      %v4239 = vunpack.c.l.b16 %v4175
      %v4240 = vunpack.c.l.b16 %v4176
      %v4241 = vunpack.c.l.b16 %v4177
      %v4242 = vunpack.c.l.b16 %v4178
      %v4243 = vunpack.c.l.b16 %v4179
      %v4244 = vpack.c.b16 %v4229, %v4228
      %v4245 = vpack.c.b16 %v4231, %v4230
      %v4246 = vpack.c.b16 %v4233, %v4232
      %v4247 = vpack.c.b16 %v4235, %v4234
      %v4248 = vpack.c.b16 %v4237, %v4236
      %v4249 = vpack.c.b16 %v4239, %v4238
      %v4250 = vpack.c.b16 %v4241, %v4240
      %v4251 = vpack.c.b16 %v4243, %v4242
      %4260 = vmatpush.bf16.msra.mxu0 %v4251
      %4261 = vmatpush.bf16.msra.mxu0 %v4250
      %4262 = vmatpush.bf16.msra.mxu0 %v4249
      %4263 = vmatpush.bf16.msra.mxu0 %v4248
      %4264 = vmatpush.bf16.msra.mxu0 %v4247
      %4265 = vmatpush.bf16.msra.mxu0 %v4246
      %4266 = vmatpush.bf16.msra.mxu0 %v4245
      %4267 = vmatpush.bf16.msra.mxu0 %v4244
      %4268 = vmatmul.bf16.gmra.mxu0 %v4199
      %v4269 = vpop.f32.mrf.mxu0
      %v4270 = vadd.f32 0.0, %v4269
      %v4271 = vpop.f32.mrf.mxu0
      %v4272 = vadd.f32 0.0, %v4271
      %4273 = vmatmul.bf16.gmra.mxu0 %v4208
      %v4274 = vpop.f32.mrf.mxu0
      %v4275 = vadd.f32 0.0, %v4274
      %v4276 = vpop.f32.mrf.mxu0
      %v4277 = vadd.f32 0.0, %v4276
      %4278 = vmatmul.bf16.gmra.mxu0 %v4207
      %v4279 = vpop.f32.mrf.mxu0
      %v4280 = vadd.f32 0.0, %v4279
      %v4281 = vpop.f32.mrf.mxu0
      %4282 = vdwg.mxu0
      %v4283 = vadd.f32 %v4158, %v4270
      %v4284 = vadd.f32 %v4159, %v4272
      %v4285 = vadd.f32 %v4160, %v4275
      %v4286 = vadd.f32 %v4161, %v4277
      %v4287 = vadd.f32 %v4162, %v4280
      %v4288 = vld [vmem:[%s4 + $0x140] sm:$0xf]
      %v4289 = vld [vmem:[%s4 + $0x144] sm:$0xf]
      %v4290 = vld [vmem:[%s4 + $0x148] sm:$0xf]
      %v4291 = vld [vmem:[%s4 + $0x14c] sm:$0xf]
      %v4292 = vld [vmem:[%s4 + $0x150] sm:$0xf]
      %v4293 = vld [vmem:[%s4 + $0x154] sm:$0xf]
      %v4294 = vld [vmem:[%s4 + $0x158] sm:$0xf]
      %v4295 = vld [vmem:[%s4 + $0x15c] sm:$0xf]
      %v4296 = vld [vmem:[%s4 + $0x160] sm:$0xf]
      %v4297 = vld [vmem:[%s4 + $0x164] sm:$0xf]
      %v4298 = vld [vmem:[%s4 + $0x168] sm:$0xf]
      %v4299 = vld [vmem:[%s4 + $0x16c] sm:$0xf]
      %v4300 = vld [vmem:[%s4 + $0x170] sm:$0xf]
      %v4301 = vld [vmem:[%s4 + $0x174] sm:$0xf]
      %v4302 = vld [vmem:[%s4 + $0x178] sm:$0xf]
      %v4303 = vld [vmem:[%s4 + $0x17c] sm:$0xf]
      %v4304 = vpack.c.b16 %v4072, %v4071
      %v4305 = vpack.c.b16 %v4074, %v4073
      %v4306 = vpack.c.b16 %v4181, %v4181
      %v4326 = vunpack.c.l.b16 %v4288
      %v4327 = vunpack.c.l.b16 %v4289
      %v4328 = vunpack.c.l.b16 %v4290
      %v4329 = vunpack.c.l.b16 %v4291
      %v4330 = vunpack.c.l.b16 %v4292
      %v4331 = vunpack.c.l.b16 %v4293
      %v4332 = vunpack.c.l.b16 %v4294
      %v4333 = vunpack.c.l.b16 %v4295
      %v4334 = vunpack.c.l.b16 %v4296
      %v4335 = vunpack.c.l.b16 %v4297
      %v4336 = vunpack.c.l.b16 %v4298
      %v4337 = vunpack.c.l.b16 %v4299
      %v4338 = vunpack.c.l.b16 %v4300
      %v4339 = vunpack.c.l.b16 %v4301
      %v4340 = vunpack.c.l.b16 %v4302
      %v4341 = vunpack.c.l.b16 %v4303
      %v4342 = vpack.c.b16 %v4327, %v4326
      %v4343 = vpack.c.b16 %v4329, %v4328
      %v4344 = vpack.c.b16 %v4331, %v4330
      %v4345 = vpack.c.b16 %v4333, %v4332
      %v4346 = vpack.c.b16 %v4335, %v4334
      %v4347 = vpack.c.b16 %v4337, %v4336
      %v4348 = vpack.c.b16 %v4339, %v4338
      %v4349 = vpack.c.b16 %v4341, %v4340
      %4358 = vmatpush.bf16.msra.mxu0 %v4349
      %4359 = vmatpush.bf16.msra.mxu0 %v4348
      %4360 = vmatpush.bf16.msra.mxu0 %v4347
      %4361 = vmatpush.bf16.msra.mxu0 %v4346
      %4362 = vmatpush.bf16.msra.mxu0 %v4345
      %4363 = vmatpush.bf16.msra.mxu0 %v4344
      %4364 = vmatpush.bf16.msra.mxu0 %v4343
      %4365 = vmatpush.bf16.msra.mxu0 %v4342
      %4366 = vmatmul.bf16.gmra.mxu0 %v4304
      %v4367 = vpop.f32.mrf.mxu0
      %v4368 = vadd.f32 0.0, %v4367
      %v4369 = vpop.f32.mrf.mxu0
      %v4370 = vadd.f32 0.0, %v4369
      %4371 = vmatmul.bf16.gmra.mxu0 %v4305
      %v4372 = vpop.f32.mrf.mxu0
      %v4373 = vadd.f32 0.0, %v4372
      %v4374 = vpop.f32.mrf.mxu0
      %v4375 = vadd.f32 0.0, %v4374
      %4376 = vmatmul.bf16.gmra.mxu0 %v4306
      %v4377 = vpop.f32.mrf.mxu0
      %v4378 = vadd.f32 0.0, %v4377
      %v4379 = vpop.f32.mrf.mxu0
      %4380 = vdwg.mxu0
      %v4381 = vadd.f32 %v4283, %v4368
      %v4382 = vadd.f32 %v4284, %v4370
      %v4383 = vadd.f32 %v4285, %v4373
      %v4384 = vadd.f32 %v4286, %v4375
      %v4385 = vadd.f32 %v4287, %v4378
      %v4386 = vld [vmem:[%s470 + $0x4] sm:$0xc]
      %v4387 = vld [vmem:[%s470 + $0x14] sm:$0xf]
      %v4388 = vld [vmem:[%s4 + $0x180] sm:$0xf]
      %v4389 = vld [vmem:[%s4 + $0x184] sm:$0xf]
      %v4390 = vld [vmem:[%s4 + $0x188] sm:$0xf]
      %v4391 = vld [vmem:[%s4 + $0x18c] sm:$0xf]
      %v4392 = vld [vmem:[%s4 + $0x190] sm:$0xf]
      %v4393 = vld [vmem:[%s4 + $0x194] sm:$0xf]
      %v4394 = vld [vmem:[%s4 + $0x198] sm:$0xf]
      %v4395 = vld [vmem:[%s4 + $0x19c] sm:$0xf]
      %v4396 = vld [vmem:[%s4 + $0x1a0] sm:$0xf]
      %v4397 = vld [vmem:[%s4 + $0x1a4] sm:$0xf]
      %v4398 = vld [vmem:[%s4 + $0x1a8] sm:$0xf]
      %v4399 = vld [vmem:[%s4 + $0x1ac] sm:$0xf]
      %v4400 = vld [vmem:[%s4 + $0x1b0] sm:$0xf]
      %v4401 = vld [vmem:[%s4 + $0x1b4] sm:$0xf]
      %v4402 = vld [vmem:[%s4 + $0x1b8] sm:$0xf]
      %v4403 = vld [vmem:[%s4 + $0x1bc] sm:$0xf]
      %v4406 = vunpack.c.l.b16 %v4386
      %v4407 = vunpack.c.l.b16 %v4387
      %v4408 = vpack.c.b16 %v4072, %v4406
      %v4409 = vpack.c.b16 %v4407, %v4407
      %v4410 = vrot.slane %v4408, 2
      %v4411 = vrot.slane %v4305, 2
      %v4412 = vsel %vm1221, %v4410, %v4411
      %v4413 = vrot.slane %v4409, 2
      %v4414 = vsel %vm1221, %v4411, %v4413
      %v4434 = vunpack.c.l.b16 %v4388
      %v4435 = vunpack.c.l.b16 %v4389
      %v4436 = vunpack.c.l.b16 %v4390
      %v4437 = vunpack.c.l.b16 %v4391
      %v4438 = vunpack.c.l.b16 %v4392
      %v4439 = vunpack.c.l.b16 %v4393
      %v4440 = vunpack.c.l.b16 %v4394
      %v4441 = vunpack.c.l.b16 %v4395
      %v4442 = vunpack.c.l.b16 %v4396
      %v4443 = vunpack.c.l.b16 %v4397
      %v4444 = vunpack.c.l.b16 %v4398
      %v4445 = vunpack.c.l.b16 %v4399
      %v4446 = vunpack.c.l.b16 %v4400
      %v4447 = vunpack.c.l.b16 %v4401
      %v4448 = vunpack.c.l.b16 %v4402
      %v4449 = vunpack.c.l.b16 %v4403
      %v4450 = vpack.c.b16 %v4435, %v4434
      %v4451 = vpack.c.b16 %v4437, %v4436
      %v4452 = vpack.c.b16 %v4439, %v4438
      %v4453 = vpack.c.b16 %v4441, %v4440
      %v4454 = vpack.c.b16 %v4443, %v4442
      %v4455 = vpack.c.b16 %v4445, %v4444
      %v4456 = vpack.c.b16 %v4447, %v4446
      %v4457 = vpack.c.b16 %v4449, %v4448
      %4466 = vmatpush.bf16.msra.mxu0 %v4457
      %4467 = vmatpush.bf16.msra.mxu0 %v4456
      %4468 = vmatpush.bf16.msra.mxu0 %v4455
      %4469 = vmatpush.bf16.msra.mxu0 %v4454
      %4470 = vmatpush.bf16.msra.mxu0 %v4453
      %4471 = vmatpush.bf16.msra.mxu0 %v4452
      %4472 = vmatpush.bf16.msra.mxu0 %v4451
      %4473 = vmatpush.bf16.msra.mxu0 %v4450
      %4474 = vmatmul.bf16.gmra.mxu0 %v4412
      %v4475 = vpop.f32.mrf.mxu0
      %v4476 = vadd.f32 0.0, %v4475
      %v4477 = vpop.f32.mrf.mxu0
      %v4478 = vadd.f32 0.0, %v4477
      %4479 = vmatmul.bf16.gmra.mxu0 %v4414
      %v4480 = vpop.f32.mrf.mxu0
      %v4481 = vadd.f32 0.0, %v4480
      %v4482 = vpop.f32.mrf.mxu0
      %v4483 = vadd.f32 0.0, %v4482
      %4484 = vmatmul.bf16.gmra.mxu0 %v4413
      %v4485 = vpop.f32.mrf.mxu0
      %v4486 = vadd.f32 0.0, %v4485
      %v4487 = vpop.f32.mrf.mxu0
      %4488 = vdwg.mxu0
      %v4489 = vadd.f32 %v4381, %v4476
      %v4490 = vadd.f32 %v4382, %v4478
      %v4491 = vadd.f32 %v4383, %v4481
      %v4492 = vadd.f32 %v4384, %v4483
      %v4493 = vadd.f32 %v4385, %v4486
      %v4494 = vld [vmem:[%s470 + $0x4] sm:$0xc]
      %v4495 = vld [vmem:[%s470 + $0x8] sm:$0xf]
      %v4496 = vld [vmem:[%s470 + $0xc] sm:$0xf]
      %v4497 = vld [vmem:[%s470 + $0x10] sm:$0xf]
      %v4498 = vld [vmem:[%s470 + $0x14] sm:$0xf]
      %v4499 = vld [vmem:[%s470 + $0x18] sm:$0x1]
      %v4500 = vld [vmem:[%s4 + $0x1c0] sm:$0xf]
      %v4501 = vld [vmem:[%s4 + $0x1c4] sm:$0xf]
      %v4502 = vld [vmem:[%s4 + $0x1c8] sm:$0xf]
      %v4503 = vld [vmem:[%s4 + $0x1cc] sm:$0xf]
      %v4504 = vld [vmem:[%s4 + $0x1d0] sm:$0xf]
      %v4505 = vld [vmem:[%s4 + $0x1d4] sm:$0xf]
      %v4506 = vld [vmem:[%s4 + $0x1d8] sm:$0xf]
      %v4507 = vld [vmem:[%s4 + $0x1dc] sm:$0xf]
      %v4508 = vld [vmem:[%s4 + $0x1e0] sm:$0xf]
      %v4509 = vld [vmem:[%s4 + $0x1e4] sm:$0xf]
      %v4510 = vld [vmem:[%s4 + $0x1e8] sm:$0xf]
      %v4511 = vld [vmem:[%s4 + $0x1ec] sm:$0xf]
      %v4512 = vld [vmem:[%s4 + $0x1f0] sm:$0xf]
      %v4513 = vld [vmem:[%s4 + $0x1f4] sm:$0xf]
      %v4514 = vld [vmem:[%s4 + $0x1f8] sm:$0xf]
      %v4515 = vld [vmem:[%s4 + $0x1fc] sm:$0xf]
      %v4522 = vunpack.c.l.b16 %v4494
      %v4523 = vunpack.c.l.b16 %v4495
      %v4524 = vunpack.c.l.b16 %v4496
      %v4525 = vunpack.c.l.b16 %v4497
      %v4526 = vunpack.c.l.b16 %v4498
      %v4527 = vunpack.c.l.b16 %v4499
      %v4528 = vpack.c.b16 %v4523, %v4522
      %v4529 = vpack.c.b16 %v4525, %v4524
      %v4530 = vpack.c.b16 %v4527, %v4526
      %v4532 = vshrl.u32 %v4528, 16
      %v4534 = vrot.slane %v4532, 2
      %v4535 = vshll.u32 %v4528, 16
      %v4537 = vrot.slane %v4535, 3
      %v4538 = vor.u32 %v4534, %v4537
      %v4540 = vshrl.u32 %v4529, 16
      %v4542 = vrot.slane %v4540, 2
      %v4543 = vshll.u32 %v4529, 16
      %v4545 = vrot.slane %v4543, 3
      %v4546 = vor.u32 %v4542, %v4545
      %v4547 = vsel %vm1343, %v4538, %v4546
      %v4549 = vshrl.u32 %v4530, 16
      %v4551 = vrot.slane %v4549, 2
      %v4552 = vshll.u32 %v4530, 16
      %v4554 = vrot.slane %v4552, 3
      %v4555 = vor.u32 %v4551, %v4554
      %v4556 = vsel %vm1343, %v4546, %v4555
      %v4576 = vunpack.c.l.b16 %v4500
      %v4577 = vunpack.c.l.b16 %v4501
      %v4578 = vunpack.c.l.b16 %v4502
      %v4579 = vunpack.c.l.b16 %v4503
      %v4580 = vunpack.c.l.b16 %v4504
      %v4581 = vunpack.c.l.b16 %v4505
      %v4582 = vunpack.c.l.b16 %v4506
      %v4583 = vunpack.c.l.b16 %v4507
      %v4584 = vunpack.c.l.b16 %v4508
      %v4585 = vunpack.c.l.b16 %v4509
      %v4586 = vunpack.c.l.b16 %v4510
      %v4587 = vunpack.c.l.b16 %v4511
      %v4588 = vunpack.c.l.b16 %v4512
      %v4589 = vunpack.c.l.b16 %v4513
      %v4590 = vunpack.c.l.b16 %v4514
      %v4591 = vunpack.c.l.b16 %v4515
      %v4592 = vpack.c.b16 %v4577, %v4576
      %v4593 = vpack.c.b16 %v4579, %v4578
      %v4594 = vpack.c.b16 %v4581, %v4580
      %v4595 = vpack.c.b16 %v4583, %v4582
      %v4596 = vpack.c.b16 %v4585, %v4584
      %v4597 = vpack.c.b16 %v4587, %v4586
      %v4598 = vpack.c.b16 %v4589, %v4588
      %v4599 = vpack.c.b16 %v4591, %v4590
      %4608 = vmatpush.bf16.msra.mxu0 %v4599
      %4609 = vmatpush.bf16.msra.mxu0 %v4598
      %4610 = vmatpush.bf16.msra.mxu0 %v4597
      %4611 = vmatpush.bf16.msra.mxu0 %v4596
      %4612 = vmatpush.bf16.msra.mxu0 %v4595
      %4613 = vmatpush.bf16.msra.mxu0 %v4594
      %4614 = vmatpush.bf16.msra.mxu0 %v4593
      %4615 = vmatpush.bf16.msra.mxu0 %v4592
      %4616 = vmatmul.bf16.gmra.mxu0 %v4547
      %v4617 = vpop.f32.mrf.mxu0
      %v4618 = vadd.f32 0.0, %v4617
      %v4619 = vpop.f32.mrf.mxu0
      %v4620 = vadd.f32 0.0, %v4619
      %4621 = vmatmul.bf16.gmra.mxu0 %v4556
      %v4622 = vpop.f32.mrf.mxu0
      %v4623 = vadd.f32 0.0, %v4622
      %v4624 = vpop.f32.mrf.mxu0
      %v4625 = vadd.f32 0.0, %v4624
      %4626 = vmatmul.bf16.gmra.mxu0 %v4555
      %v4627 = vpop.f32.mrf.mxu0
      %v4628 = vadd.f32 0.0, %v4627
      %v4629 = vpop.f32.mrf.mxu0
      %4630 = vdwg.mxu0
      %v4631 = vadd.f32 %v4489, %v4618
      %v4632 = vadd.f32 %v4490, %v4620
      %v4633 = vadd.f32 %v4491, %v4623
      %v4634 = vadd.f32 %v4492, %v4625
      %v4635 = vadd.f32 %v4493, %v4628
      %v4636 = vld [vmem:[%s470 + $0x4] sm:$0x8]
      %v4637 = vld [vmem:[%s4 + $0x200] sm:$0xf]
      %v4638 = vld [vmem:[%s4 + $0x204] sm:$0xf]
      %v4639 = vld [vmem:[%s4 + $0x208] sm:$0xf]
      %v4640 = vld [vmem:[%s4 + $0x20c] sm:$0xf]
      %v4641 = vld [vmem:[%s4 + $0x210] sm:$0xf]
      %v4642 = vld [vmem:[%s4 + $0x214] sm:$0xf]
      %v4643 = vld [vmem:[%s4 + $0x218] sm:$0xf]
      %v4644 = vld [vmem:[%s4 + $0x21c] sm:$0xf]
      %v4645 = vld [vmem:[%s4 + $0x220] sm:$0xf]
      %v4646 = vld [vmem:[%s4 + $0x224] sm:$0xf]
      %v4647 = vld [vmem:[%s4 + $0x228] sm:$0xf]
      %v4648 = vld [vmem:[%s4 + $0x22c] sm:$0xf]
      %v4649 = vld [vmem:[%s4 + $0x230] sm:$0xf]
      %v4650 = vld [vmem:[%s4 + $0x234] sm:$0xf]
      %v4651 = vld [vmem:[%s4 + $0x238] sm:$0xf]
      %v4652 = vld [vmem:[%s4 + $0x23c] sm:$0xf]
      %v4654 = vunpack.c.l.b16 %v4636
      %v4655 = vpack.c.b16 %v4523, %v4654
      %v4656 = vrot.slane %v4655, 3
      %v4657 = vrot.slane %v4529, 3
      %v4658 = vsel %vm888, %v4656, %v4657
      %v4659 = vrot.slane %v4530, 3
      %v4660 = vsel %vm888, %v4657, %v4659
      %v4680 = vunpack.c.l.b16 %v4637
      %v4681 = vunpack.c.l.b16 %v4638
      %v4682 = vunpack.c.l.b16 %v4639
      %v4683 = vunpack.c.l.b16 %v4640
      %v4684 = vunpack.c.l.b16 %v4641
      %v4685 = vunpack.c.l.b16 %v4642
      %v4686 = vunpack.c.l.b16 %v4643
      %v4687 = vunpack.c.l.b16 %v4644
      %v4688 = vunpack.c.l.b16 %v4645
      %v4689 = vunpack.c.l.b16 %v4646
      %v4690 = vunpack.c.l.b16 %v4647
      %v4691 = vunpack.c.l.b16 %v4648
      %v4692 = vunpack.c.l.b16 %v4649
      %v4693 = vunpack.c.l.b16 %v4650
      %v4694 = vunpack.c.l.b16 %v4651
      %v4695 = vunpack.c.l.b16 %v4652
      %v4696 = vpack.c.b16 %v4681, %v4680
      %v4697 = vpack.c.b16 %v4683, %v4682
      %v4698 = vpack.c.b16 %v4685, %v4684
      %v4699 = vpack.c.b16 %v4687, %v4686
      %v4700 = vpack.c.b16 %v4689, %v4688
      %v4701 = vpack.c.b16 %v4691, %v4690
      %v4702 = vpack.c.b16 %v4693, %v4692
      %v4703 = vpack.c.b16 %v4695, %v4694
      %4712 = vmatpush.bf16.msra.mxu0 %v4703
      %4713 = vmatpush.bf16.msra.mxu0 %v4702
      %4714 = vmatpush.bf16.msra.mxu0 %v4701
      %4715 = vmatpush.bf16.msra.mxu0 %v4700
      %4716 = vmatpush.bf16.msra.mxu0 %v4699
      %4717 = vmatpush.bf16.msra.mxu0 %v4698
      %4718 = vmatpush.bf16.msra.mxu0 %v4697
      %4719 = vmatpush.bf16.msra.mxu0 %v4696
      %4720 = vmatmul.bf16.gmra.mxu0 %v4658
      %v4721 = vpop.f32.mrf.mxu0
      %v4722 = vadd.f32 0.0, %v4721
      %v4723 = vpop.f32.mrf.mxu0
      %v4724 = vadd.f32 0.0, %v4723
      %4725 = vmatmul.bf16.gmra.mxu0 %v4660
      %v4726 = vpop.f32.mrf.mxu0
      %v4727 = vadd.f32 0.0, %v4726
      %v4728 = vpop.f32.mrf.mxu0
      %v4729 = vadd.f32 0.0, %v4728
      %4730 = vmatmul.bf16.gmra.mxu0 %v4659
      %v4731 = vpop.f32.mrf.mxu0
      %v4732 = vadd.f32 0.0, %v4731
      %v4733 = vpop.f32.mrf.mxu0
      %4734 = vdwg.mxu0
      %v4735 = vadd.f32 %v4631, %v4722
      %v4736 = vadd.f32 %v4632, %v4724
      %v4737 = vadd.f32 %v4633, %v4727
      %v4738 = vadd.f32 %v4634, %v4729
      %v4739 = vadd.f32 %v4635, %v4732
      %v4740 = vld [vmem:[%s483] sm:$0xf]
      %v4741 = vld [vmem:[%s483 + $0x4] sm:$0xf]
      %v4742 = vld [vmem:[%s483 + $0x8] sm:$0xf]
      %v4743 = vld [vmem:[%s483 + $0xc] sm:$0xf]
      %v4744 = vld [vmem:[%s483 + $0x10] sm:$0x3]
      %v4745 = vld [vmem:[%s4 + $0x240] sm:$0xf]
      %v4746 = vld [vmem:[%s4 + $0x244] sm:$0xf]
      %v4747 = vld [vmem:[%s4 + $0x248] sm:$0xf]
      %v4748 = vld [vmem:[%s4 + $0x24c] sm:$0xf]
      %v4749 = vld [vmem:[%s4 + $0x250] sm:$0xf]
      %v4750 = vld [vmem:[%s4 + $0x254] sm:$0xf]
      %v4751 = vld [vmem:[%s4 + $0x258] sm:$0xf]
      %v4752 = vld [vmem:[%s4 + $0x25c] sm:$0xf]
      %v4753 = vld [vmem:[%s4 + $0x260] sm:$0xf]
      %v4754 = vld [vmem:[%s4 + $0x264] sm:$0xf]
      %v4755 = vld [vmem:[%s4 + $0x268] sm:$0xf]
      %v4756 = vld [vmem:[%s4 + $0x26c] sm:$0xf]
      %v4757 = vld [vmem:[%s4 + $0x270] sm:$0xf]
      %v4758 = vld [vmem:[%s4 + $0x274] sm:$0xf]
      %v4759 = vld [vmem:[%s4 + $0x278] sm:$0xf]
      %v4760 = vld [vmem:[%s4 + $0x27c] sm:$0xf]
      %v4766 = vunpack.c.l.b16 %v4740
      %v4767 = vunpack.c.l.b16 %v4741
      %v4768 = vunpack.c.l.b16 %v4742
      %v4769 = vunpack.c.l.b16 %v4743
      %v4770 = vunpack.c.l.b16 %v4744
      %v4771 = vpack.c.b16 %v4767, %v4766
      %v4772 = vpack.c.b16 %v4769, %v4768
      %v4773 = vpack.c.b16 %v4770, %v4770
      %v4793 = vunpack.c.l.b16 %v4745
      %v4794 = vunpack.c.l.b16 %v4746
      %v4795 = vunpack.c.l.b16 %v4747
      %v4796 = vunpack.c.l.b16 %v4748
      %v4797 = vunpack.c.l.b16 %v4749
      %v4798 = vunpack.c.l.b16 %v4750
      %v4799 = vunpack.c.l.b16 %v4751
      %v4800 = vunpack.c.l.b16 %v4752
      %v4801 = vunpack.c.l.b16 %v4753
      %v4802 = vunpack.c.l.b16 %v4754
      %v4803 = vunpack.c.l.b16 %v4755
      %v4804 = vunpack.c.l.b16 %v4756
      %v4805 = vunpack.c.l.b16 %v4757
      %v4806 = vunpack.c.l.b16 %v4758
      %v4807 = vunpack.c.l.b16 %v4759
      %v4808 = vunpack.c.l.b16 %v4760
      %v4809 = vpack.c.b16 %v4794, %v4793
      %v4810 = vpack.c.b16 %v4796, %v4795
      %v4811 = vpack.c.b16 %v4798, %v4797
      %v4812 = vpack.c.b16 %v4800, %v4799
      %v4813 = vpack.c.b16 %v4802, %v4801
      %v4814 = vpack.c.b16 %v4804, %v4803
      %v4815 = vpack.c.b16 %v4806, %v4805
      %v4816 = vpack.c.b16 %v4808, %v4807
      %4825 = vmatpush.bf16.msra.mxu0 %v4816
      %4826 = vmatpush.bf16.msra.mxu0 %v4815
      %4827 = vmatpush.bf16.msra.mxu0 %v4814
      %4828 = vmatpush.bf16.msra.mxu0 %v4813
      %4829 = vmatpush.bf16.msra.mxu0 %v4812
      %4830 = vmatpush.bf16.msra.mxu0 %v4811
      %4831 = vmatpush.bf16.msra.mxu0 %v4810
      %4832 = vmatpush.bf16.msra.mxu0 %v4809
      %4833 = vmatmul.bf16.gmra.mxu0 %v4771
      %v4834 = vpop.f32.mrf.mxu0
      %v4835 = vadd.f32 0.0, %v4834
      %v4836 = vpop.f32.mrf.mxu0
      %v4837 = vadd.f32 0.0, %v4836
      %4838 = vmatmul.bf16.gmra.mxu0 %v4772
      %v4839 = vpop.f32.mrf.mxu0
      %v4840 = vadd.f32 0.0, %v4839
      %v4841 = vpop.f32.mrf.mxu0
      %v4842 = vadd.f32 0.0, %v4841
      %4843 = vmatmul.bf16.gmra.mxu0 %v4773
      %v4844 = vpop.f32.mrf.mxu0
      %v4845 = vadd.f32 0.0, %v4844
      %v4846 = vpop.f32.mrf.mxu0
      %4847 = vdwg.mxu0
      %v4848 = vadd.f32 %v4735, %v4835
      %v4849 = vadd.f32 %v4736, %v4837
      %v4850 = vadd.f32 %v4737, %v4840
      %v4851 = vadd.f32 %v4738, %v4842
      %v4852 = vadd.f32 %v4739, %v4845
      %v4853 = vld [vmem:[%s483 + $0x10] sm:$0x7]
      %v4854 = vld [vmem:[%s4 + $0x280] sm:$0xf]
      %v4855 = vld [vmem:[%s4 + $0x284] sm:$0xf]
      %v4856 = vld [vmem:[%s4 + $0x288] sm:$0xf]
      %v4857 = vld [vmem:[%s4 + $0x28c] sm:$0xf]
      %v4858 = vld [vmem:[%s4 + $0x290] sm:$0xf]
      %v4859 = vld [vmem:[%s4 + $0x294] sm:$0xf]
      %v4860 = vld [vmem:[%s4 + $0x298] sm:$0xf]
      %v4861 = vld [vmem:[%s4 + $0x29c] sm:$0xf]
      %v4862 = vld [vmem:[%s4 + $0x2a0] sm:$0xf]
      %v4863 = vld [vmem:[%s4 + $0x2a4] sm:$0xf]
      %v4864 = vld [vmem:[%s4 + $0x2a8] sm:$0xf]
      %v4865 = vld [vmem:[%s4 + $0x2ac] sm:$0xf]
      %v4866 = vld [vmem:[%s4 + $0x2b0] sm:$0xf]
      %v4867 = vld [vmem:[%s4 + $0x2b4] sm:$0xf]
      %v4868 = vld [vmem:[%s4 + $0x2b8] sm:$0xf]
      %v4869 = vld [vmem:[%s4 + $0x2bc] sm:$0xf]
      %v4871 = vunpack.c.l.b16 %v4853
      %v4872 = vpack.c.b16 %v4871, %v4871
      %v4874 = vshrl.u32 %v4771, 16
      %v4876 = vshll.u32 %v4771, 16
      %v4878 = vrot.slane %v4876, 1
      %v4879 = vor.u32 %v4874, %v4878
      %v4881 = vshll.u32 %v4772, 16
      %v4883 = vrot.slane %v4881, 1
      %v4884 = vsel %vm571, %v4879, %v4883
      %v4885 = vshrl.u32 %v4772, 16
      %v4887 = vor.u32 %v4885, %v4883
      %v4889 = vshll.u32 %v4872, 16
      %v4891 = vrot.slane %v4889, 1
      %v4892 = vsel %vm571, %v4887, %v4891
      %v4893 = vshrl.u32 %v4872, 16
      %v4895 = vor.u32 %v4893, %v4891
      %v4915 = vunpack.c.l.b16 %v4854
      %v4916 = vunpack.c.l.b16 %v4855
      %v4917 = vunpack.c.l.b16 %v4856
      %v4918 = vunpack.c.l.b16 %v4857
      %v4919 = vunpack.c.l.b16 %v4858
      %v4920 = vunpack.c.l.b16 %v4859
      %v4921 = vunpack.c.l.b16 %v4860
      %v4922 = vunpack.c.l.b16 %v4861
      %v4923 = vunpack.c.l.b16 %v4862
      %v4924 = vunpack.c.l.b16 %v4863
      %v4925 = vunpack.c.l.b16 %v4864
      %v4926 = vunpack.c.l.b16 %v4865
      %v4927 = vunpack.c.l.b16 %v4866
      %v4928 = vunpack.c.l.b16 %v4867
      %v4929 = vunpack.c.l.b16 %v4868
      %v4930 = vunpack.c.l.b16 %v4869
      %v4931 = vpack.c.b16 %v4916, %v4915
      %v4932 = vpack.c.b16 %v4918, %v4917
      %v4933 = vpack.c.b16 %v4920, %v4919
      %v4934 = vpack.c.b16 %v4922, %v4921
      %v4935 = vpack.c.b16 %v4924, %v4923
      %v4936 = vpack.c.b16 %v4926, %v4925
      %v4937 = vpack.c.b16 %v4928, %v4927
      %v4938 = vpack.c.b16 %v4930, %v4929
      %4947 = vmatpush.bf16.msra.mxu0 %v4938
      %4948 = vmatpush.bf16.msra.mxu0 %v4937
      %4949 = vmatpush.bf16.msra.mxu0 %v4936
      %4950 = vmatpush.bf16.msra.mxu0 %v4935
      %4951 = vmatpush.bf16.msra.mxu0 %v4934
      %4952 = vmatpush.bf16.msra.mxu0 %v4933
      %4953 = vmatpush.bf16.msra.mxu0 %v4932
      %4954 = vmatpush.bf16.msra.mxu0 %v4931
      %4955 = vmatmul.bf16.gmra.mxu0 %v4884
      %v4956 = vpop.f32.mrf.mxu0
      %v4957 = vadd.f32 0.0, %v4956
      %v4958 = vpop.f32.mrf.mxu0
      %v4959 = vadd.f32 0.0, %v4958
      %4960 = vmatmul.bf16.gmra.mxu0 %v4892
      %v4961 = vpop.f32.mrf.mxu0
      %v4962 = vadd.f32 0.0, %v4961
      %v4963 = vpop.f32.mrf.mxu0
      %v4964 = vadd.f32 0.0, %v4963
      %4965 = vmatmul.bf16.gmra.mxu0 %v4895
      %v4966 = vpop.f32.mrf.mxu0
      %v4967 = vadd.f32 0.0, %v4966
      %v4968 = vpop.f32.mrf.mxu0
      %4969 = vdwg.mxu0
      %v4970 = vadd.f32 %v4848, %v4957
      %v4971 = vadd.f32 %v4849, %v4959
      %v4972 = vadd.f32 %v4850, %v4962
      %v4973 = vadd.f32 %v4851, %v4964
      %v4974 = vadd.f32 %v4852, %v4967
      %v4975 = vld [vmem:[%s483] sm:$0xe]
      %v4976 = vld [vmem:[%s4 + $0x2c0] sm:$0xf]
      %v4977 = vld [vmem:[%s4 + $0x2c4] sm:$0xf]
      %v4978 = vld [vmem:[%s4 + $0x2c8] sm:$0xf]
      %v4979 = vld [vmem:[%s4 + $0x2cc] sm:$0xf]
      %v4980 = vld [vmem:[%s4 + $0x2d0] sm:$0xf]
      %v4981 = vld [vmem:[%s4 + $0x2d4] sm:$0xf]
      %v4982 = vld [vmem:[%s4 + $0x2d8] sm:$0xf]
      %v4983 = vld [vmem:[%s4 + $0x2dc] sm:$0xf]
      %v4984 = vld [vmem:[%s4 + $0x2e0] sm:$0xf]
      %v4985 = vld [vmem:[%s4 + $0x2e4] sm:$0xf]
      %v4986 = vld [vmem:[%s4 + $0x2e8] sm:$0xf]
      %v4987 = vld [vmem:[%s4 + $0x2ec] sm:$0xf]
      %v4988 = vld [vmem:[%s4 + $0x2f0] sm:$0xf]
      %v4989 = vld [vmem:[%s4 + $0x2f4] sm:$0xf]
      %v4990 = vld [vmem:[%s4 + $0x2f8] sm:$0xf]
      %v4991 = vld [vmem:[%s4 + $0x2fc] sm:$0xf]
      %v4993 = vunpack.c.l.b16 %v4975
      %v4994 = vpack.c.b16 %v4767, %v4993
      %v4995 = vrot.slane %v4994, 1
      %v4996 = vrot.slane %v4772, 1
      %v4997 = vsel %vm766, %v4995, %v4996
      %v4998 = vrot.slane %v4872, 1
      %v4999 = vsel %vm766, %v4996, %v4998
      %v5019 = vunpack.c.l.b16 %v4976
      %v5020 = vunpack.c.l.b16 %v4977
      %v5021 = vunpack.c.l.b16 %v4978
      %v5022 = vunpack.c.l.b16 %v4979
      %v5023 = vunpack.c.l.b16 %v4980
      %v5024 = vunpack.c.l.b16 %v4981
      %v5025 = vunpack.c.l.b16 %v4982
      %v5026 = vunpack.c.l.b16 %v4983
      %v5027 = vunpack.c.l.b16 %v4984
      %v5028 = vunpack.c.l.b16 %v4985
      %v5029 = vunpack.c.l.b16 %v4986
      %v5030 = vunpack.c.l.b16 %v4987
      %v5031 = vunpack.c.l.b16 %v4988
      %v5032 = vunpack.c.l.b16 %v4989
      %v5033 = vunpack.c.l.b16 %v4990
      %v5034 = vunpack.c.l.b16 %v4991
      %v5035 = vpack.c.b16 %v5020, %v5019
      %v5036 = vpack.c.b16 %v5022, %v5021
      %v5037 = vpack.c.b16 %v5024, %v5023
      %v5038 = vpack.c.b16 %v5026, %v5025
      %v5039 = vpack.c.b16 %v5028, %v5027
      %v5040 = vpack.c.b16 %v5030, %v5029
      %v5041 = vpack.c.b16 %v5032, %v5031
      %v5042 = vpack.c.b16 %v5034, %v5033
      %5051 = vmatpush.bf16.msra.mxu0 %v5042
      %5052 = vmatpush.bf16.msra.mxu0 %v5041
      %5053 = vmatpush.bf16.msra.mxu0 %v5040
      %5054 = vmatpush.bf16.msra.mxu0 %v5039
      %5055 = vmatpush.bf16.msra.mxu0 %v5038
      %5056 = vmatpush.bf16.msra.mxu0 %v5037
      %5057 = vmatpush.bf16.msra.mxu0 %v5036
      %5058 = vmatpush.bf16.msra.mxu0 %v5035
      %5059 = vmatmul.bf16.gmra.mxu0 %v4997
      %v5060 = vpop.f32.mrf.mxu0
      %v5061 = vadd.f32 0.0, %v5060
      %v5062 = vpop.f32.mrf.mxu0
      %v5063 = vadd.f32 0.0, %v5062
      %5064 = vmatmul.bf16.gmra.mxu0 %v4999
      %v5065 = vpop.f32.mrf.mxu0
      %v5066 = vadd.f32 0.0, %v5065
      %v5067 = vpop.f32.mrf.mxu0
      %v5068 = vadd.f32 0.0, %v5067
      %5069 = vmatmul.bf16.gmra.mxu0 %v4998
      %v5070 = vpop.f32.mrf.mxu0
      %v5071 = vadd.f32 0.0, %v5070
      %v5072 = vpop.f32.mrf.mxu0
      %5073 = vdwg.mxu0
      %v5074 = vadd.f32 %v4970, %v5061
      %v5075 = vadd.f32 %v4971, %v5063
      %v5076 = vadd.f32 %v4972, %v5066
      %v5077 = vadd.f32 %v4973, %v5068
      %v5078 = vadd.f32 %v4974, %v5071
      %v5079 = vld [vmem:[%s483] sm:$0x8]
      %v5080 = vld [vmem:[%s483 + $0x4] sm:$0xf]
      %v5081 = vld [vmem:[%s483 + $0x8] sm:$0xf]
      %v5082 = vld [vmem:[%s483 + $0xc] sm:$0xf]
      %v5083 = vld [vmem:[%s483 + $0x10] sm:$0xf]
      %v5084 = vld [vmem:[%s483 + $0x14] sm:$0x1]
      %v5085 = vld [vmem:[%s4 + $0x300] sm:$0xf]
      %v5086 = vld [vmem:[%s4 + $0x304] sm:$0xf]
      %v5087 = vld [vmem:[%s4 + $0x308] sm:$0xf]
      %v5088 = vld [vmem:[%s4 + $0x30c] sm:$0xf]
      %v5089 = vld [vmem:[%s4 + $0x310] sm:$0xf]
      %v5090 = vld [vmem:[%s4 + $0x314] sm:$0xf]
      %v5091 = vld [vmem:[%s4 + $0x318] sm:$0xf]
      %v5092 = vld [vmem:[%s4 + $0x31c] sm:$0xf]
      %v5093 = vld [vmem:[%s4 + $0x320] sm:$0xf]
      %v5094 = vld [vmem:[%s4 + $0x324] sm:$0xf]
      %v5095 = vld [vmem:[%s4 + $0x328] sm:$0xf]
      %v5096 = vld [vmem:[%s4 + $0x32c] sm:$0xf]
      %v5097 = vld [vmem:[%s4 + $0x330] sm:$0xf]
      %v5098 = vld [vmem:[%s4 + $0x334] sm:$0xf]
      %v5099 = vld [vmem:[%s4 + $0x338] sm:$0xf]
      %v5100 = vld [vmem:[%s4 + $0x33c] sm:$0xf]
      %v5107 = vunpack.c.l.b16 %v5079
      %v5108 = vunpack.c.l.b16 %v5080
      %v5109 = vunpack.c.l.b16 %v5081
      %v5110 = vunpack.c.l.b16 %v5082
      %v5111 = vunpack.c.l.b16 %v5083
      %v5112 = vunpack.c.l.b16 %v5084
      %v5113 = vpack.c.b16 %v5108, %v5107
      %v5114 = vpack.c.b16 %v5110, %v5109
      %v5115 = vpack.c.b16 %v5112, %v5111
      %v5116 = vrot.slane %v5113, 3
      %v5117 = vrot.slane %v5114, 3
      %v5118 = vsel %vm888, %v5116, %v5117
      %v5119 = vrot.slane %v5115, 3
      %v5120 = vsel %vm888, %v5117, %v5119
      %v5140 = vunpack.c.l.b16 %v5085
      %v5141 = vunpack.c.l.b16 %v5086
      %v5142 = vunpack.c.l.b16 %v5087
      %v5143 = vunpack.c.l.b16 %v5088
      %v5144 = vunpack.c.l.b16 %v5089
      %v5145 = vunpack.c.l.b16 %v5090
      %v5146 = vunpack.c.l.b16 %v5091
      %v5147 = vunpack.c.l.b16 %v5092
      %v5148 = vunpack.c.l.b16 %v5093
      %v5149 = vunpack.c.l.b16 %v5094
      %v5150 = vunpack.c.l.b16 %v5095
      %v5151 = vunpack.c.l.b16 %v5096
      %v5152 = vunpack.c.l.b16 %v5097
      %v5153 = vunpack.c.l.b16 %v5098
      %v5154 = vunpack.c.l.b16 %v5099
      %v5155 = vunpack.c.l.b16 %v5100
      %v5156 = vpack.c.b16 %v5141, %v5140
      %v5157 = vpack.c.b16 %v5143, %v5142
      %v5158 = vpack.c.b16 %v5145, %v5144
      %v5159 = vpack.c.b16 %v5147, %v5146
      %v5160 = vpack.c.b16 %v5149, %v5148
      %v5161 = vpack.c.b16 %v5151, %v5150
      %v5162 = vpack.c.b16 %v5153, %v5152
      %v5163 = vpack.c.b16 %v5155, %v5154
      %5172 = vmatpush.bf16.msra.mxu0 %v5163
      %5173 = vmatpush.bf16.msra.mxu0 %v5162
      %5174 = vmatpush.bf16.msra.mxu0 %v5161
      %5175 = vmatpush.bf16.msra.mxu0 %v5160
      %5176 = vmatpush.bf16.msra.mxu0 %v5159
      %5177 = vmatpush.bf16.msra.mxu0 %v5158
      %5178 = vmatpush.bf16.msra.mxu0 %v5157
      %5179 = vmatpush.bf16.msra.mxu0 %v5156
      %5180 = vmatmul.bf16.gmra.mxu0 %v5118
      %v5181 = vpop.f32.mrf.mxu0
      %v5182 = vadd.f32 0.0, %v5181
      %v5183 = vpop.f32.mrf.mxu0
      %v5184 = vadd.f32 0.0, %v5183
      %5185 = vmatmul.bf16.gmra.mxu0 %v5120
      %v5186 = vpop.f32.mrf.mxu0
      %v5187 = vadd.f32 0.0, %v5186
      %v5188 = vpop.f32.mrf.mxu0
      %v5189 = vadd.f32 0.0, %v5188
      %5190 = vmatmul.bf16.gmra.mxu0 %v5119
      %v5191 = vpop.f32.mrf.mxu0
      %v5192 = vadd.f32 0.0, %v5191
      %v5193 = vpop.f32.mrf.mxu0
      %5194 = vdwg.mxu0
      %v5195 = vadd.f32 %v5074, %v5182
      %v5196 = vadd.f32 %v5075, %v5184
      %v5197 = vadd.f32 %v5076, %v5187
      %v5198 = vadd.f32 %v5077, %v5189
      %v5199 = vadd.f32 %v5078, %v5192
      %v5200 = vld [vmem:[%s483 + $0x14] sm:$0x3]
      %v5201 = vld [vmem:[%s4 + $0x340] sm:$0xf]
      %v5202 = vld [vmem:[%s4 + $0x344] sm:$0xf]
      %v5203 = vld [vmem:[%s4 + $0x348] sm:$0xf]
      %v5204 = vld [vmem:[%s4 + $0x34c] sm:$0xf]
      %v5205 = vld [vmem:[%s4 + $0x350] sm:$0xf]
      %v5206 = vld [vmem:[%s4 + $0x354] sm:$0xf]
      %v5207 = vld [vmem:[%s4 + $0x358] sm:$0xf]
      %v5208 = vld [vmem:[%s4 + $0x35c] sm:$0xf]
      %v5209 = vld [vmem:[%s4 + $0x360] sm:$0xf]
      %v5210 = vld [vmem:[%s4 + $0x364] sm:$0xf]
      %v5211 = vld [vmem:[%s4 + $0x368] sm:$0xf]
      %v5212 = vld [vmem:[%s4 + $0x36c] sm:$0xf]
      %v5213 = vld [vmem:[%s4 + $0x370] sm:$0xf]
      %v5214 = vld [vmem:[%s4 + $0x374] sm:$0xf]
      %v5215 = vld [vmem:[%s4 + $0x378] sm:$0xf]
      %v5216 = vld [vmem:[%s4 + $0x37c] sm:$0xf]
      %v5218 = vunpack.c.l.b16 %v5200
      %v5219 = vpack.c.b16 %v5218, %v5111
      %v5221 = vshrl.u32 %v5113, 16
      %v5223 = vrot.slane %v5221, 3
      %v5224 = vshll.u32 %v5113, 16
      %v5226 = vrot.slane %v5224, 4
      %v5227 = vor.u32 %v5223, %v5226
      %v5229 = vshrl.u32 %v5114, 16
      %v5231 = vrot.slane %v5229, 3
      %v5232 = vshll.u32 %v5114, 16
      %v5234 = vrot.slane %v5232, 4
      %v5235 = vor.u32 %v5231, %v5234
      %v5236 = vsel %vm993, %v5227, %v5235
      %v5238 = vshrl.u32 %v5219, 16
      %v5240 = vrot.slane %v5238, 3
      %v5241 = vshll.u32 %v5219, 16
      %v5243 = vrot.slane %v5241, 4
      %v5244 = vor.u32 %v5240, %v5243
      %v5245 = vsel %vm993, %v5235, %v5244
      %v5265 = vunpack.c.l.b16 %v5201
      %v5266 = vunpack.c.l.b16 %v5202
      %v5267 = vunpack.c.l.b16 %v5203
      %v5268 = vunpack.c.l.b16 %v5204
      %v5269 = vunpack.c.l.b16 %v5205
      %v5270 = vunpack.c.l.b16 %v5206
      %v5271 = vunpack.c.l.b16 %v5207
      %v5272 = vunpack.c.l.b16 %v5208
      %v5273 = vunpack.c.l.b16 %v5209
      %v5274 = vunpack.c.l.b16 %v5210
      %v5275 = vunpack.c.l.b16 %v5211
      %v5276 = vunpack.c.l.b16 %v5212
      %v5277 = vunpack.c.l.b16 %v5213
      %v5278 = vunpack.c.l.b16 %v5214
      %v5279 = vunpack.c.l.b16 %v5215
      %v5280 = vunpack.c.l.b16 %v5216
      %v5281 = vpack.c.b16 %v5266, %v5265
      %v5282 = vpack.c.b16 %v5268, %v5267
      %v5283 = vpack.c.b16 %v5270, %v5269
      %v5284 = vpack.c.b16 %v5272, %v5271
      %v5285 = vpack.c.b16 %v5274, %v5273
      %v5286 = vpack.c.b16 %v5276, %v5275
      %v5287 = vpack.c.b16 %v5278, %v5277
      %v5288 = vpack.c.b16 %v5280, %v5279
      %5297 = vmatpush.bf16.msra.mxu0 %v5288
      %5298 = vmatpush.bf16.msra.mxu0 %v5287
      %5299 = vmatpush.bf16.msra.mxu0 %v5286
      %5300 = vmatpush.bf16.msra.mxu0 %v5285
      %5301 = vmatpush.bf16.msra.mxu0 %v5284
      %5302 = vmatpush.bf16.msra.mxu0 %v5283
      %5303 = vmatpush.bf16.msra.mxu0 %v5282
      %5304 = vmatpush.bf16.msra.mxu0 %v5281
      %5305 = vmatmul.bf16.gmra.mxu0 %v5236
      %v5306 = vpop.f32.mrf.mxu0
      %v5307 = vadd.f32 0.0, %v5306
      %v5308 = vpop.f32.mrf.mxu0
      %v5309 = vadd.f32 0.0, %v5308
      %5310 = vmatmul.bf16.gmra.mxu0 %v5245
      %v5311 = vpop.f32.mrf.mxu0
      %v5312 = vadd.f32 0.0, %v5311
      %v5313 = vpop.f32.mrf.mxu0
      %v5314 = vadd.f32 0.0, %v5313
      %5315 = vmatmul.bf16.gmra.mxu0 %v5244
      %v5316 = vpop.f32.mrf.mxu0
      %v5317 = vadd.f32 0.0, %v5316
      %v5318 = vpop.f32.mrf.mxu0
      %5319 = vdwg.mxu0
      %v5320 = vadd.f32 %v5195, %v5307
      %v5321 = vadd.f32 %v5196, %v5309
      %v5322 = vadd.f32 %v5197, %v5312
      %v5323 = vadd.f32 %v5198, %v5314
      %v5324 = vadd.f32 %v5199, %v5317
      %v5325 = vld [vmem:[%s4 + $0x380] sm:$0xf]
      %v5326 = vld [vmem:[%s4 + $0x384] sm:$0xf]
      %v5327 = vld [vmem:[%s4 + $0x388] sm:$0xf]
      %v5328 = vld [vmem:[%s4 + $0x38c] sm:$0xf]
      %v5329 = vld [vmem:[%s4 + $0x390] sm:$0xf]
      %v5330 = vld [vmem:[%s4 + $0x394] sm:$0xf]
      %v5331 = vld [vmem:[%s4 + $0x398] sm:$0xf]
      %v5332 = vld [vmem:[%s4 + $0x39c] sm:$0xf]
      %v5333 = vld [vmem:[%s4 + $0x3a0] sm:$0xf]
      %v5334 = vld [vmem:[%s4 + $0x3a4] sm:$0xf]
      %v5335 = vld [vmem:[%s4 + $0x3a8] sm:$0xf]
      %v5336 = vld [vmem:[%s4 + $0x3ac] sm:$0xf]
      %v5337 = vld [vmem:[%s4 + $0x3b0] sm:$0xf]
      %v5338 = vld [vmem:[%s4 + $0x3b4] sm:$0xf]
      %v5339 = vld [vmem:[%s4 + $0x3b8] sm:$0xf]
      %v5340 = vld [vmem:[%s4 + $0x3bc] sm:$0xf]
      %v5341 = vpack.c.b16 %v5109, %v5108
      %v5342 = vpack.c.b16 %v5111, %v5110
      %v5343 = vpack.c.b16 %v5218, %v5218
      %v5363 = vunpack.c.l.b16 %v5325
      %v5364 = vunpack.c.l.b16 %v5326
      %v5365 = vunpack.c.l.b16 %v5327
      %v5366 = vunpack.c.l.b16 %v5328
      %v5367 = vunpack.c.l.b16 %v5329
      %v5368 = vunpack.c.l.b16 %v5330
      %v5369 = vunpack.c.l.b16 %v5331
      %v5370 = vunpack.c.l.b16 %v5332
      %v5371 = vunpack.c.l.b16 %v5333
      %v5372 = vunpack.c.l.b16 %v5334
      %v5373 = vunpack.c.l.b16 %v5335
      %v5374 = vunpack.c.l.b16 %v5336
      %v5375 = vunpack.c.l.b16 %v5337
      %v5376 = vunpack.c.l.b16 %v5338
      %v5377 = vunpack.c.l.b16 %v5339
      %v5378 = vunpack.c.l.b16 %v5340
      %v5379 = vpack.c.b16 %v5364, %v5363
      %v5380 = vpack.c.b16 %v5366, %v5365
      %v5381 = vpack.c.b16 %v5368, %v5367
      %v5382 = vpack.c.b16 %v5370, %v5369
      %v5383 = vpack.c.b16 %v5372, %v5371
      %v5384 = vpack.c.b16 %v5374, %v5373
      %v5385 = vpack.c.b16 %v5376, %v5375
      %v5386 = vpack.c.b16 %v5378, %v5377
      %5395 = vmatpush.bf16.msra.mxu0 %v5386
      %5396 = vmatpush.bf16.msra.mxu0 %v5385
      %5397 = vmatpush.bf16.msra.mxu0 %v5384
      %5398 = vmatpush.bf16.msra.mxu0 %v5383
      %5399 = vmatpush.bf16.msra.mxu0 %v5382
      %5400 = vmatpush.bf16.msra.mxu0 %v5381
      %5401 = vmatpush.bf16.msra.mxu0 %v5380
      %5402 = vmatpush.bf16.msra.mxu0 %v5379
      %5403 = vmatmul.bf16.gmra.mxu0 %v5341
      %v5404 = vpop.f32.mrf.mxu0
      %v5405 = vadd.f32 0.0, %v5404
      %v5406 = vpop.f32.mrf.mxu0
      %v5407 = vadd.f32 0.0, %v5406
      %5408 = vmatmul.bf16.gmra.mxu0 %v5342
      %v5409 = vpop.f32.mrf.mxu0
      %v5410 = vadd.f32 0.0, %v5409
      %v5411 = vpop.f32.mrf.mxu0
      %v5412 = vadd.f32 0.0, %v5411
      %5413 = vmatmul.bf16.gmra.mxu0 %v5343
      %v5414 = vpop.f32.mrf.mxu0
      %v5415 = vadd.f32 0.0, %v5414
      %v5416 = vpop.f32.mrf.mxu0
      %5417 = vdwg.mxu0
      %v5418 = vadd.f32 %v5320, %v5405
      %v5419 = vadd.f32 %v5321, %v5407
      %v5420 = vadd.f32 %v5322, %v5410
      %v5421 = vadd.f32 %v5323, %v5412
      %v5422 = vadd.f32 %v5324, %v5415
      %v5423 = vld [vmem:[%s483 + $0x4] sm:$0xc]
      %v5424 = vld [vmem:[%s483 + $0x14] sm:$0xf]
      %v5425 = vld [vmem:[%s4 + $0x3c0] sm:$0xf]
      %v5426 = vld [vmem:[%s4 + $0x3c4] sm:$0xf]
      %v5427 = vld [vmem:[%s4 + $0x3c8] sm:$0xf]
      %v5428 = vld [vmem:[%s4 + $0x3cc] sm:$0xf]
      %v5429 = vld [vmem:[%s4 + $0x3d0] sm:$0xf]
      %v5430 = vld [vmem:[%s4 + $0x3d4] sm:$0xf]
      %v5431 = vld [vmem:[%s4 + $0x3d8] sm:$0xf]
      %v5432 = vld [vmem:[%s4 + $0x3dc] sm:$0xf]
      %v5433 = vld [vmem:[%s4 + $0x3e0] sm:$0xf]
      %v5434 = vld [vmem:[%s4 + $0x3e4] sm:$0xf]
      %v5435 = vld [vmem:[%s4 + $0x3e8] sm:$0xf]
      %v5436 = vld [vmem:[%s4 + $0x3ec] sm:$0xf]
      %v5437 = vld [vmem:[%s4 + $0x3f0] sm:$0xf]
      %v5438 = vld [vmem:[%s4 + $0x3f4] sm:$0xf]
      %v5439 = vld [vmem:[%s4 + $0x3f8] sm:$0xf]
      %v5440 = vld [vmem:[%s4 + $0x3fc] sm:$0xf]
      %v5443 = vunpack.c.l.b16 %v5423
      %v5444 = vunpack.c.l.b16 %v5424
      %v5445 = vpack.c.b16 %v5109, %v5443
      %v5446 = vpack.c.b16 %v5444, %v5444
      %v5447 = vrot.slane %v5445, 2
      %v5448 = vrot.slane %v5342, 2
      %v5449 = vsel %vm1221, %v5447, %v5448
      %v5450 = vrot.slane %v5446, 2
      %v5451 = vsel %vm1221, %v5448, %v5450
      %v5471 = vunpack.c.l.b16 %v5425
      %v5472 = vunpack.c.l.b16 %v5426
      %v5473 = vunpack.c.l.b16 %v5427
      %v5474 = vunpack.c.l.b16 %v5428
      %v5475 = vunpack.c.l.b16 %v5429
      %v5476 = vunpack.c.l.b16 %v5430
      %v5477 = vunpack.c.l.b16 %v5431
      %v5478 = vunpack.c.l.b16 %v5432
      %v5479 = vunpack.c.l.b16 %v5433
      %v5480 = vunpack.c.l.b16 %v5434
      %v5481 = vunpack.c.l.b16 %v5435
      %v5482 = vunpack.c.l.b16 %v5436
      %v5483 = vunpack.c.l.b16 %v5437
      %v5484 = vunpack.c.l.b16 %v5438
      %v5485 = vunpack.c.l.b16 %v5439
      %v5486 = vunpack.c.l.b16 %v5440
      %v5487 = vpack.c.b16 %v5472, %v5471
      %v5488 = vpack.c.b16 %v5474, %v5473
      %v5489 = vpack.c.b16 %v5476, %v5475
      %v5490 = vpack.c.b16 %v5478, %v5477
      %v5491 = vpack.c.b16 %v5480, %v5479
      %v5492 = vpack.c.b16 %v5482, %v5481
      %v5493 = vpack.c.b16 %v5484, %v5483
      %v5494 = vpack.c.b16 %v5486, %v5485
      %5503 = vmatpush.bf16.msra.mxu0 %v5494
      %5504 = vmatpush.bf16.msra.mxu0 %v5493
      %5505 = vmatpush.bf16.msra.mxu0 %v5492
      %5506 = vmatpush.bf16.msra.mxu0 %v5491
      %5507 = vmatpush.bf16.msra.mxu0 %v5490
      %5508 = vmatpush.bf16.msra.mxu0 %v5489
      %5509 = vmatpush.bf16.msra.mxu0 %v5488
      %5510 = vmatpush.bf16.msra.mxu0 %v5487
      %5511 = vmatmul.bf16.gmra.mxu0 %v5449
      %v5512 = vpop.f32.mrf.mxu0
      %v5513 = vadd.f32 0.0, %v5512
      %v5514 = vpop.f32.mrf.mxu0
      %v5515 = vadd.f32 0.0, %v5514
      %5516 = vmatmul.bf16.gmra.mxu0 %v5451
      %v5517 = vpop.f32.mrf.mxu0
      %v5518 = vadd.f32 0.0, %v5517
      %v5519 = vpop.f32.mrf.mxu0
      %v5520 = vadd.f32 0.0, %v5519
      %5521 = vmatmul.bf16.gmra.mxu0 %v5450
      %v5522 = vpop.f32.mrf.mxu0
      %v5523 = vadd.f32 0.0, %v5522
      %v5524 = vpop.f32.mrf.mxu0
      %5525 = vdwg.mxu0
      %v5526 = vadd.f32 %v5418, %v5513
      %v5527 = vadd.f32 %v5419, %v5515
      %v5528 = vadd.f32 %v5420, %v5518
      %v5529 = vadd.f32 %v5421, %v5520
      %v5530 = vadd.f32 %v5422, %v5523
      %v5531 = vld [vmem:[%s483 + $0x4] sm:$0xc]
      %v5532 = vld [vmem:[%s483 + $0x8] sm:$0xf]
      %v5533 = vld [vmem:[%s483 + $0xc] sm:$0xf]
      %v5534 = vld [vmem:[%s483 + $0x10] sm:$0xf]
      %v5535 = vld [vmem:[%s483 + $0x14] sm:$0xf]
      %v5536 = vld [vmem:[%s483 + $0x18] sm:$0x1]
      %v5537 = vld [vmem:[%s4 + $0x400] sm:$0xf]
      %v5538 = vld [vmem:[%s4 + $0x404] sm:$0xf]
      %v5539 = vld [vmem:[%s4 + $0x408] sm:$0xf]
      %v5540 = vld [vmem:[%s4 + $0x40c] sm:$0xf]
      %v5541 = vld [vmem:[%s4 + $0x410] sm:$0xf]
      %v5542 = vld [vmem:[%s4 + $0x414] sm:$0xf]
      %v5543 = vld [vmem:[%s4 + $0x418] sm:$0xf]
      %v5544 = vld [vmem:[%s4 + $0x41c] sm:$0xf]
      %v5545 = vld [vmem:[%s4 + $0x420] sm:$0xf]
      %v5546 = vld [vmem:[%s4 + $0x424] sm:$0xf]
      %v5547 = vld [vmem:[%s4 + $0x428] sm:$0xf]
      %v5548 = vld [vmem:[%s4 + $0x42c] sm:$0xf]
      %v5549 = vld [vmem:[%s4 + $0x430] sm:$0xf]
      %v5550 = vld [vmem:[%s4 + $0x434] sm:$0xf]
      %v5551 = vld [vmem:[%s4 + $0x438] sm:$0xf]
      %v5552 = vld [vmem:[%s4 + $0x43c] sm:$0xf]
      %v5559 = vunpack.c.l.b16 %v5531
      %v5560 = vunpack.c.l.b16 %v5532
      %v5561 = vunpack.c.l.b16 %v5533
      %v5562 = vunpack.c.l.b16 %v5534
      %v5563 = vunpack.c.l.b16 %v5535
      %v5564 = vunpack.c.l.b16 %v5536
      %v5565 = vpack.c.b16 %v5560, %v5559
      %v5566 = vpack.c.b16 %v5562, %v5561
      %v5567 = vpack.c.b16 %v5564, %v5563
      %v5569 = vshrl.u32 %v5565, 16
      %v5571 = vrot.slane %v5569, 2
      %v5572 = vshll.u32 %v5565, 16
      %v5574 = vrot.slane %v5572, 3
      %v5575 = vor.u32 %v5571, %v5574
      %v5577 = vshrl.u32 %v5566, 16
      %v5579 = vrot.slane %v5577, 2
      %v5580 = vshll.u32 %v5566, 16
      %v5582 = vrot.slane %v5580, 3
      %v5583 = vor.u32 %v5579, %v5582
      %v5584 = vsel %vm1343, %v5575, %v5583
      %v5586 = vshrl.u32 %v5567, 16
      %v5588 = vrot.slane %v5586, 2
      %v5589 = vshll.u32 %v5567, 16
      %v5591 = vrot.slane %v5589, 3
      %v5592 = vor.u32 %v5588, %v5591
      %v5593 = vsel %vm1343, %v5583, %v5592
      %v5613 = vunpack.c.l.b16 %v5537
      %v5614 = vunpack.c.l.b16 %v5538
      %v5615 = vunpack.c.l.b16 %v5539
      %v5616 = vunpack.c.l.b16 %v5540
      %v5617 = vunpack.c.l.b16 %v5541
      %v5618 = vunpack.c.l.b16 %v5542
      %v5619 = vunpack.c.l.b16 %v5543
      %v5620 = vunpack.c.l.b16 %v5544
      %v5621 = vunpack.c.l.b16 %v5545
      %v5622 = vunpack.c.l.b16 %v5546
      %v5623 = vunpack.c.l.b16 %v5547
      %v5624 = vunpack.c.l.b16 %v5548
      %v5625 = vunpack.c.l.b16 %v5549
      %v5626 = vunpack.c.l.b16 %v5550
      %v5627 = vunpack.c.l.b16 %v5551
      %v5628 = vunpack.c.l.b16 %v5552
      %v5629 = vpack.c.b16 %v5614, %v5613
      %v5630 = vpack.c.b16 %v5616, %v5615
      %v5631 = vpack.c.b16 %v5618, %v5617
      %v5632 = vpack.c.b16 %v5620, %v5619
      %v5633 = vpack.c.b16 %v5622, %v5621
      %v5634 = vpack.c.b16 %v5624, %v5623
      %v5635 = vpack.c.b16 %v5626, %v5625
      %v5636 = vpack.c.b16 %v5628, %v5627
      %5645 = vmatpush.bf16.msra.mxu0 %v5636
      %5646 = vmatpush.bf16.msra.mxu0 %v5635
      %5647 = vmatpush.bf16.msra.mxu0 %v5634
      %5648 = vmatpush.bf16.msra.mxu0 %v5633
      %5649 = vmatpush.bf16.msra.mxu0 %v5632
      %5650 = vmatpush.bf16.msra.mxu0 %v5631
      %5651 = vmatpush.bf16.msra.mxu0 %v5630
      %5652 = vmatpush.bf16.msra.mxu0 %v5629
      %5653 = vmatmul.bf16.gmra.mxu0 %v5584
      %v5654 = vpop.f32.mrf.mxu0
      %v5655 = vadd.f32 0.0, %v5654
      %v5656 = vpop.f32.mrf.mxu0
      %v5657 = vadd.f32 0.0, %v5656
      %5658 = vmatmul.bf16.gmra.mxu0 %v5593
      %v5659 = vpop.f32.mrf.mxu0
      %v5660 = vadd.f32 0.0, %v5659
      %v5661 = vpop.f32.mrf.mxu0
      %v5662 = vadd.f32 0.0, %v5661
      %5663 = vmatmul.bf16.gmra.mxu0 %v5592
      %v5664 = vpop.f32.mrf.mxu0
      %v5665 = vadd.f32 0.0, %v5664
      %v5666 = vpop.f32.mrf.mxu0
      %5667 = vdwg.mxu0
      %v5668 = vadd.f32 %v5526, %v5655
      %v5669 = vadd.f32 %v5527, %v5657
      %v5670 = vadd.f32 %v5528, %v5660
      %v5671 = vadd.f32 %v5529, %v5662
      %v5672 = vadd.f32 %v5530, %v5665
      %v5673 = vld [vmem:[%s483 + $0x4] sm:$0x8]
      %v5674 = vld [vmem:[%s4 + $0x440] sm:$0xf]
      %v5675 = vld [vmem:[%s4 + $0x444] sm:$0xf]
      %v5676 = vld [vmem:[%s4 + $0x448] sm:$0xf]
      %v5677 = vld [vmem:[%s4 + $0x44c] sm:$0xf]
      %v5678 = vld [vmem:[%s4 + $0x450] sm:$0xf]
      %v5679 = vld [vmem:[%s4 + $0x454] sm:$0xf]
      %v5680 = vld [vmem:[%s4 + $0x458] sm:$0xf]
      %v5681 = vld [vmem:[%s4 + $0x45c] sm:$0xf]
      %v5682 = vld [vmem:[%s4 + $0x460] sm:$0xf]
      %v5683 = vld [vmem:[%s4 + $0x464] sm:$0xf]
      %v5684 = vld [vmem:[%s4 + $0x468] sm:$0xf]
      %v5685 = vld [vmem:[%s4 + $0x46c] sm:$0xf]
      %v5686 = vld [vmem:[%s4 + $0x470] sm:$0xf]
      %v5687 = vld [vmem:[%s4 + $0x474] sm:$0xf]
      %v5688 = vld [vmem:[%s4 + $0x478] sm:$0xf]
      %v5689 = vld [vmem:[%s4 + $0x47c] sm:$0xf]
      %v5691 = vunpack.c.l.b16 %v5673
      %v5692 = vpack.c.b16 %v5560, %v5691
      %v5693 = vrot.slane %v5692, 3
      %v5694 = vrot.slane %v5566, 3
      %v5695 = vsel %vm888, %v5693, %v5694
      %v5696 = vrot.slane %v5567, 3
      %v5697 = vsel %vm888, %v5694, %v5696
      %v5717 = vunpack.c.l.b16 %v5674
      %v5718 = vunpack.c.l.b16 %v5675
      %v5719 = vunpack.c.l.b16 %v5676
      %v5720 = vunpack.c.l.b16 %v5677
      %v5721 = vunpack.c.l.b16 %v5678
      %v5722 = vunpack.c.l.b16 %v5679
      %v5723 = vunpack.c.l.b16 %v5680
      %v5724 = vunpack.c.l.b16 %v5681
      %v5725 = vunpack.c.l.b16 %v5682
      %v5726 = vunpack.c.l.b16 %v5683
      %v5727 = vunpack.c.l.b16 %v5684
      %v5728 = vunpack.c.l.b16 %v5685
      %v5729 = vunpack.c.l.b16 %v5686
      %v5730 = vunpack.c.l.b16 %v5687
      %v5731 = vunpack.c.l.b16 %v5688
      %v5732 = vunpack.c.l.b16 %v5689
      %v5733 = vpack.c.b16 %v5718, %v5717
      %v5734 = vpack.c.b16 %v5720, %v5719
      %v5735 = vpack.c.b16 %v5722, %v5721
      %v5736 = vpack.c.b16 %v5724, %v5723
      %v5737 = vpack.c.b16 %v5726, %v5725
      %v5738 = vpack.c.b16 %v5728, %v5727
      %v5739 = vpack.c.b16 %v5730, %v5729
      %v5740 = vpack.c.b16 %v5732, %v5731
      %5749 = vmatpush.bf16.msra.mxu0 %v5740
      %5750 = vmatpush.bf16.msra.mxu0 %v5739
      %5751 = vmatpush.bf16.msra.mxu0 %v5738
      %5752 = vmatpush.bf16.msra.mxu0 %v5737
      %5753 = vmatpush.bf16.msra.mxu0 %v5736
      %5754 = vmatpush.bf16.msra.mxu0 %v5735
      %5755 = vmatpush.bf16.msra.mxu0 %v5734
      %5756 = vmatpush.bf16.msra.mxu0 %v5733
      %5757 = vmatmul.bf16.gmra.mxu0 %v5695
      %v5758 = vpop.f32.mrf.mxu0
      %v5759 = vadd.f32 0.0, %v5758
      %v5760 = vpop.f32.mrf.mxu0
      %v5761 = vadd.f32 0.0, %v5760
      %5762 = vmatmul.bf16.gmra.mxu0 %v5697
      %v5763 = vpop.f32.mrf.mxu0
      %v5764 = vadd.f32 0.0, %v5763
      %v5765 = vpop.f32.mrf.mxu0
      %v5766 = vadd.f32 0.0, %v5765
      %5767 = vmatmul.bf16.gmra.mxu0 %v5696
      %v5768 = vpop.f32.mrf.mxu0
      %v5769 = vadd.f32 0.0, %v5768
      %v5770 = vpop.f32.mrf.mxu0
      %5771 = vdwg.mxu0
      %v5772 = vadd.f32 %v5668, %v5759
      %v5773 = vadd.f32 %v5669, %v5761
      %v5774 = vadd.f32 %v5670, %v5764
      %v5775 = vadd.f32 %v5671, %v5766
      %v5776 = vadd.f32 %v5672, %v5769
      %v5777 = vld [vmem:[%s496] sm:$0xf]
      %v5778 = vld [vmem:[%s496 + $0x4] sm:$0xf]
      %v5779 = vld [vmem:[%s496 + $0x8] sm:$0xf]
      %v5780 = vld [vmem:[%s496 + $0xc] sm:$0xf]
      %v5781 = vld [vmem:[%s496 + $0x10] sm:$0x3]
      %v5782 = vld [vmem:[%s4 + $0x480] sm:$0xf]
      %v5783 = vld [vmem:[%s4 + $0x484] sm:$0xf]
      %v5784 = vld [vmem:[%s4 + $0x488] sm:$0xf]
      %v5785 = vld [vmem:[%s4 + $0x48c] sm:$0xf]
      %v5786 = vld [vmem:[%s4 + $0x490] sm:$0xf]
      %v5787 = vld [vmem:[%s4 + $0x494] sm:$0xf]
      %v5788 = vld [vmem:[%s4 + $0x498] sm:$0xf]
      %v5789 = vld [vmem:[%s4 + $0x49c] sm:$0xf]
      %v5790 = vld [vmem:[%s4 + $0x4a0] sm:$0xf]
      %v5791 = vld [vmem:[%s4 + $0x4a4] sm:$0xf]
      %v5792 = vld [vmem:[%s4 + $0x4a8] sm:$0xf]
      %v5793 = vld [vmem:[%s4 + $0x4ac] sm:$0xf]
      %v5794 = vld [vmem:[%s4 + $0x4b0] sm:$0xf]
      %v5795 = vld [vmem:[%s4 + $0x4b4] sm:$0xf]
      %v5796 = vld [vmem:[%s4 + $0x4b8] sm:$0xf]
      %v5797 = vld [vmem:[%s4 + $0x4bc] sm:$0xf]
      %v5803 = vunpack.c.l.b16 %v5777
      %v5804 = vunpack.c.l.b16 %v5778
      %v5805 = vunpack.c.l.b16 %v5779
      %v5806 = vunpack.c.l.b16 %v5780
      %v5807 = vunpack.c.l.b16 %v5781
      %v5808 = vpack.c.b16 %v5804, %v5803
      %v5809 = vpack.c.b16 %v5806, %v5805
      %v5810 = vpack.c.b16 %v5807, %v5807
      %v5830 = vunpack.c.l.b16 %v5782
      %v5831 = vunpack.c.l.b16 %v5783
      %v5832 = vunpack.c.l.b16 %v5784
      %v5833 = vunpack.c.l.b16 %v5785
      %v5834 = vunpack.c.l.b16 %v5786
      %v5835 = vunpack.c.l.b16 %v5787
      %v5836 = vunpack.c.l.b16 %v5788
      %v5837 = vunpack.c.l.b16 %v5789
      %v5838 = vunpack.c.l.b16 %v5790
      %v5839 = vunpack.c.l.b16 %v5791
      %v5840 = vunpack.c.l.b16 %v5792
      %v5841 = vunpack.c.l.b16 %v5793
      %v5842 = vunpack.c.l.b16 %v5794
      %v5843 = vunpack.c.l.b16 %v5795
      %v5844 = vunpack.c.l.b16 %v5796
      %v5845 = vunpack.c.l.b16 %v5797
      %v5846 = vpack.c.b16 %v5831, %v5830
      %v5847 = vpack.c.b16 %v5833, %v5832
      %v5848 = vpack.c.b16 %v5835, %v5834
      %v5849 = vpack.c.b16 %v5837, %v5836
      %v5850 = vpack.c.b16 %v5839, %v5838
      %v5851 = vpack.c.b16 %v5841, %v5840
      %v5852 = vpack.c.b16 %v5843, %v5842
      %v5853 = vpack.c.b16 %v5845, %v5844
      %5862 = vmatpush.bf16.msra.mxu0 %v5853
      %5863 = vmatpush.bf16.msra.mxu0 %v5852
      %5864 = vmatpush.bf16.msra.mxu0 %v5851
      %5865 = vmatpush.bf16.msra.mxu0 %v5850
      %5866 = vmatpush.bf16.msra.mxu0 %v5849
      %5867 = vmatpush.bf16.msra.mxu0 %v5848
      %5868 = vmatpush.bf16.msra.mxu0 %v5847
      %5869 = vmatpush.bf16.msra.mxu0 %v5846
      %5870 = vmatmul.bf16.gmra.mxu0 %v5808
      %v5871 = vpop.f32.mrf.mxu0
      %v5872 = vadd.f32 0.0, %v5871
      %v5873 = vpop.f32.mrf.mxu0
      %v5874 = vadd.f32 0.0, %v5873
      %5875 = vmatmul.bf16.gmra.mxu0 %v5809
      %v5876 = vpop.f32.mrf.mxu0
      %v5877 = vadd.f32 0.0, %v5876
      %v5878 = vpop.f32.mrf.mxu0
      %v5879 = vadd.f32 0.0, %v5878
      %5880 = vmatmul.bf16.gmra.mxu0 %v5810
      %v5881 = vpop.f32.mrf.mxu0
      %v5882 = vadd.f32 0.0, %v5881
      %v5883 = vpop.f32.mrf.mxu0
      %5884 = vdwg.mxu0
      %v5885 = vadd.f32 %v5772, %v5872
      %v5886 = vadd.f32 %v5773, %v5874
      %v5887 = vadd.f32 %v5774, %v5877
      %v5888 = vadd.f32 %v5775, %v5879
      %v5889 = vadd.f32 %v5776, %v5882
      %v5890 = vld [vmem:[%s496 + $0x10] sm:$0x7]
      %v5891 = vld [vmem:[%s4 + $0x4c0] sm:$0xf]
      %v5892 = vld [vmem:[%s4 + $0x4c4] sm:$0xf]
      %v5893 = vld [vmem:[%s4 + $0x4c8] sm:$0xf]
      %v5894 = vld [vmem:[%s4 + $0x4cc] sm:$0xf]
      %v5895 = vld [vmem:[%s4 + $0x4d0] sm:$0xf]
      %v5896 = vld [vmem:[%s4 + $0x4d4] sm:$0xf]
      %v5897 = vld [vmem:[%s4 + $0x4d8] sm:$0xf]
      %v5898 = vld [vmem:[%s4 + $0x4dc] sm:$0xf]
      %v5899 = vld [vmem:[%s4 + $0x4e0] sm:$0xf]
      %v5900 = vld [vmem:[%s4 + $0x4e4] sm:$0xf]
      %v5901 = vld [vmem:[%s4 + $0x4e8] sm:$0xf]
      %v5902 = vld [vmem:[%s4 + $0x4ec] sm:$0xf]
      %v5903 = vld [vmem:[%s4 + $0x4f0] sm:$0xf]
      %v5904 = vld [vmem:[%s4 + $0x4f4] sm:$0xf]
      %v5905 = vld [vmem:[%s4 + $0x4f8] sm:$0xf]
      %v5906 = vld [vmem:[%s4 + $0x4fc] sm:$0xf]
      %v5908 = vunpack.c.l.b16 %v5890
      %v5909 = vpack.c.b16 %v5908, %v5908
      %v5911 = vshrl.u32 %v5808, 16
      %v5913 = vshll.u32 %v5808, 16
      %v5915 = vrot.slane %v5913, 1
      %v5916 = vor.u32 %v5911, %v5915
      %v5918 = vshll.u32 %v5809, 16
      %v5920 = vrot.slane %v5918, 1
      %v5921 = vsel %vm571, %v5916, %v5920
      %v5922 = vshrl.u32 %v5809, 16
      %v5924 = vor.u32 %v5922, %v5920
      %v5926 = vshll.u32 %v5909, 16
      %v5928 = vrot.slane %v5926, 1
      %v5929 = vsel %vm571, %v5924, %v5928
      %v5930 = vshrl.u32 %v5909, 16
      %v5932 = vor.u32 %v5930, %v5928
      %v5952 = vunpack.c.l.b16 %v5891
      %v5953 = vunpack.c.l.b16 %v5892
      %v5954 = vunpack.c.l.b16 %v5893
      %v5955 = vunpack.c.l.b16 %v5894
      %v5956 = vunpack.c.l.b16 %v5895
      %v5957 = vunpack.c.l.b16 %v5896
      %v5958 = vunpack.c.l.b16 %v5897
      %v5959 = vunpack.c.l.b16 %v5898
      %v5960 = vunpack.c.l.b16 %v5899
      %v5961 = vunpack.c.l.b16 %v5900
      %v5962 = vunpack.c.l.b16 %v5901
      %v5963 = vunpack.c.l.b16 %v5902
      %v5964 = vunpack.c.l.b16 %v5903
      %v5965 = vunpack.c.l.b16 %v5904
      %v5966 = vunpack.c.l.b16 %v5905
      %v5967 = vunpack.c.l.b16 %v5906
      %v5968 = vpack.c.b16 %v5953, %v5952
      %v5969 = vpack.c.b16 %v5955, %v5954
      %v5970 = vpack.c.b16 %v5957, %v5956
      %v5971 = vpack.c.b16 %v5959, %v5958
      %v5972 = vpack.c.b16 %v5961, %v5960
      %v5973 = vpack.c.b16 %v5963, %v5962
      %v5974 = vpack.c.b16 %v5965, %v5964
      %v5975 = vpack.c.b16 %v5967, %v5966
      %5984 = vmatpush.bf16.msra.mxu0 %v5975
      %5985 = vmatpush.bf16.msra.mxu0 %v5974
      %5986 = vmatpush.bf16.msra.mxu0 %v5973
      %5987 = vmatpush.bf16.msra.mxu0 %v5972
      %5988 = vmatpush.bf16.msra.mxu0 %v5971
      %5989 = vmatpush.bf16.msra.mxu0 %v5970
      %5990 = vmatpush.bf16.msra.mxu0 %v5969
      %5991 = vmatpush.bf16.msra.mxu0 %v5968
      %5992 = vmatmul.bf16.gmra.mxu0 %v5921
      %v5993 = vpop.f32.mrf.mxu0
      %v5994 = vadd.f32 0.0, %v5993
      %v5995 = vpop.f32.mrf.mxu0
      %v5996 = vadd.f32 0.0, %v5995
      %5997 = vmatmul.bf16.gmra.mxu0 %v5929
      %v5998 = vpop.f32.mrf.mxu0
      %v5999 = vadd.f32 0.0, %v5998
      %v6000 = vpop.f32.mrf.mxu0
      %v6001 = vadd.f32 0.0, %v6000
      %6002 = vmatmul.bf16.gmra.mxu0 %v5932
      %v6003 = vpop.f32.mrf.mxu0
      %v6004 = vadd.f32 0.0, %v6003
      %v6005 = vpop.f32.mrf.mxu0
      %6006 = vdwg.mxu0
      %v6007 = vadd.f32 %v5885, %v5994
      %v6008 = vadd.f32 %v5886, %v5996
      %v6009 = vadd.f32 %v5887, %v5999
      %v6010 = vadd.f32 %v5888, %v6001
      %v6011 = vadd.f32 %v5889, %v6004
      %v6012 = vld [vmem:[%s496] sm:$0xe]
      %v6013 = vld [vmem:[%s4 + $0x500] sm:$0xf]
      %v6014 = vld [vmem:[%s4 + $0x504] sm:$0xf]
      %v6015 = vld [vmem:[%s4 + $0x508] sm:$0xf]
      %v6016 = vld [vmem:[%s4 + $0x50c] sm:$0xf]
      %v6017 = vld [vmem:[%s4 + $0x510] sm:$0xf]
      %v6018 = vld [vmem:[%s4 + $0x514] sm:$0xf]
      %v6019 = vld [vmem:[%s4 + $0x518] sm:$0xf]
      %v6020 = vld [vmem:[%s4 + $0x51c] sm:$0xf]
      %v6021 = vld [vmem:[%s4 + $0x520] sm:$0xf]
      %v6022 = vld [vmem:[%s4 + $0x524] sm:$0xf]
      %v6023 = vld [vmem:[%s4 + $0x528] sm:$0xf]
      %v6024 = vld [vmem:[%s4 + $0x52c] sm:$0xf]
      %v6025 = vld [vmem:[%s4 + $0x530] sm:$0xf]
      %v6026 = vld [vmem:[%s4 + $0x534] sm:$0xf]
      %v6027 = vld [vmem:[%s4 + $0x538] sm:$0xf]
      %v6028 = vld [vmem:[%s4 + $0x53c] sm:$0xf]
      %v6030 = vunpack.c.l.b16 %v6012
      %v6031 = vpack.c.b16 %v5804, %v6030
      %v6032 = vrot.slane %v6031, 1
      %v6033 = vrot.slane %v5809, 1
      %v6034 = vsel %vm766, %v6032, %v6033
      %v6035 = vrot.slane %v5909, 1
      %v6036 = vsel %vm766, %v6033, %v6035
      %v6056 = vunpack.c.l.b16 %v6013
      %v6057 = vunpack.c.l.b16 %v6014
      %v6058 = vunpack.c.l.b16 %v6015
      %v6059 = vunpack.c.l.b16 %v6016
      %v6060 = vunpack.c.l.b16 %v6017
      %v6061 = vunpack.c.l.b16 %v6018
      %v6062 = vunpack.c.l.b16 %v6019
      %v6063 = vunpack.c.l.b16 %v6020
      %v6064 = vunpack.c.l.b16 %v6021
      %v6065 = vunpack.c.l.b16 %v6022
      %v6066 = vunpack.c.l.b16 %v6023
      %v6067 = vunpack.c.l.b16 %v6024
      %v6068 = vunpack.c.l.b16 %v6025
      %v6069 = vunpack.c.l.b16 %v6026
      %v6070 = vunpack.c.l.b16 %v6027
      %v6071 = vunpack.c.l.b16 %v6028
      %v6072 = vpack.c.b16 %v6057, %v6056
      %v6073 = vpack.c.b16 %v6059, %v6058
      %v6074 = vpack.c.b16 %v6061, %v6060
      %v6075 = vpack.c.b16 %v6063, %v6062
      %v6076 = vpack.c.b16 %v6065, %v6064
      %v6077 = vpack.c.b16 %v6067, %v6066
      %v6078 = vpack.c.b16 %v6069, %v6068
      %v6079 = vpack.c.b16 %v6071, %v6070
      %6088 = vmatpush.bf16.msra.mxu0 %v6079
      %6089 = vmatpush.bf16.msra.mxu0 %v6078
      %6090 = vmatpush.bf16.msra.mxu0 %v6077
      %6091 = vmatpush.bf16.msra.mxu0 %v6076
      %6092 = vmatpush.bf16.msra.mxu0 %v6075
      %6093 = vmatpush.bf16.msra.mxu0 %v6074
      %6094 = vmatpush.bf16.msra.mxu0 %v6073
      %6095 = vmatpush.bf16.msra.mxu0 %v6072
      %6096 = vmatmul.bf16.gmra.mxu0 %v6034
      %v6097 = vpop.f32.mrf.mxu0
      %v6098 = vadd.f32 0.0, %v6097
      %v6099 = vpop.f32.mrf.mxu0
      %v6100 = vadd.f32 0.0, %v6099
      %6101 = vmatmul.bf16.gmra.mxu0 %v6036
      %v6102 = vpop.f32.mrf.mxu0
      %v6103 = vadd.f32 0.0, %v6102
      %v6104 = vpop.f32.mrf.mxu0
      %v6105 = vadd.f32 0.0, %v6104
      %6106 = vmatmul.bf16.gmra.mxu0 %v6035
      %v6107 = vpop.f32.mrf.mxu0
      %v6108 = vadd.f32 0.0, %v6107
      %v6109 = vpop.f32.mrf.mxu0
      %6110 = vdwg.mxu0
      %v6111 = vadd.f32 %v6007, %v6098
      %v6112 = vadd.f32 %v6008, %v6100
      %v6113 = vadd.f32 %v6009, %v6103
      %v6114 = vadd.f32 %v6010, %v6105
      %v6115 = vadd.f32 %v6011, %v6108
      %v6116 = vld [vmem:[%s496] sm:$0x8]
      %v6117 = vld [vmem:[%s496 + $0x4] sm:$0xf]
      %v6118 = vld [vmem:[%s496 + $0x8] sm:$0xf]
      %v6119 = vld [vmem:[%s496 + $0xc] sm:$0xf]
      %v6120 = vld [vmem:[%s496 + $0x10] sm:$0xf]
      %v6121 = vld [vmem:[%s496 + $0x14] sm:$0x1]
      %v6122 = vld [vmem:[%s4 + $0x540] sm:$0xf]
      %v6123 = vld [vmem:[%s4 + $0x544] sm:$0xf]
      %v6124 = vld [vmem:[%s4 + $0x548] sm:$0xf]
      %v6125 = vld [vmem:[%s4 + $0x54c] sm:$0xf]
      %v6126 = vld [vmem:[%s4 + $0x550] sm:$0xf]
      %v6127 = vld [vmem:[%s4 + $0x554] sm:$0xf]
      %v6128 = vld [vmem:[%s4 + $0x558] sm:$0xf]
      %v6129 = vld [vmem:[%s4 + $0x55c] sm:$0xf]
      %v6130 = vld [vmem:[%s4 + $0x560] sm:$0xf]
      %v6131 = vld [vmem:[%s4 + $0x564] sm:$0xf]
      %v6132 = vld [vmem:[%s4 + $0x568] sm:$0xf]
      %v6133 = vld [vmem:[%s4 + $0x56c] sm:$0xf]
      %v6134 = vld [vmem:[%s4 + $0x570] sm:$0xf]
      %v6135 = vld [vmem:[%s4 + $0x574] sm:$0xf]
      %v6136 = vld [vmem:[%s4 + $0x578] sm:$0xf]
      %v6137 = vld [vmem:[%s4 + $0x57c] sm:$0xf]
      %v6144 = vunpack.c.l.b16 %v6116
      %v6145 = vunpack.c.l.b16 %v6117
      %v6146 = vunpack.c.l.b16 %v6118
      %v6147 = vunpack.c.l.b16 %v6119
      %v6148 = vunpack.c.l.b16 %v6120
      %v6149 = vunpack.c.l.b16 %v6121
      %v6150 = vpack.c.b16 %v6145, %v6144
      %v6151 = vpack.c.b16 %v6147, %v6146
      %v6152 = vpack.c.b16 %v6149, %v6148
      %v6153 = vrot.slane %v6150, 3
      %v6154 = vrot.slane %v6151, 3
      %v6155 = vsel %vm888, %v6153, %v6154
      %v6156 = vrot.slane %v6152, 3
      %v6157 = vsel %vm888, %v6154, %v6156
      %v6177 = vunpack.c.l.b16 %v6122
      %v6178 = vunpack.c.l.b16 %v6123
      %v6179 = vunpack.c.l.b16 %v6124
      %v6180 = vunpack.c.l.b16 %v6125
      %v6181 = vunpack.c.l.b16 %v6126
      %v6182 = vunpack.c.l.b16 %v6127
      %v6183 = vunpack.c.l.b16 %v6128
      %v6184 = vunpack.c.l.b16 %v6129
      %v6185 = vunpack.c.l.b16 %v6130
      %v6186 = vunpack.c.l.b16 %v6131
      %v6187 = vunpack.c.l.b16 %v6132
      %v6188 = vunpack.c.l.b16 %v6133
      %v6189 = vunpack.c.l.b16 %v6134
      %v6190 = vunpack.c.l.b16 %v6135
      %v6191 = vunpack.c.l.b16 %v6136
      %v6192 = vunpack.c.l.b16 %v6137
      %v6193 = vpack.c.b16 %v6178, %v6177
      %v6194 = vpack.c.b16 %v6180, %v6179
      %v6195 = vpack.c.b16 %v6182, %v6181
      %v6196 = vpack.c.b16 %v6184, %v6183
      %v6197 = vpack.c.b16 %v6186, %v6185
      %v6198 = vpack.c.b16 %v6188, %v6187
      %v6199 = vpack.c.b16 %v6190, %v6189
      %v6200 = vpack.c.b16 %v6192, %v6191
      %6209 = vmatpush.bf16.msra.mxu0 %v6200
      %6210 = vmatpush.bf16.msra.mxu0 %v6199
      %6211 = vmatpush.bf16.msra.mxu0 %v6198
      %6212 = vmatpush.bf16.msra.mxu0 %v6197
      %6213 = vmatpush.bf16.msra.mxu0 %v6196
      %6214 = vmatpush.bf16.msra.mxu0 %v6195
      %6215 = vmatpush.bf16.msra.mxu0 %v6194
      %6216 = vmatpush.bf16.msra.mxu0 %v6193
      %6217 = vmatmul.bf16.gmra.mxu0 %v6155
      %v6218 = vpop.f32.mrf.mxu0
      %v6219 = vadd.f32 0.0, %v6218
      %v6220 = vpop.f32.mrf.mxu0
      %v6221 = vadd.f32 0.0, %v6220
      %6222 = vmatmul.bf16.gmra.mxu0 %v6157
      %v6223 = vpop.f32.mrf.mxu0
      %v6224 = vadd.f32 0.0, %v6223
      %v6225 = vpop.f32.mrf.mxu0
      %v6226 = vadd.f32 0.0, %v6225
      %6227 = vmatmul.bf16.gmra.mxu0 %v6156
      %v6228 = vpop.f32.mrf.mxu0
      %v6229 = vadd.f32 0.0, %v6228
      %v6230 = vpop.f32.mrf.mxu0
      %6231 = vdwg.mxu0
      %v6232 = vadd.f32 %v6111, %v6219
      %v6233 = vadd.f32 %v6112, %v6221
      %v6234 = vadd.f32 %v6113, %v6224
      %v6235 = vadd.f32 %v6114, %v6226
      %v6236 = vadd.f32 %v6115, %v6229
      %v6237 = vld [vmem:[%s496 + $0x14] sm:$0x3]
      %v6238 = vld [vmem:[%s4 + $0x580] sm:$0xf]
      %v6239 = vld [vmem:[%s4 + $0x584] sm:$0xf]
      %v6240 = vld [vmem:[%s4 + $0x588] sm:$0xf]
      %v6241 = vld [vmem:[%s4 + $0x58c] sm:$0xf]
      %v6242 = vld [vmem:[%s4 + $0x590] sm:$0xf]
      %v6243 = vld [vmem:[%s4 + $0x594] sm:$0xf]
      %v6244 = vld [vmem:[%s4 + $0x598] sm:$0xf]
      %v6245 = vld [vmem:[%s4 + $0x59c] sm:$0xf]
      %v6246 = vld [vmem:[%s4 + $0x5a0] sm:$0xf]
      %v6247 = vld [vmem:[%s4 + $0x5a4] sm:$0xf]
      %v6248 = vld [vmem:[%s4 + $0x5a8] sm:$0xf]
      %v6249 = vld [vmem:[%s4 + $0x5ac] sm:$0xf]
      %v6250 = vld [vmem:[%s4 + $0x5b0] sm:$0xf]
      %v6251 = vld [vmem:[%s4 + $0x5b4] sm:$0xf]
      %v6252 = vld [vmem:[%s4 + $0x5b8] sm:$0xf]
      %v6253 = vld [vmem:[%s4 + $0x5bc] sm:$0xf]
      %v6255 = vunpack.c.l.b16 %v6237
      %v6256 = vpack.c.b16 %v6255, %v6148
      %v6258 = vshrl.u32 %v6150, 16
      %v6260 = vrot.slane %v6258, 3
      %v6261 = vshll.u32 %v6150, 16
      %v6263 = vrot.slane %v6261, 4
      %v6264 = vor.u32 %v6260, %v6263
      %v6266 = vshrl.u32 %v6151, 16
      %v6268 = vrot.slane %v6266, 3
      %v6269 = vshll.u32 %v6151, 16
      %v6271 = vrot.slane %v6269, 4
      %v6272 = vor.u32 %v6268, %v6271
      %v6273 = vsel %vm993, %v6264, %v6272
      %v6275 = vshrl.u32 %v6256, 16
      %v6277 = vrot.slane %v6275, 3
      %v6278 = vshll.u32 %v6256, 16
      %v6280 = vrot.slane %v6278, 4
      %v6281 = vor.u32 %v6277, %v6280
      %v6282 = vsel %vm993, %v6272, %v6281
      %v6302 = vunpack.c.l.b16 %v6238
      %v6303 = vunpack.c.l.b16 %v6239
      %v6304 = vunpack.c.l.b16 %v6240
      %v6305 = vunpack.c.l.b16 %v6241
      %v6306 = vunpack.c.l.b16 %v6242
      %v6307 = vunpack.c.l.b16 %v6243
      %v6308 = vunpack.c.l.b16 %v6244
      %v6309 = vunpack.c.l.b16 %v6245
      %v6310 = vunpack.c.l.b16 %v6246
      %v6311 = vunpack.c.l.b16 %v6247
      %v6312 = vunpack.c.l.b16 %v6248
      %v6313 = vunpack.c.l.b16 %v6249
      %v6314 = vunpack.c.l.b16 %v6250
      %v6315 = vunpack.c.l.b16 %v6251
      %v6316 = vunpack.c.l.b16 %v6252
      %v6317 = vunpack.c.l.b16 %v6253
      %v6318 = vpack.c.b16 %v6303, %v6302
      %v6319 = vpack.c.b16 %v6305, %v6304
      %v6320 = vpack.c.b16 %v6307, %v6306
      %v6321 = vpack.c.b16 %v6309, %v6308
      %v6322 = vpack.c.b16 %v6311, %v6310
      %v6323 = vpack.c.b16 %v6313, %v6312
      %v6324 = vpack.c.b16 %v6315, %v6314
      %v6325 = vpack.c.b16 %v6317, %v6316
      %6334 = vmatpush.bf16.msra.mxu0 %v6325
      %6335 = vmatpush.bf16.msra.mxu0 %v6324
      %6336 = vmatpush.bf16.msra.mxu0 %v6323
      %6337 = vmatpush.bf16.msra.mxu0 %v6322
      %6338 = vmatpush.bf16.msra.mxu0 %v6321
      %6339 = vmatpush.bf16.msra.mxu0 %v6320
      %6340 = vmatpush.bf16.msra.mxu0 %v6319
      %6341 = vmatpush.bf16.msra.mxu0 %v6318
      %6342 = vmatmul.bf16.gmra.mxu0 %v6273
      %v6343 = vpop.f32.mrf.mxu0
      %v6344 = vadd.f32 0.0, %v6343
      %v6345 = vpop.f32.mrf.mxu0
      %v6346 = vadd.f32 0.0, %v6345
      %6347 = vmatmul.bf16.gmra.mxu0 %v6282
      %v6348 = vpop.f32.mrf.mxu0
      %v6349 = vadd.f32 0.0, %v6348
      %v6350 = vpop.f32.mrf.mxu0
      %v6351 = vadd.f32 0.0, %v6350
      %6352 = vmatmul.bf16.gmra.mxu0 %v6281
      %v6353 = vpop.f32.mrf.mxu0
      %v6354 = vadd.f32 0.0, %v6353
      %v6355 = vpop.f32.mrf.mxu0
      %6356 = vdwg.mxu0
      %v6357 = vadd.f32 %v6232, %v6344
      %v6358 = vadd.f32 %v6233, %v6346
      %v6359 = vadd.f32 %v6234, %v6349
      %v6360 = vadd.f32 %v6235, %v6351
      %v6361 = vadd.f32 %v6236, %v6354
      %v6362 = vld [vmem:[%s4 + $0x5c0] sm:$0xf]
      %v6363 = vld [vmem:[%s4 + $0x5c4] sm:$0xf]
      %v6364 = vld [vmem:[%s4 + $0x5c8] sm:$0xf]
      %v6365 = vld [vmem:[%s4 + $0x5cc] sm:$0xf]
      %v6366 = vld [vmem:[%s4 + $0x5d0] sm:$0xf]
      %v6367 = vld [vmem:[%s4 + $0x5d4] sm:$0xf]
      %v6368 = vld [vmem:[%s4 + $0x5d8] sm:$0xf]
      %v6369 = vld [vmem:[%s4 + $0x5dc] sm:$0xf]
      %v6370 = vld [vmem:[%s4 + $0x5e0] sm:$0xf]
      %v6371 = vld [vmem:[%s4 + $0x5e4] sm:$0xf]
      %v6372 = vld [vmem:[%s4 + $0x5e8] sm:$0xf]
      %v6373 = vld [vmem:[%s4 + $0x5ec] sm:$0xf]
      %v6374 = vld [vmem:[%s4 + $0x5f0] sm:$0xf]
      %v6375 = vld [vmem:[%s4 + $0x5f4] sm:$0xf]
      %v6376 = vld [vmem:[%s4 + $0x5f8] sm:$0xf]
      %v6377 = vld [vmem:[%s4 + $0x5fc] sm:$0xf]
      %v6378 = vpack.c.b16 %v6146, %v6145
      %v6379 = vpack.c.b16 %v6148, %v6147
      %v6380 = vpack.c.b16 %v6255, %v6255
      %v6400 = vunpack.c.l.b16 %v6362
      %v6401 = vunpack.c.l.b16 %v6363
      %v6402 = vunpack.c.l.b16 %v6364
      %v6403 = vunpack.c.l.b16 %v6365
      %v6404 = vunpack.c.l.b16 %v6366
      %v6405 = vunpack.c.l.b16 %v6367
      %v6406 = vunpack.c.l.b16 %v6368
      %v6407 = vunpack.c.l.b16 %v6369
      %v6408 = vunpack.c.l.b16 %v6370
      %v6409 = vunpack.c.l.b16 %v6371
      %v6410 = vunpack.c.l.b16 %v6372
      %v6411 = vunpack.c.l.b16 %v6373
      %v6412 = vunpack.c.l.b16 %v6374
      %v6413 = vunpack.c.l.b16 %v6375
      %v6414 = vunpack.c.l.b16 %v6376
      %v6415 = vunpack.c.l.b16 %v6377
      %v6416 = vpack.c.b16 %v6401, %v6400
      %v6417 = vpack.c.b16 %v6403, %v6402
      %v6418 = vpack.c.b16 %v6405, %v6404
      %v6419 = vpack.c.b16 %v6407, %v6406
      %v6420 = vpack.c.b16 %v6409, %v6408
      %v6421 = vpack.c.b16 %v6411, %v6410
      %v6422 = vpack.c.b16 %v6413, %v6412
      %v6423 = vpack.c.b16 %v6415, %v6414
      %6432 = vmatpush.bf16.msra.mxu0 %v6423
      %6433 = vmatpush.bf16.msra.mxu0 %v6422
      %6434 = vmatpush.bf16.msra.mxu0 %v6421
      %6435 = vmatpush.bf16.msra.mxu0 %v6420
      %6436 = vmatpush.bf16.msra.mxu0 %v6419
      %6437 = vmatpush.bf16.msra.mxu0 %v6418
      %6438 = vmatpush.bf16.msra.mxu0 %v6417
      %6439 = vmatpush.bf16.msra.mxu0 %v6416
      %6440 = vmatmul.bf16.gmra.mxu0 %v6378
      %v6441 = vpop.f32.mrf.mxu0
      %v6442 = vadd.f32 0.0, %v6441
      %v6443 = vpop.f32.mrf.mxu0
      %v6444 = vadd.f32 0.0, %v6443
      %6445 = vmatmul.bf16.gmra.mxu0 %v6379
      %v6446 = vpop.f32.mrf.mxu0
      %v6447 = vadd.f32 0.0, %v6446
      %v6448 = vpop.f32.mrf.mxu0
      %v6449 = vadd.f32 0.0, %v6448
      %6450 = vmatmul.bf16.gmra.mxu0 %v6380
      %v6451 = vpop.f32.mrf.mxu0
      %v6452 = vadd.f32 0.0, %v6451
      %v6453 = vpop.f32.mrf.mxu0
      %6454 = vdwg.mxu0
      %v6455 = vadd.f32 %v6357, %v6442
      %v6456 = vadd.f32 %v6358, %v6444
      %v6457 = vadd.f32 %v6359, %v6447
      %v6458 = vadd.f32 %v6360, %v6449
      %v6459 = vadd.f32 %v6361, %v6452
      %v6460 = vld [vmem:[%s496 + $0x4] sm:$0xc]
      %v6461 = vld [vmem:[%s496 + $0x14] sm:$0xf]
      %v6462 = vld [vmem:[%s4 + $0x600] sm:$0xf]
      %v6463 = vld [vmem:[%s4 + $0x604] sm:$0xf]
      %v6464 = vld [vmem:[%s4 + $0x608] sm:$0xf]
      %v6465 = vld [vmem:[%s4 + $0x60c] sm:$0xf]
      %v6466 = vld [vmem:[%s4 + $0x610] sm:$0xf]
      %v6467 = vld [vmem:[%s4 + $0x614] sm:$0xf]
      %v6468 = vld [vmem:[%s4 + $0x618] sm:$0xf]
      %v6469 = vld [vmem:[%s4 + $0x61c] sm:$0xf]
      %v6470 = vld [vmem:[%s4 + $0x620] sm:$0xf]
      %v6471 = vld [vmem:[%s4 + $0x624] sm:$0xf]
      %v6472 = vld [vmem:[%s4 + $0x628] sm:$0xf]
      %v6473 = vld [vmem:[%s4 + $0x62c] sm:$0xf]
      %v6474 = vld [vmem:[%s4 + $0x630] sm:$0xf]
      %v6475 = vld [vmem:[%s4 + $0x634] sm:$0xf]
      %v6476 = vld [vmem:[%s4 + $0x638] sm:$0xf]
      %v6477 = vld [vmem:[%s4 + $0x63c] sm:$0xf]
      %v6480 = vunpack.c.l.b16 %v6460
      %v6481 = vunpack.c.l.b16 %v6461
      %v6482 = vpack.c.b16 %v6146, %v6480
      %v6483 = vpack.c.b16 %v6481, %v6481
      %v6484 = vrot.slane %v6482, 2
      %v6485 = vrot.slane %v6379, 2
      %v6486 = vsel %vm1221, %v6484, %v6485
      %v6487 = vrot.slane %v6483, 2
      %v6488 = vsel %vm1221, %v6485, %v6487
      %v6508 = vunpack.c.l.b16 %v6462
      %v6509 = vunpack.c.l.b16 %v6463
      %v6510 = vunpack.c.l.b16 %v6464
      %v6511 = vunpack.c.l.b16 %v6465
      %v6512 = vunpack.c.l.b16 %v6466
      %v6513 = vunpack.c.l.b16 %v6467
      %v6514 = vunpack.c.l.b16 %v6468
      %v6515 = vunpack.c.l.b16 %v6469
      %v6516 = vunpack.c.l.b16 %v6470
      %v6517 = vunpack.c.l.b16 %v6471
      %v6518 = vunpack.c.l.b16 %v6472
      %v6519 = vunpack.c.l.b16 %v6473
      %v6520 = vunpack.c.l.b16 %v6474
      %v6521 = vunpack.c.l.b16 %v6475
      %v6522 = vunpack.c.l.b16 %v6476
      %v6523 = vunpack.c.l.b16 %v6477
      %v6524 = vpack.c.b16 %v6509, %v6508
      %v6525 = vpack.c.b16 %v6511, %v6510
      %v6526 = vpack.c.b16 %v6513, %v6512
      %v6527 = vpack.c.b16 %v6515, %v6514
      %v6528 = vpack.c.b16 %v6517, %v6516
      %v6529 = vpack.c.b16 %v6519, %v6518
      %v6530 = vpack.c.b16 %v6521, %v6520
      %v6531 = vpack.c.b16 %v6523, %v6522
      %6540 = vmatpush.bf16.msra.mxu0 %v6531
      %6541 = vmatpush.bf16.msra.mxu0 %v6530
      %6542 = vmatpush.bf16.msra.mxu0 %v6529
      %6543 = vmatpush.bf16.msra.mxu0 %v6528
      %6544 = vmatpush.bf16.msra.mxu0 %v6527
      %6545 = vmatpush.bf16.msra.mxu0 %v6526
      %6546 = vmatpush.bf16.msra.mxu0 %v6525
      %6547 = vmatpush.bf16.msra.mxu0 %v6524
      %6548 = vmatmul.bf16.gmra.mxu0 %v6486
      %v6549 = vpop.f32.mrf.mxu0
      %v6550 = vadd.f32 0.0, %v6549
      %v6551 = vpop.f32.mrf.mxu0
      %v6552 = vadd.f32 0.0, %v6551
      %6553 = vmatmul.bf16.gmra.mxu0 %v6488
      %v6554 = vpop.f32.mrf.mxu0
      %v6555 = vadd.f32 0.0, %v6554
      %v6556 = vpop.f32.mrf.mxu0
      %v6557 = vadd.f32 0.0, %v6556
      %6558 = vmatmul.bf16.gmra.mxu0 %v6487
      %v6559 = vpop.f32.mrf.mxu0
      %v6560 = vadd.f32 0.0, %v6559
      %v6561 = vpop.f32.mrf.mxu0
      %6562 = vdwg.mxu0
      %v6563 = vadd.f32 %v6455, %v6550
      %v6564 = vadd.f32 %v6456, %v6552
      %v6565 = vadd.f32 %v6457, %v6555
      %v6566 = vadd.f32 %v6458, %v6557
      %v6567 = vadd.f32 %v6459, %v6560
      %v6568 = vld [vmem:[%s496 + $0x4] sm:$0xc]
      %v6569 = vld [vmem:[%s496 + $0x8] sm:$0xf]
      %v6570 = vld [vmem:[%s496 + $0xc] sm:$0xf]
      %v6571 = vld [vmem:[%s496 + $0x10] sm:$0xf]
      %v6572 = vld [vmem:[%s496 + $0x14] sm:$0xf]
      %v6573 = vld [vmem:[%s496 + $0x18] sm:$0x1]
      %v6574 = vld [vmem:[%s4 + $0x640] sm:$0xf]
      %v6575 = vld [vmem:[%s4 + $0x644] sm:$0xf]
      %v6576 = vld [vmem:[%s4 + $0x648] sm:$0xf]
      %v6577 = vld [vmem:[%s4 + $0x64c] sm:$0xf]
      %v6578 = vld [vmem:[%s4 + $0x650] sm:$0xf]
      %v6579 = vld [vmem:[%s4 + $0x654] sm:$0xf]
      %v6580 = vld [vmem:[%s4 + $0x658] sm:$0xf]
      %v6581 = vld [vmem:[%s4 + $0x65c] sm:$0xf]
      %v6582 = vld [vmem:[%s4 + $0x660] sm:$0xf]
      %v6583 = vld [vmem:[%s4 + $0x664] sm:$0xf]
      %v6584 = vld [vmem:[%s4 + $0x668] sm:$0xf]
      %v6585 = vld [vmem:[%s4 + $0x66c] sm:$0xf]
      %v6586 = vld [vmem:[%s4 + $0x670] sm:$0xf]
      %v6587 = vld [vmem:[%s4 + $0x674] sm:$0xf]
      %v6588 = vld [vmem:[%s4 + $0x678] sm:$0xf]
      %v6589 = vld [vmem:[%s4 + $0x67c] sm:$0xf]
      %v6596 = vunpack.c.l.b16 %v6568
      %v6597 = vunpack.c.l.b16 %v6569
      %v6598 = vunpack.c.l.b16 %v6570
      %v6599 = vunpack.c.l.b16 %v6571
      %v6600 = vunpack.c.l.b16 %v6572
      %v6601 = vunpack.c.l.b16 %v6573
      %v6602 = vpack.c.b16 %v6597, %v6596
      %v6603 = vpack.c.b16 %v6599, %v6598
      %v6604 = vpack.c.b16 %v6601, %v6600
      %v6606 = vshrl.u32 %v6602, 16
      %v6608 = vrot.slane %v6606, 2
      %v6609 = vshll.u32 %v6602, 16
      %v6611 = vrot.slane %v6609, 3
      %v6612 = vor.u32 %v6608, %v6611
      %v6614 = vshrl.u32 %v6603, 16
      %v6616 = vrot.slane %v6614, 2
      %v6617 = vshll.u32 %v6603, 16
      %v6619 = vrot.slane %v6617, 3
      %v6620 = vor.u32 %v6616, %v6619
      %v6621 = vsel %vm1343, %v6612, %v6620
      %v6623 = vshrl.u32 %v6604, 16
      %v6625 = vrot.slane %v6623, 2
      %v6626 = vshll.u32 %v6604, 16
      %v6628 = vrot.slane %v6626, 3
      %v6629 = vor.u32 %v6625, %v6628
      %v6630 = vsel %vm1343, %v6620, %v6629
      %v6650 = vunpack.c.l.b16 %v6574
      %v6651 = vunpack.c.l.b16 %v6575
      %v6652 = vunpack.c.l.b16 %v6576
      %v6653 = vunpack.c.l.b16 %v6577
      %v6654 = vunpack.c.l.b16 %v6578
      %v6655 = vunpack.c.l.b16 %v6579
      %v6656 = vunpack.c.l.b16 %v6580
      %v6657 = vunpack.c.l.b16 %v6581
      %v6658 = vunpack.c.l.b16 %v6582
      %v6659 = vunpack.c.l.b16 %v6583
      %v6660 = vunpack.c.l.b16 %v6584
      %v6661 = vunpack.c.l.b16 %v6585
      %v6662 = vunpack.c.l.b16 %v6586
      %v6663 = vunpack.c.l.b16 %v6587
      %v6664 = vunpack.c.l.b16 %v6588
      %v6665 = vunpack.c.l.b16 %v6589
      %v6666 = vpack.c.b16 %v6651, %v6650
      %v6667 = vpack.c.b16 %v6653, %v6652
      %v6668 = vpack.c.b16 %v6655, %v6654
      %v6669 = vpack.c.b16 %v6657, %v6656
      %v6670 = vpack.c.b16 %v6659, %v6658
      %v6671 = vpack.c.b16 %v6661, %v6660
      %v6672 = vpack.c.b16 %v6663, %v6662
      %v6673 = vpack.c.b16 %v6665, %v6664
      %6682 = vmatpush.bf16.msra.mxu0 %v6673
      %6683 = vmatpush.bf16.msra.mxu0 %v6672
      %6684 = vmatpush.bf16.msra.mxu0 %v6671
      %6685 = vmatpush.bf16.msra.mxu0 %v6670
      %6686 = vmatpush.bf16.msra.mxu0 %v6669
      %6687 = vmatpush.bf16.msra.mxu0 %v6668
      %6688 = vmatpush.bf16.msra.mxu0 %v6667
      %6689 = vmatpush.bf16.msra.mxu0 %v6666
      %6690 = vmatmul.bf16.gmra.mxu0 %v6621
      %v6691 = vpop.f32.mrf.mxu0
      %v6692 = vadd.f32 0.0, %v6691
      %v6693 = vpop.f32.mrf.mxu0
      %v6694 = vadd.f32 0.0, %v6693
      %6695 = vmatmul.bf16.gmra.mxu0 %v6630
      %v6696 = vpop.f32.mrf.mxu0
      %v6697 = vadd.f32 0.0, %v6696
      %v6698 = vpop.f32.mrf.mxu0
      %v6699 = vadd.f32 0.0, %v6698
      %6700 = vmatmul.bf16.gmra.mxu0 %v6629
      %v6701 = vpop.f32.mrf.mxu0
      %v6702 = vadd.f32 0.0, %v6701
      %v6703 = vpop.f32.mrf.mxu0
      %6704 = vdwg.mxu0
      %v6705 = vadd.f32 %v6563, %v6692
      %v6706 = vadd.f32 %v6564, %v6694
      %v6707 = vadd.f32 %v6565, %v6697
      %v6708 = vadd.f32 %v6566, %v6699
      %v6709 = vadd.f32 %v6567, %v6702
      %v6710 = vld [vmem:[%s496 + $0x4] sm:$0x8]
      %v6711 = vld [vmem:[%s4 + $0x680] sm:$0xf]
      %v6712 = vld [vmem:[%s4 + $0x684] sm:$0xf]
      %v6713 = vld [vmem:[%s4 + $0x688] sm:$0xf]
      %v6714 = vld [vmem:[%s4 + $0x68c] sm:$0xf]
      %v6715 = vld [vmem:[%s4 + $0x690] sm:$0xf]
      %v6716 = vld [vmem:[%s4 + $0x694] sm:$0xf]
      %v6717 = vld [vmem:[%s4 + $0x698] sm:$0xf]
      %v6718 = vld [vmem:[%s4 + $0x69c] sm:$0xf]
      %v6719 = vld [vmem:[%s4 + $0x6a0] sm:$0xf]
      %v6720 = vld [vmem:[%s4 + $0x6a4] sm:$0xf]
      %v6721 = vld [vmem:[%s4 + $0x6a8] sm:$0xf]
      %v6722 = vld [vmem:[%s4 + $0x6ac] sm:$0xf]
      %v6723 = vld [vmem:[%s4 + $0x6b0] sm:$0xf]
      %v6724 = vld [vmem:[%s4 + $0x6b4] sm:$0xf]
      %v6725 = vld [vmem:[%s4 + $0x6b8] sm:$0xf]
      %v6726 = vld [vmem:[%s4 + $0x6bc] sm:$0xf]
      %v6728 = vunpack.c.l.b16 %v6710
      %v6729 = vpack.c.b16 %v6597, %v6728
      %v6730 = vrot.slane %v6729, 3
      %v6731 = vrot.slane %v6603, 3
      %v6732 = vsel %vm888, %v6730, %v6731
      %v6733 = vrot.slane %v6604, 3
      %v6734 = vsel %vm888, %v6731, %v6733
      %v6754 = vunpack.c.l.b16 %v6711
      %v6755 = vunpack.c.l.b16 %v6712
      %v6756 = vunpack.c.l.b16 %v6713
      %v6757 = vunpack.c.l.b16 %v6714
      %v6758 = vunpack.c.l.b16 %v6715
      %v6759 = vunpack.c.l.b16 %v6716
      %v6760 = vunpack.c.l.b16 %v6717
      %v6761 = vunpack.c.l.b16 %v6718
      %v6762 = vunpack.c.l.b16 %v6719
      %v6763 = vunpack.c.l.b16 %v6720
      %v6764 = vunpack.c.l.b16 %v6721
      %v6765 = vunpack.c.l.b16 %v6722
      %v6766 = vunpack.c.l.b16 %v6723
      %v6767 = vunpack.c.l.b16 %v6724
      %v6768 = vunpack.c.l.b16 %v6725
      %v6769 = vunpack.c.l.b16 %v6726
      %v6770 = vpack.c.b16 %v6755, %v6754
      %v6771 = vpack.c.b16 %v6757, %v6756
      %v6772 = vpack.c.b16 %v6759, %v6758
      %v6773 = vpack.c.b16 %v6761, %v6760
      %v6774 = vpack.c.b16 %v6763, %v6762
      %v6775 = vpack.c.b16 %v6765, %v6764
      %v6776 = vpack.c.b16 %v6767, %v6766
      %v6777 = vpack.c.b16 %v6769, %v6768
      %6786 = vmatpush.bf16.msra.mxu0 %v6777
      %6787 = vmatpush.bf16.msra.mxu0 %v6776
      %6788 = vmatpush.bf16.msra.mxu0 %v6775
      %6789 = vmatpush.bf16.msra.mxu0 %v6774
      %6790 = vmatpush.bf16.msra.mxu0 %v6773
      %6791 = vmatpush.bf16.msra.mxu0 %v6772
      %6792 = vmatpush.bf16.msra.mxu0 %v6771
      %6793 = vmatpush.bf16.msra.mxu0 %v6770
      %6794 = vmatmul.bf16.gmra.mxu0 %v6732
      %v6795 = vpop.f32.mrf.mxu0
      %v6796 = vadd.f32 0.0, %v6795
      %v6797 = vpop.f32.mrf.mxu0
      %v6798 = vadd.f32 0.0, %v6797
      %6799 = vmatmul.bf16.gmra.mxu0 %v6734
      %v6800 = vpop.f32.mrf.mxu0
      %v6801 = vadd.f32 0.0, %v6800
      %v6802 = vpop.f32.mrf.mxu0
      %v6803 = vadd.f32 0.0, %v6802
      %6804 = vmatmul.bf16.gmra.mxu0 %v6733
      %v6805 = vpop.f32.mrf.mxu0
      %v6806 = vadd.f32 0.0, %v6805
      %v6807 = vpop.f32.mrf.mxu0
      %6808 = vdwg.mxu0
      %v6809 = vadd.f32 %v6705, %v6796
      %v6810 = vadd.f32 %v6706, %v6798
      %v6811 = vadd.f32 %v6707, %v6801
      %v6812 = vadd.f32 %v6708, %v6803
      %v6813 = vadd.f32 %v6709, %v6806
      %v6814 = vld [vmem:[%s5] sm:$0x1]
      %v6816 = vperm.slane %v6814, 0
      %v6818 = vadd.f32 %v6809, %v6816
      %v6819 = vadd.f32 %v6810, %v6816
      %v6820 = vadd.f32 %v6811, %v6816
      %v6821 = vadd.f32 %v6812, %v6816
      %v6822 = vadd.f32 %v6813, %v6816
      %v6823 = vpack.c.bf16 %v6818, %v6818
      %v6824 = vpack.c.bf16 %v6819, %v6819
      %v6825 = vpack.c.bf16 %v6820, %v6820
      %v6826 = vpack.c.bf16 %v6821, %v6821
      %v6827 = vpack.c.bf16 %v6822, %v6822
      %s6828 = scalar_lea.vmem %s508, 20
      %6829 = vst [vmem:[%s6828] sm:$0xf] %v6823
      %6830 = vst [vmem:[%s6828 + $0x4] sm:$0xf] %v6824
      %6831 = vst [vmem:[%s6828 + $0x8] sm:$0xf] %v6825
      %6832 = vst [vmem:[%s6828 + $0xc] sm:$0xf] %v6826
      %6833 = vst [vmem:[%s6828 + $0x10] sm:$0x3] %v6827
      %v6834 = vld [vmem:[%s6] sm:$0xff]
      %v6835 = vld [vmem:[%s6 + $0x8] sm:$0xff]
      %v6836 = vld [vmem:[%s6 + $0x10] sm:$0xff]
      %v6837 = vld [vmem:[%s6 + $0x18] sm:$0xff]
      %v6838 = vld [vmem:[%s6 + $0x20] sm:$0xf]
      %6840 = vset.pattern.permute.xlu0 0
      %6841 = vperm.xlu0 %6840, %v6834
      %v6842 = vpop.permute.xlu0 %6841
      %6845 = vset.pattern.permute.xlu0 0
      %6846 = vperm.xlu0 %6845, %v6835
      %v6847 = vpop.permute.xlu0 %6846
      %6850 = vset.pattern.permute.xlu0 0
      %6851 = vperm.xlu0 %6850, %v6836
      %v6852 = vpop.permute.xlu0 %6851
      %6855 = vset.pattern.permute.xlu0 0
      %6856 = vperm.xlu0 %6855, %v6837
      %v6857 = vpop.permute.xlu0 %6856
      %6860 = vset.pattern.permute.xlu0 0
      %6861 = vperm.xlu0 %6860, %v6838
      %v6862 = vpop.permute.xlu0 %6861
      %v6864 = vmul.f32 %v6818, %v6842
      %v6865 = vmul.f32 %v6819, %v6847
      %v6866 = vmul.f32 %v6820, %v6852
      %v6867 = vmul.f32 %v6821, %v6857
      %v6868 = vmul.f32 %v6822, %v6862
      %v6869 = vadd.f32 %v6864, %v6865
      %v6870 = vadd.f32 %v6869, %v6866
      %v6871 = vadd.f32 %v6870, %v6867
      %v6872 = vsel %vm3684, %v6868, 0.0
      %v6873 = vadd.f32 %v6871, %v6872
      %v6874 = vrot.slane %v6873, 4
      %v6875 = vadd.f32 %v6873, %v6874
      %v6876 = vrot.slane %v6875, 2
      %v6877 = vadd.f32 %v6875, %v6876
      %v6878 = vrot.slane %v6877, 1
      %v6879 = vadd.f32 %v6877, %v6878
      %v6880 = vadd.f32 %v6879, 0.0
      %v6881 = vmul.f32 %v6864, %v6818
      %v6882 = vmul.f32 %v6865, %v6819
      %v6883 = vmul.f32 %v6866, %v6820
      %v6884 = vmul.f32 %v6867, %v6821
      %v6885 = vmul.f32 %v6868, %v6822
      %v6886 = vadd.f32 %v6881, %v6882
      %v6887 = vadd.f32 %v6886, %v6883
      %v6888 = vadd.f32 %v6887, %v6884
      %v6889 = vsel %vm3684, %v6885, 0.0
      %v6890 = vadd.f32 %v6888, %v6889
      %v6891 = vrot.slane %v6890, 4
      %v6892 = vadd.f32 %v6890, %v6891
      %v6893 = vrot.slane %v6892, 2
      %v6894 = vadd.f32 %v6892, %v6893
      %v6895 = vrot.slane %v6894, 1
      %v6896 = vadd.f32 %v6894, %v6895
      %v6897 = vadd.f32 %v6896, 0.0
      %s6898 = scalar_lea.vmem %s518, 2
      %6899 = vst [vmem:[%s6898] sm:$0x1] %v6880
      %6900 = vst [vmem:[%s6898 + $0x1] sm:$0x1] %v6897
      %s6901 = smul.u32 2, %s25
      %p6902 = scmp.lt.s32.totalorder %s24, 1
      %s6903 = scalar_select %p6902, %s24, 1
      %p6904 = scmp.lt.s32.totalorder %s6901, 3
      %s6905 = scalar_select %p6904, %s6901, 3
      %s6906 = smul.addr %s6905, 5
      %s6907 = smul.addr %s6903, 20
      %s6908 = sadd.s32 %s6906, %s6907
      %s6909 = smul.addr %s6908, 4
      %s6910 = scalar_lea.vmem %s7, %s6909
      %s6911 = smul.u32 2, %s25
      %p6912 = scmp.lt.s32.totalorder %s24, 1
      %s6913 = scalar_select %p6912, %s24, 1
      %p6914 = scmp.lt.s32.totalorder %s6911, 3
      %s6915 = scalar_select %p6914, %s6911, 3
      %s6916 = smul.addr %s6913, 4
      %s6917 = sadd.s32 %s6915, %s6916
      %s6918 = smul.addr %s6917, 2
      %s6919 = scalar_lea.vmem %s8, %s6918
      // Predicated region
      $region49: #{basic_block_forward.4} parent=47 // pred_check
        %p6920 = pneg %p241
      $region50: #{basic_block_forward.4} parent=47 // pred_check_branch
        %6922 = sbr.rel (%p6920) target = $region52
      $region51: #{basic_block_forward.4} parent=47 // pred_region
        %s6923 = smul.u32 2, %s25
      $region52: #{basic_block_forward.4} parent=47 // pred_fallthru
        _
      // Predicated region
      $region53: #{basic_block_forward.4} parent=47 // pred_check
        %p6924 = pneg %p269
      $region54: #{basic_block_forward.4} parent=47 // pred_check_branch
        %6926 = sbr.rel (%p6924) target = $region56
      $region55: #{basic_block_forward.4} parent=47 // pred_region
        %s6927 = smul.u32 2, %s25
      $region56: #{basic_block_forward.4} parent=47 // pred_fallthru
        _
    $region48: #{basic_block_forward.4} parent=5 // pred_fallthru
      _
    %p6928 = scmp.le.s32.totalorder 2, %s15
    // Predicated region
    $region57: #{basic_block_forward.4} parent=5 // pred_check
      %p6929 = pneg %p6928
    $region58: #{basic_block_forward.4} parent=5 // pred_check_branch
      %6931 = sbr.rel (%p6929) target = $region60
    $region59: #{basic_block_forward.4} parent=5 // pred_region
      %s6932 = ssub.s32 %s15, 2
      // Predicated region
      $region61: #{basic_block_forward.4} parent=59 // pred_check
        %p6933 = pneg %p247
      $region62: #{basic_block_forward.4} parent=59 // pred_check_branch
        %6935 = sbr.rel (%p6933) target = $region64
      $region63: #{basic_block_forward.4} parent=59 // pred_region
        %s6936 = smul.u32 2, %s27
        %p6937 = scmp.lt.s32.totalorder %s26, 1
        %s6938 = scalar_select %p6937, %s26, 1
        %p6939 = scmp.lt.s32.totalorder %s6936, 3
        %s6940 = scalar_select %p6939, %s6936, 3
        %s6941 = smul.addr %s6940, 5
        %s6942 = smul.addr %s6938, 20
        %s6943 = sadd.s32 %s6941, %s6942
        %s6944 = smul.addr %s6943, 4
        %s6945 = scalar_lea.vmem %s7, %s6944
      $region64: #{basic_block_forward.4} parent=59 // pred_fallthru
        _
      // Predicated region
      $region65: #{basic_block_forward.4} parent=59 // pred_check
        %p6946 = pneg %p275
      $region66: #{basic_block_forward.4} parent=59 // pred_check_branch
        %6948 = sbr.rel (%p6946) target = $region68
      $region67: #{basic_block_forward.4} parent=59 // pred_region
        %s6949 = smul.u32 2, %s27
        %p6950 = scmp.lt.s32.totalorder %s26, 1
        %s6951 = scalar_select %p6950, %s26, 1
        %p6952 = scmp.lt.s32.totalorder %s6949, 3
        %s6953 = scalar_select %p6952, %s6949, 3
        %s6954 = smul.addr %s6951, 4
        %s6955 = sadd.s32 %s6953, %s6954
        %s6956 = smul.addr %s6955, 2
        %s6957 = scalar_lea.vmem %s8, %s6956
      $region68: #{basic_block_forward.4} parent=59 // pred_fallthru
        _
    $region60: #{basic_block_forward.4} parent=5 // pred_fallthru
      _
  $region6: #{basic_block_forward.4} parent=0 // loop_footer
    %s19 = sadd.s32 1, %s15
  $region7: #{basic_block_forward.4} parent=0 // loop_footer_branch
    %14 = sbr.rel target = $region3
  $region8: #{basic_block_forward.4} parent=0 // loop_exit
    _

</llo_original>
